<compile_context>
chip_gen: v6e
topology: v6e:2x2x1
jax: 0.10.0
libtpu: 0.0.40
codegen_flags: <defaults>
</compile_context>

<pallas_src>
import jax
import jax.numpy as jnp
from jax.experimental import pallas as pl
from jax.experimental.pallas import tpu as pltpu

NEG_SLOPE = 0.1   # the spec module uses LeakyReLU(0.1) (not SiLU)
BN_EPS = 1e-5
K = 3             # conv / pool kernel size used by SPPF


def _sppf_kernel(x_ref, w1_ref, s1_ref, sh1_ref, w2_ref, s2_ref, sh2_ref,
                 o_ref, pool_buf):
    """Entire SPPF for one image (one grid step)."""
    _, Hp, Wp, C = x_ref.shape
    H, W = Hp - 2, Wp - 2
    HW = H * W
    ch = w1_ref.shape[2]

    x = x_ref[0]                                    # (H+2, W+2, C) bf16, in VMEM

    # ---- 3x3 'same' conv as a sum over (kh, kw) of shifted MXU matmuls ----
    acc = jnp.zeros((HW, ch), jnp.float32)
    for kh in range(K):
        for kw in range(K):
            slab = x[kh:kh + H, kw:kw + W, :].reshape(HW, C)        # bf16
            acc = acc + jnp.dot(slab, w1_ref[kh * K + kw],
                                preferred_element_type=jnp.float32)

    # fused BatchNorm (eval stats folded) + LeakyReLU(0.1)
    y = acc * s1_ref[...] + sh1_ref[...]
    y = jnp.where(y >= 0, y, NEG_SLOPE * y)                         # (HW, ch) f32

    # ---- SPPF pyramid fused with the 1x1 conv:
    #      concat([y0..y3]) @ W2  ==  sum_i  y_i @ W2[i]  (concat never built) ----
    out = jnp.dot(y.astype(jnp.bfloat16), w2_ref[0],
                  preferred_element_type=jnp.float32)               # (HW, Co_pad)

    # -inf border written once; the interior is overwritten before each pool,
    # which gives exact MaxPool2d(3, stride=1, padding=1) semantics.
    pool_buf[...] = jnp.full(pool_buf.shape, -jnp.inf, jnp.float32)
    y_sp = y.reshape(H, W, ch)
    for level in range(1, 4):
        pool_buf[1:H + 1, 1:W + 1, :] = y_sp
        m = pool_buf[0:H, 0:W, :]
        for dh in range(K):
            for dw in range(K):
                if dh == 0 and dw == 0:
                    continue
                m = jnp.maximum(m, pool_buf[dh:dh + H, dw:dw + W, :])
        y_sp = m                                                    # pooled level
        out = out + jnp.dot(y_sp.reshape(HW, ch).astype(jnp.bfloat16),
                            w2_ref[level], preferred_element_type=jnp.float32)

    # fused BN + LeakyReLU of the 1x1 conv; lane-dense (Co padded to 128) store
    z = out * s2_ref[...] + sh2_ref[...]
    o_ref[...] = jnp.where(z >= 0, z, NEG_SLOPE * z).astype(o_ref.dtype)


def sppf_forward(x, w1, b1, g1, be1, rm1, rv1, w2, b2, g2, be2, rm2, rv2):
    """SPPF forward (inference-mode BN).  x: (N, C, H, W) float32 NCHW."""
    N, C, H, W = x.shape
    ch = w1.shape[0]                 # = ch_in // 2
    Co = w2.shape[0]
    assert w1.shape == (ch, C, K, K)
    assert w2.shape == (Co, 4 * ch, 1, 1)
    HW = H * W
    Co_pad = pl.cdiv(Co, 128) * 128  # lane-dense output stores

    # one layout change at entry: NCHW -> NHWC (+ conv halo pad), bf16 stream
    x_nhwc = jnp.transpose(x, (0, 2, 3, 1))
    xp = jnp.pad(x_nhwc, ((0, 0), (1, 1), (1, 1), (0, 0))).astype(jnp.bfloat16)

    # fold conv bias + eval-mode BN into per-channel scale / shift (f32)
    s1 = g1 / jnp.sqrt(rv1 + BN_EPS)
    sh1 = be1 + (b1 - rm1) * s1
    s2 = g2 / jnp.sqrt(rv2 + BN_EPS)
    sh2 = be2 + (b2 - rm2) * s2

    # weights: OIHW -> (KH*KW, C, ch) and (4, ch, Co_pad); bf16 into the MXU
    w1_k = jnp.transpose(w1, (2, 3, 1, 0)).reshape(K * K, C, ch).astype(jnp.bfloat16)
    w2_mat = w2.reshape(Co, 4 * ch).T.reshape(4, ch, Co)
    w2_mat = jnp.pad(w2_mat, ((0, 0), (0, 0), (0, Co_pad - Co))).astype(jnp.bfloat16)

    s1r = s1.reshape(1, ch).astype(jnp.float32)
    sh1r = sh1.reshape(1, ch).astype(jnp.float32)
    s2r = jnp.pad(s2, (0, Co_pad - Co)).reshape(1, Co_pad).astype(jnp.float32)
    sh2r = jnp.pad(sh2, (0, Co_pad - Co)).reshape(1, Co_pad).astype(jnp.float32)

    out_flat = pl.pallas_call(
        _sppf_kernel,
        out_shape=jax.ShapeDtypeStruct((N * HW, Co_pad), jnp.float32),
        grid_spec=pltpu.PrefetchScalarGridSpec(
            num_scalar_prefetch=0,
            grid=(N,),                                   # >=2 parallel blocks
            in_specs=[
                pl.BlockSpec((1, H + 2, W + 2, C), lambda n: (n, 0, 0, 0)),
                pl.BlockSpec((K * K, C, ch), lambda n: (0, 0, 0)),
                pl.BlockSpec((1, ch), lambda n: (0, 0)),
                pl.BlockSpec((1, ch), lambda n: (0, 0)),
                pl.BlockSpec((4, ch, Co_pad), lambda n: (0, 0, 0)),
                pl.BlockSpec((1, Co_pad), lambda n: (0, 0)),
                pl.BlockSpec((1, Co_pad), lambda n: (0, 0)),
            ],
            out_specs=pl.BlockSpec((HW, Co_pad), lambda n: (n, 0)),
            scratch_shapes=[pltpu.VMEM((H + 2, W + 2, ch), jnp.float32)],
        ),
        compiler_params=pltpu.CompilerParams(
            dimension_semantics=("parallel",),
            vmem_limit_bytes=64 * 1024 * 1024,
        ),
    )(xp, w1_k, s1r, sh1r, w2_mat, s2r, sh2r)

    # drop channel padding; one transpose back to the PyTorch NCHW contract
    return out_flat[:, :Co].reshape(N, H, W, Co).transpose(0, 3, 1, 2)


def sppf_reference(x, w1, b1, g1, be1, rm1, rv1, w2, b2, g2, be2, rm2, rv2):
    """Pure-JAX (XLA) reference with matching bf16-in / f32-accumulate precision."""
    def conv_bn_act(inp, w, b, g, be, rm, rv, pad):
        z = jax.lax.conv_general_dilated(
            inp.astype(jnp.bfloat16), w.astype(jnp.bfloat16),
            window_strides=(1, 1), padding=[(pad, pad), (pad, pad)],
            dimension_numbers=("NCHW", "OIHW", "NCHW"),
            preferred_element_type=jnp.float32)
        z = z + b[None, :, None, None]
        s = g / jnp.sqrt(rv + BN_EPS)
        z = s[None, :, None, None] * (z - rm[None, :, None, None]) + be[None, :, None, None]
        return jnp.where(z >= 0, z, NEG_SLOPE * z)

    y0 = conv_bn_act(x, w1, b1, g1, be1, rm1, rv1, 1)
    feats = [y0]
    for _ in range(3):
        feats.append(jax.lax.reduce_window(
            feats[-1], -jnp.inf, jax.lax.max,
            window_dimensions=(1, 1, 3, 3), window_strides=(1, 1, 1, 1),
            padding=((0, 0), (0, 0), (1, 1), (1, 1))))
    cat = jnp.concatenate(feats, axis=1)
    return conv_bn_act(cat, w2, b2, g2, be2, rm2, rv2, 0)


if __name__ == "__main__":
    ch_in, ch_out = 4, 8
    N, H, W = 2, 16, 16
    ch = ch_in // 2

    key = jax.random.PRNGKey(0)
    ks = jax.random.split(key, 13)
    x = jax.random.normal(ks[0], (N, ch_in, H, W), dtype=jnp.float32)
    w1 = 0.1 * jax.random.normal(ks[1], (ch, ch_in, 3, 3), dtype=jnp.float32)
    b1 = 0.1 * jax.random.normal(ks[2], (ch,), dtype=jnp.float32)
    g1 = 1.0 + 0.1 * jax.random.normal(ks[3], (ch,), dtype=jnp.float32)
    be1 = 0.1 * jax.random.normal(ks[4], (ch,), dtype=jnp.float32)
    rm1 = 0.1 * jax.random.normal(ks[5], (ch,), dtype=jnp.float32)
    rv1 = 1.0 + 0.1 * jnp.abs(jax.random.normal(ks[6], (ch,), dtype=jnp.float32))
    w2 = 0.1 * jax.random.normal(ks[7], (ch_out, 4 * ch, 1, 1), dtype=jnp.float32)
    b2 = 0.1 * jax.random.normal(ks[8], (ch_out,), dtype=jnp.float32)
    g2 = 1.0 + 0.1 * jax.random.normal(ks[9], (ch_out,), dtype=jnp.float32)
    be2 = 0.1 * jax.random.normal(ks[10], (ch_out,), dtype=jnp.float32)
    rm2 = 0.1 * jax.random.normal(ks[11], (ch_out,), dtype=jnp.float32)
    rv2 = 1.0 + 0.1 * jnp.abs(jax.random.normal(ks[12], (ch_out,), dtype=jnp.float32))

    args = (x, w1, b1, g1, be1, rm1, rv1, w2, b2, g2, be2, rm2, rv2)

    out = jax.jit(sppf_forward)(*args)
    jax.block_until_ready(out)

    ref = sppf_reference(*args)
    assert out.shape == ref.shape == (N, ch_out, H, W)
    err = float(jnp.max(jnp.abs(out - ref)))
    assert err < 2e-2, f"max abs err too large: {err}"
    print("KERNEL_OK")
</pallas_src>

<mosaic_0001>
module attributes {stable_mosaic.version = 11 : i64} {
  func.func @_sppf_kernel(%arg0: i32, %arg1: memref<1x18x18x4xbf16, #tpu.memory_space<vmem>>, %arg2: memref<9x4x2xbf16, #tpu.memory_space<vmem>>, %arg3: memref<1x2xf32, #tpu.memory_space<vmem>>, %arg4: memref<1x2xf32, #tpu.memory_space<vmem>>, %arg5: memref<4x2x128xbf16, #tpu.memory_space<vmem>>, %arg6: memref<1x128xf32, #tpu.memory_space<vmem>>, %arg7: memref<1x128xf32, #tpu.memory_space<vmem>>, %arg8: memref<256x128xf32, #tpu.memory_space<vmem>>, %arg9: memref<18x18x2xf32, #tpu.memory_space<vmem>>) attributes {dimension_semantics = [#tpu.dimension_semantics<parallel>], iteration_bounds = array<i64: 2>, scalar_prefetch = 0 : i64, scratch_operands = 1 : i64, tpu.core_type = #tpu.core_type<tc>, window_params = [{transform_indices = @transform_0, window_bounds = array<i64: 1, 18, 18, 4>}, {pipeline_mode = #tpu.pipeline_mode<synchronous>, transform_indices = @transform_1, window_bounds = array<i64: 9, 4, 2>}, {pipeline_mode = #tpu.pipeline_mode<synchronous>, transform_indices = @transform_2, window_bounds = array<i64: 1, 2>}, {pipeline_mode = #tpu.pipeline_mode<synchronous>, transform_indices = @transform_3, window_bounds = array<i64: 1, 2>}, {pipeline_mode = #tpu.pipeline_mode<synchronous>, transform_indices = @transform_4, window_bounds = array<i64: 4, 2, 128>}, {pipeline_mode = #tpu.pipeline_mode<synchronous>, transform_indices = @transform_5, window_bounds = array<i64: 1, 128>}, {pipeline_mode = #tpu.pipeline_mode<synchronous>, transform_indices = @transform_6, window_bounds = array<i64: 1, 128>}, {transform_indices = @transform_7, window_bounds = array<i64: 256, 128>}]} {
    %c0 = arith.constant 0 : index
    %c0_0 = arith.constant 0 : index
    %c0_1 = arith.constant 0 : index
    %c0_2 = arith.constant 0 : index
    %0 = vector.load %arg1[%c0, %c0_0, %c0_1, %c0_2] : memref<1x18x18x4xbf16, #tpu.memory_space<vmem>>, vector<1x18x18x4xbf16>
    %1 = vector.shape_cast %0 : vector<1x18x18x4xbf16> to vector<18x18x4xbf16>
    %cst = arith.constant 0.000000e+00 : f32
    %2 = vector.broadcast %cst : f32 to vector<256x2xf32>
    %3 = vector.extract_strided_slice %1 {offsets = [0, 0, 0], sizes = [16, 16, 4], strides = [1, 1, 1]} : vector<18x18x4xbf16> to vector<16x16x4xbf16>
    %4 = vector.shape_cast %3 : vector<16x16x4xbf16> to vector<256x4xbf16>
    %c0_3 = arith.constant 0 : index
    %c0_4 = arith.constant 0 : index
    %c0_5 = arith.constant 0 : index
    %5 = vector.load %arg2[%c0_3, %c0_4, %c0_5] : memref<9x4x2xbf16, #tpu.memory_space<vmem>>, vector<1x4x2xbf16>
    %6 = vector.shape_cast %5 : vector<1x4x2xbf16> to vector<4x2xbf16>
    %cst_6 = arith.constant dense<0.000000e+00> : vector<256x2xf32>
    %7 = tpu.matmul %4, %6, %cst_6 {dimension_numbers = #tpu.dot_dimension_numbers<[1], [0], [0], [1], [0, 0, 1, 1], [], []>} : vector<256x4xbf16>, vector<4x2xbf16>, vector<256x2xf32> -> vector<256x2xf32>
    %8 = arith.addf %2, %7 : vector<256x2xf32>
    %9 = vector.extract_strided_slice %1 {offsets = [0, 1, 0], sizes = [16, 16, 4], strides = [1, 1, 1]} : vector<18x18x4xbf16> to vector<16x16x4xbf16>
    %10 = vector.shape_cast %9 : vector<16x16x4xbf16> to vector<256x4xbf16>
    %c1 = arith.constant 1 : index
    %c0_7 = arith.constant 0 : index
    %c0_8 = arith.constant 0 : index
    %11 = vector.load %arg2[%c1, %c0_7, %c0_8] : memref<9x4x2xbf16, #tpu.memory_space<vmem>>, vector<1x4x2xbf16>
    %12 = vector.shape_cast %11 : vector<1x4x2xbf16> to vector<4x2xbf16>
    %cst_9 = arith.constant dense<0.000000e+00> : vector<256x2xf32>
    %13 = tpu.matmul %10, %12, %cst_9 {dimension_numbers = #tpu.dot_dimension_numbers<[1], [0], [0], [1], [0, 0, 1, 1], [], []>} : vector<256x4xbf16>, vector<4x2xbf16>, vector<256x2xf32> -> vector<256x2xf32>
    %14 = arith.addf %8, %13 : vector<256x2xf32>
    %15 = vector.extract_strided_slice %1 {offsets = [0, 2, 0], sizes = [16, 16, 4], strides = [1, 1, 1]} : vector<18x18x4xbf16> to vector<16x16x4xbf16>
    %16 = vector.shape_cast %15 : vector<16x16x4xbf16> to vector<256x4xbf16>
    %c2 = arith.constant 2 : index
    %c0_10 = arith.constant 0 : index
    %c0_11 = arith.constant 0 : index
    %17 = vector.load %arg2[%c2, %c0_10, %c0_11] : memref<9x4x2xbf16, #tpu.memory_space<vmem>>, vector<1x4x2xbf16>
    %18 = vector.shape_cast %17 : vector<1x4x2xbf16> to vector<4x2xbf16>
    %cst_12 = arith.constant dense<0.000000e+00> : vector<256x2xf32>
    %19 = tpu.matmul %16, %18, %cst_12 {dimension_numbers = #tpu.dot_dimension_numbers<[1], [0], [0], [1], [0, 0, 1, 1], [], []>} : vector<256x4xbf16>, vector<4x2xbf16>, vector<256x2xf32> -> vector<256x2xf32>
    %20 = arith.addf %14, %19 : vector<256x2xf32>
    %21 = vector.extract_strided_slice %1 {offsets = [1, 0, 0], sizes = [16, 16, 4], strides = [1, 1, 1]} : vector<18x18x4xbf16> to vector<16x16x4xbf16>
    %22 = vector.shape_cast %21 : vector<16x16x4xbf16> to vector<256x4xbf16>
    %c3 = arith.constant 3 : index
    %c0_13 = arith.constant 0 : index
    %c0_14 = arith.constant 0 : index
    %23 = vector.load %arg2[%c3, %c0_13, %c0_14] : memref<9x4x2xbf16, #tpu.memory_space<vmem>>, vector<1x4x2xbf16>
    %24 = vector.shape_cast %23 : vector<1x4x2xbf16> to vector<4x2xbf16>
    %cst_15 = arith.constant dense<0.000000e+00> : vector<256x2xf32>
    %25 = tpu.matmul %22, %24, %cst_15 {dimension_numbers = #tpu.dot_dimension_numbers<[1], [0], [0], [1], [0, 0, 1, 1], [], []>} : vector<256x4xbf16>, vector<4x2xbf16>, vector<256x2xf32> -> vector<256x2xf32>
    %26 = arith.addf %20, %25 : vector<256x2xf32>
    %27 = vector.extract_strided_slice %1 {offsets = [1, 1, 0], sizes = [16, 16, 4], strides = [1, 1, 1]} : vector<18x18x4xbf16> to vector<16x16x4xbf16>
    %28 = vector.shape_cast %27 : vector<16x16x4xbf16> to vector<256x4xbf16>
    %c4 = arith.constant 4 : index
    %c0_16 = arith.constant 0 : index
    %c0_17 = arith.constant 0 : index
    %29 = vector.load %arg2[%c4, %c0_16, %c0_17] : memref<9x4x2xbf16, #tpu.memory_space<vmem>>, vector<1x4x2xbf16>
    %30 = vector.shape_cast %29 : vector<1x4x2xbf16> to vector<4x2xbf16>
    %cst_18 = arith.constant dense<0.000000e+00> : vector<256x2xf32>
    %31 = tpu.matmul %28, %30, %cst_18 {dimension_numbers = #tpu.dot_dimension_numbers<[1], [0], [0], [1], [0, 0, 1, 1], [], []>} : vector<256x4xbf16>, vector<4x2xbf16>, vector<256x2xf32> -> vector<256x2xf32>
    %32 = arith.addf %26, %31 : vector<256x2xf32>
    %33 = vector.extract_strided_slice %1 {offsets = [1, 2, 0], sizes = [16, 16, 4], strides = [1, 1, 1]} : vector<18x18x4xbf16> to vector<16x16x4xbf16>
    %34 = vector.shape_cast %33 : vector<16x16x4xbf16> to vector<256x4xbf16>
    %c5 = arith.constant 5 : index
    %c0_19 = arith.constant 0 : index
    %c0_20 = arith.constant 0 : index
    %35 = vector.load %arg2[%c5, %c0_19, %c0_20] : memref<9x4x2xbf16, #tpu.memory_space<vmem>>, vector<1x4x2xbf16>
    %36 = vector.shape_cast %35 : vector<1x4x2xbf16> to vector<4x2xbf16>
    %cst_21 = arith.constant dense<0.000000e+00> : vector<256x2xf32>
    %37 = tpu.matmul %34, %36, %cst_21 {dimension_numbers = #tpu.dot_dimension_numbers<[1], [0], [0], [1], [0, 0, 1, 1], [], []>} : vector<256x4xbf16>, vector<4x2xbf16>, vector<256x2xf32> -> vector<256x2xf32>
    %38 = arith.addf %32, %37 : vector<256x2xf32>
    %39 = vector.extract_strided_slice %1 {offsets = [2, 0, 0], sizes = [16, 16, 4], strides = [1, 1, 1]} : vector<18x18x4xbf16> to vector<16x16x4xbf16>
    %40 = vector.shape_cast %39 : vector<16x16x4xbf16> to vector<256x4xbf16>
    %c6 = arith.constant 6 : index
    %c0_22 = arith.constant 0 : index
    %c0_23 = arith.constant 0 : index
    %41 = vector.load %arg2[%c6, %c0_22, %c0_23] : memref<9x4x2xbf16, #tpu.memory_space<vmem>>, vector<1x4x2xbf16>
    %42 = vector.shape_cast %41 : vector<1x4x2xbf16> to vector<4x2xbf16>
    %cst_24 = arith.constant dense<0.000000e+00> : vector<256x2xf32>
    %43 = tpu.matmul %40, %42, %cst_24 {dimension_numbers = #tpu.dot_dimension_numbers<[1], [0], [0], [1], [0, 0, 1, 1], [], []>} : vector<256x4xbf16>, vector<4x2xbf16>, vector<256x2xf32> -> vector<256x2xf32>
    %44 = arith.addf %38, %43 : vector<256x2xf32>
    %45 = vector.extract_strided_slice %1 {offsets = [2, 1, 0], sizes = [16, 16, 4], strides = [1, 1, 1]} : vector<18x18x4xbf16> to vector<16x16x4xbf16>
    %46 = vector.shape_cast %45 : vector<16x16x4xbf16> to vector<256x4xbf16>
    %c7 = arith.constant 7 : index
    %c0_25 = arith.constant 0 : index
    %c0_26 = arith.constant 0 : index
    %47 = vector.load %arg2[%c7, %c0_25, %c0_26] : memref<9x4x2xbf16, #tpu.memory_space<vmem>>, vector<1x4x2xbf16>
    %48 = vector.shape_cast %47 : vector<1x4x2xbf16> to vector<4x2xbf16>
    %cst_27 = arith.constant dense<0.000000e+00> : vector<256x2xf32>
    %49 = tpu.matmul %46, %48, %cst_27 {dimension_numbers = #tpu.dot_dimension_numbers<[1], [0], [0], [1], [0, 0, 1, 1], [], []>} : vector<256x4xbf16>, vector<4x2xbf16>, vector<256x2xf32> -> vector<256x2xf32>
    %50 = arith.addf %44, %49 : vector<256x2xf32>
    %51 = vector.extract_strided_slice %1 {offsets = [2, 2, 0], sizes = [16, 16, 4], strides = [1, 1, 1]} : vector<18x18x4xbf16> to vector<16x16x4xbf16>
    %52 = vector.shape_cast %51 : vector<16x16x4xbf16> to vector<256x4xbf16>
    %c8 = arith.constant 8 : index
    %c0_28 = arith.constant 0 : index
    %c0_29 = arith.constant 0 : index
    %53 = vector.load %arg2[%c8, %c0_28, %c0_29] : memref<9x4x2xbf16, #tpu.memory_space<vmem>>, vector<1x4x2xbf16>
    %54 = vector.shape_cast %53 : vector<1x4x2xbf16> to vector<4x2xbf16>
    %cst_30 = arith.constant dense<0.000000e+00> : vector<256x2xf32>
    %55 = tpu.matmul %52, %54, %cst_30 {dimension_numbers = #tpu.dot_dimension_numbers<[1], [0], [0], [1], [0, 0, 1, 1], [], []>} : vector<256x4xbf16>, vector<4x2xbf16>, vector<256x2xf32> -> vector<256x2xf32>
    %56 = arith.addf %50, %55 : vector<256x2xf32>
    %c0_31 = arith.constant 0 : index
    %c0_32 = arith.constant 0 : index
    %57 = vector.load %arg3[%c0_31, %c0_32] : memref<1x2xf32, #tpu.memory_space<vmem>>, vector<1x2xf32>
    %58 = vector.broadcast %57 : vector<1x2xf32> to vector<256x2xf32>
    %59 = arith.mulf %56, %58 : vector<256x2xf32>
    %c0_33 = arith.constant 0 : index
    %c0_34 = arith.constant 0 : index
    %60 = vector.load %arg4[%c0_33, %c0_34] : memref<1x2xf32, #tpu.memory_space<vmem>>, vector<1x2xf32>
    %61 = vector.broadcast %60 : vector<1x2xf32> to vector<256x2xf32>
    %62 = arith.addf %59, %61 : vector<256x2xf32>
    %cst_35 = arith.constant 0.000000e+00 : f32
    %63 = vector.broadcast %cst_35 : f32 to vector<256x2xf32>
    %64 = arith.cmpf oge, %62, %63 : vector<256x2xf32>
    %cst_36 = arith.constant 1.000000e-01 : f32
    %65 = vector.broadcast %cst_36 : f32 to vector<256x2xf32>
    %66 = arith.mulf %65, %62 : vector<256x2xf32>
    %67 = arith.select %64, %62, %66 : vector<256x2xi1>, vector<256x2xf32>
    %68 = arith.truncf %67 : vector<256x2xf32> to vector<256x2xbf16>
    %c0_37 = arith.constant 0 : index
    %c0_38 = arith.constant 0 : index
    %c0_39 = arith.constant 0 : index
    %69 = vector.load %arg5[%c0_37, %c0_38, %c0_39] : memref<4x2x128xbf16, #tpu.memory_space<vmem>>, vector<1x2x128xbf16>
    %70 = vector.shape_cast %69 : vector<1x2x128xbf16> to vector<2x128xbf16>
    %cst_40 = arith.constant dense<0.000000e+00> : vector<256x128xf32>
    %71 = tpu.matmul %68, %70, %cst_40 {dimension_numbers = #tpu.dot_dimension_numbers<[1], [0], [0], [1], [0, 0, 1, 1], [], []>} : vector<256x2xbf16>, vector<2x128xbf16>, vector<256x128xf32> -> vector<256x128xf32>
    %cst_41 = arith.constant 0xFF800000 : f32
    %72 = vector.broadcast %cst_41 : f32 to vector<18x18x2xf32>
    %c0_42 = arith.constant 0 : index
    %c0_43 = arith.constant 0 : index
    %c0_44 = arith.constant 0 : index
    %73 = vector.load %arg9[%c0_42, %c0_43, %c0_44] : memref<18x18x2xf32, #tpu.memory_space<vmem>>, vector<18x18x2xf32>
    tpu.vector_store %arg9[%c0_42, %c0_43, %c0_44], %72 {strides = array<i32>} : memref<18x18x2xf32, #tpu.memory_space<vmem>>, vector<18x18x2xf32>,
    %74 = vector.shape_cast %67 : vector<256x2xf32> to vector<16x16x2xf32>
    %c1_45 = arith.constant 1 : index
    %c1_46 = arith.constant 1 : index
    %c0_47 = arith.constant 0 : index
    %75 = vector.load %arg9[%c1_45, %c1_46, %c0_47] : memref<18x18x2xf32, #tpu.memory_space<vmem>>, vector<16x16x2xf32>
    tpu.vector_store %arg9[%c1_45, %c1_46, %c0_47], %74 {strides = array<i32>} : memref<18x18x2xf32, #tpu.memory_space<vmem>>, vector<16x16x2xf32>,
    %c0_48 = arith.constant 0 : index
    %c0_49 = arith.constant 0 : index
    %c0_50 = arith.constant 0 : index
    %76 = vector.load %arg9[%c0_48, %c0_49, %c0_50] : memref<18x18x2xf32, #tpu.memory_space<vmem>>, vector<16x16x2xf32>
    %c0_51 = arith.constant 0 : index
    %c1_52 = arith.constant 1 : index
    %c0_53 = arith.constant 0 : index
    %77 = vector.load %arg9[%c0_51, %c1_52, %c0_53] : memref<18x18x2xf32, #tpu.memory_space<vmem>>, vector<16x16x2xf32>
    %78 = arith.maximumf %76, %77 : vector<16x16x2xf32>
    %c0_54 = arith.constant 0 : index
    %c2_55 = arith.constant 2 : index
    %c0_56 = arith.constant 0 : index
    %79 = vector.load %arg9[%c0_54, %c2_55, %c0_56] : memref<18x18x2xf32, #tpu.memory_space<vmem>>, vector<16x16x2xf32>
    %80 = arith.maximumf %78, %79 : vector<16x16x2xf32>
    %c1_57 = arith.constant 1 : index
    %c0_58 = arith.constant 0 : index
    %c0_59 = arith.constant 0 : index
    %81 = vector.load %arg9[%c1_57, %c0_58, %c0_59] : memref<18x18x2xf32, #tpu.memory_space<vmem>>, vector<16x16x2xf32>
    %82 = arith.maximumf %80, %81 : vector<16x16x2xf32>
    %c1_60 = arith.constant 1 : index
    %c1_61 = arith.constant 1 : index
    %c0_62 = arith.constant 0 : index
    %83 = vector.load %arg9[%c1_60, %c1_61, %c0_62] : memref<18x18x2xf32, #tpu.memory_space<vmem>>, vector<16x16x2xf32>
    %84 = arith.maximumf %82, %83 : vector<16x16x2xf32>
    %c1_63 = arith.constant 1 : index
    %c2_64 = arith.constant 2 : index
    %c0_65 = arith.constant 0 : index
    %85 = vector.load %arg9[%c1_63, %c2_64, %c0_65] : memref<18x18x2xf32, #tpu.memory_space<vmem>>, vector<16x16x2xf32>
    %86 = arith.maximumf %84, %85 : vector<16x16x2xf32>
    %c2_66 = arith.constant 2 : index
    %c0_67 = arith.constant 0 : index
    %c0_68 = arith.constant 0 : index
    %87 = vector.load %arg9[%c2_66, %c0_67, %c0_68] : memref<18x18x2xf32, #tpu.memory_space<vmem>>, vector<16x16x2xf32>
    %88 = arith.maximumf %86, %87 : vector<16x16x2xf32>
    %c2_69 = arith.constant 2 : index
    %c1_70 = arith.constant 1 : index
    %c0_71 = arith.constant 0 : index
    %89 = vector.load %arg9[%c2_69, %c1_70, %c0_71] : memref<18x18x2xf32, #tpu.memory_space<vmem>>, vector<16x16x2xf32>
    %90 = arith.maximumf %88, %89 : vector<16x16x2xf32>
    %c2_72 = arith.constant 2 : index
    %c2_73 = arith.constant 2 : index
    %c0_74 = arith.constant 0 : index
    %91 = vector.load %arg9[%c2_72, %c2_73, %c0_74] : memref<18x18x2xf32, #tpu.memory_space<vmem>>, vector<16x16x2xf32>
    %92 = arith.maximumf %90, %91 : vector<16x16x2xf32>
    %93 = vector.shape_cast %92 : vector<16x16x2xf32> to vector<256x2xf32>
    %94 = arith.truncf %93 : vector<256x2xf32> to vector<256x2xbf16>
    %c1_75 = arith.constant 1 : index
    %c0_76 = arith.constant 0 : index
    %c0_77 = arith.constant 0 : index
    %95 = vector.load %arg5[%c1_75, %c0_76, %c0_77] : memref<4x2x128xbf16, #tpu.memory_space<vmem>>, vector<1x2x128xbf16>
    %96 = vector.shape_cast %95 : vector<1x2x128xbf16> to vector<2x128xbf16>
    %cst_78 = arith.constant dense<0.000000e+00> : vector<256x128xf32>
    %97 = tpu.matmul %94, %96, %cst_78 {dimension_numbers = #tpu.dot_dimension_numbers<[1], [0], [0], [1], [0, 0, 1, 1], [], []>} : vector<256x2xbf16>, vector<2x128xbf16>, vector<256x128xf32> -> vector<256x128xf32>
    %98 = arith.addf %71, %97 : vector<256x128xf32>
    %c1_79 = arith.constant 1 : index
    %c1_80 = arith.constant 1 : index
    %c0_81 = arith.constant 0 : index
    %99 = vector.load %arg9[%c1_79, %c1_80, %c0_81] : memref<18x18x2xf32, #tpu.memory_space<vmem>>, vector<16x16x2xf32>
    tpu.vector_store %arg9[%c1_79, %c1_80, %c0_81], %92 {strides = array<i32>} : memref<18x18x2xf32, #tpu.memory_space<vmem>>, vector<16x16x2xf32>,
    %c0_82 = arith.constant 0 : index
    %c0_83 = arith.constant 0 : index
    %c0_84 = arith.constant 0 : index
    %100 = vector.load %arg9[%c0_82, %c0_83, %c0_84] : memref<18x18x2xf32, #tpu.memory_space<vmem>>, vector<16x16x2xf32>
    %c0_85 = arith.constant 0 : index
    %c1_86 = arith.constant 1 : index
    %c0_87 = arith.constant 0 : index
    %101 = vector.load %arg9[%c0_85, %c1_86, %c0_87] : memref<18x18x2xf32, #tpu.memory_space<vmem>>, vector<16x16x2xf32>
    %102 = arith.maximumf %100, %101 : vector<16x16x2xf32>
    %c0_88 = arith.constant 0 : index
    %c2_89 = arith.constant 2 : index
    %c0_90 = arith.constant 0 : index
    %103 = vector.load %arg9[%c0_88, %c2_89, %c0_90] : memref<18x18x2xf32, #tpu.memory_space<vmem>>, vector<16x16x2xf32>
    %104 = arith.maximumf %102, %103 : vector<16x16x2xf32>
    %c1_91 = arith.constant 1 : index
    %c0_92 = arith.constant 0 : index
    %c0_93 = arith.constant 0 : index
    %105 = vector.load %arg9[%c1_91, %c0_92, %c0_93] : memref<18x18x2xf32, #tpu.memory_space<vmem>>, vector<16x16x2xf32>
    %106 = arith.maximumf %104, %105 : vector<16x16x2xf32>
    %c1_94 = arith.constant 1 : index
    %c1_95 = arith.constant 1 : index
    %c0_96 = arith.constant 0 : index
    %107 = vector.load %arg9[%c1_94, %c1_95, %c0_96] : memref<18x18x2xf32, #tpu.memory_space<vmem>>, vector<16x16x2xf32>
    %108 = arith.maximumf %106, %107 : vector<16x16x2xf32>
    %c1_97 = arith.constant 1 : index
    %c2_98 = arith.constant 2 : index
    %c0_99 = arith.constant 0 : index
    %109 = vector.load %arg9[%c1_97, %c2_98, %c0_99] : memref<18x18x2xf32, #tpu.memory_space<vmem>>, vector<16x16x2xf32>
    %110 = arith.maximumf %108, %109 : vector<16x16x2xf32>
    %c2_100 = arith.constant 2 : index
    %c0_101 = arith.constant 0 : index
    %c0_102 = arith.constant 0 : index
    %111 = vector.load %arg9[%c2_100, %c0_101, %c0_102] : memref<18x18x2xf32, #tpu.memory_space<vmem>>, vector<16x16x2xf32>
    %112 = arith.maximumf %110, %111 : vector<16x16x2xf32>
    %c2_103 = arith.constant 2 : index
    %c1_104 = arith.constant 1 : index
    %c0_105 = arith.constant 0 : index
    %113 = vector.load %arg9[%c2_103, %c1_104, %c0_105] : memref<18x18x2xf32, #tpu.memory_space<vmem>>, vector<16x16x2xf32>
    %114 = arith.maximumf %112, %113 : vector<16x16x2xf32>
    %c2_106 = arith.constant 2 : index
    %c2_107 = arith.constant 2 : index
    %c0_108 = arith.constant 0 : index
    %115 = vector.load %arg9[%c2_106, %c2_107, %c0_108] : memref<18x18x2xf32, #tpu.memory_space<vmem>>, vector<16x16x2xf32>
    %116 = arith.maximumf %114, %115 : vector<16x16x2xf32>
    %117 = vector.shape_cast %116 : vector<16x16x2xf32> to vector<256x2xf32>
    %118 = arith.truncf %117 : vector<256x2xf32> to vector<256x2xbf16>
    %c2_109 = arith.constant 2 : index
    %c0_110 = arith.constant 0 : index
    %c0_111 = arith.constant 0 : index
    %119 = vector.load %arg5[%c2_109, %c0_110, %c0_111] : memref<4x2x128xbf16, #tpu.memory_space<vmem>>, vector<1x2x128xbf16>
    %120 = vector.shape_cast %119 : vector<1x2x128xbf16> to vector<2x128xbf16>
    %cst_112 = arith.constant dense<0.000000e+00> : vector<256x128xf32>
    %121 = tpu.matmul %118, %120, %cst_112 {dimension_numbers = #tpu.dot_dimension_numbers<[1], [0], [0], [1], [0, 0, 1, 1], [], []>} : vector<256x2xbf16>, vector<2x128xbf16>, vector<256x128xf32> -> vector<256x128xf32>
    %122 = arith.addf %98, %121 : vector<256x128xf32>
    %c1_113 = arith.constant 1 : index
    %c1_114 = arith.constant 1 : index
    %c0_115 = arith.constant 0 : index
    %123 = vector.load %arg9[%c1_113, %c1_114, %c0_115] : memref<18x18x2xf32, #tpu.memory_space<vmem>>, vector<16x16x2xf32>
    tpu.vector_store %arg9[%c1_113, %c1_114, %c0_115], %116 {strides = array<i32>} : memref<18x18x2xf32, #tpu.memory_space<vmem>>, vector<16x16x2xf32>,
    %c0_116 = arith.constant 0 : index
    %c0_117 = arith.constant 0 : index
    %c0_118 = arith.constant 0 : index
    %124 = vector.load %arg9[%c0_116, %c0_117, %c0_118] : memref<18x18x2xf32, #tpu.memory_space<vmem>>, vector<16x16x2xf32>
    %c0_119 = arith.constant 0 : index
    %c1_120 = arith.constant 1 : index
    %c0_121 = arith.constant 0 : index
    %125 = vector.load %arg9[%c0_119, %c1_120, %c0_121] : memref<18x18x2xf32, #tpu.memory_space<vmem>>, vector<16x16x2xf32>
    %126 = arith.maximumf %124, %125 : vector<16x16x2xf32>
    %c0_122 = arith.constant 0 : index
    %c2_123 = arith.constant 2 : index
    %c0_124 = arith.constant 0 : index
    %127 = vector.load %arg9[%c0_122, %c2_123, %c0_124] : memref<18x18x2xf32, #tpu.memory_space<vmem>>, vector<16x16x2xf32>
    %128 = arith.maximumf %126, %127 : vector<16x16x2xf32>
    %c1_125 = arith.constant 1 : index
    %c0_126 = arith.constant 0 : index
    %c0_127 = arith.constant 0 : index
    %129 = vector.load %arg9[%c1_125, %c0_126, %c0_127] : memref<18x18x2xf32, #tpu.memory_space<vmem>>, vector<16x16x2xf32>
    %130 = arith.maximumf %128, %129 : vector<16x16x2xf32>
    %c1_128 = arith.constant 1 : index
    %c1_129 = arith.constant 1 : index
    %c0_130 = arith.constant 0 : index
    %131 = vector.load %arg9[%c1_128, %c1_129, %c0_130] : memref<18x18x2xf32, #tpu.memory_space<vmem>>, vector<16x16x2xf32>
    %132 = arith.maximumf %130, %131 : vector<16x16x2xf32>
    %c1_131 = arith.constant 1 : index
    %c2_132 = arith.constant 2 : index
    %c0_133 = arith.constant 0 : index
    %133 = vector.load %arg9[%c1_131, %c2_132, %c0_133] : memref<18x18x2xf32, #tpu.memory_space<vmem>>, vector<16x16x2xf32>
    %134 = arith.maximumf %132, %133 : vector<16x16x2xf32>
    %c2_134 = arith.constant 2 : index
    %c0_135 = arith.constant 0 : index
    %c0_136 = arith.constant 0 : index
    %135 = vector.load %arg9[%c2_134, %c0_135, %c0_136] : memref<18x18x2xf32, #tpu.memory_space<vmem>>, vector<16x16x2xf32>
    %136 = arith.maximumf %134, %135 : vector<16x16x2xf32>
    %c2_137 = arith.constant 2 : index
    %c1_138 = arith.constant 1 : index
    %c0_139 = arith.constant 0 : index
    %137 = vector.load %arg9[%c2_137, %c1_138, %c0_139] : memref<18x18x2xf32, #tpu.memory_space<vmem>>, vector<16x16x2xf32>
    %138 = arith.maximumf %136, %137 : vector<16x16x2xf32>
    %c2_140 = arith.constant 2 : index
    %c2_141 = arith.constant 2 : index
    %c0_142 = arith.constant 0 : index
    %139 = vector.load %arg9[%c2_140, %c2_141, %c0_142] : memref<18x18x2xf32, #tpu.memory_space<vmem>>, vector<16x16x2xf32>
    %140 = arith.maximumf %138, %139 : vector<16x16x2xf32>
    %141 = vector.shape_cast %140 : vector<16x16x2xf32> to vector<256x2xf32>
    %142 = arith.truncf %141 : vector<256x2xf32> to vector<256x2xbf16>
    %c3_143 = arith.constant 3 : index
    %c0_144 = arith.constant 0 : index
    %c0_145 = arith.constant 0 : index
    %143 = vector.load %arg5[%c3_143, %c0_144, %c0_145] : memref<4x2x128xbf16, #tpu.memory_space<vmem>>, vector<1x2x128xbf16>
    %144 = vector.shape_cast %143 : vector<1x2x128xbf16> to vector<2x128xbf16>
    %cst_146 = arith.constant dense<0.000000e+00> : vector<256x128xf32>
    %145 = tpu.matmul %142, %144, %cst_146 {dimension_numbers = #tpu.dot_dimension_numbers<[1], [0], [0], [1], [0, 0, 1, 1], [], []>} : vector<256x2xbf16>, vector<2x128xbf16>, vector<256x128xf32> -> vector<256x128xf32>
    %146 = arith.addf %122, %145 : vector<256x128xf32>
    %c0_147 = arith.constant 0 : index
    %c0_148 = arith.constant 0 : index
    %147 = vector.load %arg6[%c0_147, %c0_148] : memref<1x128xf32, #tpu.memory_space<vmem>>, vector<1x128xf32>
    %148 = vector.broadcast %147 : vector<1x128xf32> to vector<256x128xf32>
    %149 = arith.mulf %146, %148 : vector<256x128xf32>
    %c0_149 = arith.constant 0 : index
    %c0_150 = arith.constant 0 : index
    %150 = vector.load %arg7[%c0_149, %c0_150] : memref<1x128xf32, #tpu.memory_space<vmem>>, vector<1x128xf32>
    %151 = vector.broadcast %150 : vector<1x128xf32> to vector<256x128xf32>
    %152 = arith.addf %149, %151 : vector<256x128xf32>
    %cst_151 = arith.constant 0.000000e+00 : f32
    %153 = vector.broadcast %cst_151 : f32 to vector<256x128xf32>
    %154 = arith.cmpf oge, %152, %153 : vector<256x128xf32>
    %cst_152 = arith.constant 1.000000e-01 : f32
    %155 = vector.broadcast %cst_152 : f32 to vector<256x128xf32>
    %156 = arith.mulf %155, %152 : vector<256x128xf32>
    %157 = arith.select %154, %152, %156 : vector<256x128xi1>, vector<256x128xf32>
    %c0_153 = arith.constant 0 : index
    %c0_154 = arith.constant 0 : index
    %158 = vector.load %arg8[%c0_153, %c0_154] : memref<256x128xf32, #tpu.memory_space<vmem>>, vector<256x128xf32>
    tpu.vector_store %arg8[%c0_153, %c0_154], %157 {strides = array<i32>} : memref<256x128xf32, #tpu.memory_space<vmem>>, vector<256x128xf32>,
    return
  }
  func.func @transform_0(%arg0: i32) -> (i32, i32, i32, i32) {
    %c0_i32 = arith.constant 0 : i32
    %c0_i32_0 = arith.constant 0 : i32
    %c0_i32_1 = arith.constant 0 : i32
    %c0_i32_2 = arith.constant 0 : i32
    return %arg0, %c0_i32, %c0_i32_0, %c0_i32_1 : i32, i32, i32, i32
  }
  func.func @transform_1(%arg0: i32) -> (i32, i32, i32) {
    %c0_i32 = arith.constant 0 : i32
    %c0_i32_0 = arith.constant 0 : i32
    %c0_i32_1 = arith.constant 0 : i32
    %c0_i32_2 = arith.constant 0 : i32
    return %c0_i32, %c0_i32_0, %c0_i32_1 : i32, i32, i32
  }
  func.func @transform_2(%arg0: i32) -> (i32, i32) {
    %c0_i32 = arith.constant 0 : i32
    %c0_i32_0 = arith.constant 0 : i32
    %c0_i32_1 = arith.constant 0 : i32
    return %c0_i32, %c0_i32_0 : i32, i32
  }
  func.func @transform_3(%arg0: i32) -> (i32, i32) {
    %c0_i32 = arith.constant 0 : i32
    %c0_i32_0 = arith.constant 0 : i32
    %c0_i32_1 = arith.constant 0 : i32
    return %c0_i32, %c0_i32_0 : i32, i32
  }
  func.func @transform_4(%arg0: i32) -> (i32, i32, i32) {
    %c0_i32 = arith.constant 0 : i32
    %c0_i32_0 = arith.constant 0 : i32
    %c0_i32_1 = arith.constant 0 : i32
    %c0_i32_2 = arith.constant 0 : i32
    return %c0_i32, %c0_i32_0, %c0_i32_1 : i32, i32, i32
  }
  func.func @transform_5(%arg0: i32) -> (i32, i32) {
    %c0_i32 = arith.constant 0 : i32
    %c0_i32_0 = arith.constant 0 : i32
    %c0_i32_1 = arith.constant 0 : i32
    return %c0_i32, %c0_i32_0 : i32, i32
  }
  func.func @transform_6(%arg0: i32) -> (i32, i32) {
    %c0_i32 = arith.constant 0 : i32
    %c0_i32_0 = arith.constant 0 : i32
    %c0_i32_1 = arith.constant 0 : i32
    return %c0_i32, %c0_i32_0 : i32, i32
  }
  func.func @transform_7(%arg0: i32) -> (i32, i32) {
    %c0_i32 = arith.constant 0 : i32
    %c0_i32_0 = arith.constant 0 : i32
    return %arg0, %c0_i32 : i32, i32
  }
}

</mosaic_0001>

<llo_original>
// kernel: sppf_forward.1
$region0: #{sppf_forward.1}
  #allocation0 [shape = 'u32[]', space=smem, size = 0x4, offset = 0x4, fixed_abs, tag = 'smem constant byte address 0x4 - core index']
  #allocation1 [shape = 'u32[144,128]{1,0:T(1,128)}', space=vmem, size = 0x12000, scoped, tag = 'internal scratch']
  #allocation2 [shape = 'f32[18,18,2]{2,1,0:T(8,128)}', space=vmem, size = 0x36000, scoped, tag = 'scratch operand']
  %s0 = inlined_call_operand.vmem [shape: bf16[2,18,18,4], index: 0, kind: input, shape index: {}]
  %s1 = inlined_call_operand.vmem [shape: bf16[9,4,2], index: 1, kind: input, shape index: {}]
  %s2 = inlined_call_operand.vmem [shape: f32[1,2], index: 2, kind: input, shape index: {}]
  %s3 = inlined_call_operand.vmem [shape: f32[1,2], index: 3, kind: input, shape index: {}]
  %s4 = inlined_call_operand.vmem [shape: bf16[4,2,128], index: 4, kind: input, shape index: {}]
  %s5 = inlined_call_operand.vmem [shape: f32[1,128], index: 5, kind: input, shape index: {}]
  %s6 = inlined_call_operand.vmem [shape: f32[1,128], index: 6, kind: input, shape index: {}]
  %s7 = inlined_call_operand.vmem [shape: f32[512,128], index: 7, kind: output, shape index: {}]
  %s8 = sld [smem:[#allocation0]]
  $region61: #{sppf_forward.1} parent=0
    _
  %s10 = ssub.s32 1, %s8
  %s11 = scalar_select 0, %s10, %s8
  loop: start=0, step=1, limit=4
  $region2: #{sppf_forward.1} parent=0 // loop_pre_header
    _
  $region3: #{sppf_forward.1} parent=0 // loop_header
    %s13 = sphi 0, %s17
    %p14 = scmp.ge.s32.totalorder %s13, 4
    %s23 = sphi 0, %s25
    %s26 = sphi 0, %s23
    %s27 = sphi 0, %s26
    %s43 = sphi 0, %s27
    %s47 = sphi 0, %s47
    %s49 = sphi 0, %s47
    %s50 = sphi 0, %s49
    %s64 = sphi 0, %s50
    %s68 = sphi 0, %s68
    %s70 = sphi 0, %s68
    %s71 = sphi 0, %s70
    %s85 = sphi 0, %s71
    %s89 = sphi 0, %s89
    %s91 = sphi 0, %s89
    %s92 = sphi 0, %s91
    %s106 = sphi 0, %s92
    %s110 = sphi 0, %s110
    %s112 = sphi 0, %s110
    %s113 = sphi 0, %s112
    %s127 = sphi 0, %s113
    %s131 = sphi 0, %s131
    %s133 = sphi 0, %s131
    %s134 = sphi 0, %s133
    %s148 = sphi 0, %s134
    %s152 = sphi 0, %s152
    %s154 = sphi 0, %s152
    %s155 = sphi 0, %s154
    %s169 = sphi 0, %s155
    %s175 = sphi 0, %s177
    %s178 = sphi 0, %s175
    %s179 = sphi 0, %s178
    %s195 = sphi 0, %s179
  $region4: #{sppf_forward.1} parent=0 // loop_header_branch
    %16 = sbr.rel (%p14) target = $region8
  $region5: #{sppf_forward.1} parent=0 // loop_body
    %s18 = ssub.s32 %s13, 1
    %s19 = ssub.s32 %s13, 2
    %s20 = sadd.s32 %s13, 1
    %s21 = ssub.s32 %s13, %s20
    %p22 = scmp.eq.s32.totalorder %s21, 0
    %s24 = sadd.s32 %s23, 1
    %s25 = scalar_select %p22, %s23, %s24
    %p28 = pneg %p22
    %p29 = scmp.eq.s32.totalorder %s13, 1
    %p30 = por %p28, %p29
    %p31 = scmp.ne.s32.totalorder %s23, %s26
    %p32 = scmp.eq.s32.totalorder %s13, 0
    %p33 = por %p31, %p32
    %p34 = scmp.ne.s32.totalorder %s23, %s26
    %p35 = scmp.eq.s32.totalorder %s18, 1
    %p36 = por %p34, %p35
    %p37 = scmp.ne.s32.totalorder %s26, %s27
    %p38 = scmp.eq.s32.totalorder %s18, 0
    %p39 = por %p37, %p38
    %p40 = scmp.ne.s32.totalorder %s26, %s27
    %p41 = scmp.eq.s32.totalorder %s19, 1
    %p42 = por %p40, %p41
    %p44 = scmp.ne.s32.totalorder %s27, %s43
    %p45 = scmp.eq.s32.totalorder %s19, 0
    %p46 = por %p44, %p45
    %s48 = sadd.s32 %s47, 1
    %p51 = scmp.eq.s32.totalorder %s13, 1
    %p52 = scmp.ne.s32.totalorder %s47, %s49
    %p53 = scmp.eq.s32.totalorder %s13, 0
    %p54 = por %p52, %p53
    %p55 = scmp.ne.s32.totalorder %s47, %s49
    %p56 = scmp.eq.s32.totalorder %s18, 1
    %p57 = por %p55, %p56
    %p58 = scmp.ne.s32.totalorder %s49, %s50
    %p59 = scmp.eq.s32.totalorder %s18, 0
    %p60 = por %p58, %p59
    %p61 = scmp.ne.s32.totalorder %s49, %s50
    %p62 = scmp.eq.s32.totalorder %s19, 1
    %p63 = por %p61, %p62
    %p65 = scmp.ne.s32.totalorder %s50, %s64
    %p66 = scmp.eq.s32.totalorder %s19, 0
    %p67 = por %p65, %p66
    %s69 = sadd.s32 %s68, 1
    %p72 = scmp.eq.s32.totalorder %s13, 1
    %p73 = scmp.ne.s32.totalorder %s68, %s70
    %p74 = scmp.eq.s32.totalorder %s13, 0
    %p75 = por %p73, %p74
    %p76 = scmp.ne.s32.totalorder %s68, %s70
    %p77 = scmp.eq.s32.totalorder %s18, 1
    %p78 = por %p76, %p77
    %p79 = scmp.ne.s32.totalorder %s70, %s71
    %p80 = scmp.eq.s32.totalorder %s18, 0
    %p81 = por %p79, %p80
    %p82 = scmp.ne.s32.totalorder %s70, %s71
    %p83 = scmp.eq.s32.totalorder %s19, 1
    %p84 = por %p82, %p83
    %p86 = scmp.ne.s32.totalorder %s71, %s85
    %p87 = scmp.eq.s32.totalorder %s19, 0
    %p88 = por %p86, %p87
    %s90 = sadd.s32 %s89, 1
    %p93 = scmp.eq.s32.totalorder %s13, 1
    %p94 = scmp.ne.s32.totalorder %s89, %s91
    %p95 = scmp.eq.s32.totalorder %s13, 0
    %p96 = por %p94, %p95
    %p97 = scmp.ne.s32.totalorder %s89, %s91
    %p98 = scmp.eq.s32.totalorder %s18, 1
    %p99 = por %p97, %p98
    %p100 = scmp.ne.s32.totalorder %s91, %s92
    %p101 = scmp.eq.s32.totalorder %s18, 0
    %p102 = por %p100, %p101
    %p103 = scmp.ne.s32.totalorder %s91, %s92
    %p104 = scmp.eq.s32.totalorder %s19, 1
    %p105 = por %p103, %p104
    %p107 = scmp.ne.s32.totalorder %s92, %s106
    %p108 = scmp.eq.s32.totalorder %s19, 0
    %p109 = por %p107, %p108
    %s111 = sadd.s32 %s110, 1
    %p114 = scmp.eq.s32.totalorder %s13, 1
    %p115 = scmp.ne.s32.totalorder %s110, %s112
    %p116 = scmp.eq.s32.totalorder %s13, 0
    %p117 = por %p115, %p116
    %p118 = scmp.ne.s32.totalorder %s110, %s112
    %p119 = scmp.eq.s32.totalorder %s18, 1
    %p120 = por %p118, %p119
    %p121 = scmp.ne.s32.totalorder %s112, %s113
    %p122 = scmp.eq.s32.totalorder %s18, 0
    %p123 = por %p121, %p122
    %p124 = scmp.ne.s32.totalorder %s112, %s113
    %p125 = scmp.eq.s32.totalorder %s19, 1
    %p126 = por %p124, %p125
    %p128 = scmp.ne.s32.totalorder %s113, %s127
    %p129 = scmp.eq.s32.totalorder %s19, 0
    %p130 = por %p128, %p129
    %s132 = sadd.s32 %s131, 1
    %p135 = scmp.eq.s32.totalorder %s13, 1
    %p136 = scmp.ne.s32.totalorder %s131, %s133
    %p137 = scmp.eq.s32.totalorder %s13, 0
    %p138 = por %p136, %p137
    %p139 = scmp.ne.s32.totalorder %s131, %s133
    %p140 = scmp.eq.s32.totalorder %s18, 1
    %p141 = por %p139, %p140
    %p142 = scmp.ne.s32.totalorder %s133, %s134
    %p143 = scmp.eq.s32.totalorder %s18, 0
    %p144 = por %p142, %p143
    %p145 = scmp.ne.s32.totalorder %s133, %s134
    %p146 = scmp.eq.s32.totalorder %s19, 1
    %p147 = por %p145, %p146
    %p149 = scmp.ne.s32.totalorder %s134, %s148
    %p150 = scmp.eq.s32.totalorder %s19, 0
    %p151 = por %p149, %p150
    %s153 = sadd.s32 %s152, 1
    %p156 = scmp.eq.s32.totalorder %s13, 1
    %p157 = scmp.ne.s32.totalorder %s152, %s154
    %p158 = scmp.eq.s32.totalorder %s13, 0
    %p159 = por %p157, %p158
    %p160 = scmp.ne.s32.totalorder %s152, %s154
    %p161 = scmp.eq.s32.totalorder %s18, 1
    %p162 = por %p160, %p161
    %p163 = scmp.ne.s32.totalorder %s154, %s155
    %p164 = scmp.eq.s32.totalorder %s18, 0
    %p165 = por %p163, %p164
    %p166 = scmp.ne.s32.totalorder %s154, %s155
    %p167 = scmp.eq.s32.totalorder %s19, 1
    %p168 = por %p166, %p167
    %p170 = scmp.ne.s32.totalorder %s155, %s169
    %p171 = scmp.eq.s32.totalorder %s19, 0
    %p172 = por %p170, %p171
    %s173 = ssub.s32 %s13, %s20
    %p174 = scmp.eq.s32.totalorder %s173, 0
    %s176 = sadd.s32 %s175, 1
    %s177 = scalar_select %p174, %s175, %s176
    %p180 = pneg %p174
    %p181 = scmp.eq.s32.totalorder %s13, 1
    %p182 = por %p180, %p181
    %p183 = scmp.ne.s32.totalorder %s175, %s178
    %p184 = scmp.eq.s32.totalorder %s13, 0
    %p185 = por %p183, %p184
    %p186 = scmp.ne.s32.totalorder %s175, %s178
    %p187 = scmp.eq.s32.totalorder %s18, 1
    %p188 = por %p186, %p187
    %p189 = scmp.ne.s32.totalorder %s178, %s179
    %p190 = scmp.eq.s32.totalorder %s18, 0
    %p191 = por %p189, %p190
    %p192 = scmp.ne.s32.totalorder %s178, %s179
    %p193 = scmp.eq.s32.totalorder %s19, 1
    %p194 = por %p192, %p193
    %p196 = scmp.ne.s32.totalorder %s179, %s195
    %p197 = scmp.eq.s32.totalorder %s19, 0
    %p198 = por %p196, %p197
    %p199 = scmp.le.s32.totalorder 1, %s13
    %p200 = scmp.lt.s32.totalorder %s13, 3
    %p201 = pnand %p199, %p200
    %p202 = pneg %p201
    // Predicated region
    $region9: #{sppf_forward.1} parent=5 // pred_check
      _
    $region10: #{sppf_forward.1} parent=5 // pred_check_branch
      %204 = sbr.rel (%p201) target = $region12
    $region11: #{sppf_forward.1} parent=5 // pred_region
      %s205 = ssub.s32 %s13, 1
      // Predicated region
      $region13: #{sppf_forward.1} parent=11 // pred_check
        %p206 = pneg %p60
      $region14: #{sppf_forward.1} parent=11 // pred_check_branch
        %208 = sbr.rel (%p206) target = $region16
      $region15: #{sppf_forward.1} parent=11 // pred_region
        _
      $region16: #{sppf_forward.1} parent=11 // pred_fallthru
        _
      // Predicated region
      $region17: #{sppf_forward.1} parent=11 // pred_check
        %p209 = pneg %p81
      $region18: #{sppf_forward.1} parent=11 // pred_check_branch
        %211 = sbr.rel (%p209) target = $region20
      $region19: #{sppf_forward.1} parent=11 // pred_region
        _
      $region20: #{sppf_forward.1} parent=11 // pred_fallthru
        _
      // Predicated region
      $region21: #{sppf_forward.1} parent=11 // pred_check
        %p212 = pneg %p102
      $region22: #{sppf_forward.1} parent=11 // pred_check_branch
        %214 = sbr.rel (%p212) target = $region24
      $region23: #{sppf_forward.1} parent=11 // pred_region
        _
      $region24: #{sppf_forward.1} parent=11 // pred_fallthru
        _
      // Predicated region
      $region25: #{sppf_forward.1} parent=11 // pred_check
        %p215 = pneg %p123
      $region26: #{sppf_forward.1} parent=11 // pred_check_branch
        %217 = sbr.rel (%p215) target = $region28
      $region27: #{sppf_forward.1} parent=11 // pred_region
        _
      $region28: #{sppf_forward.1} parent=11 // pred_fallthru
        _
      // Predicated region
      $region29: #{sppf_forward.1} parent=11 // pred_check
        %p218 = pneg %p144
      $region30: #{sppf_forward.1} parent=11 // pred_check_branch
        %220 = sbr.rel (%p218) target = $region32
      $region31: #{sppf_forward.1} parent=11 // pred_region
        _
      $region32: #{sppf_forward.1} parent=11 // pred_fallthru
        _
      // Predicated region
      $region33: #{sppf_forward.1} parent=11 // pred_check
        %p221 = pneg %p165
      $region34: #{sppf_forward.1} parent=11 // pred_check_branch
        %223 = sbr.rel (%p221) target = $region36
      $region35: #{sppf_forward.1} parent=11 // pred_region
        _
      $region36: #{sppf_forward.1} parent=11 // pred_fallthru
        _
    $region12: #{sppf_forward.1} parent=5 // pred_fallthru
      _
    %p224 = scmp.lt.s32.totalorder %s13, 2
    // Predicated region
    $region37: #{sppf_forward.1} parent=5 // pred_check
      %p225 = pneg %p224
    $region38: #{sppf_forward.1} parent=5 // pred_check_branch
      %227 = sbr.rel (%p225) target = $region40
    $region39: #{sppf_forward.1} parent=5 // pred_region
      // Predicated region
      $region41: #{sppf_forward.1} parent=39 // pred_check
        %p228 = pneg %p33
      $region42: #{sppf_forward.1} parent=39 // pred_check_branch
        %230 = sbr.rel (%p228) target = $region44
      $region43: #{sppf_forward.1} parent=39 // pred_region
        %p231 = scmp.lt.s32.totalorder %s13, 1
        %s232 = scalar_select %p231, %s13, 1
        %s233 = smul.addr %s232, 54
        %s234 = smul.addr %s233, 4
        %s235 = scalar_lea.vmem %s0, %s234
      $region44: #{sppf_forward.1} parent=39 // pred_fallthru
        _
    $region40: #{sppf_forward.1} parent=5 // pred_fallthru
      _
    %p236 = scmp.le.s32.totalorder 1, %s13
    %p237 = scmp.lt.s32.totalorder %s13, 3
    %p238 = pnand %p236, %p237
    %p239 = pneg %p238
    // Predicated region
    $region45: #{sppf_forward.1} parent=5 // pred_check
      _
    $region46: #{sppf_forward.1} parent=5 // pred_check_branch
      %241 = sbr.rel (%p238) target = $region48
    $region47: #{sppf_forward.1} parent=5 // pred_region
      %s242 = ssub.s32 %s13, 1
      %p243 = scmp.lt.s32.totalorder %s18, 1
      %s244 = scalar_select %p243, %s18, 1
      %s245 = smul.addr %s244, 54
      %s246 = smul.addr %s245, 4
      %s247 = scalar_lea.vmem %s0, %s246
      %p248 = pneg %p39
      %p249 = pneg %p36
      %p250 = pneg %p60
      %p251 = pneg %p57
      %p252 = pneg %p81
      %p253 = pneg %p78
      %p254 = pneg %p102
      %p255 = pneg %p99
      %p256 = pneg %p123
      %p257 = pneg %p120
      %p258 = pneg %p144
      %p259 = pneg %p141
      %p260 = pneg %p165
      %p261 = pneg %p162
      %p262 = pneg %p191
      %p263 = pneg %p188
      %s264 = smul.u32 32, %s18
      %p265 = scmp.lt.s32.totalorder %s264, 63
      %s266 = scalar_select %p265, %s264, 63
      %s267 = smul.addr %s266, 8
      %s268 = scalar_lea.vmem %s7, %s267
      %p269 = scmp.lt.s32.totalorder %s18, 1
      %s270 = scalar_select %p269, %s18, 1
      %s271 = smul.addr %s270, 54
      %s272 = smul.addr %s271, 4
      %s273 = scalar_lea.vmem %s0, %s272
      %s274 = smul.u32 32, %s18
      %p275 = scmp.lt.s32.totalorder %s274, 63
      %s276 = scalar_select %p275, %s274, 63
      %s277 = smul.addr %s276, 8
      %s278 = scalar_lea.vmem %s7, %s277
      %s279 = smul.u32 32, %s18
      %v281 = vld [vmem:[%s273] sm:$0xf]
      %v282 = vld [vmem:[%s273 + $0x4] sm:$0xf]
      %v283 = vld [vmem:[%s273 + $0x8] sm:$0x1]
      %v284 = vld [vmem:[%s273 + $0xc] sm:$0xf]
      %v285 = vld [vmem:[%s273 + $0x10] sm:$0xf]
      %v286 = vld [vmem:[%s273 + $0x14] sm:$0x1]
      %v287 = vld [vmem:[%s273 + $0x18] sm:$0xf]
      %v288 = vld [vmem:[%s273 + $0x1c] sm:$0xf]
      %v289 = vld [vmem:[%s273 + $0x20] sm:$0x1]
      %v290 = vld [vmem:[%s273 + $0x24] sm:$0xf]
      %v291 = vld [vmem:[%s273 + $0x28] sm:$0xf]
      %v292 = vld [vmem:[%s273 + $0x2c] sm:$0x1]
      %v293 = vld [vmem:[%s273 + $0x30] sm:$0xf]
      %v294 = vld [vmem:[%s273 + $0x34] sm:$0xf]
      %v295 = vld [vmem:[%s273 + $0x38] sm:$0x1]
      %v296 = vld [vmem:[%s273 + $0x3c] sm:$0xf]
      %v297 = vld [vmem:[%s273 + $0x40] sm:$0xf]
      %v298 = vld [vmem:[%s273 + $0x44] sm:$0x1]
      %v299 = vld [vmem:[%s273 + $0x48] sm:$0xf]
      %v300 = vld [vmem:[%s273 + $0x4c] sm:$0xf]
      %v301 = vld [vmem:[%s273 + $0x50] sm:$0x1]
      %v302 = vld [vmem:[%s273 + $0x54] sm:$0xf]
      %v303 = vld [vmem:[%s273 + $0x58] sm:$0xf]
      %v304 = vld [vmem:[%s273 + $0x5c] sm:$0x1]
      %v305 = vld [vmem:[%s273 + $0x60] sm:$0xf]
      %v306 = vld [vmem:[%s273 + $0x64] sm:$0xf]
      %v307 = vld [vmem:[%s273 + $0x68] sm:$0x1]
      %v308 = vld [vmem:[%s273 + $0x6c] sm:$0xf]
      %v309 = vld [vmem:[%s273 + $0x70] sm:$0xf]
      %v310 = vld [vmem:[%s273 + $0x74] sm:$0x1]
      %v311 = vld [vmem:[%s273 + $0x78] sm:$0xf]
      %v312 = vld [vmem:[%s273 + $0x7c] sm:$0xf]
      %v313 = vld [vmem:[%s273 + $0x80] sm:$0x1]
      %v314 = vld [vmem:[%s273 + $0x84] sm:$0xf]
      %v315 = vld [vmem:[%s273 + $0x88] sm:$0xf]
      %v316 = vld [vmem:[%s273 + $0x8c] sm:$0x1]
      %v317 = vld [vmem:[%s273 + $0x90] sm:$0xf]
      %v318 = vld [vmem:[%s273 + $0x94] sm:$0xf]
      %v319 = vld [vmem:[%s273 + $0x98] sm:$0x1]
      %v320 = vld [vmem:[%s273 + $0x9c] sm:$0xf]
      %v321 = vld [vmem:[%s273 + $0xa0] sm:$0xf]
      %v322 = vld [vmem:[%s273 + $0xa4] sm:$0x1]
      %v323 = vld [vmem:[%s273 + $0xa8] sm:$0xf]
      %v324 = vld [vmem:[%s273 + $0xac] sm:$0xf]
      %v325 = vld [vmem:[%s273 + $0xb0] sm:$0x1]
      %v326 = vld [vmem:[%s273 + $0xb4] sm:$0xf]
      %v327 = vld [vmem:[%s273 + $0xb8] sm:$0xf]
      %v328 = vld [vmem:[%s273 + $0xbc] sm:$0x1]
      %v329 = vld [vmem:[%s273 + $0xc0] sm:$0xf]
      %v330 = vld [vmem:[%s273 + $0xc4] sm:$0xf]
      %v331 = vld [vmem:[%s273 + $0xc8] sm:$0x1]
      %v332 = vld [vmem:[%s273 + $0xcc] sm:$0xf]
      %v333 = vld [vmem:[%s273 + $0xd0] sm:$0xf]
      %v334 = vld [vmem:[%s273 + $0xd4] sm:$0x1]
      %v335 = vld [vmem:[%s1] sm:$0x3]
      %vm336 = vsmask.f32 3328
      %vm337 = vsmask.f32 7440
      %vm338 = vmor %vm336, %vm337
      %v340 = vshrl.u32 %v281, 16
      %v342 = vrot.slane %v340, 4
      %v343 = vshll.u32 %v281, 16
      %v345 = vrot.slane %v343, 5
      %v346 = vor.u32 %v342, %v345
      %v347 = vrot.slane %v346, 4
      %v349 = vshll.u32 %v282, 16
      %v351 = vrot.slane %v349, 5
      %v352 = vsel %vm338, %v347, %v351
      %v353 = vshrl.u32 %v282, 16
      %v355 = vrot.slane %v353, 4
      %v356 = vor.u32 %v355, %v351
      %v357 = vrot.slane %v356, 4
      %v359 = vshll.u32 %v283, 16
      %v361 = vrot.slane %v359, 5
      %v362 = vsel %vm338, %v357, %v361
      %v364 = vshrl.u32 %v284, 16
      %v366 = vrot.slane %v364, 4
      %v367 = vshll.u32 %v284, 16
      %v369 = vrot.slane %v367, 5
      %v370 = vor.u32 %v366, %v369
      %v371 = vrot.slane %v370, 4
      %v373 = vshll.u32 %v285, 16
      %v375 = vrot.slane %v373, 5
      %v376 = vsel %vm338, %v371, %v375
      %v377 = vshrl.u32 %v285, 16
      %v379 = vrot.slane %v377, 4
      %v380 = vor.u32 %v379, %v375
      %v381 = vrot.slane %v380, 4
      %v383 = vshll.u32 %v286, 16
      %v385 = vrot.slane %v383, 5
      %v386 = vsel %vm338, %v381, %v385
      %v388 = vshrl.u32 %v287, 16
      %v390 = vrot.slane %v388, 4
      %v391 = vshll.u32 %v287, 16
      %v393 = vrot.slane %v391, 5
      %v394 = vor.u32 %v390, %v393
      %v395 = vrot.slane %v394, 4
      %v397 = vshll.u32 %v288, 16
      %v399 = vrot.slane %v397, 5
      %v400 = vsel %vm338, %v395, %v399
      %v401 = vshrl.u32 %v288, 16
      %v403 = vrot.slane %v401, 4
      %v404 = vor.u32 %v403, %v399
      %v405 = vrot.slane %v404, 4
      %v407 = vshll.u32 %v289, 16
      %v409 = vrot.slane %v407, 5
      %v410 = vsel %vm338, %v405, %v409
      %v412 = vshrl.u32 %v290, 16
      %v414 = vrot.slane %v412, 4
      %v415 = vshll.u32 %v290, 16
      %v417 = vrot.slane %v415, 5
      %v418 = vor.u32 %v414, %v417
      %v419 = vrot.slane %v418, 4
      %v421 = vshll.u32 %v291, 16
      %v423 = vrot.slane %v421, 5
      %v424 = vsel %vm338, %v419, %v423
      %v425 = vshrl.u32 %v291, 16
      %v427 = vrot.slane %v425, 4
      %v428 = vor.u32 %v427, %v423
      %v429 = vrot.slane %v428, 4
      %v431 = vshll.u32 %v292, 16
      %v433 = vrot.slane %v431, 5
      %v434 = vsel %vm338, %v429, %v433
      %v436 = vshrl.u32 %v293, 16
      %v438 = vrot.slane %v436, 4
      %v439 = vshll.u32 %v293, 16
      %v441 = vrot.slane %v439, 5
      %v442 = vor.u32 %v438, %v441
      %v443 = vrot.slane %v442, 4
      %v445 = vshll.u32 %v294, 16
      %v447 = vrot.slane %v445, 5
      %v448 = vsel %vm338, %v443, %v447
      %v449 = vshrl.u32 %v294, 16
      %v451 = vrot.slane %v449, 4
      %v452 = vor.u32 %v451, %v447
      %v453 = vrot.slane %v452, 4
      %v455 = vshll.u32 %v295, 16
      %v457 = vrot.slane %v455, 5
      %v458 = vsel %vm338, %v453, %v457
      %v460 = vshrl.u32 %v296, 16
      %v462 = vrot.slane %v460, 4
      %v463 = vshll.u32 %v296, 16
      %v465 = vrot.slane %v463, 5
      %v466 = vor.u32 %v462, %v465
      %v467 = vrot.slane %v466, 4
      %v469 = vshll.u32 %v297, 16
      %v471 = vrot.slane %v469, 5
      %v472 = vsel %vm338, %v467, %v471
      %v473 = vshrl.u32 %v297, 16
      %v475 = vrot.slane %v473, 4
      %v476 = vor.u32 %v475, %v471
      %v477 = vrot.slane %v476, 4
      %v479 = vshll.u32 %v298, 16
      %v481 = vrot.slane %v479, 5
      %v482 = vsel %vm338, %v477, %v481
      %v484 = vshrl.u32 %v299, 16
      %v486 = vrot.slane %v484, 4
      %v487 = vshll.u32 %v299, 16
      %v489 = vrot.slane %v487, 5
      %v490 = vor.u32 %v486, %v489
      %v491 = vrot.slane %v490, 4
      %v493 = vshll.u32 %v300, 16
      %v495 = vrot.slane %v493, 5
      %v496 = vsel %vm338, %v491, %v495
      %v497 = vshrl.u32 %v300, 16
      %v499 = vrot.slane %v497, 4
      %v500 = vor.u32 %v499, %v495
      %v501 = vrot.slane %v500, 4
      %v503 = vshll.u32 %v301, 16
      %v505 = vrot.slane %v503, 5
      %v506 = vsel %vm338, %v501, %v505
      %v508 = vshrl.u32 %v302, 16
      %v510 = vrot.slane %v508, 4
      %v511 = vshll.u32 %v302, 16
      %v513 = vrot.slane %v511, 5
      %v514 = vor.u32 %v510, %v513
      %v515 = vrot.slane %v514, 4
      %v517 = vshll.u32 %v303, 16
      %v519 = vrot.slane %v517, 5
      %v520 = vsel %vm338, %v515, %v519
      %v521 = vshrl.u32 %v303, 16
      %v523 = vrot.slane %v521, 4
      %v524 = vor.u32 %v523, %v519
      %v525 = vrot.slane %v524, 4
      %v527 = vshll.u32 %v304, 16
      %v529 = vrot.slane %v527, 5
      %v530 = vsel %vm338, %v525, %v529
      %v532 = vshrl.u32 %v305, 16
      %v534 = vrot.slane %v532, 4
      %v535 = vshll.u32 %v305, 16
      %v537 = vrot.slane %v535, 5
      %v538 = vor.u32 %v534, %v537
      %v539 = vrot.slane %v538, 4
      %v541 = vshll.u32 %v306, 16
      %v543 = vrot.slane %v541, 5
      %v544 = vsel %vm338, %v539, %v543
      %v545 = vshrl.u32 %v306, 16
      %v547 = vrot.slane %v545, 4
      %v548 = vor.u32 %v547, %v543
      %v549 = vrot.slane %v548, 4
      %v551 = vshll.u32 %v307, 16
      %v553 = vrot.slane %v551, 5
      %v554 = vsel %vm338, %v549, %v553
      %v556 = vshrl.u32 %v308, 16
      %v558 = vrot.slane %v556, 4
      %v559 = vshll.u32 %v308, 16
      %v561 = vrot.slane %v559, 5
      %v562 = vor.u32 %v558, %v561
      %v563 = vrot.slane %v562, 4
      %v565 = vshll.u32 %v309, 16
      %v567 = vrot.slane %v565, 5
      %v568 = vsel %vm338, %v563, %v567
      %v569 = vshrl.u32 %v309, 16
      %v571 = vrot.slane %v569, 4
      %v572 = vor.u32 %v571, %v567
      %v573 = vrot.slane %v572, 4
      %v575 = vshll.u32 %v310, 16
      %v577 = vrot.slane %v575, 5
      %v578 = vsel %vm338, %v573, %v577
      %v580 = vshrl.u32 %v311, 16
      %v582 = vrot.slane %v580, 4
      %v583 = vshll.u32 %v311, 16
      %v585 = vrot.slane %v583, 5
      %v586 = vor.u32 %v582, %v585
      %v587 = vrot.slane %v586, 4
      %v589 = vshll.u32 %v312, 16
      %v591 = vrot.slane %v589, 5
      %v592 = vsel %vm338, %v587, %v591
      %v593 = vshrl.u32 %v312, 16
      %v595 = vrot.slane %v593, 4
      %v596 = vor.u32 %v595, %v591
      %v597 = vrot.slane %v596, 4
      %v599 = vshll.u32 %v313, 16
      %v601 = vrot.slane %v599, 5
      %v602 = vsel %vm338, %v597, %v601
      %v604 = vshrl.u32 %v314, 16
      %v606 = vrot.slane %v604, 4
      %v607 = vshll.u32 %v314, 16
      %v609 = vrot.slane %v607, 5
      %v610 = vor.u32 %v606, %v609
      %v611 = vrot.slane %v610, 4
      %v613 = vshll.u32 %v315, 16
      %v615 = vrot.slane %v613, 5
      %v616 = vsel %vm338, %v611, %v615
      %v617 = vshrl.u32 %v315, 16
      %v619 = vrot.slane %v617, 4
      %v620 = vor.u32 %v619, %v615
      %v621 = vrot.slane %v620, 4
      %v623 = vshll.u32 %v316, 16
      %v625 = vrot.slane %v623, 5
      %v626 = vsel %vm338, %v621, %v625
      %v628 = vshrl.u32 %v317, 16
      %v630 = vrot.slane %v628, 4
      %v631 = vshll.u32 %v317, 16
      %v633 = vrot.slane %v631, 5
      %v634 = vor.u32 %v630, %v633
      %v635 = vrot.slane %v634, 4
      %v637 = vshll.u32 %v318, 16
      %v639 = vrot.slane %v637, 5
      %v640 = vsel %vm338, %v635, %v639
      %v641 = vshrl.u32 %v318, 16
      %v643 = vrot.slane %v641, 4
      %v644 = vor.u32 %v643, %v639
      %v645 = vrot.slane %v644, 4
      %v647 = vshll.u32 %v319, 16
      %v649 = vrot.slane %v647, 5
      %v650 = vsel %vm338, %v645, %v649
      %v652 = vshrl.u32 %v320, 16
      %v654 = vrot.slane %v652, 4
      %v655 = vshll.u32 %v320, 16
      %v657 = vrot.slane %v655, 5
      %v658 = vor.u32 %v654, %v657
      %v659 = vrot.slane %v658, 4
      %v661 = vshll.u32 %v321, 16
      %v663 = vrot.slane %v661, 5
      %v664 = vsel %vm338, %v659, %v663
      %v665 = vshrl.u32 %v321, 16
      %v667 = vrot.slane %v665, 4
      %v668 = vor.u32 %v667, %v663
      %v669 = vrot.slane %v668, 4
      %v671 = vshll.u32 %v322, 16
      %v673 = vrot.slane %v671, 5
      %v674 = vsel %vm338, %v669, %v673
      %v676 = vshrl.u32 %v323, 16
      %v678 = vrot.slane %v676, 4
      %v679 = vshll.u32 %v323, 16
      %v681 = vrot.slane %v679, 5
      %v682 = vor.u32 %v678, %v681
      %v683 = vrot.slane %v682, 4
      %v685 = vshll.u32 %v324, 16
      %v687 = vrot.slane %v685, 5
      %v688 = vsel %vm338, %v683, %v687
      %v689 = vshrl.u32 %v324, 16
      %v691 = vrot.slane %v689, 4
      %v692 = vor.u32 %v691, %v687
      %v693 = vrot.slane %v692, 4
      %v695 = vshll.u32 %v325, 16
      %v697 = vrot.slane %v695, 5
      %v698 = vsel %vm338, %v693, %v697
      %v700 = vshrl.u32 %v326, 16
      %v702 = vrot.slane %v700, 4
      %v703 = vshll.u32 %v326, 16
      %v705 = vrot.slane %v703, 5
      %v706 = vor.u32 %v702, %v705
      %v707 = vrot.slane %v706, 4
      %v709 = vshll.u32 %v327, 16
      %v711 = vrot.slane %v709, 5
      %v712 = vsel %vm338, %v707, %v711
      %v713 = vshrl.u32 %v327, 16
      %v715 = vrot.slane %v713, 4
      %v716 = vor.u32 %v715, %v711
      %v717 = vrot.slane %v716, 4
      %v719 = vshll.u32 %v328, 16
      %v721 = vrot.slane %v719, 5
      %v722 = vsel %vm338, %v717, %v721
      %s723 = scalar_lea.vmem %s1, 2
      %v724 = vld [vmem:[%s723] sm:$0x3]
      %v725 = vunpack.c.l.b16 %v352
      %v726 = vunpack.c.l.b16 %v362
      %v727 = vunpack.c.l.b16 %v376
      %v728 = vunpack.c.l.b16 %v386
      %v729 = vunpack.c.l.b16 %v400
      %v730 = vunpack.c.l.b16 %v410
      %v731 = vunpack.c.l.b16 %v424
      %v732 = vunpack.c.l.b16 %v434
      %v733 = vunpack.c.l.b16 %v448
      %v734 = vunpack.c.l.b16 %v458
      %v735 = vunpack.c.l.b16 %v472
      %v736 = vunpack.c.l.b16 %v482
      %v737 = vunpack.c.l.b16 %v496
      %v738 = vunpack.c.l.b16 %v506
      %v739 = vunpack.c.l.b16 %v520
      %v740 = vunpack.c.l.b16 %v530
      %v741 = vunpack.c.l.b16 %v544
      %v742 = vunpack.c.l.b16 %v554
      %v743 = vunpack.c.l.b16 %v568
      %v744 = vunpack.c.l.b16 %v578
      %v745 = vunpack.c.l.b16 %v592
      %v746 = vunpack.c.l.b16 %v602
      %v747 = vunpack.c.l.b16 %v616
      %v748 = vunpack.c.l.b16 %v626
      %v749 = vunpack.c.l.b16 %v640
      %v750 = vunpack.c.l.b16 %v650
      %v751 = vunpack.c.l.b16 %v664
      %v752 = vunpack.c.l.b16 %v674
      %v753 = vunpack.c.l.b16 %v688
      %v754 = vunpack.c.l.b16 %v698
      %v755 = vunpack.c.l.b16 %v712
      %v756 = vunpack.c.l.b16 %v722
      %v757 = vpack.c.b16 %v726, %v725
      %v758 = vpack.c.b16 %v728, %v727
      %v759 = vpack.c.b16 %v730, %v729
      %v760 = vpack.c.b16 %v732, %v731
      %v761 = vpack.c.b16 %v734, %v733
      %v762 = vpack.c.b16 %v736, %v735
      %v763 = vpack.c.b16 %v738, %v737
      %v764 = vpack.c.b16 %v740, %v739
      %v765 = vpack.c.b16 %v742, %v741
      %v766 = vpack.c.b16 %v744, %v743
      %v767 = vpack.c.b16 %v746, %v745
      %v768 = vpack.c.b16 %v748, %v747
      %v769 = vpack.c.b16 %v750, %v749
      %v770 = vpack.c.b16 %v752, %v751
      %v771 = vpack.c.b16 %v754, %v753
      %v772 = vpack.c.b16 %v756, %v755
      %vm773 = vcmask 31744
      %v775 = vsel %vm773, %v757, 0
      %v778 = vsel %vm773, %v758, 0
      %v781 = vsel %vm773, %v759, 0
      %v784 = vsel %vm773, %v760, 0
      %v787 = vsel %vm773, %v761, 0
      %v790 = vsel %vm773, %v762, 0
      %v793 = vsel %vm773, %v763, 0
      %v796 = vsel %vm773, %v764, 0
      %v799 = vsel %vm773, %v765, 0
      %v802 = vsel %vm773, %v766, 0
      %v805 = vsel %vm773, %v767, 0
      %v808 = vsel %vm773, %v768, 0
      %v811 = vsel %vm773, %v769, 0
      %v814 = vsel %vm773, %v770, 0
      %v817 = vsel %vm773, %v771, 0
      %v820 = vsel %vm773, %v772, 0
      %vm822 = vcmask 1041408
      %v824 = vsel %vm822, %v724, 0
      %826 = vmatprep.subr.bf16.mxu0 0
      %827 = vmatpush1.bf16.msra.mxu0 0
      %828 = vmatprep.subr.bf16.mxu0 0
      %829 = vmatpush1.bf16.msra.mxu0 0
      %830 = vmatprep.subr.bf16.mxu0 0
      %831 = vmatpush1.bf16.msra.mxu0 0
      %832 = vmatprep.subr.bf16.mxu0 0
      %833 = vmatpush1.bf16.msra.mxu0 0
      %834 = vmatprep.subr.bf16.mxu0 0
      %835 = vmatpush1.bf16.msra.mxu0 0
      %836 = vmatprep.subr.bf16.mxu0 0
      %837 = vmatpush1.bf16.msra.mxu0 0
      %838 = vmatprep.subr.bf16.mxu0 0
      %839 = vmatpush1.bf16.msra.mxu0 0
      %840 = vmatprep.subr.bf16.mxu0 0
      %841 = vmatpush1.bf16.msra.mxu0 %v824
      %842 = vmatprep.subr.bf16.mxu0 0
      %843 = vmatpush2.bf16.msra.mxu0 0
      %844 = vmatprep.subr.bf16.mxu0 0
      %845 = vmatpush2.bf16.msra.mxu0 0
      %846 = vmatprep.subr.bf16.mxu0 0
      %847 = vmatpush2.bf16.msra.mxu0 0
      %848 = vmatprep.subr.bf16.mxu0 0
      %849 = vmatpush2.bf16.msra.mxu0 0
      %850 = vmatprep.subr.bf16.mxu0 0
      %851 = vmatpush2.bf16.msra.mxu0 0
      %852 = vmatprep.subr.bf16.mxu0 0
      %853 = vmatpush2.bf16.msra.mxu0 0
      %854 = vmatprep.subr.bf16.mxu0 0
      %855 = vmatpush2.bf16.msra.mxu0 0
      %856 = vmatprep.subr.bf16.mxu0 0
      %857 = vmatpush2.bf16.msra.mxu0 0
      %858 = vmatprep.mubr.bf16.mxu0 0
      %859 = vmatmul.mubr.bf16.gmra.mxu0 %v775
      %v860 = vpop.f32.mrf.mxu0
      %v861 = vadd.f32 0.0, %v860
      %v862 = vpop.f32.mrf.mxu0
      %v863 = vpop.f32.mrf.mxu0
      %v864 = vadd.f32 0.0, %v863
      %v865 = vpop.f32.mrf.mxu0
      %866 = vmatprep.mubr.bf16.mxu0 0
      %867 = vmatmul.mubr.bf16.gmra.mxu0 %v778
      %v868 = vpop.f32.mrf.mxu0
      %v869 = vadd.f32 0.0, %v868
      %v870 = vpop.f32.mrf.mxu0
      %v871 = vpop.f32.mrf.mxu0
      %v872 = vadd.f32 0.0, %v871
      %v873 = vpop.f32.mrf.mxu0
      %874 = vmatprep.mubr.bf16.mxu0 0
      %875 = vmatmul.mubr.bf16.gmra.mxu0 %v781
      %v876 = vpop.f32.mrf.mxu0
      %v877 = vadd.f32 0.0, %v876
      %v878 = vpop.f32.mrf.mxu0
      %v879 = vpop.f32.mrf.mxu0
      %v880 = vadd.f32 0.0, %v879
      %v881 = vpop.f32.mrf.mxu0
      %882 = vmatprep.mubr.bf16.mxu0 0
      %883 = vmatmul.mubr.bf16.gmra.mxu0 %v784
      %v884 = vpop.f32.mrf.mxu0
      %v885 = vadd.f32 0.0, %v884
      %v886 = vpop.f32.mrf.mxu0
      %v887 = vpop.f32.mrf.mxu0
      %v888 = vadd.f32 0.0, %v887
      %v889 = vpop.f32.mrf.mxu0
      %890 = vmatprep.mubr.bf16.mxu0 0
      %891 = vmatmul.mubr.bf16.gmra.mxu0 %v787
      %v892 = vpop.f32.mrf.mxu0
      %v893 = vadd.f32 0.0, %v892
      %v894 = vpop.f32.mrf.mxu0
      %v895 = vpop.f32.mrf.mxu0
      %v896 = vadd.f32 0.0, %v895
      %v897 = vpop.f32.mrf.mxu0
      %898 = vmatprep.mubr.bf16.mxu0 0
      %899 = vmatmul.mubr.bf16.gmra.mxu0 %v790
      %v900 = vpop.f32.mrf.mxu0
      %v901 = vadd.f32 0.0, %v900
      %v902 = vpop.f32.mrf.mxu0
      %v903 = vpop.f32.mrf.mxu0
      %v904 = vadd.f32 0.0, %v903
      %v905 = vpop.f32.mrf.mxu0
      %906 = vmatprep.mubr.bf16.mxu0 0
      %907 = vmatmul.mubr.bf16.gmra.mxu0 %v793
      %v908 = vpop.f32.mrf.mxu0
      %v909 = vadd.f32 0.0, %v908
      %v910 = vpop.f32.mrf.mxu0
      %v911 = vpop.f32.mrf.mxu0
      %v912 = vadd.f32 0.0, %v911
      %v913 = vpop.f32.mrf.mxu0
      %914 = vmatprep.mubr.bf16.mxu0 0
      %915 = vmatmul.mubr.bf16.gmra.mxu0 %v796
      %v916 = vpop.f32.mrf.mxu0
      %v917 = vadd.f32 0.0, %v916
      %v918 = vpop.f32.mrf.mxu0
      %v919 = vpop.f32.mrf.mxu0
      %v920 = vadd.f32 0.0, %v919
      %v921 = vpop.f32.mrf.mxu0
      %922 = vmatprep.mubr.bf16.mxu0 0
      %923 = vmatmul.mubr.bf16.gmra.mxu0 %v799
      %v924 = vpop.f32.mrf.mxu0
      %v925 = vadd.f32 0.0, %v924
      %v926 = vpop.f32.mrf.mxu0
      %v927 = vpop.f32.mrf.mxu0
      %v928 = vadd.f32 0.0, %v927
      %v929 = vpop.f32.mrf.mxu0
      %930 = vmatprep.mubr.bf16.mxu0 0
      %931 = vmatmul.mubr.bf16.gmra.mxu0 %v802
      %v932 = vpop.f32.mrf.mxu0
      %v933 = vadd.f32 0.0, %v932
      %v934 = vpop.f32.mrf.mxu0
      %v935 = vpop.f32.mrf.mxu0
      %v936 = vadd.f32 0.0, %v935
      %v937 = vpop.f32.mrf.mxu0
      %938 = vmatprep.mubr.bf16.mxu0 0
      %939 = vmatmul.mubr.bf16.gmra.mxu0 %v805
      %v940 = vpop.f32.mrf.mxu0
      %v941 = vadd.f32 0.0, %v940
      %v942 = vpop.f32.mrf.mxu0
      %v943 = vpop.f32.mrf.mxu0
      %v944 = vadd.f32 0.0, %v943
      %v945 = vpop.f32.mrf.mxu0
      %946 = vmatprep.mubr.bf16.mxu0 0
      %947 = vmatmul.mubr.bf16.gmra.mxu0 %v808
      %v948 = vpop.f32.mrf.mxu0
      %v949 = vadd.f32 0.0, %v948
      %v950 = vpop.f32.mrf.mxu0
      %v951 = vpop.f32.mrf.mxu0
      %v952 = vadd.f32 0.0, %v951
      %v953 = vpop.f32.mrf.mxu0
      %954 = vmatprep.mubr.bf16.mxu0 0
      %955 = vmatmul.mubr.bf16.gmra.mxu0 %v811
      %v956 = vpop.f32.mrf.mxu0
      %v957 = vadd.f32 0.0, %v956
      %v958 = vpop.f32.mrf.mxu0
      %v959 = vpop.f32.mrf.mxu0
      %v960 = vadd.f32 0.0, %v959
      %v961 = vpop.f32.mrf.mxu0
      %962 = vmatprep.mubr.bf16.mxu0 0
      %963 = vmatmul.mubr.bf16.gmra.mxu0 %v814
      %v964 = vpop.f32.mrf.mxu0
      %v965 = vadd.f32 0.0, %v964
      %v966 = vpop.f32.mrf.mxu0
      %v967 = vpop.f32.mrf.mxu0
      %v968 = vadd.f32 0.0, %v967
      %v969 = vpop.f32.mrf.mxu0
      %970 = vmatprep.mubr.bf16.mxu0 0
      %971 = vmatmul.mubr.bf16.gmra.mxu0 %v817
      %v972 = vpop.f32.mrf.mxu0
      %v973 = vadd.f32 0.0, %v972
      %v974 = vpop.f32.mrf.mxu0
      %v975 = vpop.f32.mrf.mxu0
      %v976 = vadd.f32 0.0, %v975
      %v977 = vpop.f32.mrf.mxu0
      %978 = vmatprep.mubr.bf16.mxu0 0
      %979 = vmatmul.mubr.bf16.gmra.mxu0 %v820
      %v980 = vpop.f32.mrf.mxu0
      %v981 = vadd.f32 0.0, %v980
      %v982 = vpop.f32.mrf.mxu0
      %v983 = vpop.f32.mrf.mxu0
      %v984 = vadd.f32 0.0, %v983
      %v985 = vpop.f32.mrf.mxu0
      %986 = vdwg.mxu0
      %v1019 = vunpack.c.l.b16 %v281
      %v1020 = vunpack.c.l.b16 %v282
      %v1021 = vunpack.c.l.b16 %v284
      %v1022 = vunpack.c.l.b16 %v285
      %v1023 = vunpack.c.l.b16 %v287
      %v1024 = vunpack.c.l.b16 %v288
      %v1025 = vunpack.c.l.b16 %v290
      %v1026 = vunpack.c.l.b16 %v291
      %v1027 = vunpack.c.l.b16 %v293
      %v1028 = vunpack.c.l.b16 %v294
      %v1029 = vunpack.c.l.b16 %v296
      %v1030 = vunpack.c.l.b16 %v297
      %v1031 = vunpack.c.l.b16 %v299
      %v1032 = vunpack.c.l.b16 %v300
      %v1033 = vunpack.c.l.b16 %v302
      %v1034 = vunpack.c.l.b16 %v303
      %v1035 = vunpack.c.l.b16 %v305
      %v1036 = vunpack.c.l.b16 %v306
      %v1037 = vunpack.c.l.b16 %v308
      %v1038 = vunpack.c.l.b16 %v309
      %v1039 = vunpack.c.l.b16 %v311
      %v1040 = vunpack.c.l.b16 %v312
      %v1041 = vunpack.c.l.b16 %v314
      %v1042 = vunpack.c.l.b16 %v315
      %v1043 = vunpack.c.l.b16 %v317
      %v1044 = vunpack.c.l.b16 %v318
      %v1045 = vunpack.c.l.b16 %v320
      %v1046 = vunpack.c.l.b16 %v321
      %v1047 = vunpack.c.l.b16 %v323
      %v1048 = vunpack.c.l.b16 %v324
      %v1049 = vunpack.c.l.b16 %v326
      %v1050 = vunpack.c.l.b16 %v327
      %v1051 = vpack.c.b16 %v1020, %v1019
      %v1052 = vpack.c.b16 %v1022, %v1021
      %v1053 = vpack.c.b16 %v1024, %v1023
      %v1054 = vpack.c.b16 %v1026, %v1025
      %v1055 = vpack.c.b16 %v1028, %v1027
      %v1056 = vpack.c.b16 %v1030, %v1029
      %v1057 = vpack.c.b16 %v1032, %v1031
      %v1058 = vpack.c.b16 %v1034, %v1033
      %v1059 = vpack.c.b16 %v1036, %v1035
      %v1060 = vpack.c.b16 %v1038, %v1037
      %v1061 = vpack.c.b16 %v1040, %v1039
      %v1062 = vpack.c.b16 %v1042, %v1041
      %v1063 = vpack.c.b16 %v1044, %v1043
      %v1064 = vpack.c.b16 %v1046, %v1045
      %v1065 = vpack.c.b16 %v1048, %v1047
      %v1066 = vpack.c.b16 %v1050, %v1049
      %v1068 = vsel %vm773, %v1051, 0
      %v1071 = vsel %vm773, %v1052, 0
      %v1074 = vsel %vm773, %v1053, 0
      %v1077 = vsel %vm773, %v1054, 0
      %v1080 = vsel %vm773, %v1055, 0
      %v1083 = vsel %vm773, %v1056, 0
      %v1086 = vsel %vm773, %v1057, 0
      %v1089 = vsel %vm773, %v1058, 0
      %v1092 = vsel %vm773, %v1059, 0
      %v1095 = vsel %vm773, %v1060, 0
      %v1098 = vsel %vm773, %v1061, 0
      %v1101 = vsel %vm773, %v1062, 0
      %v1104 = vsel %vm773, %v1063, 0
      %v1107 = vsel %vm773, %v1064, 0
      %v1110 = vsel %vm773, %v1065, 0
      %v1113 = vsel %vm773, %v1066, 0
      %v1116 = vsel %vm822, %v335, 0
      %1118 = vmatprep.subr.bf16.mxu0 0
      %1119 = vmatpush1.bf16.msra.mxu0 0
      %1120 = vmatprep.subr.bf16.mxu0 0
      %1121 = vmatpush1.bf16.msra.mxu0 0
      %1122 = vmatprep.subr.bf16.mxu0 0
      %1123 = vmatpush1.bf16.msra.mxu0 0
      %1124 = vmatprep.subr.bf16.mxu0 0
      %1125 = vmatpush1.bf16.msra.mxu0 0
      %1126 = vmatprep.subr.bf16.mxu0 0
      %1127 = vmatpush1.bf16.msra.mxu0 0
      %1128 = vmatprep.subr.bf16.mxu0 0
      %1129 = vmatpush1.bf16.msra.mxu0 0
      %1130 = vmatprep.subr.bf16.mxu0 0
      %1131 = vmatpush1.bf16.msra.mxu0 0
      %1132 = vmatprep.subr.bf16.mxu0 0
      %1133 = vmatpush1.bf16.msra.mxu0 %v1116
      %1134 = vmatprep.subr.bf16.mxu0 0
      %1135 = vmatpush2.bf16.msra.mxu0 0
      %1136 = vmatprep.subr.bf16.mxu0 0
      %1137 = vmatpush2.bf16.msra.mxu0 0
      %1138 = vmatprep.subr.bf16.mxu0 0
      %1139 = vmatpush2.bf16.msra.mxu0 0
      %1140 = vmatprep.subr.bf16.mxu0 0
      %1141 = vmatpush2.bf16.msra.mxu0 0
      %1142 = vmatprep.subr.bf16.mxu0 0
      %1143 = vmatpush2.bf16.msra.mxu0 0
      %1144 = vmatprep.subr.bf16.mxu0 0
      %1145 = vmatpush2.bf16.msra.mxu0 0
      %1146 = vmatprep.subr.bf16.mxu0 0
      %1147 = vmatpush2.bf16.msra.mxu0 0
      %1148 = vmatprep.subr.bf16.mxu0 0
      %1149 = vmatpush2.bf16.msra.mxu0 0
      %1150 = vmatprep.mubr.bf16.mxu0 0
      %1151 = vmatmul.mubr.bf16.gmra.mxu0 %v1068
      %v1152 = vpop.f32.mrf.mxu0
      %v1153 = vadd.f32 %v861, %v1152
      %v1154 = vpop.f32.mrf.mxu0
      %v1155 = vpop.f32.mrf.mxu0
      %v1156 = vadd.f32 %v864, %v1155
      %v1157 = vpop.f32.mrf.mxu0
      %1158 = vmatprep.mubr.bf16.mxu0 0
      %1159 = vmatmul.mubr.bf16.gmra.mxu0 %v1071
      %v1160 = vpop.f32.mrf.mxu0
      %v1161 = vadd.f32 %v869, %v1160
      %v1162 = vpop.f32.mrf.mxu0
      %v1163 = vpop.f32.mrf.mxu0
      %v1164 = vadd.f32 %v872, %v1163
      %v1165 = vpop.f32.mrf.mxu0
      %1166 = vmatprep.mubr.bf16.mxu0 0
      %1167 = vmatmul.mubr.bf16.gmra.mxu0 %v1074
      %v1168 = vpop.f32.mrf.mxu0
      %v1169 = vadd.f32 %v877, %v1168
      %v1170 = vpop.f32.mrf.mxu0
      %v1171 = vpop.f32.mrf.mxu0
      %v1172 = vadd.f32 %v880, %v1171
      %v1173 = vpop.f32.mrf.mxu0
      %1174 = vmatprep.mubr.bf16.mxu0 0
      %1175 = vmatmul.mubr.bf16.gmra.mxu0 %v1077
      %v1176 = vpop.f32.mrf.mxu0
      %v1177 = vadd.f32 %v885, %v1176
      %v1178 = vpop.f32.mrf.mxu0
      %v1179 = vpop.f32.mrf.mxu0
      %v1180 = vadd.f32 %v888, %v1179
      %v1181 = vpop.f32.mrf.mxu0
      %1182 = vmatprep.mubr.bf16.mxu0 0
      %1183 = vmatmul.mubr.bf16.gmra.mxu0 %v1080
      %v1184 = vpop.f32.mrf.mxu0
      %v1185 = vadd.f32 %v893, %v1184
      %v1186 = vpop.f32.mrf.mxu0
      %v1187 = vpop.f32.mrf.mxu0
      %v1188 = vadd.f32 %v896, %v1187
      %v1189 = vpop.f32.mrf.mxu0
      %1190 = vmatprep.mubr.bf16.mxu0 0
      %1191 = vmatmul.mubr.bf16.gmra.mxu0 %v1083
      %v1192 = vpop.f32.mrf.mxu0
      %v1193 = vadd.f32 %v901, %v1192
      %v1194 = vpop.f32.mrf.mxu0
      %v1195 = vpop.f32.mrf.mxu0
      %v1196 = vadd.f32 %v904, %v1195
      %v1197 = vpop.f32.mrf.mxu0
      %1198 = vmatprep.mubr.bf16.mxu0 0
      %1199 = vmatmul.mubr.bf16.gmra.mxu0 %v1086
      %v1200 = vpop.f32.mrf.mxu0
      %v1201 = vadd.f32 %v909, %v1200
      %v1202 = vpop.f32.mrf.mxu0
      %v1203 = vpop.f32.mrf.mxu0
      %v1204 = vadd.f32 %v912, %v1203
      %v1205 = vpop.f32.mrf.mxu0
      %1206 = vmatprep.mubr.bf16.mxu0 0
      %1207 = vmatmul.mubr.bf16.gmra.mxu0 %v1089
      %v1208 = vpop.f32.mrf.mxu0
      %v1209 = vadd.f32 %v917, %v1208
      %v1210 = vpop.f32.mrf.mxu0
      %v1211 = vpop.f32.mrf.mxu0
      %v1212 = vadd.f32 %v920, %v1211
      %v1213 = vpop.f32.mrf.mxu0
      %1214 = vmatprep.mubr.bf16.mxu0 0
      %1215 = vmatmul.mubr.bf16.gmra.mxu0 %v1092
      %v1216 = vpop.f32.mrf.mxu0
      %v1217 = vadd.f32 %v925, %v1216
      %v1218 = vpop.f32.mrf.mxu0
      %v1219 = vpop.f32.mrf.mxu0
      %v1220 = vadd.f32 %v928, %v1219
      %v1221 = vpop.f32.mrf.mxu0
      %1222 = vmatprep.mubr.bf16.mxu0 0
      %1223 = vmatmul.mubr.bf16.gmra.mxu0 %v1095
      %v1224 = vpop.f32.mrf.mxu0
      %v1225 = vadd.f32 %v933, %v1224
      %v1226 = vpop.f32.mrf.mxu0
      %v1227 = vpop.f32.mrf.mxu0
      %v1228 = vadd.f32 %v936, %v1227
      %v1229 = vpop.f32.mrf.mxu0
      %1230 = vmatprep.mubr.bf16.mxu0 0
      %1231 = vmatmul.mubr.bf16.gmra.mxu0 %v1098
      %v1232 = vpop.f32.mrf.mxu0
      %v1233 = vadd.f32 %v941, %v1232
      %v1234 = vpop.f32.mrf.mxu0
      %v1235 = vpop.f32.mrf.mxu0
      %v1236 = vadd.f32 %v944, %v1235
      %v1237 = vpop.f32.mrf.mxu0
      %1238 = vmatprep.mubr.bf16.mxu0 0
      %1239 = vmatmul.mubr.bf16.gmra.mxu0 %v1101
      %v1240 = vpop.f32.mrf.mxu0
      %v1241 = vadd.f32 %v949, %v1240
      %v1242 = vpop.f32.mrf.mxu0
      %v1243 = vpop.f32.mrf.mxu0
      %v1244 = vadd.f32 %v952, %v1243
      %v1245 = vpop.f32.mrf.mxu0
      %1246 = vmatprep.mubr.bf16.mxu0 0
      %1247 = vmatmul.mubr.bf16.gmra.mxu0 %v1104
      %v1248 = vpop.f32.mrf.mxu0
      %v1249 = vadd.f32 %v957, %v1248
      %v1250 = vpop.f32.mrf.mxu0
      %v1251 = vpop.f32.mrf.mxu0
      %v1252 = vadd.f32 %v960, %v1251
      %v1253 = vpop.f32.mrf.mxu0
      %1254 = vmatprep.mubr.bf16.mxu0 0
      %1255 = vmatmul.mubr.bf16.gmra.mxu0 %v1107
      %v1256 = vpop.f32.mrf.mxu0
      %v1257 = vadd.f32 %v965, %v1256
      %v1258 = vpop.f32.mrf.mxu0
      %v1259 = vpop.f32.mrf.mxu0
      %v1260 = vadd.f32 %v968, %v1259
      %v1261 = vpop.f32.mrf.mxu0
      %1262 = vmatprep.mubr.bf16.mxu0 0
      %1263 = vmatmul.mubr.bf16.gmra.mxu0 %v1110
      %v1264 = vpop.f32.mrf.mxu0
      %v1265 = vadd.f32 %v973, %v1264
      %v1266 = vpop.f32.mrf.mxu0
      %v1267 = vpop.f32.mrf.mxu0
      %v1268 = vadd.f32 %v976, %v1267
      %v1269 = vpop.f32.mrf.mxu0
      %1270 = vmatprep.mubr.bf16.mxu0 0
      %1271 = vmatmul.mubr.bf16.gmra.mxu0 %v1113
      %v1272 = vpop.f32.mrf.mxu0
      %v1273 = vadd.f32 %v981, %v1272
      %v1274 = vpop.f32.mrf.mxu0
      %v1275 = vpop.f32.mrf.mxu0
      %v1276 = vadd.f32 %v984, %v1275
      %v1277 = vpop.f32.mrf.mxu0
      %1278 = vdwg.mxu0
      %vm1295 = vcmask 1042432
      %vm1296 = vcmask 1046532
      %vm1297 = vmor %vm1295, %vm1296
      %v1298 = vrot.slane %v281, 5
      %v1299 = vrot.slane %v1298, 4
      %v1300 = vrot.slane %v282, 5
      %v1301 = vsel %vm1297, %v1299, %v1300
      %v1302 = vrot.slane %v1300, 4
      %v1303 = vrot.slane %v283, 5
      %v1304 = vsel %vm1297, %v1302, %v1303
      %v1305 = vrot.slane %v284, 5
      %v1306 = vrot.slane %v1305, 4
      %v1307 = vrot.slane %v285, 5
      %v1308 = vsel %vm1297, %v1306, %v1307
      %v1309 = vrot.slane %v1307, 4
      %v1310 = vrot.slane %v286, 5
      %v1311 = vsel %vm1297, %v1309, %v1310
      %v1312 = vrot.slane %v287, 5
      %v1313 = vrot.slane %v1312, 4
      %v1314 = vrot.slane %v288, 5
      %v1315 = vsel %vm1297, %v1313, %v1314
      %v1316 = vrot.slane %v1314, 4
      %v1317 = vrot.slane %v289, 5
      %v1318 = vsel %vm1297, %v1316, %v1317
      %v1319 = vrot.slane %v290, 5
      %v1320 = vrot.slane %v1319, 4
      %v1321 = vrot.slane %v291, 5
      %v1322 = vsel %vm1297, %v1320, %v1321
      %v1323 = vrot.slane %v1321, 4
      %v1324 = vrot.slane %v292, 5
      %v1325 = vsel %vm1297, %v1323, %v1324
      %v1326 = vrot.slane %v293, 5
      %v1327 = vrot.slane %v1326, 4
      %v1328 = vrot.slane %v294, 5
      %v1329 = vsel %vm1297, %v1327, %v1328
      %v1330 = vrot.slane %v1328, 4
      %v1331 = vrot.slane %v295, 5
      %v1332 = vsel %vm1297, %v1330, %v1331
      %v1333 = vrot.slane %v296, 5
      %v1334 = vrot.slane %v1333, 4
      %v1335 = vrot.slane %v297, 5
      %v1336 = vsel %vm1297, %v1334, %v1335
      %v1337 = vrot.slane %v1335, 4
      %v1338 = vrot.slane %v298, 5
      %v1339 = vsel %vm1297, %v1337, %v1338
      %v1340 = vrot.slane %v299, 5
      %v1341 = vrot.slane %v1340, 4
      %v1342 = vrot.slane %v300, 5
      %v1343 = vsel %vm1297, %v1341, %v1342
      %v1344 = vrot.slane %v1342, 4
      %v1345 = vrot.slane %v301, 5
      %v1346 = vsel %vm1297, %v1344, %v1345
      %v1347 = vrot.slane %v302, 5
      %v1348 = vrot.slane %v1347, 4
      %v1349 = vrot.slane %v303, 5
      %v1350 = vsel %vm1297, %v1348, %v1349
      %v1351 = vrot.slane %v1349, 4
      %v1352 = vrot.slane %v304, 5
      %v1353 = vsel %vm1297, %v1351, %v1352
      %v1354 = vrot.slane %v305, 5
      %v1355 = vrot.slane %v1354, 4
      %v1356 = vrot.slane %v306, 5
      %v1357 = vsel %vm1297, %v1355, %v1356
      %v1358 = vrot.slane %v1356, 4
      %v1359 = vrot.slane %v307, 5
      %v1360 = vsel %vm1297, %v1358, %v1359
      %v1361 = vrot.slane %v308, 5
      %v1362 = vrot.slane %v1361, 4
      %v1363 = vrot.slane %v309, 5
      %v1364 = vsel %vm1297, %v1362, %v1363
      %v1365 = vrot.slane %v1363, 4
      %v1366 = vrot.slane %v310, 5
      %v1367 = vsel %vm1297, %v1365, %v1366
      %v1368 = vrot.slane %v311, 5
      %v1369 = vrot.slane %v1368, 4
      %v1370 = vrot.slane %v312, 5
      %v1371 = vsel %vm1297, %v1369, %v1370
      %v1372 = vrot.slane %v1370, 4
      %v1373 = vrot.slane %v313, 5
      %v1374 = vsel %vm1297, %v1372, %v1373
      %v1375 = vrot.slane %v314, 5
      %v1376 = vrot.slane %v1375, 4
      %v1377 = vrot.slane %v315, 5
      %v1378 = vsel %vm1297, %v1376, %v1377
      %v1379 = vrot.slane %v1377, 4
      %v1380 = vrot.slane %v316, 5
      %v1381 = vsel %vm1297, %v1379, %v1380
      %v1382 = vrot.slane %v317, 5
      %v1383 = vrot.slane %v1382, 4
      %v1384 = vrot.slane %v318, 5
      %v1385 = vsel %vm1297, %v1383, %v1384
      %v1386 = vrot.slane %v1384, 4
      %v1387 = vrot.slane %v319, 5
      %v1388 = vsel %vm1297, %v1386, %v1387
      %v1389 = vrot.slane %v320, 5
      %v1390 = vrot.slane %v1389, 4
      %v1391 = vrot.slane %v321, 5
      %v1392 = vsel %vm1297, %v1390, %v1391
      %v1393 = vrot.slane %v1391, 4
      %v1394 = vrot.slane %v322, 5
      %v1395 = vsel %vm1297, %v1393, %v1394
      %v1396 = vrot.slane %v323, 5
      %v1397 = vrot.slane %v1396, 4
      %v1398 = vrot.slane %v324, 5
      %v1399 = vsel %vm1297, %v1397, %v1398
      %v1400 = vrot.slane %v1398, 4
      %v1401 = vrot.slane %v325, 5
      %v1402 = vsel %vm1297, %v1400, %v1401
      %v1403 = vrot.slane %v326, 5
      %v1404 = vrot.slane %v1403, 4
      %v1405 = vrot.slane %v327, 5
      %v1406 = vsel %vm1297, %v1404, %v1405
      %v1407 = vrot.slane %v1405, 4
      %v1408 = vrot.slane %v328, 5
      %v1409 = vsel %vm1297, %v1407, %v1408
      %s1410 = scalar_lea.vmem %s1, 4
      %v1411 = vld [vmem:[%s1410] sm:$0x3]
      %v1412 = vunpack.c.l.b16 %v1301
      %v1413 = vunpack.c.l.b16 %v1304
      %v1414 = vunpack.c.l.b16 %v1308
      %v1415 = vunpack.c.l.b16 %v1311
      %v1416 = vunpack.c.l.b16 %v1315
      %v1417 = vunpack.c.l.b16 %v1318
      %v1418 = vunpack.c.l.b16 %v1322
      %v1419 = vunpack.c.l.b16 %v1325
      %v1420 = vunpack.c.l.b16 %v1329
      %v1421 = vunpack.c.l.b16 %v1332
      %v1422 = vunpack.c.l.b16 %v1336
      %v1423 = vunpack.c.l.b16 %v1339
      %v1424 = vunpack.c.l.b16 %v1343
      %v1425 = vunpack.c.l.b16 %v1346
      %v1426 = vunpack.c.l.b16 %v1350
      %v1427 = vunpack.c.l.b16 %v1353
      %v1428 = vunpack.c.l.b16 %v1357
      %v1429 = vunpack.c.l.b16 %v1360
      %v1430 = vunpack.c.l.b16 %v1364
      %v1431 = vunpack.c.l.b16 %v1367
      %v1432 = vunpack.c.l.b16 %v1371
      %v1433 = vunpack.c.l.b16 %v1374
      %v1434 = vunpack.c.l.b16 %v1378
      %v1435 = vunpack.c.l.b16 %v1381
      %v1436 = vunpack.c.l.b16 %v1385
      %v1437 = vunpack.c.l.b16 %v1388
      %v1438 = vunpack.c.l.b16 %v1392
      %v1439 = vunpack.c.l.b16 %v1395
      %v1440 = vunpack.c.l.b16 %v1399
      %v1441 = vunpack.c.l.b16 %v1402
      %v1442 = vunpack.c.l.b16 %v1406
      %v1443 = vunpack.c.l.b16 %v1409
      %v1444 = vpack.c.b16 %v1413, %v1412
      %v1445 = vpack.c.b16 %v1415, %v1414
      %v1446 = vpack.c.b16 %v1417, %v1416
      %v1447 = vpack.c.b16 %v1419, %v1418
      %v1448 = vpack.c.b16 %v1421, %v1420
      %v1449 = vpack.c.b16 %v1423, %v1422
      %v1450 = vpack.c.b16 %v1425, %v1424
      %v1451 = vpack.c.b16 %v1427, %v1426
      %v1452 = vpack.c.b16 %v1429, %v1428
      %v1453 = vpack.c.b16 %v1431, %v1430
      %v1454 = vpack.c.b16 %v1433, %v1432
      %v1455 = vpack.c.b16 %v1435, %v1434
      %v1456 = vpack.c.b16 %v1437, %v1436
      %v1457 = vpack.c.b16 %v1439, %v1438
      %v1458 = vpack.c.b16 %v1441, %v1440
      %v1459 = vpack.c.b16 %v1443, %v1442
      %v1461 = vsel %vm773, %v1444, 0
      %v1464 = vsel %vm773, %v1445, 0
      %v1467 = vsel %vm773, %v1446, 0
      %v1470 = vsel %vm773, %v1447, 0
      %v1473 = vsel %vm773, %v1448, 0
      %v1476 = vsel %vm773, %v1449, 0
      %v1479 = vsel %vm773, %v1450, 0
      %v1482 = vsel %vm773, %v1451, 0
      %v1485 = vsel %vm773, %v1452, 0
      %v1488 = vsel %vm773, %v1453, 0
      %v1491 = vsel %vm773, %v1454, 0
      %v1494 = vsel %vm773, %v1455, 0
      %v1497 = vsel %vm773, %v1456, 0
      %v1500 = vsel %vm773, %v1457, 0
      %v1503 = vsel %vm773, %v1458, 0
      %v1506 = vsel %vm773, %v1459, 0
      %v1509 = vsel %vm822, %v1411, 0
      %1511 = vmatprep.subr.bf16.mxu0 0
      %1512 = vmatpush1.bf16.msra.mxu0 0
      %1513 = vmatprep.subr.bf16.mxu0 0
      %1514 = vmatpush1.bf16.msra.mxu0 0
      %1515 = vmatprep.subr.bf16.mxu0 0
      %1516 = vmatpush1.bf16.msra.mxu0 0
      %1517 = vmatprep.subr.bf16.mxu0 0
      %1518 = vmatpush1.bf16.msra.mxu0 0
      %1519 = vmatprep.subr.bf16.mxu0 0
      %1520 = vmatpush1.bf16.msra.mxu0 0
      %1521 = vmatprep.subr.bf16.mxu0 0
      %1522 = vmatpush1.bf16.msra.mxu0 0
      %1523 = vmatprep.subr.bf16.mxu0 0
      %1524 = vmatpush1.bf16.msra.mxu0 0
      %1525 = vmatprep.subr.bf16.mxu0 0
      %1526 = vmatpush1.bf16.msra.mxu0 %v1509
      %1527 = vmatprep.subr.bf16.mxu0 0
      %1528 = vmatpush2.bf16.msra.mxu0 0
      %1529 = vmatprep.subr.bf16.mxu0 0
      %1530 = vmatpush2.bf16.msra.mxu0 0
      %1531 = vmatprep.subr.bf16.mxu0 0
      %1532 = vmatpush2.bf16.msra.mxu0 0
      %1533 = vmatprep.subr.bf16.mxu0 0
      %1534 = vmatpush2.bf16.msra.mxu0 0
      %1535 = vmatprep.subr.bf16.mxu0 0
      %1536 = vmatpush2.bf16.msra.mxu0 0
      %1537 = vmatprep.subr.bf16.mxu0 0
      %1538 = vmatpush2.bf16.msra.mxu0 0
      %1539 = vmatprep.subr.bf16.mxu0 0
      %1540 = vmatpush2.bf16.msra.mxu0 0
      %1541 = vmatprep.subr.bf16.mxu0 0
      %1542 = vmatpush2.bf16.msra.mxu0 0
      %1543 = vmatprep.mubr.bf16.mxu0 0
      %1544 = vmatmul.mubr.bf16.gmra.mxu0 %v1461
      %v1545 = vpop.f32.mrf.mxu0
      %v1546 = vadd.f32 0.0, %v1545
      %v1547 = vpop.f32.mrf.mxu0
      %v1548 = vpop.f32.mrf.mxu0
      %v1549 = vadd.f32 0.0, %v1548
      %v1550 = vpop.f32.mrf.mxu0
      %1551 = vmatprep.mubr.bf16.mxu0 0
      %1552 = vmatmul.mubr.bf16.gmra.mxu0 %v1464
      %v1553 = vpop.f32.mrf.mxu0
      %v1554 = vadd.f32 0.0, %v1553
      %v1555 = vpop.f32.mrf.mxu0
      %v1556 = vpop.f32.mrf.mxu0
      %v1557 = vadd.f32 0.0, %v1556
      %v1558 = vpop.f32.mrf.mxu0
      %1559 = vmatprep.mubr.bf16.mxu0 0
      %1560 = vmatmul.mubr.bf16.gmra.mxu0 %v1467
      %v1561 = vpop.f32.mrf.mxu0
      %v1562 = vadd.f32 0.0, %v1561
      %v1563 = vpop.f32.mrf.mxu0
      %v1564 = vpop.f32.mrf.mxu0
      %v1565 = vadd.f32 0.0, %v1564
      %v1566 = vpop.f32.mrf.mxu0
      %1567 = vmatprep.mubr.bf16.mxu0 0
      %1568 = vmatmul.mubr.bf16.gmra.mxu0 %v1470
      %v1569 = vpop.f32.mrf.mxu0
      %v1570 = vadd.f32 0.0, %v1569
      %v1571 = vpop.f32.mrf.mxu0
      %v1572 = vpop.f32.mrf.mxu0
      %v1573 = vadd.f32 0.0, %v1572
      %v1574 = vpop.f32.mrf.mxu0
      %1575 = vmatprep.mubr.bf16.mxu0 0
      %1576 = vmatmul.mubr.bf16.gmra.mxu0 %v1473
      %v1577 = vpop.f32.mrf.mxu0
      %v1578 = vadd.f32 0.0, %v1577
      %v1579 = vpop.f32.mrf.mxu0
      %v1580 = vpop.f32.mrf.mxu0
      %v1581 = vadd.f32 0.0, %v1580
      %v1582 = vpop.f32.mrf.mxu0
      %1583 = vmatprep.mubr.bf16.mxu0 0
      %1584 = vmatmul.mubr.bf16.gmra.mxu0 %v1476
      %v1585 = vpop.f32.mrf.mxu0
      %v1586 = vadd.f32 0.0, %v1585
      %v1587 = vpop.f32.mrf.mxu0
      %v1588 = vpop.f32.mrf.mxu0
      %v1589 = vadd.f32 0.0, %v1588
      %v1590 = vpop.f32.mrf.mxu0
      %1591 = vmatprep.mubr.bf16.mxu0 0
      %1592 = vmatmul.mubr.bf16.gmra.mxu0 %v1479
      %v1593 = vpop.f32.mrf.mxu0
      %v1594 = vadd.f32 0.0, %v1593
      %v1595 = vpop.f32.mrf.mxu0
      %v1596 = vpop.f32.mrf.mxu0
      %v1597 = vadd.f32 0.0, %v1596
      %v1598 = vpop.f32.mrf.mxu0
      %1599 = vmatprep.mubr.bf16.mxu0 0
      %1600 = vmatmul.mubr.bf16.gmra.mxu0 %v1482
      %v1601 = vpop.f32.mrf.mxu0
      %v1602 = vadd.f32 0.0, %v1601
      %v1603 = vpop.f32.mrf.mxu0
      %v1604 = vpop.f32.mrf.mxu0
      %v1605 = vadd.f32 0.0, %v1604
      %v1606 = vpop.f32.mrf.mxu0
      %1607 = vmatprep.mubr.bf16.mxu0 0
      %1608 = vmatmul.mubr.bf16.gmra.mxu0 %v1485
      %v1609 = vpop.f32.mrf.mxu0
      %v1610 = vadd.f32 0.0, %v1609
      %v1611 = vpop.f32.mrf.mxu0
      %v1612 = vpop.f32.mrf.mxu0
      %v1613 = vadd.f32 0.0, %v1612
      %v1614 = vpop.f32.mrf.mxu0
      %1615 = vmatprep.mubr.bf16.mxu0 0
      %1616 = vmatmul.mubr.bf16.gmra.mxu0 %v1488
      %v1617 = vpop.f32.mrf.mxu0
      %v1618 = vadd.f32 0.0, %v1617
      %v1619 = vpop.f32.mrf.mxu0
      %v1620 = vpop.f32.mrf.mxu0
      %v1621 = vadd.f32 0.0, %v1620
      %v1622 = vpop.f32.mrf.mxu0
      %1623 = vmatprep.mubr.bf16.mxu0 0
      %1624 = vmatmul.mubr.bf16.gmra.mxu0 %v1491
      %v1625 = vpop.f32.mrf.mxu0
      %v1626 = vadd.f32 0.0, %v1625
      %v1627 = vpop.f32.mrf.mxu0
      %v1628 = vpop.f32.mrf.mxu0
      %v1629 = vadd.f32 0.0, %v1628
      %v1630 = vpop.f32.mrf.mxu0
      %1631 = vmatprep.mubr.bf16.mxu0 0
      %1632 = vmatmul.mubr.bf16.gmra.mxu0 %v1494
      %v1633 = vpop.f32.mrf.mxu0
      %v1634 = vadd.f32 0.0, %v1633
      %v1635 = vpop.f32.mrf.mxu0
      %v1636 = vpop.f32.mrf.mxu0
      %v1637 = vadd.f32 0.0, %v1636
      %v1638 = vpop.f32.mrf.mxu0
      %1639 = vmatprep.mubr.bf16.mxu0 0
      %1640 = vmatmul.mubr.bf16.gmra.mxu0 %v1497
      %v1641 = vpop.f32.mrf.mxu0
      %v1642 = vadd.f32 0.0, %v1641
      %v1643 = vpop.f32.mrf.mxu0
      %v1644 = vpop.f32.mrf.mxu0
      %v1645 = vadd.f32 0.0, %v1644
      %v1646 = vpop.f32.mrf.mxu0
      %1647 = vmatprep.mubr.bf16.mxu0 0
      %1648 = vmatmul.mubr.bf16.gmra.mxu0 %v1500
      %v1649 = vpop.f32.mrf.mxu0
      %v1650 = vadd.f32 0.0, %v1649
      %v1651 = vpop.f32.mrf.mxu0
      %v1652 = vpop.f32.mrf.mxu0
      %v1653 = vadd.f32 0.0, %v1652
      %v1654 = vpop.f32.mrf.mxu0
      %1655 = vmatprep.mubr.bf16.mxu0 0
      %1656 = vmatmul.mubr.bf16.gmra.mxu0 %v1503
      %v1657 = vpop.f32.mrf.mxu0
      %v1658 = vadd.f32 0.0, %v1657
      %v1659 = vpop.f32.mrf.mxu0
      %v1660 = vpop.f32.mrf.mxu0
      %v1661 = vadd.f32 0.0, %v1660
      %v1662 = vpop.f32.mrf.mxu0
      %1663 = vmatprep.mubr.bf16.mxu0 0
      %1664 = vmatmul.mubr.bf16.gmra.mxu0 %v1506
      %v1665 = vpop.f32.mrf.mxu0
      %v1666 = vadd.f32 0.0, %v1665
      %v1667 = vpop.f32.mrf.mxu0
      %v1668 = vpop.f32.mrf.mxu0
      %v1669 = vadd.f32 0.0, %v1668
      %v1670 = vpop.f32.mrf.mxu0
      %1671 = vdwg.mxu0
      %v1672 = vadd.f32 %v1153, %v1546
      %v1673 = vadd.f32 %v1156, %v1549
      %v1674 = vadd.f32 %v1161, %v1554
      %v1675 = vadd.f32 %v1164, %v1557
      %v1676 = vadd.f32 %v1169, %v1562
      %v1677 = vadd.f32 %v1172, %v1565
      %v1678 = vadd.f32 %v1177, %v1570
      %v1679 = vadd.f32 %v1180, %v1573
      %v1680 = vadd.f32 %v1185, %v1578
      %v1681 = vadd.f32 %v1188, %v1581
      %v1682 = vadd.f32 %v1193, %v1586
      %v1683 = vadd.f32 %v1196, %v1589
      %v1684 = vadd.f32 %v1201, %v1594
      %v1685 = vadd.f32 %v1204, %v1597
      %v1686 = vadd.f32 %v1209, %v1602
      %v1687 = vadd.f32 %v1212, %v1605
      %v1688 = vadd.f32 %v1217, %v1610
      %v1689 = vadd.f32 %v1220, %v1613
      %v1690 = vadd.f32 %v1225, %v1618
      %v1691 = vadd.f32 %v1228, %v1621
      %v1692 = vadd.f32 %v1233, %v1626
      %v1693 = vadd.f32 %v1236, %v1629
      %v1694 = vadd.f32 %v1241, %v1634
      %v1695 = vadd.f32 %v1244, %v1637
      %v1696 = vadd.f32 %v1249, %v1642
      %v1697 = vadd.f32 %v1252, %v1645
      %v1698 = vadd.f32 %v1257, %v1650
      %v1699 = vadd.f32 %v1260, %v1653
      %v1700 = vadd.f32 %v1265, %v1658
      %v1701 = vadd.f32 %v1268, %v1661
      %v1702 = vadd.f32 %v1273, %v1666
      %v1703 = vadd.f32 %v1276, %v1669
      %s1704 = scalar_lea.vmem %s1, 6
      %v1705 = vld [vmem:[%s1704] sm:$0x3]
      %v1708 = vunpack.c.l.b16 %v329
      %v1709 = vunpack.c.l.b16 %v330
      %v1710 = vpack.c.b16 %v1709, %v1708
      %v1712 = vsel %vm773, %v1710, 0
      %v1715 = vsel %vm822, %v1705, 0
      %1717 = vmatprep.subr.bf16.mxu0 0
      %1718 = vmatpush1.bf16.msra.mxu0 0
      %1719 = vmatprep.subr.bf16.mxu0 0
      %1720 = vmatpush1.bf16.msra.mxu0 0
      %1721 = vmatprep.subr.bf16.mxu0 0
      %1722 = vmatpush1.bf16.msra.mxu0 0
      %1723 = vmatprep.subr.bf16.mxu0 0
      %1724 = vmatpush1.bf16.msra.mxu0 0
      %1725 = vmatprep.subr.bf16.mxu0 0
      %1726 = vmatpush1.bf16.msra.mxu0 0
      %1727 = vmatprep.subr.bf16.mxu0 0
      %1728 = vmatpush1.bf16.msra.mxu0 0
      %1729 = vmatprep.subr.bf16.mxu0 0
      %1730 = vmatpush1.bf16.msra.mxu0 0
      %1731 = vmatprep.subr.bf16.mxu0 0
      %1732 = vmatpush1.bf16.msra.mxu0 %v1715
      %1733 = vmatprep.subr.bf16.mxu0 0
      %1734 = vmatpush2.bf16.msra.mxu0 0
      %1735 = vmatprep.subr.bf16.mxu0 0
      %1736 = vmatpush2.bf16.msra.mxu0 0
      %1737 = vmatprep.subr.bf16.mxu0 0
      %1738 = vmatpush2.bf16.msra.mxu0 0
      %1739 = vmatprep.subr.bf16.mxu0 0
      %1740 = vmatpush2.bf16.msra.mxu0 0
      %1741 = vmatprep.subr.bf16.mxu0 0
      %1742 = vmatpush2.bf16.msra.mxu0 0
      %1743 = vmatprep.subr.bf16.mxu0 0
      %1744 = vmatpush2.bf16.msra.mxu0 0
      %1745 = vmatprep.subr.bf16.mxu0 0
      %1746 = vmatpush2.bf16.msra.mxu0 0
      %1747 = vmatprep.subr.bf16.mxu0 0
      %1748 = vmatpush2.bf16.msra.mxu0 0
      %1749 = vmatprep.mubr.bf16.mxu0 0
      %1750 = vmatmul.mubr.bf16.gmra.mxu0 %v1071
      %v1751 = vpop.f32.mrf.mxu0
      %v1752 = vadd.f32 0.0, %v1751
      %v1753 = vpop.f32.mrf.mxu0
      %v1754 = vpop.f32.mrf.mxu0
      %v1755 = vadd.f32 0.0, %v1754
      %v1756 = vpop.f32.mrf.mxu0
      %1757 = vmatprep.mubr.bf16.mxu0 0
      %1758 = vmatmul.mubr.bf16.gmra.mxu0 %v1074
      %v1759 = vpop.f32.mrf.mxu0
      %v1760 = vadd.f32 0.0, %v1759
      %v1761 = vpop.f32.mrf.mxu0
      %v1762 = vpop.f32.mrf.mxu0
      %v1763 = vadd.f32 0.0, %v1762
      %v1764 = vpop.f32.mrf.mxu0
      %1765 = vmatprep.mubr.bf16.mxu0 0
      %1766 = vmatmul.mubr.bf16.gmra.mxu0 %v1077
      %v1767 = vpop.f32.mrf.mxu0
      %v1768 = vadd.f32 0.0, %v1767
      %v1769 = vpop.f32.mrf.mxu0
      %v1770 = vpop.f32.mrf.mxu0
      %v1771 = vadd.f32 0.0, %v1770
      %v1772 = vpop.f32.mrf.mxu0
      %1773 = vmatprep.mubr.bf16.mxu0 0
      %1774 = vmatmul.mubr.bf16.gmra.mxu0 %v1080
      %v1775 = vpop.f32.mrf.mxu0
      %v1776 = vadd.f32 0.0, %v1775
      %v1777 = vpop.f32.mrf.mxu0
      %v1778 = vpop.f32.mrf.mxu0
      %v1779 = vadd.f32 0.0, %v1778
      %v1780 = vpop.f32.mrf.mxu0
      %1781 = vmatprep.mubr.bf16.mxu0 0
      %1782 = vmatmul.mubr.bf16.gmra.mxu0 %v1083
      %v1783 = vpop.f32.mrf.mxu0
      %v1784 = vadd.f32 0.0, %v1783
      %v1785 = vpop.f32.mrf.mxu0
      %v1786 = vpop.f32.mrf.mxu0
      %v1787 = vadd.f32 0.0, %v1786
      %v1788 = vpop.f32.mrf.mxu0
      %1789 = vmatprep.mubr.bf16.mxu0 0
      %1790 = vmatmul.mubr.bf16.gmra.mxu0 %v1086
      %v1791 = vpop.f32.mrf.mxu0
      %v1792 = vadd.f32 0.0, %v1791
      %v1793 = vpop.f32.mrf.mxu0
      %v1794 = vpop.f32.mrf.mxu0
      %v1795 = vadd.f32 0.0, %v1794
      %v1796 = vpop.f32.mrf.mxu0
      %1797 = vmatprep.mubr.bf16.mxu0 0
      %1798 = vmatmul.mubr.bf16.gmra.mxu0 %v1089
      %v1799 = vpop.f32.mrf.mxu0
      %v1800 = vadd.f32 0.0, %v1799
      %v1801 = vpop.f32.mrf.mxu0
      %v1802 = vpop.f32.mrf.mxu0
      %v1803 = vadd.f32 0.0, %v1802
      %v1804 = vpop.f32.mrf.mxu0
      %1805 = vmatprep.mubr.bf16.mxu0 0
      %1806 = vmatmul.mubr.bf16.gmra.mxu0 %v1092
      %v1807 = vpop.f32.mrf.mxu0
      %v1808 = vadd.f32 0.0, %v1807
      %v1809 = vpop.f32.mrf.mxu0
      %v1810 = vpop.f32.mrf.mxu0
      %v1811 = vadd.f32 0.0, %v1810
      %v1812 = vpop.f32.mrf.mxu0
      %1813 = vmatprep.mubr.bf16.mxu0 0
      %1814 = vmatmul.mubr.bf16.gmra.mxu0 %v1095
      %v1815 = vpop.f32.mrf.mxu0
      %v1816 = vadd.f32 0.0, %v1815
      %v1817 = vpop.f32.mrf.mxu0
      %v1818 = vpop.f32.mrf.mxu0
      %v1819 = vadd.f32 0.0, %v1818
      %v1820 = vpop.f32.mrf.mxu0
      %1821 = vmatprep.mubr.bf16.mxu0 0
      %1822 = vmatmul.mubr.bf16.gmra.mxu0 %v1098
      %v1823 = vpop.f32.mrf.mxu0
      %v1824 = vadd.f32 0.0, %v1823
      %v1825 = vpop.f32.mrf.mxu0
      %v1826 = vpop.f32.mrf.mxu0
      %v1827 = vadd.f32 0.0, %v1826
      %v1828 = vpop.f32.mrf.mxu0
      %1829 = vmatprep.mubr.bf16.mxu0 0
      %1830 = vmatmul.mubr.bf16.gmra.mxu0 %v1101
      %v1831 = vpop.f32.mrf.mxu0
      %v1832 = vadd.f32 0.0, %v1831
      %v1833 = vpop.f32.mrf.mxu0
      %v1834 = vpop.f32.mrf.mxu0
      %v1835 = vadd.f32 0.0, %v1834
      %v1836 = vpop.f32.mrf.mxu0
      %1837 = vmatprep.mubr.bf16.mxu0 0
      %1838 = vmatmul.mubr.bf16.gmra.mxu0 %v1104
      %v1839 = vpop.f32.mrf.mxu0
      %v1840 = vadd.f32 0.0, %v1839
      %v1841 = vpop.f32.mrf.mxu0
      %v1842 = vpop.f32.mrf.mxu0
      %v1843 = vadd.f32 0.0, %v1842
      %v1844 = vpop.f32.mrf.mxu0
      %1845 = vmatprep.mubr.bf16.mxu0 0
      %1846 = vmatmul.mubr.bf16.gmra.mxu0 %v1107
      %v1847 = vpop.f32.mrf.mxu0
      %v1848 = vadd.f32 0.0, %v1847
      %v1849 = vpop.f32.mrf.mxu0
      %v1850 = vpop.f32.mrf.mxu0
      %v1851 = vadd.f32 0.0, %v1850
      %v1852 = vpop.f32.mrf.mxu0
      %1853 = vmatprep.mubr.bf16.mxu0 0
      %1854 = vmatmul.mubr.bf16.gmra.mxu0 %v1110
      %v1855 = vpop.f32.mrf.mxu0
      %v1856 = vadd.f32 0.0, %v1855
      %v1857 = vpop.f32.mrf.mxu0
      %v1858 = vpop.f32.mrf.mxu0
      %v1859 = vadd.f32 0.0, %v1858
      %v1860 = vpop.f32.mrf.mxu0
      %1861 = vmatprep.mubr.bf16.mxu0 0
      %1862 = vmatmul.mubr.bf16.gmra.mxu0 %v1113
      %v1863 = vpop.f32.mrf.mxu0
      %v1864 = vadd.f32 0.0, %v1863
      %v1865 = vpop.f32.mrf.mxu0
      %v1866 = vpop.f32.mrf.mxu0
      %v1867 = vadd.f32 0.0, %v1866
      %v1868 = vpop.f32.mrf.mxu0
      %1869 = vmatprep.mubr.bf16.mxu0 0
      %1870 = vmatmul.mubr.bf16.gmra.mxu0 %v1712
      %v1871 = vpop.f32.mrf.mxu0
      %v1872 = vadd.f32 0.0, %v1871
      %v1873 = vpop.f32.mrf.mxu0
      %v1874 = vpop.f32.mrf.mxu0
      %v1875 = vadd.f32 0.0, %v1874
      %v1876 = vpop.f32.mrf.mxu0
      %1877 = vdwg.mxu0
      %v1878 = vadd.f32 %v1672, %v1752
      %v1879 = vadd.f32 %v1673, %v1755
      %v1880 = vadd.f32 %v1674, %v1760
      %v1881 = vadd.f32 %v1675, %v1763
      %v1882 = vadd.f32 %v1676, %v1768
      %v1883 = vadd.f32 %v1677, %v1771
      %v1884 = vadd.f32 %v1678, %v1776
      %v1885 = vadd.f32 %v1679, %v1779
      %v1886 = vadd.f32 %v1680, %v1784
      %v1887 = vadd.f32 %v1681, %v1787
      %v1888 = vadd.f32 %v1682, %v1792
      %v1889 = vadd.f32 %v1683, %v1795
      %v1890 = vadd.f32 %v1684, %v1800
      %v1891 = vadd.f32 %v1685, %v1803
      %v1892 = vadd.f32 %v1686, %v1808
      %v1893 = vadd.f32 %v1687, %v1811
      %v1894 = vadd.f32 %v1688, %v1816
      %v1895 = vadd.f32 %v1689, %v1819
      %v1896 = vadd.f32 %v1690, %v1824
      %v1897 = vadd.f32 %v1691, %v1827
      %v1898 = vadd.f32 %v1692, %v1832
      %v1899 = vadd.f32 %v1693, %v1835
      %v1900 = vadd.f32 %v1694, %v1840
      %v1901 = vadd.f32 %v1695, %v1843
      %v1902 = vadd.f32 %v1696, %v1848
      %v1903 = vadd.f32 %v1697, %v1851
      %v1904 = vadd.f32 %v1698, %v1856
      %v1905 = vadd.f32 %v1699, %v1859
      %v1906 = vadd.f32 %v1700, %v1864
      %v1907 = vadd.f32 %v1701, %v1867
      %v1908 = vadd.f32 %v1702, %v1872
      %v1909 = vadd.f32 %v1703, %v1875
      %v1911 = vshrl.u32 %v329, 16
      %v1913 = vrot.slane %v1911, 4
      %v1914 = vshll.u32 %v329, 16
      %v1916 = vrot.slane %v1914, 5
      %v1917 = vor.u32 %v1913, %v1916
      %v1918 = vrot.slane %v1917, 4
      %v1920 = vshll.u32 %v330, 16
      %v1922 = vrot.slane %v1920, 5
      %v1923 = vsel %vm338, %v1918, %v1922
      %v1924 = vshrl.u32 %v330, 16
      %v1926 = vrot.slane %v1924, 4
      %v1927 = vor.u32 %v1926, %v1922
      %v1928 = vrot.slane %v1927, 4
      %v1930 = vshll.u32 %v331, 16
      %v1932 = vrot.slane %v1930, 5
      %v1933 = vsel %vm338, %v1928, %v1932
      %s1934 = scalar_lea.vmem %s1, 8
      %v1935 = vld [vmem:[%s1934] sm:$0x3]
      %v1936 = vunpack.c.l.b16 %v1923
      %v1937 = vunpack.c.l.b16 %v1933
      %v1938 = vpack.c.b16 %v1937, %v1936
      %v1940 = vsel %vm773, %v1938, 0
      %v1943 = vsel %vm822, %v1935, 0
      %1945 = vmatprep.subr.bf16.mxu0 0
      %1946 = vmatpush1.bf16.msra.mxu0 0
      %1947 = vmatprep.subr.bf16.mxu0 0
      %1948 = vmatpush1.bf16.msra.mxu0 0
      %1949 = vmatprep.subr.bf16.mxu0 0
      %1950 = vmatpush1.bf16.msra.mxu0 0
      %1951 = vmatprep.subr.bf16.mxu0 0
      %1952 = vmatpush1.bf16.msra.mxu0 0
      %1953 = vmatprep.subr.bf16.mxu0 0
      %1954 = vmatpush1.bf16.msra.mxu0 0
      %1955 = vmatprep.subr.bf16.mxu0 0
      %1956 = vmatpush1.bf16.msra.mxu0 0
      %1957 = vmatprep.subr.bf16.mxu0 0
      %1958 = vmatpush1.bf16.msra.mxu0 0
      %1959 = vmatprep.subr.bf16.mxu0 0
      %1960 = vmatpush1.bf16.msra.mxu0 %v1943
      %1961 = vmatprep.subr.bf16.mxu0 0
      %1962 = vmatpush2.bf16.msra.mxu0 0
      %1963 = vmatprep.subr.bf16.mxu0 0
      %1964 = vmatpush2.bf16.msra.mxu0 0
      %1965 = vmatprep.subr.bf16.mxu0 0
      %1966 = vmatpush2.bf16.msra.mxu0 0
      %1967 = vmatprep.subr.bf16.mxu0 0
      %1968 = vmatpush2.bf16.msra.mxu0 0
      %1969 = vmatprep.subr.bf16.mxu0 0
      %1970 = vmatpush2.bf16.msra.mxu0 0
      %1971 = vmatprep.subr.bf16.mxu0 0
      %1972 = vmatpush2.bf16.msra.mxu0 0
      %1973 = vmatprep.subr.bf16.mxu0 0
      %1974 = vmatpush2.bf16.msra.mxu0 0
      %1975 = vmatprep.subr.bf16.mxu0 0
      %1976 = vmatpush2.bf16.msra.mxu0 0
      %1977 = vmatprep.mubr.bf16.mxu0 0
      %1978 = vmatmul.mubr.bf16.gmra.mxu0 %v778
      %v1979 = vpop.f32.mrf.mxu0
      %v1980 = vadd.f32 0.0, %v1979
      %v1981 = vpop.f32.mrf.mxu0
      %v1982 = vpop.f32.mrf.mxu0
      %v1983 = vadd.f32 0.0, %v1982
      %v1984 = vpop.f32.mrf.mxu0
      %1985 = vmatprep.mubr.bf16.mxu0 0
      %1986 = vmatmul.mubr.bf16.gmra.mxu0 %v781
      %v1987 = vpop.f32.mrf.mxu0
      %v1988 = vadd.f32 0.0, %v1987
      %v1989 = vpop.f32.mrf.mxu0
      %v1990 = vpop.f32.mrf.mxu0
      %v1991 = vadd.f32 0.0, %v1990
      %v1992 = vpop.f32.mrf.mxu0
      %1993 = vmatprep.mubr.bf16.mxu0 0
      %1994 = vmatmul.mubr.bf16.gmra.mxu0 %v784
      %v1995 = vpop.f32.mrf.mxu0
      %v1996 = vadd.f32 0.0, %v1995
      %v1997 = vpop.f32.mrf.mxu0
      %v1998 = vpop.f32.mrf.mxu0
      %v1999 = vadd.f32 0.0, %v1998
      %v2000 = vpop.f32.mrf.mxu0
      %2001 = vmatprep.mubr.bf16.mxu0 0
      %2002 = vmatmul.mubr.bf16.gmra.mxu0 %v787
      %v2003 = vpop.f32.mrf.mxu0
      %v2004 = vadd.f32 0.0, %v2003
      %v2005 = vpop.f32.mrf.mxu0
      %v2006 = vpop.f32.mrf.mxu0
      %v2007 = vadd.f32 0.0, %v2006
      %v2008 = vpop.f32.mrf.mxu0
      %2009 = vmatprep.mubr.bf16.mxu0 0
      %2010 = vmatmul.mubr.bf16.gmra.mxu0 %v790
      %v2011 = vpop.f32.mrf.mxu0
      %v2012 = vadd.f32 0.0, %v2011
      %v2013 = vpop.f32.mrf.mxu0
      %v2014 = vpop.f32.mrf.mxu0
      %v2015 = vadd.f32 0.0, %v2014
      %v2016 = vpop.f32.mrf.mxu0
      %2017 = vmatprep.mubr.bf16.mxu0 0
      %2018 = vmatmul.mubr.bf16.gmra.mxu0 %v793
      %v2019 = vpop.f32.mrf.mxu0
      %v2020 = vadd.f32 0.0, %v2019
      %v2021 = vpop.f32.mrf.mxu0
      %v2022 = vpop.f32.mrf.mxu0
      %v2023 = vadd.f32 0.0, %v2022
      %v2024 = vpop.f32.mrf.mxu0
      %2025 = vmatprep.mubr.bf16.mxu0 0
      %2026 = vmatmul.mubr.bf16.gmra.mxu0 %v796
      %v2027 = vpop.f32.mrf.mxu0
      %v2028 = vadd.f32 0.0, %v2027
      %v2029 = vpop.f32.mrf.mxu0
      %v2030 = vpop.f32.mrf.mxu0
      %v2031 = vadd.f32 0.0, %v2030
      %v2032 = vpop.f32.mrf.mxu0
      %2033 = vmatprep.mubr.bf16.mxu0 0
      %2034 = vmatmul.mubr.bf16.gmra.mxu0 %v799
      %v2035 = vpop.f32.mrf.mxu0
      %v2036 = vadd.f32 0.0, %v2035
      %v2037 = vpop.f32.mrf.mxu0
      %v2038 = vpop.f32.mrf.mxu0
      %v2039 = vadd.f32 0.0, %v2038
      %v2040 = vpop.f32.mrf.mxu0
      %2041 = vmatprep.mubr.bf16.mxu0 0
      %2042 = vmatmul.mubr.bf16.gmra.mxu0 %v802
      %v2043 = vpop.f32.mrf.mxu0
      %v2044 = vadd.f32 0.0, %v2043
      %v2045 = vpop.f32.mrf.mxu0
      %v2046 = vpop.f32.mrf.mxu0
      %v2047 = vadd.f32 0.0, %v2046
      %v2048 = vpop.f32.mrf.mxu0
      %2049 = vmatprep.mubr.bf16.mxu0 0
      %2050 = vmatmul.mubr.bf16.gmra.mxu0 %v805
      %v2051 = vpop.f32.mrf.mxu0
      %v2052 = vadd.f32 0.0, %v2051
      %v2053 = vpop.f32.mrf.mxu0
      %v2054 = vpop.f32.mrf.mxu0
      %v2055 = vadd.f32 0.0, %v2054
      %v2056 = vpop.f32.mrf.mxu0
      %2057 = vmatprep.mubr.bf16.mxu0 0
      %2058 = vmatmul.mubr.bf16.gmra.mxu0 %v808
      %v2059 = vpop.f32.mrf.mxu0
      %v2060 = vadd.f32 0.0, %v2059
      %v2061 = vpop.f32.mrf.mxu0
      %v2062 = vpop.f32.mrf.mxu0
      %v2063 = vadd.f32 0.0, %v2062
      %v2064 = vpop.f32.mrf.mxu0
      %2065 = vmatprep.mubr.bf16.mxu0 0
      %2066 = vmatmul.mubr.bf16.gmra.mxu0 %v811
      %v2067 = vpop.f32.mrf.mxu0
      %v2068 = vadd.f32 0.0, %v2067
      %v2069 = vpop.f32.mrf.mxu0
      %v2070 = vpop.f32.mrf.mxu0
      %v2071 = vadd.f32 0.0, %v2070
      %v2072 = vpop.f32.mrf.mxu0
      %2073 = vmatprep.mubr.bf16.mxu0 0
      %2074 = vmatmul.mubr.bf16.gmra.mxu0 %v814
      %v2075 = vpop.f32.mrf.mxu0
      %v2076 = vadd.f32 0.0, %v2075
      %v2077 = vpop.f32.mrf.mxu0
      %v2078 = vpop.f32.mrf.mxu0
      %v2079 = vadd.f32 0.0, %v2078
      %v2080 = vpop.f32.mrf.mxu0
      %2081 = vmatprep.mubr.bf16.mxu0 0
      %2082 = vmatmul.mubr.bf16.gmra.mxu0 %v817
      %v2083 = vpop.f32.mrf.mxu0
      %v2084 = vadd.f32 0.0, %v2083
      %v2085 = vpop.f32.mrf.mxu0
      %v2086 = vpop.f32.mrf.mxu0
      %v2087 = vadd.f32 0.0, %v2086
      %v2088 = vpop.f32.mrf.mxu0
      %2089 = vmatprep.mubr.bf16.mxu0 0
      %2090 = vmatmul.mubr.bf16.gmra.mxu0 %v820
      %v2091 = vpop.f32.mrf.mxu0
      %v2092 = vadd.f32 0.0, %v2091
      %v2093 = vpop.f32.mrf.mxu0
      %v2094 = vpop.f32.mrf.mxu0
      %v2095 = vadd.f32 0.0, %v2094
      %v2096 = vpop.f32.mrf.mxu0
      %2097 = vmatprep.mubr.bf16.mxu0 0
      %2098 = vmatmul.mubr.bf16.gmra.mxu0 %v1940
      %v2099 = vpop.f32.mrf.mxu0
      %v2100 = vadd.f32 0.0, %v2099
      %v2101 = vpop.f32.mrf.mxu0
      %v2102 = vpop.f32.mrf.mxu0
      %v2103 = vadd.f32 0.0, %v2102
      %v2104 = vpop.f32.mrf.mxu0
      %2105 = vdwg.mxu0
      %v2106 = vadd.f32 %v1878, %v1980
      %v2107 = vadd.f32 %v1879, %v1983
      %v2108 = vadd.f32 %v1880, %v1988
      %v2109 = vadd.f32 %v1881, %v1991
      %v2110 = vadd.f32 %v1882, %v1996
      %v2111 = vadd.f32 %v1883, %v1999
      %v2112 = vadd.f32 %v1884, %v2004
      %v2113 = vadd.f32 %v1885, %v2007
      %v2114 = vadd.f32 %v1886, %v2012
      %v2115 = vadd.f32 %v1887, %v2015
      %v2116 = vadd.f32 %v1888, %v2020
      %v2117 = vadd.f32 %v1889, %v2023
      %v2118 = vadd.f32 %v1890, %v2028
      %v2119 = vadd.f32 %v1891, %v2031
      %v2120 = vadd.f32 %v1892, %v2036
      %v2121 = vadd.f32 %v1893, %v2039
      %v2122 = vadd.f32 %v1894, %v2044
      %v2123 = vadd.f32 %v1895, %v2047
      %v2124 = vadd.f32 %v1896, %v2052
      %v2125 = vadd.f32 %v1897, %v2055
      %v2126 = vadd.f32 %v1898, %v2060
      %v2127 = vadd.f32 %v1899, %v2063
      %v2128 = vadd.f32 %v1900, %v2068
      %v2129 = vadd.f32 %v1901, %v2071
      %v2130 = vadd.f32 %v1902, %v2076
      %v2131 = vadd.f32 %v1903, %v2079
      %v2132 = vadd.f32 %v1904, %v2084
      %v2133 = vadd.f32 %v1905, %v2087
      %v2134 = vadd.f32 %v1906, %v2092
      %v2135 = vadd.f32 %v1907, %v2095
      %v2136 = vadd.f32 %v1908, %v2100
      %v2137 = vadd.f32 %v1909, %v2103
      %v2139 = vrot.slane %v329, 5
      %v2140 = vrot.slane %v2139, 4
      %v2141 = vrot.slane %v330, 5
      %v2142 = vsel %vm1297, %v2140, %v2141
      %v2143 = vrot.slane %v2141, 4
      %v2144 = vrot.slane %v331, 5
      %v2145 = vsel %vm1297, %v2143, %v2144
      %s2146 = scalar_lea.vmem %s1, 10
      %v2147 = vld [vmem:[%s2146] sm:$0x3]
      %v2148 = vunpack.c.l.b16 %v2142
      %v2149 = vunpack.c.l.b16 %v2145
      %v2150 = vpack.c.b16 %v2149, %v2148
      %v2152 = vsel %vm773, %v2150, 0
      %v2155 = vsel %vm822, %v2147, 0
      %2157 = vmatprep.subr.bf16.mxu0 0
      %2158 = vmatpush1.bf16.msra.mxu0 0
      %2159 = vmatprep.subr.bf16.mxu0 0
      %2160 = vmatpush1.bf16.msra.mxu0 0
      %2161 = vmatprep.subr.bf16.mxu0 0
      %2162 = vmatpush1.bf16.msra.mxu0 0
      %2163 = vmatprep.subr.bf16.mxu0 0
      %2164 = vmatpush1.bf16.msra.mxu0 0
      %2165 = vmatprep.subr.bf16.mxu0 0
      %2166 = vmatpush1.bf16.msra.mxu0 0
      %2167 = vmatprep.subr.bf16.mxu0 0
      %2168 = vmatpush1.bf16.msra.mxu0 0
      %2169 = vmatprep.subr.bf16.mxu0 0
      %2170 = vmatpush1.bf16.msra.mxu0 0
      %2171 = vmatprep.subr.bf16.mxu0 0
      %2172 = vmatpush1.bf16.msra.mxu0 %v2155
      %2173 = vmatprep.subr.bf16.mxu0 0
      %2174 = vmatpush2.bf16.msra.mxu0 0
      %2175 = vmatprep.subr.bf16.mxu0 0
      %2176 = vmatpush2.bf16.msra.mxu0 0
      %2177 = vmatprep.subr.bf16.mxu0 0
      %2178 = vmatpush2.bf16.msra.mxu0 0
      %2179 = vmatprep.subr.bf16.mxu0 0
      %2180 = vmatpush2.bf16.msra.mxu0 0
      %2181 = vmatprep.subr.bf16.mxu0 0
      %2182 = vmatpush2.bf16.msra.mxu0 0
      %2183 = vmatprep.subr.bf16.mxu0 0
      %2184 = vmatpush2.bf16.msra.mxu0 0
      %2185 = vmatprep.subr.bf16.mxu0 0
      %2186 = vmatpush2.bf16.msra.mxu0 0
      %2187 = vmatprep.subr.bf16.mxu0 0
      %2188 = vmatpush2.bf16.msra.mxu0 0
      %2189 = vmatprep.mubr.bf16.mxu0 0
      %2190 = vmatmul.mubr.bf16.gmra.mxu0 %v1464
      %v2191 = vpop.f32.mrf.mxu0
      %v2192 = vadd.f32 0.0, %v2191
      %v2193 = vpop.f32.mrf.mxu0
      %v2194 = vpop.f32.mrf.mxu0
      %v2195 = vadd.f32 0.0, %v2194
      %v2196 = vpop.f32.mrf.mxu0
      %2197 = vmatprep.mubr.bf16.mxu0 0
      %2198 = vmatmul.mubr.bf16.gmra.mxu0 %v1467
      %v2199 = vpop.f32.mrf.mxu0
      %v2200 = vadd.f32 0.0, %v2199
      %v2201 = vpop.f32.mrf.mxu0
      %v2202 = vpop.f32.mrf.mxu0
      %v2203 = vadd.f32 0.0, %v2202
      %v2204 = vpop.f32.mrf.mxu0
      %2205 = vmatprep.mubr.bf16.mxu0 0
      %2206 = vmatmul.mubr.bf16.gmra.mxu0 %v1470
      %v2207 = vpop.f32.mrf.mxu0
      %v2208 = vadd.f32 0.0, %v2207
      %v2209 = vpop.f32.mrf.mxu0
      %v2210 = vpop.f32.mrf.mxu0
      %v2211 = vadd.f32 0.0, %v2210
      %v2212 = vpop.f32.mrf.mxu0
      %2213 = vmatprep.mubr.bf16.mxu0 0
      %2214 = vmatmul.mubr.bf16.gmra.mxu0 %v1473
      %v2215 = vpop.f32.mrf.mxu0
      %v2216 = vadd.f32 0.0, %v2215
      %v2217 = vpop.f32.mrf.mxu0
      %v2218 = vpop.f32.mrf.mxu0
      %v2219 = vadd.f32 0.0, %v2218
      %v2220 = vpop.f32.mrf.mxu0
      %2221 = vmatprep.mubr.bf16.mxu0 0
      %2222 = vmatmul.mubr.bf16.gmra.mxu0 %v1476
      %v2223 = vpop.f32.mrf.mxu0
      %v2224 = vadd.f32 0.0, %v2223
      %v2225 = vpop.f32.mrf.mxu0
      %v2226 = vpop.f32.mrf.mxu0
      %v2227 = vadd.f32 0.0, %v2226
      %v2228 = vpop.f32.mrf.mxu0
      %2229 = vmatprep.mubr.bf16.mxu0 0
      %2230 = vmatmul.mubr.bf16.gmra.mxu0 %v1479
      %v2231 = vpop.f32.mrf.mxu0
      %v2232 = vadd.f32 0.0, %v2231
      %v2233 = vpop.f32.mrf.mxu0
      %v2234 = vpop.f32.mrf.mxu0
      %v2235 = vadd.f32 0.0, %v2234
      %v2236 = vpop.f32.mrf.mxu0
      %2237 = vmatprep.mubr.bf16.mxu0 0
      %2238 = vmatmul.mubr.bf16.gmra.mxu0 %v1482
      %v2239 = vpop.f32.mrf.mxu0
      %v2240 = vadd.f32 0.0, %v2239
      %v2241 = vpop.f32.mrf.mxu0
      %v2242 = vpop.f32.mrf.mxu0
      %v2243 = vadd.f32 0.0, %v2242
      %v2244 = vpop.f32.mrf.mxu0
      %2245 = vmatprep.mubr.bf16.mxu0 0
      %2246 = vmatmul.mubr.bf16.gmra.mxu0 %v1485
      %v2247 = vpop.f32.mrf.mxu0
      %v2248 = vadd.f32 0.0, %v2247
      %v2249 = vpop.f32.mrf.mxu0
      %v2250 = vpop.f32.mrf.mxu0
      %v2251 = vadd.f32 0.0, %v2250
      %v2252 = vpop.f32.mrf.mxu0
      %2253 = vmatprep.mubr.bf16.mxu0 0
      %2254 = vmatmul.mubr.bf16.gmra.mxu0 %v1488
      %v2255 = vpop.f32.mrf.mxu0
      %v2256 = vadd.f32 0.0, %v2255
      %v2257 = vpop.f32.mrf.mxu0
      %v2258 = vpop.f32.mrf.mxu0
      %v2259 = vadd.f32 0.0, %v2258
      %v2260 = vpop.f32.mrf.mxu0
      %2261 = vmatprep.mubr.bf16.mxu0 0
      %2262 = vmatmul.mubr.bf16.gmra.mxu0 %v1491
      %v2263 = vpop.f32.mrf.mxu0
      %v2264 = vadd.f32 0.0, %v2263
      %v2265 = vpop.f32.mrf.mxu0
      %v2266 = vpop.f32.mrf.mxu0
      %v2267 = vadd.f32 0.0, %v2266
      %v2268 = vpop.f32.mrf.mxu0
      %2269 = vmatprep.mubr.bf16.mxu0 0
      %2270 = vmatmul.mubr.bf16.gmra.mxu0 %v1494
      %v2271 = vpop.f32.mrf.mxu0
      %v2272 = vadd.f32 0.0, %v2271
      %v2273 = vpop.f32.mrf.mxu0
      %v2274 = vpop.f32.mrf.mxu0
      %v2275 = vadd.f32 0.0, %v2274
      %v2276 = vpop.f32.mrf.mxu0
      %2277 = vmatprep.mubr.bf16.mxu0 0
      %2278 = vmatmul.mubr.bf16.gmra.mxu0 %v1497
      %v2279 = vpop.f32.mrf.mxu0
      %v2280 = vadd.f32 0.0, %v2279
      %v2281 = vpop.f32.mrf.mxu0
      %v2282 = vpop.f32.mrf.mxu0
      %v2283 = vadd.f32 0.0, %v2282
      %v2284 = vpop.f32.mrf.mxu0
      %2285 = vmatprep.mubr.bf16.mxu0 0
      %2286 = vmatmul.mubr.bf16.gmra.mxu0 %v1500
      %v2287 = vpop.f32.mrf.mxu0
      %v2288 = vadd.f32 0.0, %v2287
      %v2289 = vpop.f32.mrf.mxu0
      %v2290 = vpop.f32.mrf.mxu0
      %v2291 = vadd.f32 0.0, %v2290
      %v2292 = vpop.f32.mrf.mxu0
      %2293 = vmatprep.mubr.bf16.mxu0 0
      %2294 = vmatmul.mubr.bf16.gmra.mxu0 %v1503
      %v2295 = vpop.f32.mrf.mxu0
      %v2296 = vadd.f32 0.0, %v2295
      %v2297 = vpop.f32.mrf.mxu0
      %v2298 = vpop.f32.mrf.mxu0
      %v2299 = vadd.f32 0.0, %v2298
      %v2300 = vpop.f32.mrf.mxu0
      %2301 = vmatprep.mubr.bf16.mxu0 0
      %2302 = vmatmul.mubr.bf16.gmra.mxu0 %v1506
      %v2303 = vpop.f32.mrf.mxu0
      %v2304 = vadd.f32 0.0, %v2303
      %v2305 = vpop.f32.mrf.mxu0
      %v2306 = vpop.f32.mrf.mxu0
      %v2307 = vadd.f32 0.0, %v2306
      %v2308 = vpop.f32.mrf.mxu0
      %2309 = vmatprep.mubr.bf16.mxu0 0
      %2310 = vmatmul.mubr.bf16.gmra.mxu0 %v2152
      %v2311 = vpop.f32.mrf.mxu0
      %v2312 = vadd.f32 0.0, %v2311
      %v2313 = vpop.f32.mrf.mxu0
      %v2314 = vpop.f32.mrf.mxu0
      %v2315 = vadd.f32 0.0, %v2314
      %v2316 = vpop.f32.mrf.mxu0
      %2317 = vdwg.mxu0
      %v2318 = vadd.f32 %v2106, %v2192
      %v2319 = vadd.f32 %v2107, %v2195
      %v2320 = vadd.f32 %v2108, %v2200
      %v2321 = vadd.f32 %v2109, %v2203
      %v2322 = vadd.f32 %v2110, %v2208
      %v2323 = vadd.f32 %v2111, %v2211
      %v2324 = vadd.f32 %v2112, %v2216
      %v2325 = vadd.f32 %v2113, %v2219
      %v2326 = vadd.f32 %v2114, %v2224
      %v2327 = vadd.f32 %v2115, %v2227
      %v2328 = vadd.f32 %v2116, %v2232
      %v2329 = vadd.f32 %v2117, %v2235
      %v2330 = vadd.f32 %v2118, %v2240
      %v2331 = vadd.f32 %v2119, %v2243
      %v2332 = vadd.f32 %v2120, %v2248
      %v2333 = vadd.f32 %v2121, %v2251
      %v2334 = vadd.f32 %v2122, %v2256
      %v2335 = vadd.f32 %v2123, %v2259
      %v2336 = vadd.f32 %v2124, %v2264
      %v2337 = vadd.f32 %v2125, %v2267
      %v2338 = vadd.f32 %v2126, %v2272
      %v2339 = vadd.f32 %v2127, %v2275
      %v2340 = vadd.f32 %v2128, %v2280
      %v2341 = vadd.f32 %v2129, %v2283
      %v2342 = vadd.f32 %v2130, %v2288
      %v2343 = vadd.f32 %v2131, %v2291
      %v2344 = vadd.f32 %v2132, %v2296
      %v2345 = vadd.f32 %v2133, %v2299
      %v2346 = vadd.f32 %v2134, %v2304
      %v2347 = vadd.f32 %v2135, %v2307
      %v2348 = vadd.f32 %v2136, %v2312
      %v2349 = vadd.f32 %v2137, %v2315
      %s2350 = scalar_lea.vmem %s1, 12
      %v2351 = vld [vmem:[%s2350] sm:$0x3]
      %v2354 = vunpack.c.l.b16 %v332
      %v2355 = vunpack.c.l.b16 %v333
      %v2356 = vpack.c.b16 %v2355, %v2354
      %v2358 = vsel %vm773, %v2356, 0
      %v2361 = vsel %vm822, %v2351, 0
      %2363 = vmatprep.subr.bf16.mxu0 0
      %2364 = vmatpush1.bf16.msra.mxu0 0
      %2365 = vmatprep.subr.bf16.mxu0 0
      %2366 = vmatpush1.bf16.msra.mxu0 0
      %2367 = vmatprep.subr.bf16.mxu0 0
      %2368 = vmatpush1.bf16.msra.mxu0 0
      %2369 = vmatprep.subr.bf16.mxu0 0
      %2370 = vmatpush1.bf16.msra.mxu0 0
      %2371 = vmatprep.subr.bf16.mxu0 0
      %2372 = vmatpush1.bf16.msra.mxu0 0
      %2373 = vmatprep.subr.bf16.mxu0 0
      %2374 = vmatpush1.bf16.msra.mxu0 0
      %2375 = vmatprep.subr.bf16.mxu0 0
      %2376 = vmatpush1.bf16.msra.mxu0 0
      %2377 = vmatprep.subr.bf16.mxu0 0
      %2378 = vmatpush1.bf16.msra.mxu0 %v2361
      %2379 = vmatprep.subr.bf16.mxu0 0
      %2380 = vmatpush2.bf16.msra.mxu0 0
      %2381 = vmatprep.subr.bf16.mxu0 0
      %2382 = vmatpush2.bf16.msra.mxu0 0
      %2383 = vmatprep.subr.bf16.mxu0 0
      %2384 = vmatpush2.bf16.msra.mxu0 0
      %2385 = vmatprep.subr.bf16.mxu0 0
      %2386 = vmatpush2.bf16.msra.mxu0 0
      %2387 = vmatprep.subr.bf16.mxu0 0
      %2388 = vmatpush2.bf16.msra.mxu0 0
      %2389 = vmatprep.subr.bf16.mxu0 0
      %2390 = vmatpush2.bf16.msra.mxu0 0
      %2391 = vmatprep.subr.bf16.mxu0 0
      %2392 = vmatpush2.bf16.msra.mxu0 0
      %2393 = vmatprep.subr.bf16.mxu0 0
      %2394 = vmatpush2.bf16.msra.mxu0 0
      %2395 = vmatprep.mubr.bf16.mxu0 0
      %2396 = vmatmul.mubr.bf16.gmra.mxu0 %v1074
      %v2397 = vpop.f32.mrf.mxu0
      %v2398 = vadd.f32 0.0, %v2397
      %v2399 = vpop.f32.mrf.mxu0
      %v2400 = vpop.f32.mrf.mxu0
      %v2401 = vadd.f32 0.0, %v2400
      %v2402 = vpop.f32.mrf.mxu0
      %2403 = vmatprep.mubr.bf16.mxu0 0
      %2404 = vmatmul.mubr.bf16.gmra.mxu0 %v1077
      %v2405 = vpop.f32.mrf.mxu0
      %v2406 = vadd.f32 0.0, %v2405
      %v2407 = vpop.f32.mrf.mxu0
      %v2408 = vpop.f32.mrf.mxu0
      %v2409 = vadd.f32 0.0, %v2408
      %v2410 = vpop.f32.mrf.mxu0
      %2411 = vmatprep.mubr.bf16.mxu0 0
      %2412 = vmatmul.mubr.bf16.gmra.mxu0 %v1080
      %v2413 = vpop.f32.mrf.mxu0
      %v2414 = vadd.f32 0.0, %v2413
      %v2415 = vpop.f32.mrf.mxu0
      %v2416 = vpop.f32.mrf.mxu0
      %v2417 = vadd.f32 0.0, %v2416
      %v2418 = vpop.f32.mrf.mxu0
      %2419 = vmatprep.mubr.bf16.mxu0 0
      %2420 = vmatmul.mubr.bf16.gmra.mxu0 %v1083
      %v2421 = vpop.f32.mrf.mxu0
      %v2422 = vadd.f32 0.0, %v2421
      %v2423 = vpop.f32.mrf.mxu0
      %v2424 = vpop.f32.mrf.mxu0
      %v2425 = vadd.f32 0.0, %v2424
      %v2426 = vpop.f32.mrf.mxu0
      %2427 = vmatprep.mubr.bf16.mxu0 0
      %2428 = vmatmul.mubr.bf16.gmra.mxu0 %v1086
      %v2429 = vpop.f32.mrf.mxu0
      %v2430 = vadd.f32 0.0, %v2429
      %v2431 = vpop.f32.mrf.mxu0
      %v2432 = vpop.f32.mrf.mxu0
      %v2433 = vadd.f32 0.0, %v2432
      %v2434 = vpop.f32.mrf.mxu0
      %2435 = vmatprep.mubr.bf16.mxu0 0
      %2436 = vmatmul.mubr.bf16.gmra.mxu0 %v1089
      %v2437 = vpop.f32.mrf.mxu0
      %v2438 = vadd.f32 0.0, %v2437
      %v2439 = vpop.f32.mrf.mxu0
      %v2440 = vpop.f32.mrf.mxu0
      %v2441 = vadd.f32 0.0, %v2440
      %v2442 = vpop.f32.mrf.mxu0
      %2443 = vmatprep.mubr.bf16.mxu0 0
      %2444 = vmatmul.mubr.bf16.gmra.mxu0 %v1092
      %v2445 = vpop.f32.mrf.mxu0
      %v2446 = vadd.f32 0.0, %v2445
      %v2447 = vpop.f32.mrf.mxu0
      %v2448 = vpop.f32.mrf.mxu0
      %v2449 = vadd.f32 0.0, %v2448
      %v2450 = vpop.f32.mrf.mxu0
      %2451 = vmatprep.mubr.bf16.mxu0 0
      %2452 = vmatmul.mubr.bf16.gmra.mxu0 %v1095
      %v2453 = vpop.f32.mrf.mxu0
      %v2454 = vadd.f32 0.0, %v2453
      %v2455 = vpop.f32.mrf.mxu0
      %v2456 = vpop.f32.mrf.mxu0
      %v2457 = vadd.f32 0.0, %v2456
      %v2458 = vpop.f32.mrf.mxu0
      %2459 = vmatprep.mubr.bf16.mxu0 0
      %2460 = vmatmul.mubr.bf16.gmra.mxu0 %v1098
      %v2461 = vpop.f32.mrf.mxu0
      %v2462 = vadd.f32 0.0, %v2461
      %v2463 = vpop.f32.mrf.mxu0
      %v2464 = vpop.f32.mrf.mxu0
      %v2465 = vadd.f32 0.0, %v2464
      %v2466 = vpop.f32.mrf.mxu0
      %2467 = vmatprep.mubr.bf16.mxu0 0
      %2468 = vmatmul.mubr.bf16.gmra.mxu0 %v1101
      %v2469 = vpop.f32.mrf.mxu0
      %v2470 = vadd.f32 0.0, %v2469
      %v2471 = vpop.f32.mrf.mxu0
      %v2472 = vpop.f32.mrf.mxu0
      %v2473 = vadd.f32 0.0, %v2472
      %v2474 = vpop.f32.mrf.mxu0
      %2475 = vmatprep.mubr.bf16.mxu0 0
      %2476 = vmatmul.mubr.bf16.gmra.mxu0 %v1104
      %v2477 = vpop.f32.mrf.mxu0
      %v2478 = vadd.f32 0.0, %v2477
      %v2479 = vpop.f32.mrf.mxu0
      %v2480 = vpop.f32.mrf.mxu0
      %v2481 = vadd.f32 0.0, %v2480
      %v2482 = vpop.f32.mrf.mxu0
      %2483 = vmatprep.mubr.bf16.mxu0 0
      %2484 = vmatmul.mubr.bf16.gmra.mxu0 %v1107
      %v2485 = vpop.f32.mrf.mxu0
      %v2486 = vadd.f32 0.0, %v2485
      %v2487 = vpop.f32.mrf.mxu0
      %v2488 = vpop.f32.mrf.mxu0
      %v2489 = vadd.f32 0.0, %v2488
      %v2490 = vpop.f32.mrf.mxu0
      %2491 = vmatprep.mubr.bf16.mxu0 0
      %2492 = vmatmul.mubr.bf16.gmra.mxu0 %v1110
      %v2493 = vpop.f32.mrf.mxu0
      %v2494 = vadd.f32 0.0, %v2493
      %v2495 = vpop.f32.mrf.mxu0
      %v2496 = vpop.f32.mrf.mxu0
      %v2497 = vadd.f32 0.0, %v2496
      %v2498 = vpop.f32.mrf.mxu0
      %2499 = vmatprep.mubr.bf16.mxu0 0
      %2500 = vmatmul.mubr.bf16.gmra.mxu0 %v1113
      %v2501 = vpop.f32.mrf.mxu0
      %v2502 = vadd.f32 0.0, %v2501
      %v2503 = vpop.f32.mrf.mxu0
      %v2504 = vpop.f32.mrf.mxu0
      %v2505 = vadd.f32 0.0, %v2504
      %v2506 = vpop.f32.mrf.mxu0
      %2507 = vmatprep.mubr.bf16.mxu0 0
      %2508 = vmatmul.mubr.bf16.gmra.mxu0 %v1712
      %v2509 = vpop.f32.mrf.mxu0
      %v2510 = vadd.f32 0.0, %v2509
      %v2511 = vpop.f32.mrf.mxu0
      %v2512 = vpop.f32.mrf.mxu0
      %v2513 = vadd.f32 0.0, %v2512
      %v2514 = vpop.f32.mrf.mxu0
      %2515 = vmatprep.mubr.bf16.mxu0 0
      %2516 = vmatmul.mubr.bf16.gmra.mxu0 %v2358
      %v2517 = vpop.f32.mrf.mxu0
      %v2518 = vadd.f32 0.0, %v2517
      %v2519 = vpop.f32.mrf.mxu0
      %v2520 = vpop.f32.mrf.mxu0
      %v2521 = vadd.f32 0.0, %v2520
      %v2522 = vpop.f32.mrf.mxu0
      %2523 = vdwg.mxu0
      %v2524 = vadd.f32 %v2318, %v2398
      %v2525 = vadd.f32 %v2319, %v2401
      %v2526 = vadd.f32 %v2320, %v2406
      %v2527 = vadd.f32 %v2321, %v2409
      %v2528 = vadd.f32 %v2322, %v2414
      %v2529 = vadd.f32 %v2323, %v2417
      %v2530 = vadd.f32 %v2324, %v2422
      %v2531 = vadd.f32 %v2325, %v2425
      %v2532 = vadd.f32 %v2326, %v2430
      %v2533 = vadd.f32 %v2327, %v2433
      %v2534 = vadd.f32 %v2328, %v2438
      %v2535 = vadd.f32 %v2329, %v2441
      %v2536 = vadd.f32 %v2330, %v2446
      %v2537 = vadd.f32 %v2331, %v2449
      %v2538 = vadd.f32 %v2332, %v2454
      %v2539 = vadd.f32 %v2333, %v2457
      %v2540 = vadd.f32 %v2334, %v2462
      %v2541 = vadd.f32 %v2335, %v2465
      %v2542 = vadd.f32 %v2336, %v2470
      %v2543 = vadd.f32 %v2337, %v2473
      %v2544 = vadd.f32 %v2338, %v2478
      %v2545 = vadd.f32 %v2339, %v2481
      %v2546 = vadd.f32 %v2340, %v2486
      %v2547 = vadd.f32 %v2341, %v2489
      %v2548 = vadd.f32 %v2342, %v2494
      %v2549 = vadd.f32 %v2343, %v2497
      %v2550 = vadd.f32 %v2344, %v2502
      %v2551 = vadd.f32 %v2345, %v2505
      %v2552 = vadd.f32 %v2346, %v2510
      %v2553 = vadd.f32 %v2347, %v2513
      %v2554 = vadd.f32 %v2348, %v2518
      %v2555 = vadd.f32 %v2349, %v2521
      %v2557 = vshrl.u32 %v332, 16
      %v2559 = vrot.slane %v2557, 4
      %v2560 = vshll.u32 %v332, 16
      %v2562 = vrot.slane %v2560, 5
      %v2563 = vor.u32 %v2559, %v2562
      %v2564 = vrot.slane %v2563, 4
      %v2566 = vshll.u32 %v333, 16
      %v2568 = vrot.slane %v2566, 5
      %v2569 = vsel %vm338, %v2564, %v2568
      %v2570 = vshrl.u32 %v333, 16
      %v2572 = vrot.slane %v2570, 4
      %v2573 = vor.u32 %v2572, %v2568
      %v2574 = vrot.slane %v2573, 4
      %v2576 = vshll.u32 %v334, 16
      %v2578 = vrot.slane %v2576, 5
      %v2579 = vsel %vm338, %v2574, %v2578
      %s2580 = scalar_lea.vmem %s1, 14
      %v2581 = vld [vmem:[%s2580] sm:$0x3]
      %v2582 = vunpack.c.l.b16 %v2569
      %v2583 = vunpack.c.l.b16 %v2579
      %v2584 = vpack.c.b16 %v2583, %v2582
      %v2586 = vsel %vm773, %v2584, 0
      %v2589 = vsel %vm822, %v2581, 0
      %2591 = vmatprep.subr.bf16.mxu0 0
      %2592 = vmatpush1.bf16.msra.mxu0 0
      %2593 = vmatprep.subr.bf16.mxu0 0
      %2594 = vmatpush1.bf16.msra.mxu0 0
      %2595 = vmatprep.subr.bf16.mxu0 0
      %2596 = vmatpush1.bf16.msra.mxu0 0
      %2597 = vmatprep.subr.bf16.mxu0 0
      %2598 = vmatpush1.bf16.msra.mxu0 0
      %2599 = vmatprep.subr.bf16.mxu0 0
      %2600 = vmatpush1.bf16.msra.mxu0 0
      %2601 = vmatprep.subr.bf16.mxu0 0
      %2602 = vmatpush1.bf16.msra.mxu0 0
      %2603 = vmatprep.subr.bf16.mxu0 0
      %2604 = vmatpush1.bf16.msra.mxu0 0
      %2605 = vmatprep.subr.bf16.mxu0 0
      %2606 = vmatpush1.bf16.msra.mxu0 %v2589
      %2607 = vmatprep.subr.bf16.mxu0 0
      %2608 = vmatpush2.bf16.msra.mxu0 0
      %2609 = vmatprep.subr.bf16.mxu0 0
      %2610 = vmatpush2.bf16.msra.mxu0 0
      %2611 = vmatprep.subr.bf16.mxu0 0
      %2612 = vmatpush2.bf16.msra.mxu0 0
      %2613 = vmatprep.subr.bf16.mxu0 0
      %2614 = vmatpush2.bf16.msra.mxu0 0
      %2615 = vmatprep.subr.bf16.mxu0 0
      %2616 = vmatpush2.bf16.msra.mxu0 0
      %2617 = vmatprep.subr.bf16.mxu0 0
      %2618 = vmatpush2.bf16.msra.mxu0 0
      %2619 = vmatprep.subr.bf16.mxu0 0
      %2620 = vmatpush2.bf16.msra.mxu0 0
      %2621 = vmatprep.subr.bf16.mxu0 0
      %2622 = vmatpush2.bf16.msra.mxu0 0
      %2623 = vmatprep.mubr.bf16.mxu0 0
      %2624 = vmatmul.mubr.bf16.gmra.mxu0 %v781
      %v2625 = vpop.f32.mrf.mxu0
      %v2626 = vadd.f32 0.0, %v2625
      %v2627 = vpop.f32.mrf.mxu0
      %v2628 = vpop.f32.mrf.mxu0
      %v2629 = vadd.f32 0.0, %v2628
      %v2630 = vpop.f32.mrf.mxu0
      %2631 = vmatprep.mubr.bf16.mxu0 0
      %2632 = vmatmul.mubr.bf16.gmra.mxu0 %v784
      %v2633 = vpop.f32.mrf.mxu0
      %v2634 = vadd.f32 0.0, %v2633
      %v2635 = vpop.f32.mrf.mxu0
      %v2636 = vpop.f32.mrf.mxu0
      %v2637 = vadd.f32 0.0, %v2636
      %v2638 = vpop.f32.mrf.mxu0
      %2639 = vmatprep.mubr.bf16.mxu0 0
      %2640 = vmatmul.mubr.bf16.gmra.mxu0 %v787
      %v2641 = vpop.f32.mrf.mxu0
      %v2642 = vadd.f32 0.0, %v2641
      %v2643 = vpop.f32.mrf.mxu0
      %v2644 = vpop.f32.mrf.mxu0
      %v2645 = vadd.f32 0.0, %v2644
      %v2646 = vpop.f32.mrf.mxu0
      %2647 = vmatprep.mubr.bf16.mxu0 0
      %2648 = vmatmul.mubr.bf16.gmra.mxu0 %v790
      %v2649 = vpop.f32.mrf.mxu0
      %v2650 = vadd.f32 0.0, %v2649
      %v2651 = vpop.f32.mrf.mxu0
      %v2652 = vpop.f32.mrf.mxu0
      %v2653 = vadd.f32 0.0, %v2652
      %v2654 = vpop.f32.mrf.mxu0
      %2655 = vmatprep.mubr.bf16.mxu0 0
      %2656 = vmatmul.mubr.bf16.gmra.mxu0 %v793
      %v2657 = vpop.f32.mrf.mxu0
      %v2658 = vadd.f32 0.0, %v2657
      %v2659 = vpop.f32.mrf.mxu0
      %v2660 = vpop.f32.mrf.mxu0
      %v2661 = vadd.f32 0.0, %v2660
      %v2662 = vpop.f32.mrf.mxu0
      %2663 = vmatprep.mubr.bf16.mxu0 0
      %2664 = vmatmul.mubr.bf16.gmra.mxu0 %v796
      %v2665 = vpop.f32.mrf.mxu0
      %v2666 = vadd.f32 0.0, %v2665
      %v2667 = vpop.f32.mrf.mxu0
      %v2668 = vpop.f32.mrf.mxu0
      %v2669 = vadd.f32 0.0, %v2668
      %v2670 = vpop.f32.mrf.mxu0
      %2671 = vmatprep.mubr.bf16.mxu0 0
      %2672 = vmatmul.mubr.bf16.gmra.mxu0 %v799
      %v2673 = vpop.f32.mrf.mxu0
      %v2674 = vadd.f32 0.0, %v2673
      %v2675 = vpop.f32.mrf.mxu0
      %v2676 = vpop.f32.mrf.mxu0
      %v2677 = vadd.f32 0.0, %v2676
      %v2678 = vpop.f32.mrf.mxu0
      %2679 = vmatprep.mubr.bf16.mxu0 0
      %2680 = vmatmul.mubr.bf16.gmra.mxu0 %v802
      %v2681 = vpop.f32.mrf.mxu0
      %v2682 = vadd.f32 0.0, %v2681
      %v2683 = vpop.f32.mrf.mxu0
      %v2684 = vpop.f32.mrf.mxu0
      %v2685 = vadd.f32 0.0, %v2684
      %v2686 = vpop.f32.mrf.mxu0
      %2687 = vmatprep.mubr.bf16.mxu0 0
      %2688 = vmatmul.mubr.bf16.gmra.mxu0 %v805
      %v2689 = vpop.f32.mrf.mxu0
      %v2690 = vadd.f32 0.0, %v2689
      %v2691 = vpop.f32.mrf.mxu0
      %v2692 = vpop.f32.mrf.mxu0
      %v2693 = vadd.f32 0.0, %v2692
      %v2694 = vpop.f32.mrf.mxu0
      %2695 = vmatprep.mubr.bf16.mxu0 0
      %2696 = vmatmul.mubr.bf16.gmra.mxu0 %v808
      %v2697 = vpop.f32.mrf.mxu0
      %v2698 = vadd.f32 0.0, %v2697
      %v2699 = vpop.f32.mrf.mxu0
      %v2700 = vpop.f32.mrf.mxu0
      %v2701 = vadd.f32 0.0, %v2700
      %v2702 = vpop.f32.mrf.mxu0
      %2703 = vmatprep.mubr.bf16.mxu0 0
      %2704 = vmatmul.mubr.bf16.gmra.mxu0 %v811
      %v2705 = vpop.f32.mrf.mxu0
      %v2706 = vadd.f32 0.0, %v2705
      %v2707 = vpop.f32.mrf.mxu0
      %v2708 = vpop.f32.mrf.mxu0
      %v2709 = vadd.f32 0.0, %v2708
      %v2710 = vpop.f32.mrf.mxu0
      %2711 = vmatprep.mubr.bf16.mxu0 0
      %2712 = vmatmul.mubr.bf16.gmra.mxu0 %v814
      %v2713 = vpop.f32.mrf.mxu0
      %v2714 = vadd.f32 0.0, %v2713
      %v2715 = vpop.f32.mrf.mxu0
      %v2716 = vpop.f32.mrf.mxu0
      %v2717 = vadd.f32 0.0, %v2716
      %v2718 = vpop.f32.mrf.mxu0
      %2719 = vmatprep.mubr.bf16.mxu0 0
      %2720 = vmatmul.mubr.bf16.gmra.mxu0 %v817
      %v2721 = vpop.f32.mrf.mxu0
      %v2722 = vadd.f32 0.0, %v2721
      %v2723 = vpop.f32.mrf.mxu0
      %v2724 = vpop.f32.mrf.mxu0
      %v2725 = vadd.f32 0.0, %v2724
      %v2726 = vpop.f32.mrf.mxu0
      %2727 = vmatprep.mubr.bf16.mxu0 0
      %2728 = vmatmul.mubr.bf16.gmra.mxu0 %v820
      %v2729 = vpop.f32.mrf.mxu0
      %v2730 = vadd.f32 0.0, %v2729
      %v2731 = vpop.f32.mrf.mxu0
      %v2732 = vpop.f32.mrf.mxu0
      %v2733 = vadd.f32 0.0, %v2732
      %v2734 = vpop.f32.mrf.mxu0
      %2735 = vmatprep.mubr.bf16.mxu0 0
      %2736 = vmatmul.mubr.bf16.gmra.mxu0 %v1940
      %v2737 = vpop.f32.mrf.mxu0
      %v2738 = vadd.f32 0.0, %v2737
      %v2739 = vpop.f32.mrf.mxu0
      %v2740 = vpop.f32.mrf.mxu0
      %v2741 = vadd.f32 0.0, %v2740
      %v2742 = vpop.f32.mrf.mxu0
      %2743 = vmatprep.mubr.bf16.mxu0 0
      %2744 = vmatmul.mubr.bf16.gmra.mxu0 %v2586
      %v2745 = vpop.f32.mrf.mxu0
      %v2746 = vadd.f32 0.0, %v2745
      %v2747 = vpop.f32.mrf.mxu0
      %v2748 = vpop.f32.mrf.mxu0
      %v2749 = vadd.f32 0.0, %v2748
      %v2750 = vpop.f32.mrf.mxu0
      %2751 = vdwg.mxu0
      %v2752 = vadd.f32 %v2524, %v2626
      %v2753 = vadd.f32 %v2525, %v2629
      %v2754 = vadd.f32 %v2526, %v2634
      %v2755 = vadd.f32 %v2527, %v2637
      %v2756 = vadd.f32 %v2528, %v2642
      %v2757 = vadd.f32 %v2529, %v2645
      %v2758 = vadd.f32 %v2530, %v2650
      %v2759 = vadd.f32 %v2531, %v2653
      %v2760 = vadd.f32 %v2532, %v2658
      %v2761 = vadd.f32 %v2533, %v2661
      %v2762 = vadd.f32 %v2534, %v2666
      %v2763 = vadd.f32 %v2535, %v2669
      %v2764 = vadd.f32 %v2536, %v2674
      %v2765 = vadd.f32 %v2537, %v2677
      %v2766 = vadd.f32 %v2538, %v2682
      %v2767 = vadd.f32 %v2539, %v2685
      %v2768 = vadd.f32 %v2540, %v2690
      %v2769 = vadd.f32 %v2541, %v2693
      %v2770 = vadd.f32 %v2542, %v2698
      %v2771 = vadd.f32 %v2543, %v2701
      %v2772 = vadd.f32 %v2544, %v2706
      %v2773 = vadd.f32 %v2545, %v2709
      %v2774 = vadd.f32 %v2546, %v2714
      %v2775 = vadd.f32 %v2547, %v2717
      %v2776 = vadd.f32 %v2548, %v2722
      %v2777 = vadd.f32 %v2549, %v2725
      %v2778 = vadd.f32 %v2550, %v2730
      %v2779 = vadd.f32 %v2551, %v2733
      %v2780 = vadd.f32 %v2552, %v2738
      %v2781 = vadd.f32 %v2553, %v2741
      %v2782 = vadd.f32 %v2554, %v2746
      %v2783 = vadd.f32 %v2555, %v2749
      %v2785 = vrot.slane %v332, 5
      %v2786 = vrot.slane %v2785, 4
      %v2787 = vrot.slane %v333, 5
      %v2788 = vsel %vm1297, %v2786, %v2787
      %v2789 = vrot.slane %v2787, 4
      %v2790 = vrot.slane %v334, 5
      %v2791 = vsel %vm1297, %v2789, %v2790
      %s2792 = scalar_lea.vmem %s1, 16
      %v2793 = vld [vmem:[%s2792] sm:$0x3]
      %v2794 = vunpack.c.l.b16 %v2788
      %v2795 = vunpack.c.l.b16 %v2791
      %v2796 = vpack.c.b16 %v2795, %v2794
      %v2798 = vsel %vm773, %v2796, 0
      %v2801 = vsel %vm822, %v2793, 0
      %2803 = vmatprep.subr.bf16.mxu0 0
      %2804 = vmatpush1.bf16.msra.mxu0 0
      %2805 = vmatprep.subr.bf16.mxu0 0
      %2806 = vmatpush1.bf16.msra.mxu0 0
      %2807 = vmatprep.subr.bf16.mxu0 0
      %2808 = vmatpush1.bf16.msra.mxu0 0
      %2809 = vmatprep.subr.bf16.mxu0 0
      %2810 = vmatpush1.bf16.msra.mxu0 0
      %2811 = vmatprep.subr.bf16.mxu0 0
      %2812 = vmatpush1.bf16.msra.mxu0 0
      %2813 = vmatprep.subr.bf16.mxu0 0
      %2814 = vmatpush1.bf16.msra.mxu0 0
      %2815 = vmatprep.subr.bf16.mxu0 0
      %2816 = vmatpush1.bf16.msra.mxu0 0
      %2817 = vmatprep.subr.bf16.mxu0 0
      %2818 = vmatpush1.bf16.msra.mxu0 %v2801
      %2819 = vmatprep.subr.bf16.mxu0 0
      %2820 = vmatpush2.bf16.msra.mxu0 0
      %2821 = vmatprep.subr.bf16.mxu0 0
      %2822 = vmatpush2.bf16.msra.mxu0 0
      %2823 = vmatprep.subr.bf16.mxu0 0
      %2824 = vmatpush2.bf16.msra.mxu0 0
      %2825 = vmatprep.subr.bf16.mxu0 0
      %2826 = vmatpush2.bf16.msra.mxu0 0
      %2827 = vmatprep.subr.bf16.mxu0 0
      %2828 = vmatpush2.bf16.msra.mxu0 0
      %2829 = vmatprep.subr.bf16.mxu0 0
      %2830 = vmatpush2.bf16.msra.mxu0 0
      %2831 = vmatprep.subr.bf16.mxu0 0
      %2832 = vmatpush2.bf16.msra.mxu0 0
      %2833 = vmatprep.subr.bf16.mxu0 0
      %2834 = vmatpush2.bf16.msra.mxu0 0
      %2835 = vmatprep.mubr.bf16.mxu0 0
      %2836 = vmatmul.mubr.bf16.gmra.mxu0 %v1467
      %v2837 = vpop.f32.mrf.mxu0
      %v2838 = vadd.f32 0.0, %v2837
      %v2839 = vpop.f32.mrf.mxu0
      %v2840 = vpop.f32.mrf.mxu0
      %v2841 = vadd.f32 0.0, %v2840
      %v2842 = vpop.f32.mrf.mxu0
      %2843 = vmatprep.mubr.bf16.mxu0 0
      %2844 = vmatmul.mubr.bf16.gmra.mxu0 %v1470
      %v2845 = vpop.f32.mrf.mxu0
      %v2846 = vadd.f32 0.0, %v2845
      %v2847 = vpop.f32.mrf.mxu0
      %v2848 = vpop.f32.mrf.mxu0
      %v2849 = vadd.f32 0.0, %v2848
      %v2850 = vpop.f32.mrf.mxu0
      %2851 = vmatprep.mubr.bf16.mxu0 0
      %2852 = vmatmul.mubr.bf16.gmra.mxu0 %v1473
      %v2853 = vpop.f32.mrf.mxu0
      %v2854 = vadd.f32 0.0, %v2853
      %v2855 = vpop.f32.mrf.mxu0
      %v2856 = vpop.f32.mrf.mxu0
      %v2857 = vadd.f32 0.0, %v2856
      %v2858 = vpop.f32.mrf.mxu0
      %2859 = vmatprep.mubr.bf16.mxu0 0
      %2860 = vmatmul.mubr.bf16.gmra.mxu0 %v1476
      %v2861 = vpop.f32.mrf.mxu0
      %v2862 = vadd.f32 0.0, %v2861
      %v2863 = vpop.f32.mrf.mxu0
      %v2864 = vpop.f32.mrf.mxu0
      %v2865 = vadd.f32 0.0, %v2864
      %v2866 = vpop.f32.mrf.mxu0
      %2867 = vmatprep.mubr.bf16.mxu0 0
      %2868 = vmatmul.mubr.bf16.gmra.mxu0 %v1479
      %v2869 = vpop.f32.mrf.mxu0
      %v2870 = vadd.f32 0.0, %v2869
      %v2871 = vpop.f32.mrf.mxu0
      %v2872 = vpop.f32.mrf.mxu0
      %v2873 = vadd.f32 0.0, %v2872
      %v2874 = vpop.f32.mrf.mxu0
      %2875 = vmatprep.mubr.bf16.mxu0 0
      %2876 = vmatmul.mubr.bf16.gmra.mxu0 %v1482
      %v2877 = vpop.f32.mrf.mxu0
      %v2878 = vadd.f32 0.0, %v2877
      %v2879 = vpop.f32.mrf.mxu0
      %v2880 = vpop.f32.mrf.mxu0
      %v2881 = vadd.f32 0.0, %v2880
      %v2882 = vpop.f32.mrf.mxu0
      %2883 = vmatprep.mubr.bf16.mxu0 0
      %2884 = vmatmul.mubr.bf16.gmra.mxu0 %v1485
      %v2885 = vpop.f32.mrf.mxu0
      %v2886 = vadd.f32 0.0, %v2885
      %v2887 = vpop.f32.mrf.mxu0
      %v2888 = vpop.f32.mrf.mxu0
      %v2889 = vadd.f32 0.0, %v2888
      %v2890 = vpop.f32.mrf.mxu0
      %2891 = vmatprep.mubr.bf16.mxu0 0
      %2892 = vmatmul.mubr.bf16.gmra.mxu0 %v1488
      %v2893 = vpop.f32.mrf.mxu0
      %v2894 = vadd.f32 0.0, %v2893
      %v2895 = vpop.f32.mrf.mxu0
      %v2896 = vpop.f32.mrf.mxu0
      %v2897 = vadd.f32 0.0, %v2896
      %v2898 = vpop.f32.mrf.mxu0
      %2899 = vmatprep.mubr.bf16.mxu0 0
      %2900 = vmatmul.mubr.bf16.gmra.mxu0 %v1491
      %v2901 = vpop.f32.mrf.mxu0
      %v2902 = vadd.f32 0.0, %v2901
      %v2903 = vpop.f32.mrf.mxu0
      %v2904 = vpop.f32.mrf.mxu0
      %v2905 = vadd.f32 0.0, %v2904
      %v2906 = vpop.f32.mrf.mxu0
      %2907 = vmatprep.mubr.bf16.mxu0 0
      %2908 = vmatmul.mubr.bf16.gmra.mxu0 %v1494
      %v2909 = vpop.f32.mrf.mxu0
      %v2910 = vadd.f32 0.0, %v2909
      %v2911 = vpop.f32.mrf.mxu0
      %v2912 = vpop.f32.mrf.mxu0
      %v2913 = vadd.f32 0.0, %v2912
      %v2914 = vpop.f32.mrf.mxu0
      %2915 = vmatprep.mubr.bf16.mxu0 0
      %2916 = vmatmul.mubr.bf16.gmra.mxu0 %v1497
      %v2917 = vpop.f32.mrf.mxu0
      %v2918 = vadd.f32 0.0, %v2917
      %v2919 = vpop.f32.mrf.mxu0
      %v2920 = vpop.f32.mrf.mxu0
      %v2921 = vadd.f32 0.0, %v2920
      %v2922 = vpop.f32.mrf.mxu0
      %2923 = vmatprep.mubr.bf16.mxu0 0
      %2924 = vmatmul.mubr.bf16.gmra.mxu0 %v1500
      %v2925 = vpop.f32.mrf.mxu0
      %v2926 = vadd.f32 0.0, %v2925
      %v2927 = vpop.f32.mrf.mxu0
      %v2928 = vpop.f32.mrf.mxu0
      %v2929 = vadd.f32 0.0, %v2928
      %v2930 = vpop.f32.mrf.mxu0
      %2931 = vmatprep.mubr.bf16.mxu0 0
      %2932 = vmatmul.mubr.bf16.gmra.mxu0 %v1503
      %v2933 = vpop.f32.mrf.mxu0
      %v2934 = vadd.f32 0.0, %v2933
      %v2935 = vpop.f32.mrf.mxu0
      %v2936 = vpop.f32.mrf.mxu0
      %v2937 = vadd.f32 0.0, %v2936
      %v2938 = vpop.f32.mrf.mxu0
      %2939 = vmatprep.mubr.bf16.mxu0 0
      %2940 = vmatmul.mubr.bf16.gmra.mxu0 %v1506
      %v2941 = vpop.f32.mrf.mxu0
      %v2942 = vadd.f32 0.0, %v2941
      %v2943 = vpop.f32.mrf.mxu0
      %v2944 = vpop.f32.mrf.mxu0
      %v2945 = vadd.f32 0.0, %v2944
      %v2946 = vpop.f32.mrf.mxu0
      %2947 = vmatprep.mubr.bf16.mxu0 0
      %2948 = vmatmul.mubr.bf16.gmra.mxu0 %v2152
      %v2949 = vpop.f32.mrf.mxu0
      %v2950 = vadd.f32 0.0, %v2949
      %v2951 = vpop.f32.mrf.mxu0
      %v2952 = vpop.f32.mrf.mxu0
      %v2953 = vadd.f32 0.0, %v2952
      %v2954 = vpop.f32.mrf.mxu0
      %2955 = vmatprep.mubr.bf16.mxu0 0
      %2956 = vmatmul.mubr.bf16.gmra.mxu0 %v2798
      %v2957 = vpop.f32.mrf.mxu0
      %v2958 = vadd.f32 0.0, %v2957
      %v2959 = vpop.f32.mrf.mxu0
      %v2960 = vpop.f32.mrf.mxu0
      %v2961 = vadd.f32 0.0, %v2960
      %v2962 = vpop.f32.mrf.mxu0
      %2963 = vdwg.mxu0
      %v2964 = vadd.f32 %v2752, %v2838
      %v2965 = vadd.f32 %v2753, %v2841
      %v2966 = vadd.f32 %v2754, %v2846
      %v2967 = vadd.f32 %v2755, %v2849
      %v2968 = vadd.f32 %v2756, %v2854
      %v2969 = vadd.f32 %v2757, %v2857
      %v2970 = vadd.f32 %v2758, %v2862
      %v2971 = vadd.f32 %v2759, %v2865
      %v2972 = vadd.f32 %v2760, %v2870
      %v2973 = vadd.f32 %v2761, %v2873
      %v2974 = vadd.f32 %v2762, %v2878
      %v2975 = vadd.f32 %v2763, %v2881
      %v2976 = vadd.f32 %v2764, %v2886
      %v2977 = vadd.f32 %v2765, %v2889
      %v2978 = vadd.f32 %v2766, %v2894
      %v2979 = vadd.f32 %v2767, %v2897
      %v2980 = vadd.f32 %v2768, %v2902
      %v2981 = vadd.f32 %v2769, %v2905
      %v2982 = vadd.f32 %v2770, %v2910
      %v2983 = vadd.f32 %v2771, %v2913
      %v2984 = vadd.f32 %v2772, %v2918
      %v2985 = vadd.f32 %v2773, %v2921
      %v2986 = vadd.f32 %v2774, %v2926
      %v2987 = vadd.f32 %v2775, %v2929
      %v2988 = vadd.f32 %v2776, %v2934
      %v2989 = vadd.f32 %v2777, %v2937
      %v2990 = vadd.f32 %v2778, %v2942
      %v2991 = vadd.f32 %v2779, %v2945
      %v2992 = vadd.f32 %v2780, %v2950
      %v2993 = vadd.f32 %v2781, %v2953
      %v2994 = vadd.f32 %v2782, %v2958
      %v2995 = vadd.f32 %v2783, %v2961
      %v2996 = vld [vmem:[%s2] sm:$0x1]
      %v2998 = vlaneseq
      %v2999 = vshrl.u32 %v2998, 7
      %v3000 = vsub.s32 0, %v2999
      %v3001 = vrot.slane %v2996, %v3000
      %v3003 = vmul.f32 %v2964, %v3001
      %v3004 = vmul.f32 %v2965, %v3001
      %v3005 = vmul.f32 %v2966, %v3001
      %v3006 = vmul.f32 %v2967, %v3001
      %v3007 = vmul.f32 %v2968, %v3001
      %v3008 = vmul.f32 %v2969, %v3001
      %v3009 = vmul.f32 %v2970, %v3001
      %v3010 = vmul.f32 %v2971, %v3001
      %v3011 = vmul.f32 %v2972, %v3001
      %v3012 = vmul.f32 %v2973, %v3001
      %v3013 = vmul.f32 %v2974, %v3001
      %v3014 = vmul.f32 %v2975, %v3001
      %v3015 = vmul.f32 %v2976, %v3001
      %v3016 = vmul.f32 %v2977, %v3001
      %v3017 = vmul.f32 %v2978, %v3001
      %v3018 = vmul.f32 %v2979, %v3001
      %v3019 = vmul.f32 %v2980, %v3001
      %v3020 = vmul.f32 %v2981, %v3001
      %v3021 = vmul.f32 %v2982, %v3001
      %v3022 = vmul.f32 %v2983, %v3001
      %v3023 = vmul.f32 %v2984, %v3001
      %v3024 = vmul.f32 %v2985, %v3001
      %v3025 = vmul.f32 %v2986, %v3001
      %v3026 = vmul.f32 %v2987, %v3001
      %v3027 = vmul.f32 %v2988, %v3001
      %v3028 = vmul.f32 %v2989, %v3001
      %v3029 = vmul.f32 %v2990, %v3001
      %v3030 = vmul.f32 %v2991, %v3001
      %v3031 = vmul.f32 %v2992, %v3001
      %v3032 = vmul.f32 %v2993, %v3001
      %v3033 = vmul.f32 %v2994, %v3001
      %v3034 = vmul.f32 %v2995, %v3001
      %v3035 = vld [vmem:[%s3] sm:$0x1]
      %v3037 = vlaneseq
      %v3038 = vshrl.u32 %v3037, 7
      %v3039 = vsub.s32 0, %v3038
      %v3040 = vrot.slane %v3035, %v3039
      %v3042 = vadd.f32 %v3003, %v3040
      %v3043 = vadd.f32 %v3004, %v3040
      %v3044 = vadd.f32 %v3005, %v3040
      %v3045 = vadd.f32 %v3006, %v3040
      %v3046 = vadd.f32 %v3007, %v3040
      %v3047 = vadd.f32 %v3008, %v3040
      %v3048 = vadd.f32 %v3009, %v3040
      %v3049 = vadd.f32 %v3010, %v3040
      %v3050 = vadd.f32 %v3011, %v3040
      %v3051 = vadd.f32 %v3012, %v3040
      %v3052 = vadd.f32 %v3013, %v3040
      %v3053 = vadd.f32 %v3014, %v3040
      %v3054 = vadd.f32 %v3015, %v3040
      %v3055 = vadd.f32 %v3016, %v3040
      %v3056 = vadd.f32 %v3017, %v3040
      %v3057 = vadd.f32 %v3018, %v3040
      %v3058 = vadd.f32 %v3019, %v3040
      %v3059 = vadd.f32 %v3020, %v3040
      %v3060 = vadd.f32 %v3021, %v3040
      %v3061 = vadd.f32 %v3022, %v3040
      %v3062 = vadd.f32 %v3023, %v3040
      %v3063 = vadd.f32 %v3024, %v3040
      %v3064 = vadd.f32 %v3025, %v3040
      %v3065 = vadd.f32 %v3026, %v3040
      %v3066 = vadd.f32 %v3027, %v3040
      %v3067 = vadd.f32 %v3028, %v3040
      %v3068 = vadd.f32 %v3029, %v3040
      %v3069 = vadd.f32 %v3030, %v3040
      %v3070 = vadd.f32 %v3031, %v3040
      %v3071 = vadd.f32 %v3032, %v3040
      %v3072 = vadd.f32 %v3033, %v3040
      %v3073 = vadd.f32 %v3034, %v3040
      %vm3074 = vcmp.ge.f32.partialorder %v3042, 0.0
      %vm3075 = vcmp.ge.f32.partialorder %v3043, 0.0
      %vm3076 = vcmp.ge.f32.partialorder %v3044, 0.0
      %vm3077 = vcmp.ge.f32.partialorder %v3045, 0.0
      %vm3078 = vcmp.ge.f32.partialorder %v3046, 0.0
      %vm3079 = vcmp.ge.f32.partialorder %v3047, 0.0
      %vm3080 = vcmp.ge.f32.partialorder %v3048, 0.0
      %vm3081 = vcmp.ge.f32.partialorder %v3049, 0.0
      %vm3082 = vcmp.ge.f32.partialorder %v3050, 0.0
      %vm3083 = vcmp.ge.f32.partialorder %v3051, 0.0
      %vm3084 = vcmp.ge.f32.partialorder %v3052, 0.0
      %vm3085 = vcmp.ge.f32.partialorder %v3053, 0.0
      %vm3086 = vcmp.ge.f32.partialorder %v3054, 0.0
      %vm3087 = vcmp.ge.f32.partialorder %v3055, 0.0
      %vm3088 = vcmp.ge.f32.partialorder %v3056, 0.0
      %vm3089 = vcmp.ge.f32.partialorder %v3057, 0.0
      %vm3090 = vcmp.ge.f32.partialorder %v3058, 0.0
      %vm3091 = vcmp.ge.f32.partialorder %v3059, 0.0
      %vm3092 = vcmp.ge.f32.partialorder %v3060, 0.0
      %vm3093 = vcmp.ge.f32.partialorder %v3061, 0.0
      %vm3094 = vcmp.ge.f32.partialorder %v3062, 0.0
      %vm3095 = vcmp.ge.f32.partialorder %v3063, 0.0
      %vm3096 = vcmp.ge.f32.partialorder %v3064, 0.0
      %vm3097 = vcmp.ge.f32.partialorder %v3065, 0.0
      %vm3098 = vcmp.ge.f32.partialorder %v3066, 0.0
      %vm3099 = vcmp.ge.f32.partialorder %v3067, 0.0
      %vm3100 = vcmp.ge.f32.partialorder %v3068, 0.0
      %vm3101 = vcmp.ge.f32.partialorder %v3069, 0.0
      %vm3102 = vcmp.ge.f32.partialorder %v3070, 0.0
      %vm3103 = vcmp.ge.f32.partialorder %v3071, 0.0
      %vm3104 = vcmp.ge.f32.partialorder %v3072, 0.0
      %vm3105 = vcmp.ge.f32.partialorder %v3073, 0.0
      %v3106 = vmul.f32 %v3042, 0.1
      %v3107 = vmul.f32 %v3043, 0.1
      %v3108 = vmul.f32 %v3044, 0.1
      %v3109 = vmul.f32 %v3045, 0.1
      %v3110 = vmul.f32 %v3046, 0.1
      %v3111 = vmul.f32 %v3047, 0.1
      %v3112 = vmul.f32 %v3048, 0.1
      %v3113 = vmul.f32 %v3049, 0.1
      %v3114 = vmul.f32 %v3050, 0.1
      %v3115 = vmul.f32 %v3051, 0.1
      %v3116 = vmul.f32 %v3052, 0.1
      %v3117 = vmul.f32 %v3053, 0.1
      %v3118 = vmul.f32 %v3054, 0.1
      %v3119 = vmul.f32 %v3055, 0.1
      %v3120 = vmul.f32 %v3056, 0.1
      %v3121 = vmul.f32 %v3057, 0.1
      %v3122 = vmul.f32 %v3058, 0.1
      %v3123 = vmul.f32 %v3059, 0.1
      %v3124 = vmul.f32 %v3060, 0.1
      %v3125 = vmul.f32 %v3061, 0.1
      %v3126 = vmul.f32 %v3062, 0.1
      %v3127 = vmul.f32 %v3063, 0.1
      %v3128 = vmul.f32 %v3064, 0.1
      %v3129 = vmul.f32 %v3065, 0.1
      %v3130 = vmul.f32 %v3066, 0.1
      %v3131 = vmul.f32 %v3067, 0.1
      %v3132 = vmul.f32 %v3068, 0.1
      %v3133 = vmul.f32 %v3069, 0.1
      %v3134 = vmul.f32 %v3070, 0.1
      %v3135 = vmul.f32 %v3071, 0.1
      %v3136 = vmul.f32 %v3072, 0.1
      %v3137 = vmul.f32 %v3073, 0.1
      %v3138 = vsel %vm3074, %v3042, %v3106
      %v3139 = vsel %vm3075, %v3043, %v3107
      %v3140 = vsel %vm3076, %v3044, %v3108
      %v3141 = vsel %vm3077, %v3045, %v3109
      %v3142 = vsel %vm3078, %v3046, %v3110
      %v3143 = vsel %vm3079, %v3047, %v3111
      %v3144 = vsel %vm3080, %v3048, %v3112
      %v3145 = vsel %vm3081, %v3049, %v3113
      %v3146 = vsel %vm3082, %v3050, %v3114
      %v3147 = vsel %vm3083, %v3051, %v3115
      %v3148 = vsel %vm3084, %v3052, %v3116
      %v3149 = vsel %vm3085, %v3053, %v3117
      %v3150 = vsel %vm3086, %v3054, %v3118
      %v3151 = vsel %vm3087, %v3055, %v3119
      %v3152 = vsel %vm3088, %v3056, %v3120
      %v3153 = vsel %vm3089, %v3057, %v3121
      %v3154 = vsel %vm3090, %v3058, %v3122
      %v3155 = vsel %vm3091, %v3059, %v3123
      %v3156 = vsel %vm3092, %v3060, %v3124
      %v3157 = vsel %vm3093, %v3061, %v3125
      %v3158 = vsel %vm3094, %v3062, %v3126
      %v3159 = vsel %vm3095, %v3063, %v3127
      %v3160 = vsel %vm3096, %v3064, %v3128
      %v3161 = vsel %vm3097, %v3065, %v3129
      %v3162 = vsel %vm3098, %v3066, %v3130
      %v3163 = vsel %vm3099, %v3067, %v3131
      %v3164 = vsel %vm3100, %v3068, %v3132
      %v3165 = vsel %vm3101, %v3069, %v3133
      %v3166 = vsel %vm3102, %v3070, %v3134
      %v3167 = vsel %vm3103, %v3071, %v3135
      %v3168 = vsel %vm3104, %v3072, %v3136
      %v3169 = vsel %vm3105, %v3073, %v3137
      %v3170 = vpack.c.bf16 %v3139, %v3138
      %v3171 = vpack.c.bf16 %v3141, %v3140
      %v3172 = vpack.c.bf16 %v3143, %v3142
      %v3173 = vpack.c.bf16 %v3145, %v3144
      %v3174 = vpack.c.bf16 %v3147, %v3146
      %v3175 = vpack.c.bf16 %v3149, %v3148
      %v3176 = vpack.c.bf16 %v3151, %v3150
      %v3177 = vpack.c.bf16 %v3153, %v3152
      %v3178 = vpack.c.bf16 %v3155, %v3154
      %v3179 = vpack.c.bf16 %v3157, %v3156
      %v3180 = vpack.c.bf16 %v3159, %v3158
      %v3181 = vpack.c.bf16 %v3161, %v3160
      %v3182 = vpack.c.bf16 %v3163, %v3162
      %v3183 = vpack.c.bf16 %v3165, %v3164
      %v3184 = vpack.c.bf16 %v3167, %v3166
      %v3185 = vpack.c.bf16 %v3169, %v3168
      %v3186 = vld [vmem:[%s4] sm:$0x1]
      %vm3187 = vcmask 15360
      %3188 = vst.msk [vmem:[#allocation2] sm:$0xff] %vm3187, -inf
      %3189 = vst.msk [vmem:[#allocation2 + $0x8] sm:$0xff] %vm3187, -inf
      %vm3190 = vcmask 9216
      %3191 = vst.msk [vmem:[#allocation2 + $0x10] sm:$0x3] %vm3190, -inf
      %3192 = vst.msk [vmem:[#allocation2 + $0x18] sm:$0xff] %vm3187, -inf
      %3193 = vst.msk [vmem:[#allocation2 + $0x20] sm:$0xff] %vm3187, -inf
      %3194 = vst.msk [vmem:[#allocation2 + $0x28] sm:$0x3] %vm3190, -inf
      %3195 = vst.msk [vmem:[#allocation2 + $0x30] sm:$0xff] %vm3187, -inf
      %3196 = vst.msk [vmem:[#allocation2 + $0x38] sm:$0xff] %vm3187, -inf
      %3197 = vst.msk [vmem:[#allocation2 + $0x40] sm:$0x3] %vm3190, -inf
      %3198 = vst.msk [vmem:[#allocation2 + $0x48] sm:$0xff] %vm3187, -inf
      %3199 = vst.msk [vmem:[#allocation2 + $0x50] sm:$0xff] %vm3187, -inf
      %3200 = vst.msk [vmem:[#allocation2 + $0x58] sm:$0x3] %vm3190, -inf
      %3201 = vst.msk [vmem:[#allocation2 + $0x60] sm:$0xff] %vm3187, -inf
      %3202 = vst.msk [vmem:[#allocation2 + $0x68] sm:$0xff] %vm3187, -inf
      %3203 = vst.msk [vmem:[#allocation2 + $0x70] sm:$0x3] %vm3190, -inf
      %3204 = vst.msk [vmem:[#allocation2 + $0x78] sm:$0xff] %vm3187, -inf
      %3205 = vst.msk [vmem:[#allocation2 + $0x80] sm:$0xff] %vm3187, -inf
      %3206 = vst.msk [vmem:[#allocation2 + $0x88] sm:$0x3] %vm3190, -inf
      %3207 = vst.msk [vmem:[#allocation2 + $0x90] sm:$0xff] %vm3187, -inf
      %3208 = vst.msk [vmem:[#allocation2 + $0x98] sm:$0xff] %vm3187, -inf
      %3209 = vst.msk [vmem:[#allocation2 + $0xa0] sm:$0x3] %vm3190, -inf
      %3210 = vst.msk [vmem:[#allocation2 + $0xa8] sm:$0xff] %vm3187, -inf
      %3211 = vst.msk [vmem:[#allocation2 + $0xb0] sm:$0xff] %vm3187, -inf
      %3212 = vst.msk [vmem:[#allocation2 + $0xb8] sm:$0x3] %vm3190, -inf
      %3213 = vst.msk [vmem:[#allocation2 + $0xc0] sm:$0xff] %vm3187, -inf
      %3214 = vst.msk [vmem:[#allocation2 + $0xc8] sm:$0xff] %vm3187, -inf
      %3215 = vst.msk [vmem:[#allocation2 + $0xd0] sm:$0x3] %vm3190, -inf
      %3216 = vst.msk [vmem:[#allocation2 + $0xd8] sm:$0xff] %vm3187, -inf
      %3217 = vst.msk [vmem:[#allocation2 + $0xe0] sm:$0xff] %vm3187, -inf
      %3218 = vst.msk [vmem:[#allocation2 + $0xe8] sm:$0x3] %vm3190, -inf
      %3219 = vst.msk [vmem:[#allocation2 + $0xf0] sm:$0xff] %vm3187, -inf
      %3220 = vst.msk [vmem:[#allocation2 + $0xf8] sm:$0xff] %vm3187, -inf
      %3221 = vst.msk [vmem:[#allocation2 + $0x100] sm:$0x3] %vm3190, -inf
      %3222 = vst.msk [vmem:[#allocation2 + $0x108] sm:$0xff] %vm3187, -inf
      %3223 = vst.msk [vmem:[#allocation2 + $0x110] sm:$0xff] %vm3187, -inf
      %3224 = vst.msk [vmem:[#allocation2 + $0x118] sm:$0x3] %vm3190, -inf
      %3225 = vst.msk [vmem:[#allocation2 + $0x120] sm:$0xff] %vm3187, -inf
      %3226 = vst.msk [vmem:[#allocation2 + $0x128] sm:$0xff] %vm3187, -inf
      %3227 = vst.msk [vmem:[#allocation2 + $0x130] sm:$0x3] %vm3190, -inf
      %3228 = vst.msk [vmem:[#allocation2 + $0x138] sm:$0xff] %vm3187, -inf
      %3229 = vst.msk [vmem:[#allocation2 + $0x140] sm:$0xff] %vm3187, -inf
      %3230 = vst.msk [vmem:[#allocation2 + $0x148] sm:$0x3] %vm3190, -inf
      %3231 = vst.msk [vmem:[#allocation2 + $0x150] sm:$0xff] %vm3187, -inf
      %3232 = vst.msk [vmem:[#allocation2 + $0x158] sm:$0xff] %vm3187, -inf
      %3233 = vst.msk [vmem:[#allocation2 + $0x160] sm:$0x3] %vm3190, -inf
      %3234 = vst.msk [vmem:[#allocation2 + $0x168] sm:$0xff] %vm3187, -inf
      %3235 = vst.msk [vmem:[#allocation2 + $0x170] sm:$0xff] %vm3187, -inf
      %3236 = vst.msk [vmem:[#allocation2 + $0x178] sm:$0x3] %vm3190, -inf
      %3237 = vst.msk [vmem:[#allocation2 + $0x180] sm:$0xff] %vm3187, -inf
      %3238 = vst.msk [vmem:[#allocation2 + $0x188] sm:$0xff] %vm3187, -inf
      %3239 = vst.msk [vmem:[#allocation2 + $0x190] sm:$0x3] %vm3190, -inf
      %3240 = vst.msk [vmem:[#allocation2 + $0x198] sm:$0xff] %vm3187, -inf
      %3241 = vst.msk [vmem:[#allocation2 + $0x1a0] sm:$0xff] %vm3187, -inf
      %3242 = vst.msk [vmem:[#allocation2 + $0x1a8] sm:$0x3] %vm3190, -inf
      %s3243 = scalar_lea.vmem [#allocation2], 24
      %3244 = vst.msk [vmem:[%s3243 + $0x1] sm:$0xff] %vm3187, %v3138
      %3245 = vst.msk [vmem:[%s3243 + $0x9] sm:$0xff] %vm3187, %v3139
      %3246 = vst.msk [vmem:[%s3243 + $0x19] sm:$0xff] %vm3187, %v3140
      %3247 = vst.msk [vmem:[%s3243 + $0x21] sm:$0xff] %vm3187, %v3141
      %3248 = vst.msk [vmem:[%s3243 + $0x31] sm:$0xff] %vm3187, %v3142
      %3249 = vst.msk [vmem:[%s3243 + $0x39] sm:$0xff] %vm3187, %v3143
      %3250 = vst.msk [vmem:[%s3243 + $0x49] sm:$0xff] %vm3187, %v3144
      %3251 = vst.msk [vmem:[%s3243 + $0x51] sm:$0xff] %vm3187, %v3145
      %3252 = vst.msk [vmem:[%s3243 + $0x61] sm:$0xff] %vm3187, %v3146
      %3253 = vst.msk [vmem:[%s3243 + $0x69] sm:$0xff] %vm3187, %v3147
      %3254 = vst.msk [vmem:[%s3243 + $0x79] sm:$0xff] %vm3187, %v3148
      %3255 = vst.msk [vmem:[%s3243 + $0x81] sm:$0xff] %vm3187, %v3149
      %3256 = vst.msk [vmem:[%s3243 + $0x91] sm:$0xff] %vm3187, %v3150
      %3257 = vst.msk [vmem:[%s3243 + $0x99] sm:$0xff] %vm3187, %v3151
      %3258 = vst.msk [vmem:[%s3243 + $0xa9] sm:$0xff] %vm3187, %v3152
      %3259 = vst.msk [vmem:[%s3243 + $0xb1] sm:$0xff] %vm3187, %v3153
      %3260 = vst.msk [vmem:[%s3243 + $0xc1] sm:$0xff] %vm3187, %v3154
      %3261 = vst.msk [vmem:[%s3243 + $0xc9] sm:$0xff] %vm3187, %v3155
      %3262 = vst.msk [vmem:[%s3243 + $0xd9] sm:$0xff] %vm3187, %v3156
      %3263 = vst.msk [vmem:[%s3243 + $0xe1] sm:$0xff] %vm3187, %v3157
      %3264 = vst.msk [vmem:[%s3243 + $0xf1] sm:$0xff] %vm3187, %v3158
      %3265 = vst.msk [vmem:[%s3243 + $0xf9] sm:$0xff] %vm3187, %v3159
      %3266 = vst.msk [vmem:[%s3243 + $0x109] sm:$0xff] %vm3187, %v3160
      %3267 = vst.msk [vmem:[%s3243 + $0x111] sm:$0xff] %vm3187, %v3161
      %3268 = vst.msk [vmem:[%s3243 + $0x121] sm:$0xff] %vm3187, %v3162
      %3269 = vst.msk [vmem:[%s3243 + $0x129] sm:$0xff] %vm3187, %v3163
      %3270 = vst.msk [vmem:[%s3243 + $0x139] sm:$0xff] %vm3187, %v3164
      %3271 = vst.msk [vmem:[%s3243 + $0x141] sm:$0xff] %vm3187, %v3165
      %3272 = vst.msk [vmem:[%s3243 + $0x151] sm:$0xff] %vm3187, %v3166
      %3273 = vst.msk [vmem:[%s3243 + $0x159] sm:$0xff] %vm3187, %v3167
      %3274 = vst.msk [vmem:[%s3243 + $0x169] sm:$0xff] %vm3187, %v3168
      %3275 = vst.msk [vmem:[%s3243 + $0x171] sm:$0xff] %vm3187, %v3169
      %v3276 = vld [vmem:[#allocation2] sm:$0xff]
      %v3277 = vld [vmem:[#allocation2 + $0x8] sm:$0xff]
      %v3278 = vld [vmem:[#allocation2 + $0x18] sm:$0xff]
      %v3279 = vld [vmem:[#allocation2 + $0x20] sm:$0xff]
      %v3280 = vld [vmem:[#allocation2 + $0x30] sm:$0xff]
      %v3281 = vld [vmem:[#allocation2 + $0x38] sm:$0xff]
      %v3282 = vld [vmem:[#allocation2 + $0x48] sm:$0xff]
      %v3283 = vld [vmem:[#allocation2 + $0x50] sm:$0xff]
      %v3284 = vld [vmem:[#allocation2 + $0x60] sm:$0xff]
      %v3285 = vld [vmem:[#allocation2 + $0x68] sm:$0xff]
      %v3286 = vld [vmem:[#allocation2 + $0x78] sm:$0xff]
      %v3287 = vld [vmem:[#allocation2 + $0x80] sm:$0xff]
      %v3288 = vld [vmem:[#allocation2 + $0x90] sm:$0xff]
      %v3289 = vld [vmem:[#allocation2 + $0x98] sm:$0xff]
      %v3290 = vld [vmem:[#allocation2 + $0xa8] sm:$0xff]
      %v3291 = vld [vmem:[#allocation2 + $0xb0] sm:$0xff]
      %v3292 = vld [vmem:[#allocation2 + $0xc0] sm:$0xff]
      %v3293 = vld [vmem:[#allocation2 + $0xc8] sm:$0xff]
      %v3294 = vld [vmem:[#allocation2 + $0xd8] sm:$0xff]
      %v3295 = vld [vmem:[#allocation2 + $0xe0] sm:$0xff]
      %v3296 = vld [vmem:[#allocation2 + $0xf0] sm:$0xff]
      %v3297 = vld [vmem:[#allocation2 + $0xf8] sm:$0xff]
      %v3298 = vld [vmem:[#allocation2 + $0x108] sm:$0xff]
      %v3299 = vld [vmem:[#allocation2 + $0x110] sm:$0xff]
      %v3300 = vld [vmem:[#allocation2 + $0x120] sm:$0xff]
      %v3301 = vld [vmem:[#allocation2 + $0x128] sm:$0xff]
      %v3302 = vld [vmem:[#allocation2 + $0x138] sm:$0xff]
      %v3303 = vld [vmem:[#allocation2 + $0x140] sm:$0xff]
      %v3304 = vld [vmem:[#allocation2 + $0x150] sm:$0xff]
      %v3305 = vld [vmem:[#allocation2 + $0x158] sm:$0xff]
      %v3306 = vld [vmem:[#allocation2 + $0x168] sm:$0xff]
      %v3307 = vld [vmem:[#allocation2 + $0x170] sm:$0xff]
      %v3308 = vld [vmem:[#allocation2 + $0x1] sm:$0xff]
      %v3309 = vld [vmem:[#allocation2 + $0x9] sm:$0xff]
      %v3310 = vld [vmem:[#allocation2 + $0x19] sm:$0xff]
      %v3311 = vld [vmem:[#allocation2 + $0x21] sm:$0xff]
      %v3312 = vld [vmem:[#allocation2 + $0x31] sm:$0xff]
      %v3313 = vld [vmem:[#allocation2 + $0x39] sm:$0xff]
      %v3314 = vld [vmem:[#allocation2 + $0x49] sm:$0xff]
      %v3315 = vld [vmem:[#allocation2 + $0x51] sm:$0xff]
      %v3316 = vld [vmem:[#allocation2 + $0x61] sm:$0xff]
      %v3317 = vld [vmem:[#allocation2 + $0x69] sm:$0xff]
      %v3318 = vld [vmem:[#allocation2 + $0x79] sm:$0xff]
      %v3319 = vld [vmem:[#allocation2 + $0x81] sm:$0xff]
      %v3320 = vld [vmem:[#allocation2 + $0x91] sm:$0xff]
      %v3321 = vld [vmem:[#allocation2 + $0x99] sm:$0xff]
      %v3322 = vld [vmem:[#allocation2 + $0xa9] sm:$0xff]
      %v3323 = vld [vmem:[#allocation2 + $0xb1] sm:$0xff]
      %v3324 = vld [vmem:[#allocation2 + $0xc1] sm:$0xff]
      %v3325 = vld [vmem:[#allocation2 + $0xc9] sm:$0xff]
      %v3326 = vld [vmem:[#allocation2 + $0xd9] sm:$0xff]
      %v3327 = vld [vmem:[#allocation2 + $0xe1] sm:$0xff]
      %v3328 = vld [vmem:[#allocation2 + $0xf1] sm:$0xff]
      %v3329 = vld [vmem:[#allocation2 + $0xf9] sm:$0xff]
      %v3330 = vld [vmem:[#allocation2 + $0x109] sm:$0xff]
      %v3331 = vld [vmem:[#allocation2 + $0x111] sm:$0xff]
      %v3332 = vld [vmem:[#allocation2 + $0x121] sm:$0xff]
      %v3333 = vld [vmem:[#allocation2 + $0x129] sm:$0xff]
      %v3334 = vld [vmem:[#allocation2 + $0x139] sm:$0xff]
      %v3335 = vld [vmem:[#allocation2 + $0x141] sm:$0xff]
      %v3336 = vld [vmem:[#allocation2 + $0x151] sm:$0xff]
      %v3337 = vld [vmem:[#allocation2 + $0x159] sm:$0xff]
      %v3338 = vld [vmem:[#allocation2 + $0x169] sm:$0xff]
      %v3339 = vld [vmem:[#allocation2 + $0x171] sm:$0xff]
      %v3340 = vmax.f32 %v3276, %v3308
      %v3341 = vmax.f32 %v3277, %v3309
      %v3342 = vmax.f32 %v3278, %v3310
      %v3343 = vmax.f32 %v3279, %v3311
      %v3344 = vmax.f32 %v3280, %v3312
      %v3345 = vmax.f32 %v3281, %v3313
      %v3346 = vmax.f32 %v3282, %v3314
      %v3347 = vmax.f32 %v3283, %v3315
      %v3348 = vmax.f32 %v3284, %v3316
      %v3349 = vmax.f32 %v3285, %v3317
      %v3350 = vmax.f32 %v3286, %v3318
      %v3351 = vmax.f32 %v3287, %v3319
      %v3352 = vmax.f32 %v3288, %v3320
      %v3353 = vmax.f32 %v3289, %v3321
      %v3354 = vmax.f32 %v3290, %v3322
      %v3355 = vmax.f32 %v3291, %v3323
      %v3356 = vmax.f32 %v3292, %v3324
      %v3357 = vmax.f32 %v3293, %v3325
      %v3358 = vmax.f32 %v3294, %v3326
      %v3359 = vmax.f32 %v3295, %v3327
      %v3360 = vmax.f32 %v3296, %v3328
      %v3361 = vmax.f32 %v3297, %v3329
      %v3362 = vmax.f32 %v3298, %v3330
      %v3363 = vmax.f32 %v3299, %v3331
      %v3364 = vmax.f32 %v3300, %v3332
      %v3365 = vmax.f32 %v3301, %v3333
      %v3366 = vmax.f32 %v3302, %v3334
      %v3367 = vmax.f32 %v3303, %v3335
      %v3368 = vmax.f32 %v3304, %v3336
      %v3369 = vmax.f32 %v3305, %v3337
      %v3370 = vmax.f32 %v3306, %v3338
      %v3371 = vmax.f32 %v3307, %v3339
      %v3372 = vld [vmem:[#allocation2 + $0x2] sm:$0xff]
      %v3373 = vld [vmem:[#allocation2 + $0xa] sm:$0xff]
      %v3374 = vld [vmem:[#allocation2 + $0x1a] sm:$0xff]
      %v3375 = vld [vmem:[#allocation2 + $0x22] sm:$0xff]
      %v3376 = vld [vmem:[#allocation2 + $0x32] sm:$0xff]
      %v3377 = vld [vmem:[#allocation2 + $0x3a] sm:$0xff]
      %v3378 = vld [vmem:[#allocation2 + $0x4a] sm:$0xff]
      %v3379 = vld [vmem:[#allocation2 + $0x52] sm:$0xff]
      %v3380 = vld [vmem:[#allocation2 + $0x62] sm:$0xff]
      %v3381 = vld [vmem:[#allocation2 + $0x6a] sm:$0xff]
      %v3382 = vld [vmem:[#allocation2 + $0x7a] sm:$0xff]
      %v3383 = vld [vmem:[#allocation2 + $0x82] sm:$0xff]
      %v3384 = vld [vmem:[#allocation2 + $0x92] sm:$0xff]
      %v3385 = vld [vmem:[#allocation2 + $0x9a] sm:$0xff]
      %v3386 = vld [vmem:[#allocation2 + $0xaa] sm:$0xff]
      %v3387 = vld [vmem:[#allocation2 + $0xb2] sm:$0xff]
      %v3388 = vld [vmem:[#allocation2 + $0xc2] sm:$0xff]
      %v3389 = vld [vmem:[#allocation2 + $0xca] sm:$0xff]
      %v3390 = vld [vmem:[#allocation2 + $0xda] sm:$0xff]
      %v3391 = vld [vmem:[#allocation2 + $0xe2] sm:$0xff]
      %v3392 = vld [vmem:[#allocation2 + $0xf2] sm:$0xff]
      %v3393 = vld [vmem:[#allocation2 + $0xfa] sm:$0xff]
      %v3394 = vld [vmem:[#allocation2 + $0x10a] sm:$0xff]
      %v3395 = vld [vmem:[#allocation2 + $0x112] sm:$0xff]
      %v3396 = vld [vmem:[#allocation2 + $0x122] sm:$0xff]
      %v3397 = vld [vmem:[#allocation2 + $0x12a] sm:$0xff]
      %v3398 = vld [vmem:[#allocation2 + $0x13a] sm:$0xff]
      %v3399 = vld [vmem:[#allocation2 + $0x142] sm:$0xff]
      %v3400 = vld [vmem:[#allocation2 + $0x152] sm:$0xff]
      %v3401 = vld [vmem:[#allocation2 + $0x15a] sm:$0xff]
      %v3402 = vld [vmem:[#allocation2 + $0x16a] sm:$0xff]
      %v3403 = vld [vmem:[#allocation2 + $0x172] sm:$0xff]
      %v3404 = vmax.f32 %v3340, %v3372
      %v3405 = vmax.f32 %v3341, %v3373
      %v3406 = vmax.f32 %v3342, %v3374
      %v3407 = vmax.f32 %v3343, %v3375
      %v3408 = vmax.f32 %v3344, %v3376
      %v3409 = vmax.f32 %v3345, %v3377
      %v3410 = vmax.f32 %v3346, %v3378
      %v3411 = vmax.f32 %v3347, %v3379
      %v3412 = vmax.f32 %v3348, %v3380
      %v3413 = vmax.f32 %v3349, %v3381
      %v3414 = vmax.f32 %v3350, %v3382
      %v3415 = vmax.f32 %v3351, %v3383
      %v3416 = vmax.f32 %v3352, %v3384
      %v3417 = vmax.f32 %v3353, %v3385
      %v3418 = vmax.f32 %v3354, %v3386
      %v3419 = vmax.f32 %v3355, %v3387
      %v3420 = vmax.f32 %v3356, %v3388
      %v3421 = vmax.f32 %v3357, %v3389
      %v3422 = vmax.f32 %v3358, %v3390
      %v3423 = vmax.f32 %v3359, %v3391
      %v3424 = vmax.f32 %v3360, %v3392
      %v3425 = vmax.f32 %v3361, %v3393
      %v3426 = vmax.f32 %v3362, %v3394
      %v3427 = vmax.f32 %v3363, %v3395
      %v3428 = vmax.f32 %v3364, %v3396
      %v3429 = vmax.f32 %v3365, %v3397
      %v3430 = vmax.f32 %v3366, %v3398
      %v3431 = vmax.f32 %v3367, %v3399
      %v3432 = vmax.f32 %v3368, %v3400
      %v3433 = vmax.f32 %v3369, %v3401
      %v3434 = vmax.f32 %v3370, %v3402
      %v3435 = vmax.f32 %v3371, %v3403
      %v3436 = vld [vmem:[%s3243] sm:$0xff]
      %v3437 = vld [vmem:[%s3243 + $0x8] sm:$0xff]
      %v3438 = vld [vmem:[%s3243 + $0x18] sm:$0xff]
      %v3439 = vld [vmem:[%s3243 + $0x20] sm:$0xff]
      %v3440 = vld [vmem:[%s3243 + $0x30] sm:$0xff]
      %v3441 = vld [vmem:[%s3243 + $0x38] sm:$0xff]
      %v3442 = vld [vmem:[%s3243 + $0x48] sm:$0xff]
      %v3443 = vld [vmem:[%s3243 + $0x50] sm:$0xff]
      %v3444 = vld [vmem:[%s3243 + $0x60] sm:$0xff]
      %v3445 = vld [vmem:[%s3243 + $0x68] sm:$0xff]
      %v3446 = vld [vmem:[%s3243 + $0x78] sm:$0xff]
      %v3447 = vld [vmem:[%s3243 + $0x80] sm:$0xff]
      %v3448 = vld [vmem:[%s3243 + $0x90] sm:$0xff]
      %v3449 = vld [vmem:[%s3243 + $0x98] sm:$0xff]
      %v3450 = vld [vmem:[%s3243 + $0xa8] sm:$0xff]
      %v3451 = vld [vmem:[%s3243 + $0xb0] sm:$0xff]
      %v3452 = vld [vmem:[%s3243 + $0xc0] sm:$0xff]
      %v3453 = vld [vmem:[%s3243 + $0xc8] sm:$0xff]
      %v3454 = vld [vmem:[%s3243 + $0xd8] sm:$0xff]
      %v3455 = vld [vmem:[%s3243 + $0xe0] sm:$0xff]
      %v3456 = vld [vmem:[%s3243 + $0xf0] sm:$0xff]
      %v3457 = vld [vmem:[%s3243 + $0xf8] sm:$0xff]
      %v3458 = vld [vmem:[%s3243 + $0x108] sm:$0xff]
      %v3459 = vld [vmem:[%s3243 + $0x110] sm:$0xff]
      %v3460 = vld [vmem:[%s3243 + $0x120] sm:$0xff]
      %v3461 = vld [vmem:[%s3243 + $0x128] sm:$0xff]
      %v3462 = vld [vmem:[%s3243 + $0x138] sm:$0xff]
      %v3463 = vld [vmem:[%s3243 + $0x140] sm:$0xff]
      %v3464 = vld [vmem:[%s3243 + $0x150] sm:$0xff]
      %v3465 = vld [vmem:[%s3243 + $0x158] sm:$0xff]
      %v3466 = vld [vmem:[%s3243 + $0x168] sm:$0xff]
      %v3467 = vld [vmem:[%s3243 + $0x170] sm:$0xff]
      %v3468 = vmax.f32 %v3404, %v3436
      %v3469 = vmax.f32 %v3405, %v3437
      %v3470 = vmax.f32 %v3406, %v3438
      %v3471 = vmax.f32 %v3407, %v3439
      %v3472 = vmax.f32 %v3408, %v3440
      %v3473 = vmax.f32 %v3409, %v3441
      %v3474 = vmax.f32 %v3410, %v3442
      %v3475 = vmax.f32 %v3411, %v3443
      %v3476 = vmax.f32 %v3412, %v3444
      %v3477 = vmax.f32 %v3413, %v3445
      %v3478 = vmax.f32 %v3414, %v3446
      %v3479 = vmax.f32 %v3415, %v3447
      %v3480 = vmax.f32 %v3416, %v3448
      %v3481 = vmax.f32 %v3417, %v3449
      %v3482 = vmax.f32 %v3418, %v3450
      %v3483 = vmax.f32 %v3419, %v3451
      %v3484 = vmax.f32 %v3420, %v3452
      %v3485 = vmax.f32 %v3421, %v3453
      %v3486 = vmax.f32 %v3422, %v3454
      %v3487 = vmax.f32 %v3423, %v3455
      %v3488 = vmax.f32 %v3424, %v3456
      %v3489 = vmax.f32 %v3425, %v3457
      %v3490 = vmax.f32 %v3426, %v3458
      %v3491 = vmax.f32 %v3427, %v3459
      %v3492 = vmax.f32 %v3428, %v3460
      %v3493 = vmax.f32 %v3429, %v3461
      %v3494 = vmax.f32 %v3430, %v3462
      %v3495 = vmax.f32 %v3431, %v3463
      %v3496 = vmax.f32 %v3432, %v3464
      %v3497 = vmax.f32 %v3433, %v3465
      %v3498 = vmax.f32 %v3434, %v3466
      %v3499 = vmax.f32 %v3435, %v3467
      %v3500 = vld [vmem:[%s3243 + $0x1] sm:$0xff]
      %v3501 = vld [vmem:[%s3243 + $0x9] sm:$0xff]
      %v3502 = vld [vmem:[%s3243 + $0x19] sm:$0xff]
      %v3503 = vld [vmem:[%s3243 + $0x21] sm:$0xff]
      %v3504 = vld [vmem:[%s3243 + $0x31] sm:$0xff]
      %v3505 = vld [vmem:[%s3243 + $0x39] sm:$0xff]
      %v3506 = vld [vmem:[%s3243 + $0x49] sm:$0xff]
      %v3507 = vld [vmem:[%s3243 + $0x51] sm:$0xff]
      %v3508 = vld [vmem:[%s3243 + $0x61] sm:$0xff]
      %v3509 = vld [vmem:[%s3243 + $0x69] sm:$0xff]
      %v3510 = vld [vmem:[%s3243 + $0x79] sm:$0xff]
      %v3511 = vld [vmem:[%s3243 + $0x81] sm:$0xff]
      %v3512 = vld [vmem:[%s3243 + $0x91] sm:$0xff]
      %v3513 = vld [vmem:[%s3243 + $0x99] sm:$0xff]
      %v3514 = vld [vmem:[%s3243 + $0xa9] sm:$0xff]
      %v3515 = vld [vmem:[%s3243 + $0xb1] sm:$0xff]
      %v3516 = vld [vmem:[%s3243 + $0xc1] sm:$0xff]
      %v3517 = vld [vmem:[%s3243 + $0xc9] sm:$0xff]
      %v3518 = vld [vmem:[%s3243 + $0xd9] sm:$0xff]
      %v3519 = vld [vmem:[%s3243 + $0xe1] sm:$0xff]
      %v3520 = vld [vmem:[%s3243 + $0xf1] sm:$0xff]
      %v3521 = vld [vmem:[%s3243 + $0xf9] sm:$0xff]
      %v3522 = vld [vmem:[%s3243 + $0x109] sm:$0xff]
      %v3523 = vld [vmem:[%s3243 + $0x111] sm:$0xff]
      %v3524 = vld [vmem:[%s3243 + $0x121] sm:$0xff]
      %v3525 = vld [vmem:[%s3243 + $0x129] sm:$0xff]
      %v3526 = vld [vmem:[%s3243 + $0x139] sm:$0xff]
      %v3527 = vld [vmem:[%s3243 + $0x141] sm:$0xff]
      %v3528 = vld [vmem:[%s3243 + $0x151] sm:$0xff]
      %v3529 = vld [vmem:[%s3243 + $0x159] sm:$0xff]
      %v3530 = vld [vmem:[%s3243 + $0x169] sm:$0xff]
      %v3531 = vld [vmem:[%s3243 + $0x171] sm:$0xff]
      %v3532 = vmax.f32 %v3468, %v3500
      %v3533 = vmax.f32 %v3469, %v3501
      %v3534 = vmax.f32 %v3470, %v3502
      %v3535 = vmax.f32 %v3471, %v3503
      %v3536 = vmax.f32 %v3472, %v3504
      %v3537 = vmax.f32 %v3473, %v3505
      %v3538 = vmax.f32 %v3474, %v3506
      %v3539 = vmax.f32 %v3475, %v3507
      %v3540 = vmax.f32 %v3476, %v3508
      %v3541 = vmax.f32 %v3477, %v3509
      %v3542 = vmax.f32 %v3478, %v3510
      %v3543 = vmax.f32 %v3479, %v3511
      %v3544 = vmax.f32 %v3480, %v3512
      %v3545 = vmax.f32 %v3481, %v3513
      %v3546 = vmax.f32 %v3482, %v3514
      %v3547 = vmax.f32 %v3483, %v3515
      %v3548 = vmax.f32 %v3484, %v3516
      %v3549 = vmax.f32 %v3485, %v3517
      %v3550 = vmax.f32 %v3486, %v3518
      %v3551 = vmax.f32 %v3487, %v3519
      %v3552 = vmax.f32 %v3488, %v3520
      %v3553 = vmax.f32 %v3489, %v3521
      %v3554 = vmax.f32 %v3490, %v3522
      %v3555 = vmax.f32 %v3491, %v3523
      %v3556 = vmax.f32 %v3492, %v3524
      %v3557 = vmax.f32 %v3493, %v3525
      %v3558 = vmax.f32 %v3494, %v3526
      %v3559 = vmax.f32 %v3495, %v3527
      %v3560 = vmax.f32 %v3496, %v3528
      %v3561 = vmax.f32 %v3497, %v3529
      %v3562 = vmax.f32 %v3498, %v3530
      %v3563 = vmax.f32 %v3499, %v3531
      %v3564 = vld [vmem:[%s3243 + $0x2] sm:$0xff]
      %v3565 = vld [vmem:[%s3243 + $0xa] sm:$0xff]
      %v3566 = vld [vmem:[%s3243 + $0x1a] sm:$0xff]
      %v3567 = vld [vmem:[%s3243 + $0x22] sm:$0xff]
      %v3568 = vld [vmem:[%s3243 + $0x32] sm:$0xff]
      %v3569 = vld [vmem:[%s3243 + $0x3a] sm:$0xff]
      %v3570 = vld [vmem:[%s3243 + $0x4a] sm:$0xff]
      %v3571 = vld [vmem:[%s3243 + $0x52] sm:$0xff]
      %v3572 = vld [vmem:[%s3243 + $0x62] sm:$0xff]
      %v3573 = vld [vmem:[%s3243 + $0x6a] sm:$0xff]
      %v3574 = vld [vmem:[%s3243 + $0x7a] sm:$0xff]
      %v3575 = vld [vmem:[%s3243 + $0x82] sm:$0xff]
      %v3576 = vld [vmem:[%s3243 + $0x92] sm:$0xff]
      %v3577 = vld [vmem:[%s3243 + $0x9a] sm:$0xff]
      %v3578 = vld [vmem:[%s3243 + $0xaa] sm:$0xff]
      %v3579 = vld [vmem:[%s3243 + $0xb2] sm:$0xff]
      %v3580 = vld [vmem:[%s3243 + $0xc2] sm:$0xff]
      %v3581 = vld [vmem:[%s3243 + $0xca] sm:$0xff]
      %v3582 = vld [vmem:[%s3243 + $0xda] sm:$0xff]
      %v3583 = vld [vmem:[%s3243 + $0xe2] sm:$0xff]
      %v3584 = vld [vmem:[%s3243 + $0xf2] sm:$0xff]
      %v3585 = vld [vmem:[%s3243 + $0xfa] sm:$0xff]
      %v3586 = vld [vmem:[%s3243 + $0x10a] sm:$0xff]
      %v3587 = vld [vmem:[%s3243 + $0x112] sm:$0xff]
      %v3588 = vld [vmem:[%s3243 + $0x122] sm:$0xff]
      %v3589 = vld [vmem:[%s3243 + $0x12a] sm:$0xff]
      %v3590 = vld [vmem:[%s3243 + $0x13a] sm:$0xff]
      %v3591 = vld [vmem:[%s3243 + $0x142] sm:$0xff]
      %v3592 = vld [vmem:[%s3243 + $0x152] sm:$0xff]
      %v3593 = vld [vmem:[%s3243 + $0x15a] sm:$0xff]
      %v3594 = vld [vmem:[%s3243 + $0x16a] sm:$0xff]
      %v3595 = vld [vmem:[%s3243 + $0x172] sm:$0xff]
      %v3596 = vmax.f32 %v3532, %v3564
      %v3597 = vmax.f32 %v3533, %v3565
      %v3598 = vmax.f32 %v3534, %v3566
      %v3599 = vmax.f32 %v3535, %v3567
      %v3600 = vmax.f32 %v3536, %v3568
      %v3601 = vmax.f32 %v3537, %v3569
      %v3602 = vmax.f32 %v3538, %v3570
      %v3603 = vmax.f32 %v3539, %v3571
      %v3604 = vmax.f32 %v3540, %v3572
      %v3605 = vmax.f32 %v3541, %v3573
      %v3606 = vmax.f32 %v3542, %v3574
      %v3607 = vmax.f32 %v3543, %v3575
      %v3608 = vmax.f32 %v3544, %v3576
      %v3609 = vmax.f32 %v3545, %v3577
      %v3610 = vmax.f32 %v3546, %v3578
      %v3611 = vmax.f32 %v3547, %v3579
      %v3612 = vmax.f32 %v3548, %v3580
      %v3613 = vmax.f32 %v3549, %v3581
      %v3614 = vmax.f32 %v3550, %v3582
      %v3615 = vmax.f32 %v3551, %v3583
      %v3616 = vmax.f32 %v3552, %v3584
      %v3617 = vmax.f32 %v3553, %v3585
      %v3618 = vmax.f32 %v3554, %v3586
      %v3619 = vmax.f32 %v3555, %v3587
      %v3620 = vmax.f32 %v3556, %v3588
      %v3621 = vmax.f32 %v3557, %v3589
      %v3622 = vmax.f32 %v3558, %v3590
      %v3623 = vmax.f32 %v3559, %v3591
      %v3624 = vmax.f32 %v3560, %v3592
      %v3625 = vmax.f32 %v3561, %v3593
      %v3626 = vmax.f32 %v3562, %v3594
      %v3627 = vmax.f32 %v3563, %v3595
      %s3628 = scalar_lea.vmem [#allocation2], 48
      %v3629 = vld [vmem:[%s3628] sm:$0xff]
      %v3630 = vld [vmem:[%s3628 + $0x8] sm:$0xff]
      %v3631 = vld [vmem:[%s3628 + $0x18] sm:$0xff]
      %v3632 = vld [vmem:[%s3628 + $0x20] sm:$0xff]
      %v3633 = vld [vmem:[%s3628 + $0x30] sm:$0xff]
      %v3634 = vld [vmem:[%s3628 + $0x38] sm:$0xff]
      %v3635 = vld [vmem:[%s3628 + $0x48] sm:$0xff]
      %v3636 = vld [vmem:[%s3628 + $0x50] sm:$0xff]
      %v3637 = vld [vmem:[%s3628 + $0x60] sm:$0xff]
      %v3638 = vld [vmem:[%s3628 + $0x68] sm:$0xff]
      %v3639 = vld [vmem:[%s3628 + $0x78] sm:$0xff]
      %v3640 = vld [vmem:[%s3628 + $0x80] sm:$0xff]
      %v3641 = vld [vmem:[%s3628 + $0x90] sm:$0xff]
      %v3642 = vld [vmem:[%s3628 + $0x98] sm:$0xff]
      %v3643 = vld [vmem:[%s3628 + $0xa8] sm:$0xff]
      %v3644 = vld [vmem:[%s3628 + $0xb0] sm:$0xff]
      %v3645 = vld [vmem:[%s3628 + $0xc0] sm:$0xff]
      %v3646 = vld [vmem:[%s3628 + $0xc8] sm:$0xff]
      %v3647 = vld [vmem:[%s3628 + $0xd8] sm:$0xff]
      %v3648 = vld [vmem:[%s3628 + $0xe0] sm:$0xff]
      %v3649 = vld [vmem:[%s3628 + $0xf0] sm:$0xff]
      %v3650 = vld [vmem:[%s3628 + $0xf8] sm:$0xff]
      %v3651 = vld [vmem:[%s3628 + $0x108] sm:$0xff]
      %v3652 = vld [vmem:[%s3628 + $0x110] sm:$0xff]
      %v3653 = vld [vmem:[%s3628 + $0x120] sm:$0xff]
      %v3654 = vld [vmem:[%s3628 + $0x128] sm:$0xff]
      %v3655 = vld [vmem:[%s3628 + $0x138] sm:$0xff]
      %v3656 = vld [vmem:[%s3628 + $0x140] sm:$0xff]
      %v3657 = vld [vmem:[%s3628 + $0x150] sm:$0xff]
      %v3658 = vld [vmem:[%s3628 + $0x158] sm:$0xff]
      %v3659 = vld [vmem:[%s3628 + $0x168] sm:$0xff]
      %v3660 = vld [vmem:[%s3628 + $0x170] sm:$0xff]
      %v3661 = vmax.f32 %v3596, %v3629
      %v3662 = vmax.f32 %v3597, %v3630
      %v3663 = vmax.f32 %v3598, %v3631
      %v3664 = vmax.f32 %v3599, %v3632
      %v3665 = vmax.f32 %v3600, %v3633
      %v3666 = vmax.f32 %v3601, %v3634
      %v3667 = vmax.f32 %v3602, %v3635
      %v3668 = vmax.f32 %v3603, %v3636
      %v3669 = vmax.f32 %v3604, %v3637
      %v3670 = vmax.f32 %v3605, %v3638
      %v3671 = vmax.f32 %v3606, %v3639
      %v3672 = vmax.f32 %v3607, %v3640
      %v3673 = vmax.f32 %v3608, %v3641
      %v3674 = vmax.f32 %v3609, %v3642
      %v3675 = vmax.f32 %v3610, %v3643
      %v3676 = vmax.f32 %v3611, %v3644
      %v3677 = vmax.f32 %v3612, %v3645
      %v3678 = vmax.f32 %v3613, %v3646
      %v3679 = vmax.f32 %v3614, %v3647
      %v3680 = vmax.f32 %v3615, %v3648
      %v3681 = vmax.f32 %v3616, %v3649
      %v3682 = vmax.f32 %v3617, %v3650
      %v3683 = vmax.f32 %v3618, %v3651
      %v3684 = vmax.f32 %v3619, %v3652
      %v3685 = vmax.f32 %v3620, %v3653
      %v3686 = vmax.f32 %v3621, %v3654
      %v3687 = vmax.f32 %v3622, %v3655
      %v3688 = vmax.f32 %v3623, %v3656
      %v3689 = vmax.f32 %v3624, %v3657
      %v3690 = vmax.f32 %v3625, %v3658
      %v3691 = vmax.f32 %v3626, %v3659
      %v3692 = vmax.f32 %v3627, %v3660
      %v3693 = vld [vmem:[%s3628 + $0x1] sm:$0xff]
      %v3694 = vld [vmem:[%s3628 + $0x9] sm:$0xff]
      %v3695 = vld [vmem:[%s3628 + $0x19] sm:$0xff]
      %v3696 = vld [vmem:[%s3628 + $0x21] sm:$0xff]
      %v3697 = vld [vmem:[%s3628 + $0x31] sm:$0xff]
      %v3698 = vld [vmem:[%s3628 + $0x39] sm:$0xff]
      %v3699 = vld [vmem:[%s3628 + $0x49] sm:$0xff]
      %v3700 = vld [vmem:[%s3628 + $0x51] sm:$0xff]
      %v3701 = vld [vmem:[%s3628 + $0x61] sm:$0xff]
      %v3702 = vld [vmem:[%s3628 + $0x69] sm:$0xff]
      %v3703 = vld [vmem:[%s3628 + $0x79] sm:$0xff]
      %v3704 = vld [vmem:[%s3628 + $0x81] sm:$0xff]
      %v3705 = vld [vmem:[%s3628 + $0x91] sm:$0xff]
      %v3706 = vld [vmem:[%s3628 + $0x99] sm:$0xff]
      %v3707 = vld [vmem:[%s3628 + $0xa9] sm:$0xff]
      %v3708 = vld [vmem:[%s3628 + $0xb1] sm:$0xff]
      %v3709 = vld [vmem:[%s3628 + $0xc1] sm:$0xff]
      %v3710 = vld [vmem:[%s3628 + $0xc9] sm:$0xff]
      %v3711 = vld [vmem:[%s3628 + $0xd9] sm:$0xff]
      %v3712 = vld [vmem:[%s3628 + $0xe1] sm:$0xff]
      %v3713 = vld [vmem:[%s3628 + $0xf1] sm:$0xff]
      %v3714 = vld [vmem:[%s3628 + $0xf9] sm:$0xff]
      %v3715 = vld [vmem:[%s3628 + $0x109] sm:$0xff]
      %v3716 = vld [vmem:[%s3628 + $0x111] sm:$0xff]
      %v3717 = vld [vmem:[%s3628 + $0x121] sm:$0xff]
      %v3718 = vld [vmem:[%s3628 + $0x129] sm:$0xff]
      %v3719 = vld [vmem:[%s3628 + $0x139] sm:$0xff]
      %v3720 = vld [vmem:[%s3628 + $0x141] sm:$0xff]
      %v3721 = vld [vmem:[%s3628 + $0x151] sm:$0xff]
      %v3722 = vld [vmem:[%s3628 + $0x159] sm:$0xff]
      %v3723 = vld [vmem:[%s3628 + $0x169] sm:$0xff]
      %v3724 = vld [vmem:[%s3628 + $0x171] sm:$0xff]
      %v3725 = vmax.f32 %v3661, %v3693
      %v3726 = vmax.f32 %v3662, %v3694
      %v3727 = vmax.f32 %v3663, %v3695
      %v3728 = vmax.f32 %v3664, %v3696
      %v3729 = vmax.f32 %v3665, %v3697
      %v3730 = vmax.f32 %v3666, %v3698
      %v3731 = vmax.f32 %v3667, %v3699
      %v3732 = vmax.f32 %v3668, %v3700
      %v3733 = vmax.f32 %v3669, %v3701
      %v3734 = vmax.f32 %v3670, %v3702
      %v3735 = vmax.f32 %v3671, %v3703
      %v3736 = vmax.f32 %v3672, %v3704
      %v3737 = vmax.f32 %v3673, %v3705
      %v3738 = vmax.f32 %v3674, %v3706
      %v3739 = vmax.f32 %v3675, %v3707
      %v3740 = vmax.f32 %v3676, %v3708
      %v3741 = vmax.f32 %v3677, %v3709
      %v3742 = vmax.f32 %v3678, %v3710
      %v3743 = vmax.f32 %v3679, %v3711
      %v3744 = vmax.f32 %v3680, %v3712
      %v3745 = vmax.f32 %v3681, %v3713
      %v3746 = vmax.f32 %v3682, %v3714
      %v3747 = vmax.f32 %v3683, %v3715
      %v3748 = vmax.f32 %v3684, %v3716
      %v3749 = vmax.f32 %v3685, %v3717
      %v3750 = vmax.f32 %v3686, %v3718
      %v3751 = vmax.f32 %v3687, %v3719
      %v3752 = vmax.f32 %v3688, %v3720
      %v3753 = vmax.f32 %v3689, %v3721
      %v3754 = vmax.f32 %v3690, %v3722
      %v3755 = vmax.f32 %v3691, %v3723
      %v3756 = vmax.f32 %v3692, %v3724
      %v3757 = vld [vmem:[%s3628 + $0x2] sm:$0xff]
      %v3758 = vld [vmem:[%s3628 + $0xa] sm:$0xff]
      %v3759 = vld [vmem:[%s3628 + $0x1a] sm:$0xff]
      %v3760 = vld [vmem:[%s3628 + $0x22] sm:$0xff]
      %v3761 = vld [vmem:[%s3628 + $0x32] sm:$0xff]
      %v3762 = vld [vmem:[%s3628 + $0x3a] sm:$0xff]
      %v3763 = vld [vmem:[%s3628 + $0x4a] sm:$0xff]
      %v3764 = vld [vmem:[%s3628 + $0x52] sm:$0xff]
      %v3765 = vld [vmem:[%s3628 + $0x62] sm:$0xff]
      %v3766 = vld [vmem:[%s3628 + $0x6a] sm:$0xff]
      %v3767 = vld [vmem:[%s3628 + $0x7a] sm:$0xff]
      %v3768 = vld [vmem:[%s3628 + $0x82] sm:$0xff]
      %v3769 = vld [vmem:[%s3628 + $0x92] sm:$0xff]
      %v3770 = vld [vmem:[%s3628 + $0x9a] sm:$0xff]
      %v3771 = vld [vmem:[%s3628 + $0xaa] sm:$0xff]
      %v3772 = vld [vmem:[%s3628 + $0xb2] sm:$0xff]
      %v3773 = vld [vmem:[%s3628 + $0xc2] sm:$0xff]
      %v3774 = vld [vmem:[%s3628 + $0xca] sm:$0xff]
      %v3775 = vld [vmem:[%s3628 + $0xda] sm:$0xff]
      %v3776 = vld [vmem:[%s3628 + $0xe2] sm:$0xff]
      %v3777 = vld [vmem:[%s3628 + $0xf2] sm:$0xff]
      %v3778 = vld [vmem:[%s3628 + $0xfa] sm:$0xff]
      %v3779 = vld [vmem:[%s3628 + $0x10a] sm:$0xff]
      %v3780 = vld [vmem:[%s3628 + $0x112] sm:$0xff]
      %v3781 = vld [vmem:[%s3628 + $0x122] sm:$0xff]
      %v3782 = vld [vmem:[%s3628 + $0x12a] sm:$0xff]
      %v3783 = vld [vmem:[%s3628 + $0x13a] sm:$0xff]
      %v3784 = vld [vmem:[%s3628 + $0x142] sm:$0xff]
      %v3785 = vld [vmem:[%s3628 + $0x152] sm:$0xff]
      %v3786 = vld [vmem:[%s3628 + $0x15a] sm:$0xff]
      %v3787 = vld [vmem:[%s3628 + $0x16a] sm:$0xff]
      %v3788 = vld [vmem:[%s3628 + $0x172] sm:$0xff]
      %v3789 = vmax.f32 %v3725, %v3757
      %v3790 = vmax.f32 %v3726, %v3758
      %v3791 = vmax.f32 %v3727, %v3759
      %v3792 = vmax.f32 %v3728, %v3760
      %v3793 = vmax.f32 %v3729, %v3761
      %v3794 = vmax.f32 %v3730, %v3762
      %v3795 = vmax.f32 %v3731, %v3763
      %v3796 = vmax.f32 %v3732, %v3764
      %v3797 = vmax.f32 %v3733, %v3765
      %v3798 = vmax.f32 %v3734, %v3766
      %v3799 = vmax.f32 %v3735, %v3767
      %v3800 = vmax.f32 %v3736, %v3768
      %v3801 = vmax.f32 %v3737, %v3769
      %v3802 = vmax.f32 %v3738, %v3770
      %v3803 = vmax.f32 %v3739, %v3771
      %v3804 = vmax.f32 %v3740, %v3772
      %v3805 = vmax.f32 %v3741, %v3773
      %v3806 = vmax.f32 %v3742, %v3774
      %v3807 = vmax.f32 %v3743, %v3775
      %v3808 = vmax.f32 %v3744, %v3776
      %v3809 = vmax.f32 %v3745, %v3777
      %v3810 = vmax.f32 %v3746, %v3778
      %v3811 = vmax.f32 %v3747, %v3779
      %v3812 = vmax.f32 %v3748, %v3780
      %v3813 = vmax.f32 %v3749, %v3781
      %v3814 = vmax.f32 %v3750, %v3782
      %v3815 = vmax.f32 %v3751, %v3783
      %v3816 = vmax.f32 %v3752, %v3784
      %v3817 = vmax.f32 %v3753, %v3785
      %v3818 = vmax.f32 %v3754, %v3786
      %v3819 = vmax.f32 %v3755, %v3787
      %v3820 = vmax.f32 %v3756, %v3788
      %v3821 = vpack.c.bf16 %v3790, %v3789
      %v3822 = vpack.c.bf16 %v3792, %v3791
      %v3823 = vpack.c.bf16 %v3794, %v3793
      %v3824 = vpack.c.bf16 %v3796, %v3795
      %v3825 = vpack.c.bf16 %v3798, %v3797
      %v3826 = vpack.c.bf16 %v3800, %v3799
      %v3827 = vpack.c.bf16 %v3802, %v3801
      %v3828 = vpack.c.bf16 %v3804, %v3803
      %v3829 = vpack.c.bf16 %v3806, %v3805
      %v3830 = vpack.c.bf16 %v3808, %v3807
      %v3831 = vpack.c.bf16 %v3810, %v3809
      %v3832 = vpack.c.bf16 %v3812, %v3811
      %v3833 = vpack.c.bf16 %v3814, %v3813
      %v3834 = vpack.c.bf16 %v3816, %v3815
      %v3835 = vpack.c.bf16 %v3818, %v3817
      %v3836 = vpack.c.bf16 %v3820, %v3819
      %s3837 = scalar_lea.vmem %s4, 1
      %v3838 = vld [vmem:[%s3837] sm:$0x1]
      %v3840 = vsel %vm3187, %v3821, 0
      %v3843 = vsel %vm3187, %v3822, 0
      %v3846 = vsel %vm3187, %v3823, 0
      %v3849 = vsel %vm3187, %v3824, 0
      %v3852 = vsel %vm3187, %v3825, 0
      %v3855 = vsel %vm3187, %v3826, 0
      %v3858 = vsel %vm3187, %v3827, 0
      %v3861 = vsel %vm3187, %v3828, 0
      %v3864 = vsel %vm3187, %v3829, 0
      %v3867 = vsel %vm3187, %v3830, 0
      %v3870 = vsel %vm3187, %v3831, 0
      %v3873 = vsel %vm3187, %v3832, 0
      %v3876 = vsel %vm3187, %v3833, 0
      %v3879 = vsel %vm3187, %v3834, 0
      %v3882 = vsel %vm3187, %v3835, 0
      %v3885 = vsel %vm3187, %v3836, 0
      %vm3887 = vcmask 1040384
      %v3889 = vsel %vm3887, %v3838, 0
      %3891 = vmatprep.subr.bf16.mxu0 0
      %3892 = vmatpush1.bf16.msra.mxu0 0
      %3893 = vmatprep.subr.bf16.mxu0 0
      %3894 = vmatpush1.bf16.msra.mxu0 0
      %3895 = vmatprep.subr.bf16.mxu0 0
      %3896 = vmatpush1.bf16.msra.mxu0 0
      %3897 = vmatprep.subr.bf16.mxu0 0
      %3898 = vmatpush1.bf16.msra.mxu0 0
      %3899 = vmatprep.subr.bf16.mxu0 0
      %3900 = vmatpush1.bf16.msra.mxu0 0
      %3901 = vmatprep.subr.bf16.mxu0 0
      %3902 = vmatpush1.bf16.msra.mxu0 0
      %3903 = vmatprep.subr.bf16.mxu0 0
      %3904 = vmatpush1.bf16.msra.mxu0 0
      %3905 = vmatprep.subr.bf16.mxu0 0
      %3906 = vmatpush1.bf16.msra.mxu0 %v3889
      %3907 = vmatprep.subr.bf16.mxu0 0
      %3908 = vmatpush2.bf16.msra.mxu0 0
      %3909 = vmatprep.subr.bf16.mxu0 0
      %3910 = vmatpush2.bf16.msra.mxu0 0
      %3911 = vmatprep.subr.bf16.mxu0 0
      %3912 = vmatpush2.bf16.msra.mxu0 0
      %3913 = vmatprep.subr.bf16.mxu0 0
      %3914 = vmatpush2.bf16.msra.mxu0 0
      %3915 = vmatprep.subr.bf16.mxu0 0
      %3916 = vmatpush2.bf16.msra.mxu0 0
      %3917 = vmatprep.subr.bf16.mxu0 0
      %3918 = vmatpush2.bf16.msra.mxu0 0
      %3919 = vmatprep.subr.bf16.mxu0 0
      %3920 = vmatpush2.bf16.msra.mxu0 0
      %3921 = vmatprep.subr.bf16.mxu0 0
      %3922 = vmatpush2.bf16.msra.mxu0 0
      %3923 = vmatprep.mubr.bf16.mxu0 0
      %3924 = vmatmul.mubr.bf16.gmra.mxu0 %v3840
      %v3925 = vpop.f32.mrf.mxu0
      %v3926 = vadd.f32 0.0, %v3925
      %v3927 = vpop.f32.mrf.mxu0
      %v3928 = vpop.f32.mrf.mxu0
      %v3929 = vadd.f32 0.0, %v3928
      %v3930 = vpop.f32.mrf.mxu0
      %3931 = vmatprep.mubr.bf16.mxu0 0
      %3932 = vmatmul.mubr.bf16.gmra.mxu0 %v3843
      %v3933 = vpop.f32.mrf.mxu0
      %v3934 = vadd.f32 0.0, %v3933
      %v3935 = vpop.f32.mrf.mxu0
      %v3936 = vpop.f32.mrf.mxu0
      %v3937 = vadd.f32 0.0, %v3936
      %v3938 = vpop.f32.mrf.mxu0
      %3939 = vmatprep.mubr.bf16.mxu0 0
      %3940 = vmatmul.mubr.bf16.gmra.mxu0 %v3846
      %v3941 = vpop.f32.mrf.mxu0
      %v3942 = vadd.f32 0.0, %v3941
      %v3943 = vpop.f32.mrf.mxu0
      %v3944 = vpop.f32.mrf.mxu0
      %v3945 = vadd.f32 0.0, %v3944
      %v3946 = vpop.f32.mrf.mxu0
      %3947 = vmatprep.mubr.bf16.mxu0 0
      %3948 = vmatmul.mubr.bf16.gmra.mxu0 %v3849
      %v3949 = vpop.f32.mrf.mxu0
      %v3950 = vadd.f32 0.0, %v3949
      %v3951 = vpop.f32.mrf.mxu0
      %v3952 = vpop.f32.mrf.mxu0
      %v3953 = vadd.f32 0.0, %v3952
      %v3954 = vpop.f32.mrf.mxu0
      %3955 = vmatprep.mubr.bf16.mxu0 0
      %3956 = vmatmul.mubr.bf16.gmra.mxu0 %v3852
      %v3957 = vpop.f32.mrf.mxu0
      %v3958 = vadd.f32 0.0, %v3957
      %v3959 = vpop.f32.mrf.mxu0
      %v3960 = vpop.f32.mrf.mxu0
      %v3961 = vadd.f32 0.0, %v3960
      %v3962 = vpop.f32.mrf.mxu0
      %3963 = vmatprep.mubr.bf16.mxu0 0
      %3964 = vmatmul.mubr.bf16.gmra.mxu0 %v3855
      %v3965 = vpop.f32.mrf.mxu0
      %v3966 = vadd.f32 0.0, %v3965
      %v3967 = vpop.f32.mrf.mxu0
      %v3968 = vpop.f32.mrf.mxu0
      %v3969 = vadd.f32 0.0, %v3968
      %v3970 = vpop.f32.mrf.mxu0
      %3971 = vmatprep.mubr.bf16.mxu0 0
      %3972 = vmatmul.mubr.bf16.gmra.mxu0 %v3858
      %v3973 = vpop.f32.mrf.mxu0
      %v3974 = vadd.f32 0.0, %v3973
      %v3975 = vpop.f32.mrf.mxu0
      %v3976 = vpop.f32.mrf.mxu0
      %v3977 = vadd.f32 0.0, %v3976
      %v3978 = vpop.f32.mrf.mxu0
      %3979 = vmatprep.mubr.bf16.mxu0 0
      %3980 = vmatmul.mubr.bf16.gmra.mxu0 %v3861
      %v3981 = vpop.f32.mrf.mxu0
      %v3982 = vadd.f32 0.0, %v3981
      %v3983 = vpop.f32.mrf.mxu0
      %v3984 = vpop.f32.mrf.mxu0
      %v3985 = vadd.f32 0.0, %v3984
      %v3986 = vpop.f32.mrf.mxu0
      %3987 = vmatprep.mubr.bf16.mxu0 0
      %3988 = vmatmul.mubr.bf16.gmra.mxu0 %v3864
      %v3989 = vpop.f32.mrf.mxu0
      %v3990 = vadd.f32 0.0, %v3989
      %v3991 = vpop.f32.mrf.mxu0
      %v3992 = vpop.f32.mrf.mxu0
      %v3993 = vadd.f32 0.0, %v3992
      %v3994 = vpop.f32.mrf.mxu0
      %3995 = vmatprep.mubr.bf16.mxu0 0
      %3996 = vmatmul.mubr.bf16.gmra.mxu0 %v3867
      %v3997 = vpop.f32.mrf.mxu0
      %v3998 = vadd.f32 0.0, %v3997
      %v3999 = vpop.f32.mrf.mxu0
      %v4000 = vpop.f32.mrf.mxu0
      %v4001 = vadd.f32 0.0, %v4000
      %v4002 = vpop.f32.mrf.mxu0
      %4003 = vmatprep.mubr.bf16.mxu0 0
      %4004 = vmatmul.mubr.bf16.gmra.mxu0 %v3870
      %v4005 = vpop.f32.mrf.mxu0
      %v4006 = vadd.f32 0.0, %v4005
      %v4007 = vpop.f32.mrf.mxu0
      %v4008 = vpop.f32.mrf.mxu0
      %v4009 = vadd.f32 0.0, %v4008
      %v4010 = vpop.f32.mrf.mxu0
      %4011 = vmatprep.mubr.bf16.mxu0 0
      %4012 = vmatmul.mubr.bf16.gmra.mxu0 %v3873
      %v4013 = vpop.f32.mrf.mxu0
      %v4014 = vadd.f32 0.0, %v4013
      %v4015 = vpop.f32.mrf.mxu0
      %v4016 = vpop.f32.mrf.mxu0
      %v4017 = vadd.f32 0.0, %v4016
      %v4018 = vpop.f32.mrf.mxu0
      %4019 = vmatprep.mubr.bf16.mxu0 0
      %4020 = vmatmul.mubr.bf16.gmra.mxu0 %v3876
      %v4021 = vpop.f32.mrf.mxu0
      %v4022 = vadd.f32 0.0, %v4021
      %v4023 = vpop.f32.mrf.mxu0
      %v4024 = vpop.f32.mrf.mxu0
      %v4025 = vadd.f32 0.0, %v4024
      %v4026 = vpop.f32.mrf.mxu0
      %4027 = vmatprep.mubr.bf16.mxu0 0
      %4028 = vmatmul.mubr.bf16.gmra.mxu0 %v3879
      %v4029 = vpop.f32.mrf.mxu0
      %v4030 = vadd.f32 0.0, %v4029
      %v4031 = vpop.f32.mrf.mxu0
      %v4032 = vpop.f32.mrf.mxu0
      %v4033 = vadd.f32 0.0, %v4032
      %v4034 = vpop.f32.mrf.mxu0
      %4035 = vmatprep.mubr.bf16.mxu0 0
      %4036 = vmatmul.mubr.bf16.gmra.mxu0 %v3882
      %v4037 = vpop.f32.mrf.mxu0
      %v4038 = vadd.f32 0.0, %v4037
      %v4039 = vpop.f32.mrf.mxu0
      %v4040 = vpop.f32.mrf.mxu0
      %v4041 = vadd.f32 0.0, %v4040
      %v4042 = vpop.f32.mrf.mxu0
      %4043 = vmatprep.mubr.bf16.mxu0 0
      %4044 = vmatmul.mubr.bf16.gmra.mxu0 %v3885
      %v4045 = vpop.f32.mrf.mxu0
      %v4046 = vadd.f32 0.0, %v4045
      %v4047 = vpop.f32.mrf.mxu0
      %v4048 = vpop.f32.mrf.mxu0
      %v4049 = vadd.f32 0.0, %v4048
      %v4050 = vpop.f32.mrf.mxu0
      %4051 = vdwg.mxu0
      %v4053 = vsel %vm3187, %v3170, 0
      %v4056 = vsel %vm3187, %v3171, 0
      %v4059 = vsel %vm3187, %v3172, 0
      %v4062 = vsel %vm3187, %v3173, 0
      %v4065 = vsel %vm3187, %v3174, 0
      %v4068 = vsel %vm3187, %v3175, 0
      %v4071 = vsel %vm3187, %v3176, 0
      %v4074 = vsel %vm3187, %v3177, 0
      %v4077 = vsel %vm3187, %v3178, 0
      %v4080 = vsel %vm3187, %v3179, 0
      %v4083 = vsel %vm3187, %v3180, 0
      %v4086 = vsel %vm3187, %v3181, 0
      %v4089 = vsel %vm3187, %v3182, 0
      %v4092 = vsel %vm3187, %v3183, 0
      %v4095 = vsel %vm3187, %v3184, 0
      %v4098 = vsel %vm3187, %v3185, 0
      %v4101 = vsel %vm3887, %v3186, 0
      %4103 = vmatprep.subr.bf16.mxu0 0
      %4104 = vmatpush1.bf16.msra.mxu0 0
      %4105 = vmatprep.subr.bf16.mxu0 0
      %4106 = vmatpush1.bf16.msra.mxu0 0
      %4107 = vmatprep.subr.bf16.mxu0 0
      %4108 = vmatpush1.bf16.msra.mxu0 0
      %4109 = vmatprep.subr.bf16.mxu0 0
      %4110 = vmatpush1.bf16.msra.mxu0 0
      %4111 = vmatprep.subr.bf16.mxu0 0
      %4112 = vmatpush1.bf16.msra.mxu0 0
      %4113 = vmatprep.subr.bf16.mxu0 0
      %4114 = vmatpush1.bf16.msra.mxu0 0
      %4115 = vmatprep.subr.bf16.mxu0 0
      %4116 = vmatpush1.bf16.msra.mxu0 0
      %4117 = vmatprep.subr.bf16.mxu0 0
      %4118 = vmatpush1.bf16.msra.mxu0 %v4101
      %4119 = vmatprep.subr.bf16.mxu0 0
      %4120 = vmatpush2.bf16.msra.mxu0 0
      %4121 = vmatprep.subr.bf16.mxu0 0
      %4122 = vmatpush2.bf16.msra.mxu0 0
      %4123 = vmatprep.subr.bf16.mxu0 0
      %4124 = vmatpush2.bf16.msra.mxu0 0
      %4125 = vmatprep.subr.bf16.mxu0 0
      %4126 = vmatpush2.bf16.msra.mxu0 0
      %4127 = vmatprep.subr.bf16.mxu0 0
      %4128 = vmatpush2.bf16.msra.mxu0 0
      %4129 = vmatprep.subr.bf16.mxu0 0
      %4130 = vmatpush2.bf16.msra.mxu0 0
      %4131 = vmatprep.subr.bf16.mxu0 0
      %4132 = vmatpush2.bf16.msra.mxu0 0
      %4133 = vmatprep.subr.bf16.mxu0 0
      %4134 = vmatpush2.bf16.msra.mxu0 0
      %4135 = vmatprep.mubr.bf16.mxu0 0
      %4136 = vmatmul.mubr.bf16.gmra.mxu0 %v4053
      %v4137 = vpop.f32.mrf.mxu0
      %v4138 = vadd.f32 %v3926, %v4137
      %v4139 = vpop.f32.mrf.mxu0
      %v4140 = vpop.f32.mrf.mxu0
      %v4141 = vadd.f32 %v3929, %v4140
      %v4142 = vpop.f32.mrf.mxu0
      %4143 = vmatprep.mubr.bf16.mxu0 0
      %4144 = vmatmul.mubr.bf16.gmra.mxu0 %v4056
      %v4145 = vpop.f32.mrf.mxu0
      %v4146 = vadd.f32 %v3934, %v4145
      %v4147 = vpop.f32.mrf.mxu0
      %v4148 = vpop.f32.mrf.mxu0
      %v4149 = vadd.f32 %v3937, %v4148
      %v4150 = vpop.f32.mrf.mxu0
      %4151 = vmatprep.mubr.bf16.mxu0 0
      %4152 = vmatmul.mubr.bf16.gmra.mxu0 %v4059
      %v4153 = vpop.f32.mrf.mxu0
      %v4154 = vadd.f32 %v3942, %v4153
      %v4155 = vpop.f32.mrf.mxu0
      %v4156 = vpop.f32.mrf.mxu0
      %v4157 = vadd.f32 %v3945, %v4156
      %v4158 = vpop.f32.mrf.mxu0
      %4159 = vmatprep.mubr.bf16.mxu0 0
      %4160 = vmatmul.mubr.bf16.gmra.mxu0 %v4062
      %v4161 = vpop.f32.mrf.mxu0
      %v4162 = vadd.f32 %v3950, %v4161
      %v4163 = vpop.f32.mrf.mxu0
      %v4164 = vpop.f32.mrf.mxu0
      %v4165 = vadd.f32 %v3953, %v4164
      %v4166 = vpop.f32.mrf.mxu0
      %4167 = vmatprep.mubr.bf16.mxu0 0
      %4168 = vmatmul.mubr.bf16.gmra.mxu0 %v4065
      %v4169 = vpop.f32.mrf.mxu0
      %v4170 = vadd.f32 %v3958, %v4169
      %v4171 = vpop.f32.mrf.mxu0
      %v4172 = vpop.f32.mrf.mxu0
      %v4173 = vadd.f32 %v3961, %v4172
      %v4174 = vpop.f32.mrf.mxu0
      %4175 = vmatprep.mubr.bf16.mxu0 0
      %4176 = vmatmul.mubr.bf16.gmra.mxu0 %v4068
      %v4177 = vpop.f32.mrf.mxu0
      %v4178 = vadd.f32 %v3966, %v4177
      %v4179 = vpop.f32.mrf.mxu0
      %v4180 = vpop.f32.mrf.mxu0
      %v4181 = vadd.f32 %v3969, %v4180
      %v4182 = vpop.f32.mrf.mxu0
      %4183 = vmatprep.mubr.bf16.mxu0 0
      %4184 = vmatmul.mubr.bf16.gmra.mxu0 %v4071
      %v4185 = vpop.f32.mrf.mxu0
      %v4186 = vadd.f32 %v3974, %v4185
      %v4187 = vpop.f32.mrf.mxu0
      %v4188 = vpop.f32.mrf.mxu0
      %v4189 = vadd.f32 %v3977, %v4188
      %v4190 = vpop.f32.mrf.mxu0
      %4191 = vmatprep.mubr.bf16.mxu0 0
      %4192 = vmatmul.mubr.bf16.gmra.mxu0 %v4074
      %v4193 = vpop.f32.mrf.mxu0
      %v4194 = vadd.f32 %v3982, %v4193
      %v4195 = vpop.f32.mrf.mxu0
      %v4196 = vpop.f32.mrf.mxu0
      %v4197 = vadd.f32 %v3985, %v4196
      %v4198 = vpop.f32.mrf.mxu0
      %4199 = vmatprep.mubr.bf16.mxu0 0
      %4200 = vmatmul.mubr.bf16.gmra.mxu0 %v4077
      %v4201 = vpop.f32.mrf.mxu0
      %v4202 = vadd.f32 %v3990, %v4201
      %v4203 = vpop.f32.mrf.mxu0
      %v4204 = vpop.f32.mrf.mxu0
      %v4205 = vadd.f32 %v3993, %v4204
      %v4206 = vpop.f32.mrf.mxu0
      %4207 = vmatprep.mubr.bf16.mxu0 0
      %4208 = vmatmul.mubr.bf16.gmra.mxu0 %v4080
      %v4209 = vpop.f32.mrf.mxu0
      %v4210 = vadd.f32 %v3998, %v4209
      %v4211 = vpop.f32.mrf.mxu0
      %v4212 = vpop.f32.mrf.mxu0
      %v4213 = vadd.f32 %v4001, %v4212
      %v4214 = vpop.f32.mrf.mxu0
      %4215 = vmatprep.mubr.bf16.mxu0 0
      %4216 = vmatmul.mubr.bf16.gmra.mxu0 %v4083
      %v4217 = vpop.f32.mrf.mxu0
      %v4218 = vadd.f32 %v4006, %v4217
      %v4219 = vpop.f32.mrf.mxu0
      %v4220 = vpop.f32.mrf.mxu0
      %v4221 = vadd.f32 %v4009, %v4220
      %v4222 = vpop.f32.mrf.mxu0
      %4223 = vmatprep.mubr.bf16.mxu0 0
      %4224 = vmatmul.mubr.bf16.gmra.mxu0 %v4086
      %v4225 = vpop.f32.mrf.mxu0
      %v4226 = vadd.f32 %v4014, %v4225
      %v4227 = vpop.f32.mrf.mxu0
      %v4228 = vpop.f32.mrf.mxu0
      %v4229 = vadd.f32 %v4017, %v4228
      %v4230 = vpop.f32.mrf.mxu0
      %4231 = vmatprep.mubr.bf16.mxu0 0
      %4232 = vmatmul.mubr.bf16.gmra.mxu0 %v4089
      %v4233 = vpop.f32.mrf.mxu0
      %v4234 = vadd.f32 %v4022, %v4233
      %v4235 = vpop.f32.mrf.mxu0
      %v4236 = vpop.f32.mrf.mxu0
      %v4237 = vadd.f32 %v4025, %v4236
      %v4238 = vpop.f32.mrf.mxu0
      %4239 = vmatprep.mubr.bf16.mxu0 0
      %4240 = vmatmul.mubr.bf16.gmra.mxu0 %v4092
      %v4241 = vpop.f32.mrf.mxu0
      %v4242 = vadd.f32 %v4030, %v4241
      %v4243 = vpop.f32.mrf.mxu0
      %v4244 = vpop.f32.mrf.mxu0
      %v4245 = vadd.f32 %v4033, %v4244
      %v4246 = vpop.f32.mrf.mxu0
      %4247 = vmatprep.mubr.bf16.mxu0 0
      %4248 = vmatmul.mubr.bf16.gmra.mxu0 %v4095
      %v4249 = vpop.f32.mrf.mxu0
      %v4250 = vadd.f32 %v4038, %v4249
      %v4251 = vpop.f32.mrf.mxu0
      %v4252 = vpop.f32.mrf.mxu0
      %v4253 = vadd.f32 %v4041, %v4252
      %v4254 = vpop.f32.mrf.mxu0
      %4255 = vmatprep.mubr.bf16.mxu0 0
      %4256 = vmatmul.mubr.bf16.gmra.mxu0 %v4098
      %v4257 = vpop.f32.mrf.mxu0
      %v4258 = vadd.f32 %v4046, %v4257
      %v4259 = vpop.f32.mrf.mxu0
      %v4260 = vpop.f32.mrf.mxu0
      %v4261 = vadd.f32 %v4049, %v4260
      %v4262 = vpop.f32.mrf.mxu0
      %4263 = vdwg.mxu0
      %4264 = vst.msk [vmem:[%s3243 + $0x1] sm:$0xff] %vm3187, %v3789
      %4265 = vst.msk [vmem:[%s3243 + $0x9] sm:$0xff] %vm3187, %v3790
      %4266 = vst.msk [vmem:[%s3243 + $0x19] sm:$0xff] %vm3187, %v3791
      %4267 = vst.msk [vmem:[%s3243 + $0x21] sm:$0xff] %vm3187, %v3792
      %4268 = vst.msk [vmem:[%s3243 + $0x31] sm:$0xff] %vm3187, %v3793
      %4269 = vst.msk [vmem:[%s3243 + $0x39] sm:$0xff] %vm3187, %v3794
      %4270 = vst.msk [vmem:[%s3243 + $0x49] sm:$0xff] %vm3187, %v3795
      %4271 = vst.msk [vmem:[%s3243 + $0x51] sm:$0xff] %vm3187, %v3796
      %4272 = vst.msk [vmem:[%s3243 + $0x61] sm:$0xff] %vm3187, %v3797
      %4273 = vst.msk [vmem:[%s3243 + $0x69] sm:$0xff] %vm3187, %v3798
      %4274 = vst.msk [vmem:[%s3243 + $0x79] sm:$0xff] %vm3187, %v3799
      %4275 = vst.msk [vmem:[%s3243 + $0x81] sm:$0xff] %vm3187, %v3800
      %4276 = vst.msk [vmem:[%s3243 + $0x91] sm:$0xff] %vm3187, %v3801
      %4277 = vst.msk [vmem:[%s3243 + $0x99] sm:$0xff] %vm3187, %v3802
      %4278 = vst.msk [vmem:[%s3243 + $0xa9] sm:$0xff] %vm3187, %v3803
      %4279 = vst.msk [vmem:[%s3243 + $0xb1] sm:$0xff] %vm3187, %v3804
      %4280 = vst.msk [vmem:[%s3243 + $0xc1] sm:$0xff] %vm3187, %v3805
      %4281 = vst.msk [vmem:[%s3243 + $0xc9] sm:$0xff] %vm3187, %v3806
      %4282 = vst.msk [vmem:[%s3243 + $0xd9] sm:$0xff] %vm3187, %v3807
      %4283 = vst.msk [vmem:[%s3243 + $0xe1] sm:$0xff] %vm3187, %v3808
      %4284 = vst.msk [vmem:[%s3243 + $0xf1] sm:$0xff] %vm3187, %v3809
      %4285 = vst.msk [vmem:[%s3243 + $0xf9] sm:$0xff] %vm3187, %v3810
      %4286 = vst.msk [vmem:[%s3243 + $0x109] sm:$0xff] %vm3187, %v3811
      %4287 = vst.msk [vmem:[%s3243 + $0x111] sm:$0xff] %vm3187, %v3812
      %4288 = vst.msk [vmem:[%s3243 + $0x121] sm:$0xff] %vm3187, %v3813
      %4289 = vst.msk [vmem:[%s3243 + $0x129] sm:$0xff] %vm3187, %v3814
      %4290 = vst.msk [vmem:[%s3243 + $0x139] sm:$0xff] %vm3187, %v3815
      %4291 = vst.msk [vmem:[%s3243 + $0x141] sm:$0xff] %vm3187, %v3816
      %4292 = vst.msk [vmem:[%s3243 + $0x151] sm:$0xff] %vm3187, %v3817
      %4293 = vst.msk [vmem:[%s3243 + $0x159] sm:$0xff] %vm3187, %v3818
      %4294 = vst.msk [vmem:[%s3243 + $0x169] sm:$0xff] %vm3187, %v3819
      %4295 = vst.msk [vmem:[%s3243 + $0x171] sm:$0xff] %vm3187, %v3820
      %v4296 = vld [vmem:[#allocation2] sm:$0xff]
      %v4297 = vld [vmem:[#allocation2 + $0x8] sm:$0xff]
      %v4298 = vld [vmem:[#allocation2 + $0x18] sm:$0xff]
      %v4299 = vld [vmem:[#allocation2 + $0x20] sm:$0xff]
      %v4300 = vld [vmem:[#allocation2 + $0x30] sm:$0xff]
      %v4301 = vld [vmem:[#allocation2 + $0x38] sm:$0xff]
      %v4302 = vld [vmem:[#allocation2 + $0x48] sm:$0xff]
      %v4303 = vld [vmem:[#allocation2 + $0x50] sm:$0xff]
      %v4304 = vld [vmem:[#allocation2 + $0x60] sm:$0xff]
      %v4305 = vld [vmem:[#allocation2 + $0x68] sm:$0xff]
      %v4306 = vld [vmem:[#allocation2 + $0x78] sm:$0xff]
      %v4307 = vld [vmem:[#allocation2 + $0x80] sm:$0xff]
      %v4308 = vld [vmem:[#allocation2 + $0x90] sm:$0xff]
      %v4309 = vld [vmem:[#allocation2 + $0x98] sm:$0xff]
      %v4310 = vld [vmem:[#allocation2 + $0xa8] sm:$0xff]
      %v4311 = vld [vmem:[#allocation2 + $0xb0] sm:$0xff]
      %v4312 = vld [vmem:[#allocation2 + $0xc0] sm:$0xff]
      %v4313 = vld [vmem:[#allocation2 + $0xc8] sm:$0xff]
      %v4314 = vld [vmem:[#allocation2 + $0xd8] sm:$0xff]
      %v4315 = vld [vmem:[#allocation2 + $0xe0] sm:$0xff]
      %v4316 = vld [vmem:[#allocation2 + $0xf0] sm:$0xff]
      %v4317 = vld [vmem:[#allocation2 + $0xf8] sm:$0xff]
      %v4318 = vld [vmem:[#allocation2 + $0x108] sm:$0xff]
      %v4319 = vld [vmem:[#allocation2 + $0x110] sm:$0xff]
      %v4320 = vld [vmem:[#allocation2 + $0x120] sm:$0xff]
      %v4321 = vld [vmem:[#allocation2 + $0x128] sm:$0xff]
      %v4322 = vld [vmem:[#allocation2 + $0x138] sm:$0xff]
      %v4323 = vld [vmem:[#allocation2 + $0x140] sm:$0xff]
      %v4324 = vld [vmem:[#allocation2 + $0x150] sm:$0xff]
      %v4325 = vld [vmem:[#allocation2 + $0x158] sm:$0xff]
      %v4326 = vld [vmem:[#allocation2 + $0x168] sm:$0xff]
      %v4327 = vld [vmem:[#allocation2 + $0x170] sm:$0xff]
      %v4328 = vld [vmem:[#allocation2 + $0x1] sm:$0xff]
      %v4329 = vld [vmem:[#allocation2 + $0x9] sm:$0xff]
      %v4330 = vld [vmem:[#allocation2 + $0x19] sm:$0xff]
      %v4331 = vld [vmem:[#allocation2 + $0x21] sm:$0xff]
      %v4332 = vld [vmem:[#allocation2 + $0x31] sm:$0xff]
      %v4333 = vld [vmem:[#allocation2 + $0x39] sm:$0xff]
      %v4334 = vld [vmem:[#allocation2 + $0x49] sm:$0xff]
      %v4335 = vld [vmem:[#allocation2 + $0x51] sm:$0xff]
      %v4336 = vld [vmem:[#allocation2 + $0x61] sm:$0xff]
      %v4337 = vld [vmem:[#allocation2 + $0x69] sm:$0xff]
      %v4338 = vld [vmem:[#allocation2 + $0x79] sm:$0xff]
      %v4339 = vld [vmem:[#allocation2 + $0x81] sm:$0xff]
      %v4340 = vld [vmem:[#allocation2 + $0x91] sm:$0xff]
      %v4341 = vld [vmem:[#allocation2 + $0x99] sm:$0xff]
      %v4342 = vld [vmem:[#allocation2 + $0xa9] sm:$0xff]
      %v4343 = vld [vmem:[#allocation2 + $0xb1] sm:$0xff]
      %v4344 = vld [vmem:[#allocation2 + $0xc1] sm:$0xff]
      %v4345 = vld [vmem:[#allocation2 + $0xc9] sm:$0xff]
      %v4346 = vld [vmem:[#allocation2 + $0xd9] sm:$0xff]
      %v4347 = vld [vmem:[#allocation2 + $0xe1] sm:$0xff]
      %v4348 = vld [vmem:[#allocation2 + $0xf1] sm:$0xff]
      %v4349 = vld [vmem:[#allocation2 + $0xf9] sm:$0xff]
      %v4350 = vld [vmem:[#allocation2 + $0x109] sm:$0xff]
      %v4351 = vld [vmem:[#allocation2 + $0x111] sm:$0xff]
      %v4352 = vld [vmem:[#allocation2 + $0x121] sm:$0xff]
      %v4353 = vld [vmem:[#allocation2 + $0x129] sm:$0xff]
      %v4354 = vld [vmem:[#allocation2 + $0x139] sm:$0xff]
      %v4355 = vld [vmem:[#allocation2 + $0x141] sm:$0xff]
      %v4356 = vld [vmem:[#allocation2 + $0x151] sm:$0xff]
      %v4357 = vld [vmem:[#allocation2 + $0x159] sm:$0xff]
      %v4358 = vld [vmem:[#allocation2 + $0x169] sm:$0xff]
      %v4359 = vld [vmem:[#allocation2 + $0x171] sm:$0xff]
      %v4360 = vmax.f32 %v4296, %v4328
      %v4361 = vmax.f32 %v4297, %v4329
      %v4362 = vmax.f32 %v4298, %v4330
      %v4363 = vmax.f32 %v4299, %v4331
      %v4364 = vmax.f32 %v4300, %v4332
      %v4365 = vmax.f32 %v4301, %v4333
      %v4366 = vmax.f32 %v4302, %v4334
      %v4367 = vmax.f32 %v4303, %v4335
      %v4368 = vmax.f32 %v4304, %v4336
      %v4369 = vmax.f32 %v4305, %v4337
      %v4370 = vmax.f32 %v4306, %v4338
      %v4371 = vmax.f32 %v4307, %v4339
      %v4372 = vmax.f32 %v4308, %v4340
      %v4373 = vmax.f32 %v4309, %v4341
      %v4374 = vmax.f32 %v4310, %v4342
      %v4375 = vmax.f32 %v4311, %v4343
      %v4376 = vmax.f32 %v4312, %v4344
      %v4377 = vmax.f32 %v4313, %v4345
      %v4378 = vmax.f32 %v4314, %v4346
      %v4379 = vmax.f32 %v4315, %v4347
      %v4380 = vmax.f32 %v4316, %v4348
      %v4381 = vmax.f32 %v4317, %v4349
      %v4382 = vmax.f32 %v4318, %v4350
      %v4383 = vmax.f32 %v4319, %v4351
      %v4384 = vmax.f32 %v4320, %v4352
      %v4385 = vmax.f32 %v4321, %v4353
      %v4386 = vmax.f32 %v4322, %v4354
      %v4387 = vmax.f32 %v4323, %v4355
      %v4388 = vmax.f32 %v4324, %v4356
      %v4389 = vmax.f32 %v4325, %v4357
      %v4390 = vmax.f32 %v4326, %v4358
      %v4391 = vmax.f32 %v4327, %v4359
      %v4392 = vld [vmem:[#allocation2 + $0x2] sm:$0xff]
      %v4393 = vld [vmem:[#allocation2 + $0xa] sm:$0xff]
      %v4394 = vld [vmem:[#allocation2 + $0x1a] sm:$0xff]
      %v4395 = vld [vmem:[#allocation2 + $0x22] sm:$0xff]
      %v4396 = vld [vmem:[#allocation2 + $0x32] sm:$0xff]
      %v4397 = vld [vmem:[#allocation2 + $0x3a] sm:$0xff]
      %v4398 = vld [vmem:[#allocation2 + $0x4a] sm:$0xff]
      %v4399 = vld [vmem:[#allocation2 + $0x52] sm:$0xff]
      %v4400 = vld [vmem:[#allocation2 + $0x62] sm:$0xff]
      %v4401 = vld [vmem:[#allocation2 + $0x6a] sm:$0xff]
      %v4402 = vld [vmem:[#allocation2 + $0x7a] sm:$0xff]
      %v4403 = vld [vmem:[#allocation2 + $0x82] sm:$0xff]
      %v4404 = vld [vmem:[#allocation2 + $0x92] sm:$0xff]
      %v4405 = vld [vmem:[#allocation2 + $0x9a] sm:$0xff]
      %v4406 = vld [vmem:[#allocation2 + $0xaa] sm:$0xff]
      %v4407 = vld [vmem:[#allocation2 + $0xb2] sm:$0xff]
      %v4408 = vld [vmem:[#allocation2 + $0xc2] sm:$0xff]
      %v4409 = vld [vmem:[#allocation2 + $0xca] sm:$0xff]
      %v4410 = vld [vmem:[#allocation2 + $0xda] sm:$0xff]
      %v4411 = vld [vmem:[#allocation2 + $0xe2] sm:$0xff]
      %v4412 = vld [vmem:[#allocation2 + $0xf2] sm:$0xff]
      %v4413 = vld [vmem:[#allocation2 + $0xfa] sm:$0xff]
      %v4414 = vld [vmem:[#allocation2 + $0x10a] sm:$0xff]
      %v4415 = vld [vmem:[#allocation2 + $0x112] sm:$0xff]
      %v4416 = vld [vmem:[#allocation2 + $0x122] sm:$0xff]
      %v4417 = vld [vmem:[#allocation2 + $0x12a] sm:$0xff]
      %v4418 = vld [vmem:[#allocation2 + $0x13a] sm:$0xff]
      %v4419 = vld [vmem:[#allocation2 + $0x142] sm:$0xff]
      %v4420 = vld [vmem:[#allocation2 + $0x152] sm:$0xff]
      %v4421 = vld [vmem:[#allocation2 + $0x15a] sm:$0xff]
      %v4422 = vld [vmem:[#allocation2 + $0x16a] sm:$0xff]
      %v4423 = vld [vmem:[#allocation2 + $0x172] sm:$0xff]
      %v4424 = vmax.f32 %v4360, %v4392
      %v4425 = vmax.f32 %v4361, %v4393
      %v4426 = vmax.f32 %v4362, %v4394
      %v4427 = vmax.f32 %v4363, %v4395
      %v4428 = vmax.f32 %v4364, %v4396
      %v4429 = vmax.f32 %v4365, %v4397
      %v4430 = vmax.f32 %v4366, %v4398
      %v4431 = vmax.f32 %v4367, %v4399
      %v4432 = vmax.f32 %v4368, %v4400
      %v4433 = vmax.f32 %v4369, %v4401
      %v4434 = vmax.f32 %v4370, %v4402
      %v4435 = vmax.f32 %v4371, %v4403
      %v4436 = vmax.f32 %v4372, %v4404
      %v4437 = vmax.f32 %v4373, %v4405
      %v4438 = vmax.f32 %v4374, %v4406
      %v4439 = vmax.f32 %v4375, %v4407
      %v4440 = vmax.f32 %v4376, %v4408
      %v4441 = vmax.f32 %v4377, %v4409
      %v4442 = vmax.f32 %v4378, %v4410
      %v4443 = vmax.f32 %v4379, %v4411
      %v4444 = vmax.f32 %v4380, %v4412
      %v4445 = vmax.f32 %v4381, %v4413
      %v4446 = vmax.f32 %v4382, %v4414
      %v4447 = vmax.f32 %v4383, %v4415
      %v4448 = vmax.f32 %v4384, %v4416
      %v4449 = vmax.f32 %v4385, %v4417
      %v4450 = vmax.f32 %v4386, %v4418
      %v4451 = vmax.f32 %v4387, %v4419
      %v4452 = vmax.f32 %v4388, %v4420
      %v4453 = vmax.f32 %v4389, %v4421
      %v4454 = vmax.f32 %v4390, %v4422
      %v4455 = vmax.f32 %v4391, %v4423
      %v4456 = vld [vmem:[%s3243] sm:$0xff]
      %v4457 = vld [vmem:[%s3243 + $0x8] sm:$0xff]
      %v4458 = vld [vmem:[%s3243 + $0x18] sm:$0xff]
      %v4459 = vld [vmem:[%s3243 + $0x20] sm:$0xff]
      %v4460 = vld [vmem:[%s3243 + $0x30] sm:$0xff]
      %v4461 = vld [vmem:[%s3243 + $0x38] sm:$0xff]
      %v4462 = vld [vmem:[%s3243 + $0x48] sm:$0xff]
      %v4463 = vld [vmem:[%s3243 + $0x50] sm:$0xff]
      %v4464 = vld [vmem:[%s3243 + $0x60] sm:$0xff]
      %v4465 = vld [vmem:[%s3243 + $0x68] sm:$0xff]
      %v4466 = vld [vmem:[%s3243 + $0x78] sm:$0xff]
      %v4467 = vld [vmem:[%s3243 + $0x80] sm:$0xff]
      %v4468 = vld [vmem:[%s3243 + $0x90] sm:$0xff]
      %v4469 = vld [vmem:[%s3243 + $0x98] sm:$0xff]
      %v4470 = vld [vmem:[%s3243 + $0xa8] sm:$0xff]
      %v4471 = vld [vmem:[%s3243 + $0xb0] sm:$0xff]
      %v4472 = vld [vmem:[%s3243 + $0xc0] sm:$0xff]
      %v4473 = vld [vmem:[%s3243 + $0xc8] sm:$0xff]
      %v4474 = vld [vmem:[%s3243 + $0xd8] sm:$0xff]
      %v4475 = vld [vmem:[%s3243 + $0xe0] sm:$0xff]
      %v4476 = vld [vmem:[%s3243 + $0xf0] sm:$0xff]
      %v4477 = vld [vmem:[%s3243 + $0xf8] sm:$0xff]
      %v4478 = vld [vmem:[%s3243 + $0x108] sm:$0xff]
      %v4479 = vld [vmem:[%s3243 + $0x110] sm:$0xff]
      %v4480 = vld [vmem:[%s3243 + $0x120] sm:$0xff]
      %v4481 = vld [vmem:[%s3243 + $0x128] sm:$0xff]
      %v4482 = vld [vmem:[%s3243 + $0x138] sm:$0xff]
      %v4483 = vld [vmem:[%s3243 + $0x140] sm:$0xff]
      %v4484 = vld [vmem:[%s3243 + $0x150] sm:$0xff]
      %v4485 = vld [vmem:[%s3243 + $0x158] sm:$0xff]
      %v4486 = vld [vmem:[%s3243 + $0x168] sm:$0xff]
      %v4487 = vld [vmem:[%s3243 + $0x170] sm:$0xff]
      %v4488 = vmax.f32 %v4424, %v4456
      %v4489 = vmax.f32 %v4425, %v4457
      %v4490 = vmax.f32 %v4426, %v4458
      %v4491 = vmax.f32 %v4427, %v4459
      %v4492 = vmax.f32 %v4428, %v4460
      %v4493 = vmax.f32 %v4429, %v4461
      %v4494 = vmax.f32 %v4430, %v4462
      %v4495 = vmax.f32 %v4431, %v4463
      %v4496 = vmax.f32 %v4432, %v4464
      %v4497 = vmax.f32 %v4433, %v4465
      %v4498 = vmax.f32 %v4434, %v4466
      %v4499 = vmax.f32 %v4435, %v4467
      %v4500 = vmax.f32 %v4436, %v4468
      %v4501 = vmax.f32 %v4437, %v4469
      %v4502 = vmax.f32 %v4438, %v4470
      %v4503 = vmax.f32 %v4439, %v4471
      %v4504 = vmax.f32 %v4440, %v4472
      %v4505 = vmax.f32 %v4441, %v4473
      %v4506 = vmax.f32 %v4442, %v4474
      %v4507 = vmax.f32 %v4443, %v4475
      %v4508 = vmax.f32 %v4444, %v4476
      %v4509 = vmax.f32 %v4445, %v4477
      %v4510 = vmax.f32 %v4446, %v4478
      %v4511 = vmax.f32 %v4447, %v4479
      %v4512 = vmax.f32 %v4448, %v4480
      %v4513 = vmax.f32 %v4449, %v4481
      %v4514 = vmax.f32 %v4450, %v4482
      %v4515 = vmax.f32 %v4451, %v4483
      %v4516 = vmax.f32 %v4452, %v4484
      %v4517 = vmax.f32 %v4453, %v4485
      %v4518 = vmax.f32 %v4454, %v4486
      %v4519 = vmax.f32 %v4455, %v4487
      %v4520 = vld [vmem:[%s3243 + $0x1] sm:$0xff]
      %v4521 = vld [vmem:[%s3243 + $0x9] sm:$0xff]
      %v4522 = vld [vmem:[%s3243 + $0x19] sm:$0xff]
      %v4523 = vld [vmem:[%s3243 + $0x21] sm:$0xff]
      %v4524 = vld [vmem:[%s3243 + $0x31] sm:$0xff]
      %v4525 = vld [vmem:[%s3243 + $0x39] sm:$0xff]
      %v4526 = vld [vmem:[%s3243 + $0x49] sm:$0xff]
      %v4527 = vld [vmem:[%s3243 + $0x51] sm:$0xff]
      %v4528 = vld [vmem:[%s3243 + $0x61] sm:$0xff]
      %v4529 = vld [vmem:[%s3243 + $0x69] sm:$0xff]
      %v4530 = vld [vmem:[%s3243 + $0x79] sm:$0xff]
      %v4531 = vld [vmem:[%s3243 + $0x81] sm:$0xff]
      %v4532 = vld [vmem:[%s3243 + $0x91] sm:$0xff]
      %v4533 = vld [vmem:[%s3243 + $0x99] sm:$0xff]
      %v4534 = vld [vmem:[%s3243 + $0xa9] sm:$0xff]
      %v4535 = vld [vmem:[%s3243 + $0xb1] sm:$0xff]
      %v4536 = vld [vmem:[%s3243 + $0xc1] sm:$0xff]
      %v4537 = vld [vmem:[%s3243 + $0xc9] sm:$0xff]
      %v4538 = vld [vmem:[%s3243 + $0xd9] sm:$0xff]
      %v4539 = vld [vmem:[%s3243 + $0xe1] sm:$0xff]
      %v4540 = vld [vmem:[%s3243 + $0xf1] sm:$0xff]
      %v4541 = vld [vmem:[%s3243 + $0xf9] sm:$0xff]
      %v4542 = vld [vmem:[%s3243 + $0x109] sm:$0xff]
      %v4543 = vld [vmem:[%s3243 + $0x111] sm:$0xff]
      %v4544 = vld [vmem:[%s3243 + $0x121] sm:$0xff]
      %v4545 = vld [vmem:[%s3243 + $0x129] sm:$0xff]
      %v4546 = vld [vmem:[%s3243 + $0x139] sm:$0xff]
      %v4547 = vld [vmem:[%s3243 + $0x141] sm:$0xff]
      %v4548 = vld [vmem:[%s3243 + $0x151] sm:$0xff]
      %v4549 = vld [vmem:[%s3243 + $0x159] sm:$0xff]
      %v4550 = vld [vmem:[%s3243 + $0x169] sm:$0xff]
      %v4551 = vld [vmem:[%s3243 + $0x171] sm:$0xff]
      %v4552 = vmax.f32 %v4488, %v4520
      %v4553 = vmax.f32 %v4489, %v4521
      %v4554 = vmax.f32 %v4490, %v4522
      %v4555 = vmax.f32 %v4491, %v4523
      %v4556 = vmax.f32 %v4492, %v4524
      %v4557 = vmax.f32 %v4493, %v4525
      %v4558 = vmax.f32 %v4494, %v4526
      %v4559 = vmax.f32 %v4495, %v4527
      %v4560 = vmax.f32 %v4496, %v4528
      %v4561 = vmax.f32 %v4497, %v4529
      %v4562 = vmax.f32 %v4498, %v4530
      %v4563 = vmax.f32 %v4499, %v4531
      %v4564 = vmax.f32 %v4500, %v4532
      %v4565 = vmax.f32 %v4501, %v4533
      %v4566 = vmax.f32 %v4502, %v4534
      %v4567 = vmax.f32 %v4503, %v4535
      %v4568 = vmax.f32 %v4504, %v4536
      %v4569 = vmax.f32 %v4505, %v4537
      %v4570 = vmax.f32 %v4506, %v4538
      %v4571 = vmax.f32 %v4507, %v4539
      %v4572 = vmax.f32 %v4508, %v4540
      %v4573 = vmax.f32 %v4509, %v4541
      %v4574 = vmax.f32 %v4510, %v4542
      %v4575 = vmax.f32 %v4511, %v4543
      %v4576 = vmax.f32 %v4512, %v4544
      %v4577 = vmax.f32 %v4513, %v4545
      %v4578 = vmax.f32 %v4514, %v4546
      %v4579 = vmax.f32 %v4515, %v4547
      %v4580 = vmax.f32 %v4516, %v4548
      %v4581 = vmax.f32 %v4517, %v4549
      %v4582 = vmax.f32 %v4518, %v4550
      %v4583 = vmax.f32 %v4519, %v4551
      %v4584 = vld [vmem:[%s3243 + $0x2] sm:$0xff]
      %v4585 = vld [vmem:[%s3243 + $0xa] sm:$0xff]
      %v4586 = vld [vmem:[%s3243 + $0x1a] sm:$0xff]
      %v4587 = vld [vmem:[%s3243 + $0x22] sm:$0xff]
      %v4588 = vld [vmem:[%s3243 + $0x32] sm:$0xff]
      %v4589 = vld [vmem:[%s3243 + $0x3a] sm:$0xff]
      %v4590 = vld [vmem:[%s3243 + $0x4a] sm:$0xff]
      %v4591 = vld [vmem:[%s3243 + $0x52] sm:$0xff]
      %v4592 = vld [vmem:[%s3243 + $0x62] sm:$0xff]
      %v4593 = vld [vmem:[%s3243 + $0x6a] sm:$0xff]
      %v4594 = vld [vmem:[%s3243 + $0x7a] sm:$0xff]
      %v4595 = vld [vmem:[%s3243 + $0x82] sm:$0xff]
      %v4596 = vld [vmem:[%s3243 + $0x92] sm:$0xff]
      %v4597 = vld [vmem:[%s3243 + $0x9a] sm:$0xff]
      %v4598 = vld [vmem:[%s3243 + $0xaa] sm:$0xff]
      %v4599 = vld [vmem:[%s3243 + $0xb2] sm:$0xff]
      %v4600 = vld [vmem:[%s3243 + $0xc2] sm:$0xff]
      %v4601 = vld [vmem:[%s3243 + $0xca] sm:$0xff]
      %v4602 = vld [vmem:[%s3243 + $0xda] sm:$0xff]
      %v4603 = vld [vmem:[%s3243 + $0xe2] sm:$0xff]
      %v4604 = vld [vmem:[%s3243 + $0xf2] sm:$0xff]
      %v4605 = vld [vmem:[%s3243 + $0xfa] sm:$0xff]
      %v4606 = vld [vmem:[%s3243 + $0x10a] sm:$0xff]
      %v4607 = vld [vmem:[%s3243 + $0x112] sm:$0xff]
      %v4608 = vld [vmem:[%s3243 + $0x122] sm:$0xff]
      %v4609 = vld [vmem:[%s3243 + $0x12a] sm:$0xff]
      %v4610 = vld [vmem:[%s3243 + $0x13a] sm:$0xff]
      %v4611 = vld [vmem:[%s3243 + $0x142] sm:$0xff]
      %v4612 = vld [vmem:[%s3243 + $0x152] sm:$0xff]
      %v4613 = vld [vmem:[%s3243 + $0x15a] sm:$0xff]
      %v4614 = vld [vmem:[%s3243 + $0x16a] sm:$0xff]
      %v4615 = vld [vmem:[%s3243 + $0x172] sm:$0xff]
      %v4616 = vmax.f32 %v4552, %v4584
      %v4617 = vmax.f32 %v4553, %v4585
      %v4618 = vmax.f32 %v4554, %v4586
      %v4619 = vmax.f32 %v4555, %v4587
      %v4620 = vmax.f32 %v4556, %v4588
      %v4621 = vmax.f32 %v4557, %v4589
      %v4622 = vmax.f32 %v4558, %v4590
      %v4623 = vmax.f32 %v4559, %v4591
      %v4624 = vmax.f32 %v4560, %v4592
      %v4625 = vmax.f32 %v4561, %v4593
      %v4626 = vmax.f32 %v4562, %v4594
      %v4627 = vmax.f32 %v4563, %v4595
      %v4628 = vmax.f32 %v4564, %v4596
      %v4629 = vmax.f32 %v4565, %v4597
      %v4630 = vmax.f32 %v4566, %v4598
      %v4631 = vmax.f32 %v4567, %v4599
      %v4632 = vmax.f32 %v4568, %v4600
      %v4633 = vmax.f32 %v4569, %v4601
      %v4634 = vmax.f32 %v4570, %v4602
      %v4635 = vmax.f32 %v4571, %v4603
      %v4636 = vmax.f32 %v4572, %v4604
      %v4637 = vmax.f32 %v4573, %v4605
      %v4638 = vmax.f32 %v4574, %v4606
      %v4639 = vmax.f32 %v4575, %v4607
      %v4640 = vmax.f32 %v4576, %v4608
      %v4641 = vmax.f32 %v4577, %v4609
      %v4642 = vmax.f32 %v4578, %v4610
      %v4643 = vmax.f32 %v4579, %v4611
      %v4644 = vmax.f32 %v4580, %v4612
      %v4645 = vmax.f32 %v4581, %v4613
      %v4646 = vmax.f32 %v4582, %v4614
      %v4647 = vmax.f32 %v4583, %v4615
      %v4648 = vld [vmem:[%s3628] sm:$0xff]
      %v4649 = vld [vmem:[%s3628 + $0x8] sm:$0xff]
      %v4650 = vld [vmem:[%s3628 + $0x18] sm:$0xff]
      %v4651 = vld [vmem:[%s3628 + $0x20] sm:$0xff]
      %v4652 = vld [vmem:[%s3628 + $0x30] sm:$0xff]
      %v4653 = vld [vmem:[%s3628 + $0x38] sm:$0xff]
      %v4654 = vld [vmem:[%s3628 + $0x48] sm:$0xff]
      %v4655 = vld [vmem:[%s3628 + $0x50] sm:$0xff]
      %v4656 = vld [vmem:[%s3628 + $0x60] sm:$0xff]
      %v4657 = vld [vmem:[%s3628 + $0x68] sm:$0xff]
      %v4658 = vld [vmem:[%s3628 + $0x78] sm:$0xff]
      %v4659 = vld [vmem:[%s3628 + $0x80] sm:$0xff]
      %v4660 = vld [vmem:[%s3628 + $0x90] sm:$0xff]
      %v4661 = vld [vmem:[%s3628 + $0x98] sm:$0xff]
      %v4662 = vld [vmem:[%s3628 + $0xa8] sm:$0xff]
      %v4663 = vld [vmem:[%s3628 + $0xb0] sm:$0xff]
      %v4664 = vld [vmem:[%s3628 + $0xc0] sm:$0xff]
      %v4665 = vld [vmem:[%s3628 + $0xc8] sm:$0xff]
      %v4666 = vld [vmem:[%s3628 + $0xd8] sm:$0xff]
      %v4667 = vld [vmem:[%s3628 + $0xe0] sm:$0xff]
      %v4668 = vld [vmem:[%s3628 + $0xf0] sm:$0xff]
      %v4669 = vld [vmem:[%s3628 + $0xf8] sm:$0xff]
      %v4670 = vld [vmem:[%s3628 + $0x108] sm:$0xff]
      %v4671 = vld [vmem:[%s3628 + $0x110] sm:$0xff]
      %v4672 = vld [vmem:[%s3628 + $0x120] sm:$0xff]
      %v4673 = vld [vmem:[%s3628 + $0x128] sm:$0xff]
      %v4674 = vld [vmem:[%s3628 + $0x138] sm:$0xff]
      %v4675 = vld [vmem:[%s3628 + $0x140] sm:$0xff]
      %v4676 = vld [vmem:[%s3628 + $0x150] sm:$0xff]
      %v4677 = vld [vmem:[%s3628 + $0x158] sm:$0xff]
      %v4678 = vld [vmem:[%s3628 + $0x168] sm:$0xff]
      %v4679 = vld [vmem:[%s3628 + $0x170] sm:$0xff]
      %v4680 = vmax.f32 %v4616, %v4648
      %v4681 = vmax.f32 %v4617, %v4649
      %v4682 = vmax.f32 %v4618, %v4650
      %v4683 = vmax.f32 %v4619, %v4651
      %v4684 = vmax.f32 %v4620, %v4652
      %v4685 = vmax.f32 %v4621, %v4653
      %v4686 = vmax.f32 %v4622, %v4654
      %v4687 = vmax.f32 %v4623, %v4655
      %v4688 = vmax.f32 %v4624, %v4656
      %v4689 = vmax.f32 %v4625, %v4657
      %v4690 = vmax.f32 %v4626, %v4658
      %v4691 = vmax.f32 %v4627, %v4659
      %v4692 = vmax.f32 %v4628, %v4660
      %v4693 = vmax.f32 %v4629, %v4661
      %v4694 = vmax.f32 %v4630, %v4662
      %v4695 = vmax.f32 %v4631, %v4663
      %v4696 = vmax.f32 %v4632, %v4664
      %v4697 = vmax.f32 %v4633, %v4665
      %v4698 = vmax.f32 %v4634, %v4666
      %v4699 = vmax.f32 %v4635, %v4667
      %v4700 = vmax.f32 %v4636, %v4668
      %v4701 = vmax.f32 %v4637, %v4669
      %v4702 = vmax.f32 %v4638, %v4670
      %v4703 = vmax.f32 %v4639, %v4671
      %v4704 = vmax.f32 %v4640, %v4672
      %v4705 = vmax.f32 %v4641, %v4673
      %v4706 = vmax.f32 %v4642, %v4674
      %v4707 = vmax.f32 %v4643, %v4675
      %v4708 = vmax.f32 %v4644, %v4676
      %v4709 = vmax.f32 %v4645, %v4677
      %v4710 = vmax.f32 %v4646, %v4678
      %v4711 = vmax.f32 %v4647, %v4679
      %v4712 = vld [vmem:[%s3628 + $0x1] sm:$0xff]
      %v4713 = vld [vmem:[%s3628 + $0x9] sm:$0xff]
      %v4714 = vld [vmem:[%s3628 + $0x19] sm:$0xff]
      %v4715 = vld [vmem:[%s3628 + $0x21] sm:$0xff]
      %v4716 = vld [vmem:[%s3628 + $0x31] sm:$0xff]
      %v4717 = vld [vmem:[%s3628 + $0x39] sm:$0xff]
      %v4718 = vld [vmem:[%s3628 + $0x49] sm:$0xff]
      %v4719 = vld [vmem:[%s3628 + $0x51] sm:$0xff]
      %v4720 = vld [vmem:[%s3628 + $0x61] sm:$0xff]
      %v4721 = vld [vmem:[%s3628 + $0x69] sm:$0xff]
      %v4722 = vld [vmem:[%s3628 + $0x79] sm:$0xff]
      %v4723 = vld [vmem:[%s3628 + $0x81] sm:$0xff]
      %v4724 = vld [vmem:[%s3628 + $0x91] sm:$0xff]
      %v4725 = vld [vmem:[%s3628 + $0x99] sm:$0xff]
      %v4726 = vld [vmem:[%s3628 + $0xa9] sm:$0xff]
      %v4727 = vld [vmem:[%s3628 + $0xb1] sm:$0xff]
      %v4728 = vld [vmem:[%s3628 + $0xc1] sm:$0xff]
      %v4729 = vld [vmem:[%s3628 + $0xc9] sm:$0xff]
      %v4730 = vld [vmem:[%s3628 + $0xd9] sm:$0xff]
      %v4731 = vld [vmem:[%s3628 + $0xe1] sm:$0xff]
      %v4732 = vld [vmem:[%s3628 + $0xf1] sm:$0xff]
      %v4733 = vld [vmem:[%s3628 + $0xf9] sm:$0xff]
      %v4734 = vld [vmem:[%s3628 + $0x109] sm:$0xff]
      %v4735 = vld [vmem:[%s3628 + $0x111] sm:$0xff]
      %v4736 = vld [vmem:[%s3628 + $0x121] sm:$0xff]
      %v4737 = vld [vmem:[%s3628 + $0x129] sm:$0xff]
      %v4738 = vld [vmem:[%s3628 + $0x139] sm:$0xff]
      %v4739 = vld [vmem:[%s3628 + $0x141] sm:$0xff]
      %v4740 = vld [vmem:[%s3628 + $0x151] sm:$0xff]
      %v4741 = vld [vmem:[%s3628 + $0x159] sm:$0xff]
      %v4742 = vld [vmem:[%s3628 + $0x169] sm:$0xff]
      %v4743 = vld [vmem:[%s3628 + $0x171] sm:$0xff]
      %v4744 = vmax.f32 %v4680, %v4712
      %v4745 = vmax.f32 %v4681, %v4713
      %v4746 = vmax.f32 %v4682, %v4714
      %v4747 = vmax.f32 %v4683, %v4715
      %v4748 = vmax.f32 %v4684, %v4716
      %v4749 = vmax.f32 %v4685, %v4717
      %v4750 = vmax.f32 %v4686, %v4718
      %v4751 = vmax.f32 %v4687, %v4719
      %v4752 = vmax.f32 %v4688, %v4720
      %v4753 = vmax.f32 %v4689, %v4721
      %v4754 = vmax.f32 %v4690, %v4722
      %v4755 = vmax.f32 %v4691, %v4723
      %v4756 = vmax.f32 %v4692, %v4724
      %v4757 = vmax.f32 %v4693, %v4725
      %v4758 = vmax.f32 %v4694, %v4726
      %v4759 = vmax.f32 %v4695, %v4727
      %v4760 = vmax.f32 %v4696, %v4728
      %v4761 = vmax.f32 %v4697, %v4729
      %v4762 = vmax.f32 %v4698, %v4730
      %v4763 = vmax.f32 %v4699, %v4731
      %v4764 = vmax.f32 %v4700, %v4732
      %v4765 = vmax.f32 %v4701, %v4733
      %v4766 = vmax.f32 %v4702, %v4734
      %v4767 = vmax.f32 %v4703, %v4735
      %v4768 = vmax.f32 %v4704, %v4736
      %v4769 = vmax.f32 %v4705, %v4737
      %v4770 = vmax.f32 %v4706, %v4738
      %v4771 = vmax.f32 %v4707, %v4739
      %v4772 = vmax.f32 %v4708, %v4740
      %v4773 = vmax.f32 %v4709, %v4741
      %v4774 = vmax.f32 %v4710, %v4742
      %v4775 = vmax.f32 %v4711, %v4743
      %v4776 = vld [vmem:[%s3628 + $0x2] sm:$0xff]
      %v4777 = vld [vmem:[%s3628 + $0xa] sm:$0xff]
      %v4778 = vld [vmem:[%s3628 + $0x1a] sm:$0xff]
      %v4779 = vld [vmem:[%s3628 + $0x22] sm:$0xff]
      %v4780 = vld [vmem:[%s3628 + $0x32] sm:$0xff]
      %v4781 = vld [vmem:[%s3628 + $0x3a] sm:$0xff]
      %v4782 = vld [vmem:[%s3628 + $0x4a] sm:$0xff]
      %v4783 = vld [vmem:[%s3628 + $0x52] sm:$0xff]
      %v4784 = vld [vmem:[%s3628 + $0x62] sm:$0xff]
      %v4785 = vld [vmem:[%s3628 + $0x6a] sm:$0xff]
      %v4786 = vld [vmem:[%s3628 + $0x7a] sm:$0xff]
      %v4787 = vld [vmem:[%s3628 + $0x82] sm:$0xff]
      %v4788 = vld [vmem:[%s3628 + $0x92] sm:$0xff]
      %v4789 = vld [vmem:[%s3628 + $0x9a] sm:$0xff]
      %v4790 = vld [vmem:[%s3628 + $0xaa] sm:$0xff]
      %v4791 = vld [vmem:[%s3628 + $0xb2] sm:$0xff]
      %v4792 = vld [vmem:[%s3628 + $0xc2] sm:$0xff]
      %v4793 = vld [vmem:[%s3628 + $0xca] sm:$0xff]
      %v4794 = vld [vmem:[%s3628 + $0xda] sm:$0xff]
      %v4795 = vld [vmem:[%s3628 + $0xe2] sm:$0xff]
      %v4796 = vld [vmem:[%s3628 + $0xf2] sm:$0xff]
      %v4797 = vld [vmem:[%s3628 + $0xfa] sm:$0xff]
      %v4798 = vld [vmem:[%s3628 + $0x10a] sm:$0xff]
      %v4799 = vld [vmem:[%s3628 + $0x112] sm:$0xff]
      %v4800 = vld [vmem:[%s3628 + $0x122] sm:$0xff]
      %v4801 = vld [vmem:[%s3628 + $0x12a] sm:$0xff]
      %v4802 = vld [vmem:[%s3628 + $0x13a] sm:$0xff]
      %v4803 = vld [vmem:[%s3628 + $0x142] sm:$0xff]
      %v4804 = vld [vmem:[%s3628 + $0x152] sm:$0xff]
      %v4805 = vld [vmem:[%s3628 + $0x15a] sm:$0xff]
      %v4806 = vld [vmem:[%s3628 + $0x16a] sm:$0xff]
      %v4807 = vld [vmem:[%s3628 + $0x172] sm:$0xff]
      %v4808 = vmax.f32 %v4744, %v4776
      %v4809 = vmax.f32 %v4745, %v4777
      %v4810 = vmax.f32 %v4746, %v4778
      %v4811 = vmax.f32 %v4747, %v4779
      %v4812 = vmax.f32 %v4748, %v4780
      %v4813 = vmax.f32 %v4749, %v4781
      %v4814 = vmax.f32 %v4750, %v4782
      %v4815 = vmax.f32 %v4751, %v4783
      %v4816 = vmax.f32 %v4752, %v4784
      %v4817 = vmax.f32 %v4753, %v4785
      %v4818 = vmax.f32 %v4754, %v4786
      %v4819 = vmax.f32 %v4755, %v4787
      %v4820 = vmax.f32 %v4756, %v4788
      %v4821 = vmax.f32 %v4757, %v4789
      %v4822 = vmax.f32 %v4758, %v4790
      %v4823 = vmax.f32 %v4759, %v4791
      %v4824 = vmax.f32 %v4760, %v4792
      %v4825 = vmax.f32 %v4761, %v4793
      %v4826 = vmax.f32 %v4762, %v4794
      %v4827 = vmax.f32 %v4763, %v4795
      %v4828 = vmax.f32 %v4764, %v4796
      %v4829 = vmax.f32 %v4765, %v4797
      %v4830 = vmax.f32 %v4766, %v4798
      %v4831 = vmax.f32 %v4767, %v4799
      %v4832 = vmax.f32 %v4768, %v4800
      %v4833 = vmax.f32 %v4769, %v4801
      %v4834 = vmax.f32 %v4770, %v4802
      %v4835 = vmax.f32 %v4771, %v4803
      %v4836 = vmax.f32 %v4772, %v4804
      %v4837 = vmax.f32 %v4773, %v4805
      %v4838 = vmax.f32 %v4774, %v4806
      %v4839 = vmax.f32 %v4775, %v4807
      %v4840 = vpack.c.bf16 %v4809, %v4808
      %v4841 = vpack.c.bf16 %v4811, %v4810
      %v4842 = vpack.c.bf16 %v4813, %v4812
      %v4843 = vpack.c.bf16 %v4815, %v4814
      %v4844 = vpack.c.bf16 %v4817, %v4816
      %v4845 = vpack.c.bf16 %v4819, %v4818
      %v4846 = vpack.c.bf16 %v4821, %v4820
      %v4847 = vpack.c.bf16 %v4823, %v4822
      %v4848 = vpack.c.bf16 %v4825, %v4824
      %v4849 = vpack.c.bf16 %v4827, %v4826
      %v4850 = vpack.c.bf16 %v4829, %v4828
      %v4851 = vpack.c.bf16 %v4831, %v4830
      %v4852 = vpack.c.bf16 %v4833, %v4832
      %v4853 = vpack.c.bf16 %v4835, %v4834
      %v4854 = vpack.c.bf16 %v4837, %v4836
      %v4855 = vpack.c.bf16 %v4839, %v4838
      %s4856 = scalar_lea.vmem %s4, 2
      %v4857 = vld [vmem:[%s4856] sm:$0x1]
      %v4859 = vsel %vm3187, %v4840, 0
      %v4862 = vsel %vm3187, %v4841, 0
      %v4865 = vsel %vm3187, %v4842, 0
      %v4868 = vsel %vm3187, %v4843, 0
      %v4871 = vsel %vm3187, %v4844, 0
      %v4874 = vsel %vm3187, %v4845, 0
      %v4877 = vsel %vm3187, %v4846, 0
      %v4880 = vsel %vm3187, %v4847, 0
      %v4883 = vsel %vm3187, %v4848, 0
      %v4886 = vsel %vm3187, %v4849, 0
      %v4889 = vsel %vm3187, %v4850, 0
      %v4892 = vsel %vm3187, %v4851, 0
      %v4895 = vsel %vm3187, %v4852, 0
      %v4898 = vsel %vm3187, %v4853, 0
      %v4901 = vsel %vm3187, %v4854, 0
      %v4904 = vsel %vm3187, %v4855, 0
      %v4907 = vsel %vm3887, %v4857, 0
      %4909 = vmatprep.subr.bf16.mxu0 0
      %4910 = vmatpush1.bf16.msra.mxu0 0
      %4911 = vmatprep.subr.bf16.mxu0 0
      %4912 = vmatpush1.bf16.msra.mxu0 0
      %4913 = vmatprep.subr.bf16.mxu0 0
      %4914 = vmatpush1.bf16.msra.mxu0 0
      %4915 = vmatprep.subr.bf16.mxu0 0
      %4916 = vmatpush1.bf16.msra.mxu0 0
      %4917 = vmatprep.subr.bf16.mxu0 0
      %4918 = vmatpush1.bf16.msra.mxu0 0
      %4919 = vmatprep.subr.bf16.mxu0 0
      %4920 = vmatpush1.bf16.msra.mxu0 0
      %4921 = vmatprep.subr.bf16.mxu0 0
      %4922 = vmatpush1.bf16.msra.mxu0 0
      %4923 = vmatprep.subr.bf16.mxu0 0
      %4924 = vmatpush1.bf16.msra.mxu0 %v4907
      %4925 = vmatprep.subr.bf16.mxu0 0
      %4926 = vmatpush2.bf16.msra.mxu0 0
      %4927 = vmatprep.subr.bf16.mxu0 0
      %4928 = vmatpush2.bf16.msra.mxu0 0
      %4929 = vmatprep.subr.bf16.mxu0 0
      %4930 = vmatpush2.bf16.msra.mxu0 0
      %4931 = vmatprep.subr.bf16.mxu0 0
      %4932 = vmatpush2.bf16.msra.mxu0 0
      %4933 = vmatprep.subr.bf16.mxu0 0
      %4934 = vmatpush2.bf16.msra.mxu0 0
      %4935 = vmatprep.subr.bf16.mxu0 0
      %4936 = vmatpush2.bf16.msra.mxu0 0
      %4937 = vmatprep.subr.bf16.mxu0 0
      %4938 = vmatpush2.bf16.msra.mxu0 0
      %4939 = vmatprep.subr.bf16.mxu0 0
      %4940 = vmatpush2.bf16.msra.mxu0 0
      %4941 = vmatprep.mubr.bf16.mxu0 0
      %4942 = vmatmul.mubr.bf16.gmra.mxu0 %v4859
      %v4943 = vpop.f32.mrf.mxu0
      %v4944 = vadd.f32 0.0, %v4943
      %v4945 = vpop.f32.mrf.mxu0
      %v4946 = vpop.f32.mrf.mxu0
      %v4947 = vadd.f32 0.0, %v4946
      %v4948 = vpop.f32.mrf.mxu0
      %4949 = vmatprep.mubr.bf16.mxu0 0
      %4950 = vmatmul.mubr.bf16.gmra.mxu0 %v4862
      %v4951 = vpop.f32.mrf.mxu0
      %v4952 = vadd.f32 0.0, %v4951
      %v4953 = vpop.f32.mrf.mxu0
      %v4954 = vpop.f32.mrf.mxu0
      %v4955 = vadd.f32 0.0, %v4954
      %v4956 = vpop.f32.mrf.mxu0
      %4957 = vmatprep.mubr.bf16.mxu0 0
      %4958 = vmatmul.mubr.bf16.gmra.mxu0 %v4865
      %v4959 = vpop.f32.mrf.mxu0
      %v4960 = vadd.f32 0.0, %v4959
      %v4961 = vpop.f32.mrf.mxu0
      %v4962 = vpop.f32.mrf.mxu0
      %v4963 = vadd.f32 0.0, %v4962
      %v4964 = vpop.f32.mrf.mxu0
      %4965 = vmatprep.mubr.bf16.mxu0 0
      %4966 = vmatmul.mubr.bf16.gmra.mxu0 %v4868
      %v4967 = vpop.f32.mrf.mxu0
      %v4968 = vadd.f32 0.0, %v4967
      %v4969 = vpop.f32.mrf.mxu0
      %v4970 = vpop.f32.mrf.mxu0
      %v4971 = vadd.f32 0.0, %v4970
      %v4972 = vpop.f32.mrf.mxu0
      %4973 = vmatprep.mubr.bf16.mxu0 0
      %4974 = vmatmul.mubr.bf16.gmra.mxu0 %v4871
      %v4975 = vpop.f32.mrf.mxu0
      %v4976 = vadd.f32 0.0, %v4975
      %v4977 = vpop.f32.mrf.mxu0
      %v4978 = vpop.f32.mrf.mxu0
      %v4979 = vadd.f32 0.0, %v4978
      %v4980 = vpop.f32.mrf.mxu0
      %4981 = vmatprep.mubr.bf16.mxu0 0
      %4982 = vmatmul.mubr.bf16.gmra.mxu0 %v4874
      %v4983 = vpop.f32.mrf.mxu0
      %v4984 = vadd.f32 0.0, %v4983
      %v4985 = vpop.f32.mrf.mxu0
      %v4986 = vpop.f32.mrf.mxu0
      %v4987 = vadd.f32 0.0, %v4986
      %v4988 = vpop.f32.mrf.mxu0
      %4989 = vmatprep.mubr.bf16.mxu0 0
      %4990 = vmatmul.mubr.bf16.gmra.mxu0 %v4877
      %v4991 = vpop.f32.mrf.mxu0
      %v4992 = vadd.f32 0.0, %v4991
      %v4993 = vpop.f32.mrf.mxu0
      %v4994 = vpop.f32.mrf.mxu0
      %v4995 = vadd.f32 0.0, %v4994
      %v4996 = vpop.f32.mrf.mxu0
      %4997 = vmatprep.mubr.bf16.mxu0 0
      %4998 = vmatmul.mubr.bf16.gmra.mxu0 %v4880
      %v4999 = vpop.f32.mrf.mxu0
      %v5000 = vadd.f32 0.0, %v4999
      %v5001 = vpop.f32.mrf.mxu0
      %v5002 = vpop.f32.mrf.mxu0
      %v5003 = vadd.f32 0.0, %v5002
      %v5004 = vpop.f32.mrf.mxu0
      %5005 = vmatprep.mubr.bf16.mxu0 0
      %5006 = vmatmul.mubr.bf16.gmra.mxu0 %v4883
      %v5007 = vpop.f32.mrf.mxu0
      %v5008 = vadd.f32 0.0, %v5007
      %v5009 = vpop.f32.mrf.mxu0
      %v5010 = vpop.f32.mrf.mxu0
      %v5011 = vadd.f32 0.0, %v5010
      %v5012 = vpop.f32.mrf.mxu0
      %5013 = vmatprep.mubr.bf16.mxu0 0
      %5014 = vmatmul.mubr.bf16.gmra.mxu0 %v4886
      %v5015 = vpop.f32.mrf.mxu0
      %v5016 = vadd.f32 0.0, %v5015
      %v5017 = vpop.f32.mrf.mxu0
      %v5018 = vpop.f32.mrf.mxu0
      %v5019 = vadd.f32 0.0, %v5018
      %v5020 = vpop.f32.mrf.mxu0
      %5021 = vmatprep.mubr.bf16.mxu0 0
      %5022 = vmatmul.mubr.bf16.gmra.mxu0 %v4889
      %v5023 = vpop.f32.mrf.mxu0
      %v5024 = vadd.f32 0.0, %v5023
      %v5025 = vpop.f32.mrf.mxu0
      %v5026 = vpop.f32.mrf.mxu0
      %v5027 = vadd.f32 0.0, %v5026
      %v5028 = vpop.f32.mrf.mxu0
      %5029 = vmatprep.mubr.bf16.mxu0 0
      %5030 = vmatmul.mubr.bf16.gmra.mxu0 %v4892
      %v5031 = vpop.f32.mrf.mxu0
      %v5032 = vadd.f32 0.0, %v5031
      %v5033 = vpop.f32.mrf.mxu0
      %v5034 = vpop.f32.mrf.mxu0
      %v5035 = vadd.f32 0.0, %v5034
      %v5036 = vpop.f32.mrf.mxu0
      %5037 = vmatprep.mubr.bf16.mxu0 0
      %5038 = vmatmul.mubr.bf16.gmra.mxu0 %v4895
      %v5039 = vpop.f32.mrf.mxu0
      %v5040 = vadd.f32 0.0, %v5039
      %v5041 = vpop.f32.mrf.mxu0
      %v5042 = vpop.f32.mrf.mxu0
      %v5043 = vadd.f32 0.0, %v5042
      %v5044 = vpop.f32.mrf.mxu0
      %5045 = vmatprep.mubr.bf16.mxu0 0
      %5046 = vmatmul.mubr.bf16.gmra.mxu0 %v4898
      %v5047 = vpop.f32.mrf.mxu0
      %v5048 = vadd.f32 0.0, %v5047
      %v5049 = vpop.f32.mrf.mxu0
      %v5050 = vpop.f32.mrf.mxu0
      %v5051 = vadd.f32 0.0, %v5050
      %v5052 = vpop.f32.mrf.mxu0
      %5053 = vmatprep.mubr.bf16.mxu0 0
      %5054 = vmatmul.mubr.bf16.gmra.mxu0 %v4901
      %v5055 = vpop.f32.mrf.mxu0
      %v5056 = vadd.f32 0.0, %v5055
      %v5057 = vpop.f32.mrf.mxu0
      %v5058 = vpop.f32.mrf.mxu0
      %v5059 = vadd.f32 0.0, %v5058
      %v5060 = vpop.f32.mrf.mxu0
      %5061 = vmatprep.mubr.bf16.mxu0 0
      %5062 = vmatmul.mubr.bf16.gmra.mxu0 %v4904
      %v5063 = vpop.f32.mrf.mxu0
      %v5064 = vadd.f32 0.0, %v5063
      %v5065 = vpop.f32.mrf.mxu0
      %v5066 = vpop.f32.mrf.mxu0
      %v5067 = vadd.f32 0.0, %v5066
      %v5068 = vpop.f32.mrf.mxu0
      %5069 = vdwg.mxu0
      %v5070 = vadd.f32 %v4138, %v4944
      %v5071 = vadd.f32 %v4141, %v4947
      %v5072 = vadd.f32 %v4146, %v4952
      %v5073 = vadd.f32 %v4149, %v4955
      %v5074 = vadd.f32 %v4154, %v4960
      %v5075 = vadd.f32 %v4157, %v4963
      %v5076 = vadd.f32 %v4162, %v4968
      %v5077 = vadd.f32 %v4165, %v4971
      %v5078 = vadd.f32 %v4170, %v4976
      %v5079 = vadd.f32 %v4173, %v4979
      %v5080 = vadd.f32 %v4178, %v4984
      %v5081 = vadd.f32 %v4181, %v4987
      %v5082 = vadd.f32 %v4186, %v4992
      %v5083 = vadd.f32 %v4189, %v4995
      %v5084 = vadd.f32 %v4194, %v5000
      %v5085 = vadd.f32 %v4197, %v5003
      %v5086 = vadd.f32 %v4202, %v5008
      %v5087 = vadd.f32 %v4205, %v5011
      %v5088 = vadd.f32 %v4210, %v5016
      %v5089 = vadd.f32 %v4213, %v5019
      %v5090 = vadd.f32 %v4218, %v5024
      %v5091 = vadd.f32 %v4221, %v5027
      %v5092 = vadd.f32 %v4226, %v5032
      %v5093 = vadd.f32 %v4229, %v5035
      %v5094 = vadd.f32 %v4234, %v5040
      %v5095 = vadd.f32 %v4237, %v5043
      %v5096 = vadd.f32 %v4242, %v5048
      %v5097 = vadd.f32 %v4245, %v5051
      %v5098 = vadd.f32 %v4250, %v5056
      %v5099 = vadd.f32 %v4253, %v5059
      %v5100 = vadd.f32 %v4258, %v5064
      %v5101 = vadd.f32 %v4261, %v5067
      %5102 = vst.msk [vmem:[%s3243 + $0x1] sm:$0xff] %vm3187, %v4808
      %5103 = vst.msk [vmem:[%s3243 + $0x9] sm:$0xff] %vm3187, %v4809
      %5104 = vst.msk [vmem:[%s3243 + $0x19] sm:$0xff] %vm3187, %v4810
      %5105 = vst.msk [vmem:[%s3243 + $0x21] sm:$0xff] %vm3187, %v4811
      %5106 = vst.msk [vmem:[%s3243 + $0x31] sm:$0xff] %vm3187, %v4812
      %5107 = vst.msk [vmem:[%s3243 + $0x39] sm:$0xff] %vm3187, %v4813
      %5108 = vst.msk [vmem:[%s3243 + $0x49] sm:$0xff] %vm3187, %v4814
      %5109 = vst.msk [vmem:[%s3243 + $0x51] sm:$0xff] %vm3187, %v4815
      %5110 = vst.msk [vmem:[%s3243 + $0x61] sm:$0xff] %vm3187, %v4816
      %5111 = vst.msk [vmem:[%s3243 + $0x69] sm:$0xff] %vm3187, %v4817
      %5112 = vst.msk [vmem:[%s3243 + $0x79] sm:$0xff] %vm3187, %v4818
      %5113 = vst.msk [vmem:[%s3243 + $0x81] sm:$0xff] %vm3187, %v4819
      %5114 = vst.msk [vmem:[%s3243 + $0x91] sm:$0xff] %vm3187, %v4820
      %5115 = vst.msk [vmem:[%s3243 + $0x99] sm:$0xff] %vm3187, %v4821
      %5116 = vst.msk [vmem:[%s3243 + $0xa9] sm:$0xff] %vm3187, %v4822
      %5117 = vst.msk [vmem:[%s3243 + $0xb1] sm:$0xff] %vm3187, %v4823
      %5118 = vst.msk [vmem:[%s3243 + $0xc1] sm:$0xff] %vm3187, %v4824
      %5119 = vst.msk [vmem:[%s3243 + $0xc9] sm:$0xff] %vm3187, %v4825
      %5120 = vst.msk [vmem:[%s3243 + $0xd9] sm:$0xff] %vm3187, %v4826
      %5121 = vst.msk [vmem:[%s3243 + $0xe1] sm:$0xff] %vm3187, %v4827
      %5122 = vst.msk [vmem:[%s3243 + $0xf1] sm:$0xff] %vm3187, %v4828
      %5123 = vst.msk [vmem:[%s3243 + $0xf9] sm:$0xff] %vm3187, %v4829
      %5124 = vst.msk [vmem:[%s3243 + $0x109] sm:$0xff] %vm3187, %v4830
      %5125 = vst.msk [vmem:[%s3243 + $0x111] sm:$0xff] %vm3187, %v4831
      %5126 = vst.msk [vmem:[%s3243 + $0x121] sm:$0xff] %vm3187, %v4832
      %5127 = vst.msk [vmem:[%s3243 + $0x129] sm:$0xff] %vm3187, %v4833
      %5128 = vst.msk [vmem:[%s3243 + $0x139] sm:$0xff] %vm3187, %v4834
      %5129 = vst.msk [vmem:[%s3243 + $0x141] sm:$0xff] %vm3187, %v4835
      %5130 = vst.msk [vmem:[%s3243 + $0x151] sm:$0xff] %vm3187, %v4836
      %5131 = vst.msk [vmem:[%s3243 + $0x159] sm:$0xff] %vm3187, %v4837
      %5132 = vst.msk [vmem:[%s3243 + $0x169] sm:$0xff] %vm3187, %v4838
      %5133 = vst.msk [vmem:[%s3243 + $0x171] sm:$0xff] %vm3187, %v4839
      %v5134 = vld [vmem:[#allocation2] sm:$0xff]
      %v5135 = vld [vmem:[#allocation2 + $0x8] sm:$0xff]
      %v5136 = vld [vmem:[#allocation2 + $0x18] sm:$0xff]
      %v5137 = vld [vmem:[#allocation2 + $0x20] sm:$0xff]
      %v5138 = vld [vmem:[#allocation2 + $0x30] sm:$0xff]
      %v5139 = vld [vmem:[#allocation2 + $0x38] sm:$0xff]
      %v5140 = vld [vmem:[#allocation2 + $0x48] sm:$0xff]
      %v5141 = vld [vmem:[#allocation2 + $0x50] sm:$0xff]
      %v5142 = vld [vmem:[#allocation2 + $0x60] sm:$0xff]
      %v5143 = vld [vmem:[#allocation2 + $0x68] sm:$0xff]
      %v5144 = vld [vmem:[#allocation2 + $0x78] sm:$0xff]
      %v5145 = vld [vmem:[#allocation2 + $0x80] sm:$0xff]
      %v5146 = vld [vmem:[#allocation2 + $0x90] sm:$0xff]
      %v5147 = vld [vmem:[#allocation2 + $0x98] sm:$0xff]
      %v5148 = vld [vmem:[#allocation2 + $0xa8] sm:$0xff]
      %v5149 = vld [vmem:[#allocation2 + $0xb0] sm:$0xff]
      %v5150 = vld [vmem:[#allocation2 + $0xc0] sm:$0xff]
      %v5151 = vld [vmem:[#allocation2 + $0xc8] sm:$0xff]
      %v5152 = vld [vmem:[#allocation2 + $0xd8] sm:$0xff]
      %v5153 = vld [vmem:[#allocation2 + $0xe0] sm:$0xff]
      %v5154 = vld [vmem:[#allocation2 + $0xf0] sm:$0xff]
      %v5155 = vld [vmem:[#allocation2 + $0xf8] sm:$0xff]
      %v5156 = vld [vmem:[#allocation2 + $0x108] sm:$0xff]
      %v5157 = vld [vmem:[#allocation2 + $0x110] sm:$0xff]
      %v5158 = vld [vmem:[#allocation2 + $0x120] sm:$0xff]
      %v5159 = vld [vmem:[#allocation2 + $0x128] sm:$0xff]
      %v5160 = vld [vmem:[#allocation2 + $0x138] sm:$0xff]
      %v5161 = vld [vmem:[#allocation2 + $0x140] sm:$0xff]
      %v5162 = vld [vmem:[#allocation2 + $0x150] sm:$0xff]
      %v5163 = vld [vmem:[#allocation2 + $0x158] sm:$0xff]
      %v5164 = vld [vmem:[#allocation2 + $0x168] sm:$0xff]
      %v5165 = vld [vmem:[#allocation2 + $0x170] sm:$0xff]
      %v5166 = vld [vmem:[#allocation2 + $0x1] sm:$0xff]
      %v5167 = vld [vmem:[#allocation2 + $0x9] sm:$0xff]
      %v5168 = vld [vmem:[#allocation2 + $0x19] sm:$0xff]
      %v5169 = vld [vmem:[#allocation2 + $0x21] sm:$0xff]
      %v5170 = vld [vmem:[#allocation2 + $0x31] sm:$0xff]
      %v5171 = vld [vmem:[#allocation2 + $0x39] sm:$0xff]
      %v5172 = vld [vmem:[#allocation2 + $0x49] sm:$0xff]
      %v5173 = vld [vmem:[#allocation2 + $0x51] sm:$0xff]
      %v5174 = vld [vmem:[#allocation2 + $0x61] sm:$0xff]
      %v5175 = vld [vmem:[#allocation2 + $0x69] sm:$0xff]
      %v5176 = vld [vmem:[#allocation2 + $0x79] sm:$0xff]
      %v5177 = vld [vmem:[#allocation2 + $0x81] sm:$0xff]
      %v5178 = vld [vmem:[#allocation2 + $0x91] sm:$0xff]
      %v5179 = vld [vmem:[#allocation2 + $0x99] sm:$0xff]
      %v5180 = vld [vmem:[#allocation2 + $0xa9] sm:$0xff]
      %v5181 = vld [vmem:[#allocation2 + $0xb1] sm:$0xff]
      %v5182 = vld [vmem:[#allocation2 + $0xc1] sm:$0xff]
      %v5183 = vld [vmem:[#allocation2 + $0xc9] sm:$0xff]
      %v5184 = vld [vmem:[#allocation2 + $0xd9] sm:$0xff]
      %v5185 = vld [vmem:[#allocation2 + $0xe1] sm:$0xff]
      %v5186 = vld [vmem:[#allocation2 + $0xf1] sm:$0xff]
      %v5187 = vld [vmem:[#allocation2 + $0xf9] sm:$0xff]
      %v5188 = vld [vmem:[#allocation2 + $0x109] sm:$0xff]
      %v5189 = vld [vmem:[#allocation2 + $0x111] sm:$0xff]
      %v5190 = vld [vmem:[#allocation2 + $0x121] sm:$0xff]
      %v5191 = vld [vmem:[#allocation2 + $0x129] sm:$0xff]
      %v5192 = vld [vmem:[#allocation2 + $0x139] sm:$0xff]
      %v5193 = vld [vmem:[#allocation2 + $0x141] sm:$0xff]
      %v5194 = vld [vmem:[#allocation2 + $0x151] sm:$0xff]
      %v5195 = vld [vmem:[#allocation2 + $0x159] sm:$0xff]
      %v5196 = vld [vmem:[#allocation2 + $0x169] sm:$0xff]
      %v5197 = vld [vmem:[#allocation2 + $0x171] sm:$0xff]
      %v5198 = vmax.f32 %v5134, %v5166
      %v5199 = vmax.f32 %v5135, %v5167
      %v5200 = vmax.f32 %v5136, %v5168
      %v5201 = vmax.f32 %v5137, %v5169
      %v5202 = vmax.f32 %v5138, %v5170
      %v5203 = vmax.f32 %v5139, %v5171
      %v5204 = vmax.f32 %v5140, %v5172
      %v5205 = vmax.f32 %v5141, %v5173
      %v5206 = vmax.f32 %v5142, %v5174
      %v5207 = vmax.f32 %v5143, %v5175
      %v5208 = vmax.f32 %v5144, %v5176
      %v5209 = vmax.f32 %v5145, %v5177
      %v5210 = vmax.f32 %v5146, %v5178
      %v5211 = vmax.f32 %v5147, %v5179
      %v5212 = vmax.f32 %v5148, %v5180
      %v5213 = vmax.f32 %v5149, %v5181
      %v5214 = vmax.f32 %v5150, %v5182
      %v5215 = vmax.f32 %v5151, %v5183
      %v5216 = vmax.f32 %v5152, %v5184
      %v5217 = vmax.f32 %v5153, %v5185
      %v5218 = vmax.f32 %v5154, %v5186
      %v5219 = vmax.f32 %v5155, %v5187
      %v5220 = vmax.f32 %v5156, %v5188
      %v5221 = vmax.f32 %v5157, %v5189
      %v5222 = vmax.f32 %v5158, %v5190
      %v5223 = vmax.f32 %v5159, %v5191
      %v5224 = vmax.f32 %v5160, %v5192
      %v5225 = vmax.f32 %v5161, %v5193
      %v5226 = vmax.f32 %v5162, %v5194
      %v5227 = vmax.f32 %v5163, %v5195
      %v5228 = vmax.f32 %v5164, %v5196
      %v5229 = vmax.f32 %v5165, %v5197
      %v5230 = vld [vmem:[#allocation2 + $0x2] sm:$0xff]
      %v5231 = vld [vmem:[#allocation2 + $0xa] sm:$0xff]
      %v5232 = vld [vmem:[#allocation2 + $0x1a] sm:$0xff]
      %v5233 = vld [vmem:[#allocation2 + $0x22] sm:$0xff]
      %v5234 = vld [vmem:[#allocation2 + $0x32] sm:$0xff]
      %v5235 = vld [vmem:[#allocation2 + $0x3a] sm:$0xff]
      %v5236 = vld [vmem:[#allocation2 + $0x4a] sm:$0xff]
      %v5237 = vld [vmem:[#allocation2 + $0x52] sm:$0xff]
      %v5238 = vld [vmem:[#allocation2 + $0x62] sm:$0xff]
      %v5239 = vld [vmem:[#allocation2 + $0x6a] sm:$0xff]
      %v5240 = vld [vmem:[#allocation2 + $0x7a] sm:$0xff]
      %v5241 = vld [vmem:[#allocation2 + $0x82] sm:$0xff]
      %v5242 = vld [vmem:[#allocation2 + $0x92] sm:$0xff]
      %v5243 = vld [vmem:[#allocation2 + $0x9a] sm:$0xff]
      %v5244 = vld [vmem:[#allocation2 + $0xaa] sm:$0xff]
      %v5245 = vld [vmem:[#allocation2 + $0xb2] sm:$0xff]
      %v5246 = vld [vmem:[#allocation2 + $0xc2] sm:$0xff]
      %v5247 = vld [vmem:[#allocation2 + $0xca] sm:$0xff]
      %v5248 = vld [vmem:[#allocation2 + $0xda] sm:$0xff]
      %v5249 = vld [vmem:[#allocation2 + $0xe2] sm:$0xff]
      %v5250 = vld [vmem:[#allocation2 + $0xf2] sm:$0xff]
      %v5251 = vld [vmem:[#allocation2 + $0xfa] sm:$0xff]
      %v5252 = vld [vmem:[#allocation2 + $0x10a] sm:$0xff]
      %v5253 = vld [vmem:[#allocation2 + $0x112] sm:$0xff]
      %v5254 = vld [vmem:[#allocation2 + $0x122] sm:$0xff]
      %v5255 = vld [vmem:[#allocation2 + $0x12a] sm:$0xff]
      %v5256 = vld [vmem:[#allocation2 + $0x13a] sm:$0xff]
      %v5257 = vld [vmem:[#allocation2 + $0x142] sm:$0xff]
      %v5258 = vld [vmem:[#allocation2 + $0x152] sm:$0xff]
      %v5259 = vld [vmem:[#allocation2 + $0x15a] sm:$0xff]
      %v5260 = vld [vmem:[#allocation2 + $0x16a] sm:$0xff]
      %v5261 = vld [vmem:[#allocation2 + $0x172] sm:$0xff]
      %v5262 = vmax.f32 %v5198, %v5230
      %v5263 = vmax.f32 %v5199, %v5231
      %v5264 = vmax.f32 %v5200, %v5232
      %v5265 = vmax.f32 %v5201, %v5233
      %v5266 = vmax.f32 %v5202, %v5234
      %v5267 = vmax.f32 %v5203, %v5235
      %v5268 = vmax.f32 %v5204, %v5236
      %v5269 = vmax.f32 %v5205, %v5237
      %v5270 = vmax.f32 %v5206, %v5238
      %v5271 = vmax.f32 %v5207, %v5239
      %v5272 = vmax.f32 %v5208, %v5240
      %v5273 = vmax.f32 %v5209, %v5241
      %v5274 = vmax.f32 %v5210, %v5242
      %v5275 = vmax.f32 %v5211, %v5243
      %v5276 = vmax.f32 %v5212, %v5244
      %v5277 = vmax.f32 %v5213, %v5245
      %v5278 = vmax.f32 %v5214, %v5246
      %v5279 = vmax.f32 %v5215, %v5247
      %v5280 = vmax.f32 %v5216, %v5248
      %v5281 = vmax.f32 %v5217, %v5249
      %v5282 = vmax.f32 %v5218, %v5250
      %v5283 = vmax.f32 %v5219, %v5251
      %v5284 = vmax.f32 %v5220, %v5252
      %v5285 = vmax.f32 %v5221, %v5253
      %v5286 = vmax.f32 %v5222, %v5254
      %v5287 = vmax.f32 %v5223, %v5255
      %v5288 = vmax.f32 %v5224, %v5256
      %v5289 = vmax.f32 %v5225, %v5257
      %v5290 = vmax.f32 %v5226, %v5258
      %v5291 = vmax.f32 %v5227, %v5259
      %v5292 = vmax.f32 %v5228, %v5260
      %v5293 = vmax.f32 %v5229, %v5261
      %v5294 = vld [vmem:[%s3243] sm:$0xff]
      %v5295 = vld [vmem:[%s3243 + $0x8] sm:$0xff]
      %v5296 = vld [vmem:[%s3243 + $0x18] sm:$0xff]
      %v5297 = vld [vmem:[%s3243 + $0x20] sm:$0xff]
      %v5298 = vld [vmem:[%s3243 + $0x30] sm:$0xff]
      %v5299 = vld [vmem:[%s3243 + $0x38] sm:$0xff]
      %v5300 = vld [vmem:[%s3243 + $0x48] sm:$0xff]
      %v5301 = vld [vmem:[%s3243 + $0x50] sm:$0xff]
      %v5302 = vld [vmem:[%s3243 + $0x60] sm:$0xff]
      %v5303 = vld [vmem:[%s3243 + $0x68] sm:$0xff]
      %v5304 = vld [vmem:[%s3243 + $0x78] sm:$0xff]
      %v5305 = vld [vmem:[%s3243 + $0x80] sm:$0xff]
      %v5306 = vld [vmem:[%s3243 + $0x90] sm:$0xff]
      %v5307 = vld [vmem:[%s3243 + $0x98] sm:$0xff]
      %v5308 = vld [vmem:[%s3243 + $0xa8] sm:$0xff]
      %v5309 = vld [vmem:[%s3243 + $0xb0] sm:$0xff]
      %v5310 = vld [vmem:[%s3243 + $0xc0] sm:$0xff]
      %v5311 = vld [vmem:[%s3243 + $0xc8] sm:$0xff]
      %v5312 = vld [vmem:[%s3243 + $0xd8] sm:$0xff]
      %v5313 = vld [vmem:[%s3243 + $0xe0] sm:$0xff]
      %v5314 = vld [vmem:[%s3243 + $0xf0] sm:$0xff]
      %v5315 = vld [vmem:[%s3243 + $0xf8] sm:$0xff]
      %v5316 = vld [vmem:[%s3243 + $0x108] sm:$0xff]
      %v5317 = vld [vmem:[%s3243 + $0x110] sm:$0xff]
      %v5318 = vld [vmem:[%s3243 + $0x120] sm:$0xff]
      %v5319 = vld [vmem:[%s3243 + $0x128] sm:$0xff]
      %v5320 = vld [vmem:[%s3243 + $0x138] sm:$0xff]
      %v5321 = vld [vmem:[%s3243 + $0x140] sm:$0xff]
      %v5322 = vld [vmem:[%s3243 + $0x150] sm:$0xff]
      %v5323 = vld [vmem:[%s3243 + $0x158] sm:$0xff]
      %v5324 = vld [vmem:[%s3243 + $0x168] sm:$0xff]
      %v5325 = vld [vmem:[%s3243 + $0x170] sm:$0xff]
      %v5326 = vmax.f32 %v5262, %v5294
      %v5327 = vmax.f32 %v5263, %v5295
      %v5328 = vmax.f32 %v5264, %v5296
      %v5329 = vmax.f32 %v5265, %v5297
      %v5330 = vmax.f32 %v5266, %v5298
      %v5331 = vmax.f32 %v5267, %v5299
      %v5332 = vmax.f32 %v5268, %v5300
      %v5333 = vmax.f32 %v5269, %v5301
      %v5334 = vmax.f32 %v5270, %v5302
      %v5335 = vmax.f32 %v5271, %v5303
      %v5336 = vmax.f32 %v5272, %v5304
      %v5337 = vmax.f32 %v5273, %v5305
      %v5338 = vmax.f32 %v5274, %v5306
      %v5339 = vmax.f32 %v5275, %v5307
      %v5340 = vmax.f32 %v5276, %v5308
      %v5341 = vmax.f32 %v5277, %v5309
      %v5342 = vmax.f32 %v5278, %v5310
      %v5343 = vmax.f32 %v5279, %v5311
      %v5344 = vmax.f32 %v5280, %v5312
      %v5345 = vmax.f32 %v5281, %v5313
      %v5346 = vmax.f32 %v5282, %v5314
      %v5347 = vmax.f32 %v5283, %v5315
      %v5348 = vmax.f32 %v5284, %v5316
      %v5349 = vmax.f32 %v5285, %v5317
      %v5350 = vmax.f32 %v5286, %v5318
      %v5351 = vmax.f32 %v5287, %v5319
      %v5352 = vmax.f32 %v5288, %v5320
      %v5353 = vmax.f32 %v5289, %v5321
      %v5354 = vmax.f32 %v5290, %v5322
      %v5355 = vmax.f32 %v5291, %v5323
      %v5356 = vmax.f32 %v5292, %v5324
      %v5357 = vmax.f32 %v5293, %v5325
      %v5358 = vld [vmem:[%s3243 + $0x1] sm:$0xff]
      %v5359 = vld [vmem:[%s3243 + $0x9] sm:$0xff]
      %v5360 = vld [vmem:[%s3243 + $0x19] sm:$0xff]
      %v5361 = vld [vmem:[%s3243 + $0x21] sm:$0xff]
      %v5362 = vld [vmem:[%s3243 + $0x31] sm:$0xff]
      %v5363 = vld [vmem:[%s3243 + $0x39] sm:$0xff]
      %v5364 = vld [vmem:[%s3243 + $0x49] sm:$0xff]
      %v5365 = vld [vmem:[%s3243 + $0x51] sm:$0xff]
      %v5366 = vld [vmem:[%s3243 + $0x61] sm:$0xff]
      %v5367 = vld [vmem:[%s3243 + $0x69] sm:$0xff]
      %v5368 = vld [vmem:[%s3243 + $0x79] sm:$0xff]
      %v5369 = vld [vmem:[%s3243 + $0x81] sm:$0xff]
      %v5370 = vld [vmem:[%s3243 + $0x91] sm:$0xff]
      %v5371 = vld [vmem:[%s3243 + $0x99] sm:$0xff]
      %v5372 = vld [vmem:[%s3243 + $0xa9] sm:$0xff]
      %v5373 = vld [vmem:[%s3243 + $0xb1] sm:$0xff]
      %v5374 = vld [vmem:[%s3243 + $0xc1] sm:$0xff]
      %v5375 = vld [vmem:[%s3243 + $0xc9] sm:$0xff]
      %v5376 = vld [vmem:[%s3243 + $0xd9] sm:$0xff]
      %v5377 = vld [vmem:[%s3243 + $0xe1] sm:$0xff]
      %v5378 = vld [vmem:[%s3243 + $0xf1] sm:$0xff]
      %v5379 = vld [vmem:[%s3243 + $0xf9] sm:$0xff]
      %v5380 = vld [vmem:[%s3243 + $0x109] sm:$0xff]
      %v5381 = vld [vmem:[%s3243 + $0x111] sm:$0xff]
      %v5382 = vld [vmem:[%s3243 + $0x121] sm:$0xff]
      %v5383 = vld [vmem:[%s3243 + $0x129] sm:$0xff]
      %v5384 = vld [vmem:[%s3243 + $0x139] sm:$0xff]
      %v5385 = vld [vmem:[%s3243 + $0x141] sm:$0xff]
      %v5386 = vld [vmem:[%s3243 + $0x151] sm:$0xff]
      %v5387 = vld [vmem:[%s3243 + $0x159] sm:$0xff]
      %v5388 = vld [vmem:[%s3243 + $0x169] sm:$0xff]
      %v5389 = vld [vmem:[%s3243 + $0x171] sm:$0xff]
      %v5390 = vmax.f32 %v5326, %v5358
      %v5391 = vmax.f32 %v5327, %v5359
      %v5392 = vmax.f32 %v5328, %v5360
      %v5393 = vmax.f32 %v5329, %v5361
      %v5394 = vmax.f32 %v5330, %v5362
      %v5395 = vmax.f32 %v5331, %v5363
      %v5396 = vmax.f32 %v5332, %v5364
      %v5397 = vmax.f32 %v5333, %v5365
      %v5398 = vmax.f32 %v5334, %v5366
      %v5399 = vmax.f32 %v5335, %v5367
      %v5400 = vmax.f32 %v5336, %v5368
      %v5401 = vmax.f32 %v5337, %v5369
      %v5402 = vmax.f32 %v5338, %v5370
      %v5403 = vmax.f32 %v5339, %v5371
      %v5404 = vmax.f32 %v5340, %v5372
      %v5405 = vmax.f32 %v5341, %v5373
      %v5406 = vmax.f32 %v5342, %v5374
      %v5407 = vmax.f32 %v5343, %v5375
      %v5408 = vmax.f32 %v5344, %v5376
      %v5409 = vmax.f32 %v5345, %v5377
      %v5410 = vmax.f32 %v5346, %v5378
      %v5411 = vmax.f32 %v5347, %v5379
      %v5412 = vmax.f32 %v5348, %v5380
      %v5413 = vmax.f32 %v5349, %v5381
      %v5414 = vmax.f32 %v5350, %v5382
      %v5415 = vmax.f32 %v5351, %v5383
      %v5416 = vmax.f32 %v5352, %v5384
      %v5417 = vmax.f32 %v5353, %v5385
      %v5418 = vmax.f32 %v5354, %v5386
      %v5419 = vmax.f32 %v5355, %v5387
      %v5420 = vmax.f32 %v5356, %v5388
      %v5421 = vmax.f32 %v5357, %v5389
      %v5422 = vld [vmem:[%s3243 + $0x2] sm:$0xff]
      %v5423 = vld [vmem:[%s3243 + $0xa] sm:$0xff]
      %v5424 = vld [vmem:[%s3243 + $0x1a] sm:$0xff]
      %v5425 = vld [vmem:[%s3243 + $0x22] sm:$0xff]
      %v5426 = vld [vmem:[%s3243 + $0x32] sm:$0xff]
      %v5427 = vld [vmem:[%s3243 + $0x3a] sm:$0xff]
      %v5428 = vld [vmem:[%s3243 + $0x4a] sm:$0xff]
      %v5429 = vld [vmem:[%s3243 + $0x52] sm:$0xff]
      %v5430 = vld [vmem:[%s3243 + $0x62] sm:$0xff]
      %v5431 = vld [vmem:[%s3243 + $0x6a] sm:$0xff]
      %v5432 = vld [vmem:[%s3243 + $0x7a] sm:$0xff]
      %v5433 = vld [vmem:[%s3243 + $0x82] sm:$0xff]
      %v5434 = vld [vmem:[%s3243 + $0x92] sm:$0xff]
      %v5435 = vld [vmem:[%s3243 + $0x9a] sm:$0xff]
      %v5436 = vld [vmem:[%s3243 + $0xaa] sm:$0xff]
      %v5437 = vld [vmem:[%s3243 + $0xb2] sm:$0xff]
      %v5438 = vld [vmem:[%s3243 + $0xc2] sm:$0xff]
      %v5439 = vld [vmem:[%s3243 + $0xca] sm:$0xff]
      %v5440 = vld [vmem:[%s3243 + $0xda] sm:$0xff]
      %v5441 = vld [vmem:[%s3243 + $0xe2] sm:$0xff]
      %v5442 = vld [vmem:[%s3243 + $0xf2] sm:$0xff]
      %v5443 = vld [vmem:[%s3243 + $0xfa] sm:$0xff]
      %v5444 = vld [vmem:[%s3243 + $0x10a] sm:$0xff]
      %v5445 = vld [vmem:[%s3243 + $0x112] sm:$0xff]
      %v5446 = vld [vmem:[%s3243 + $0x122] sm:$0xff]
      %v5447 = vld [vmem:[%s3243 + $0x12a] sm:$0xff]
      %v5448 = vld [vmem:[%s3243 + $0x13a] sm:$0xff]
      %v5449 = vld [vmem:[%s3243 + $0x142] sm:$0xff]
      %v5450 = vld [vmem:[%s3243 + $0x152] sm:$0xff]
      %v5451 = vld [vmem:[%s3243 + $0x15a] sm:$0xff]
      %v5452 = vld [vmem:[%s3243 + $0x16a] sm:$0xff]
      %v5453 = vld [vmem:[%s3243 + $0x172] sm:$0xff]
      %v5454 = vmax.f32 %v5390, %v5422
      %v5455 = vmax.f32 %v5391, %v5423
      %v5456 = vmax.f32 %v5392, %v5424
      %v5457 = vmax.f32 %v5393, %v5425
      %v5458 = vmax.f32 %v5394, %v5426
      %v5459 = vmax.f32 %v5395, %v5427
      %v5460 = vmax.f32 %v5396, %v5428
      %v5461 = vmax.f32 %v5397, %v5429
      %v5462 = vmax.f32 %v5398, %v5430
      %v5463 = vmax.f32 %v5399, %v5431
      %v5464 = vmax.f32 %v5400, %v5432
      %v5465 = vmax.f32 %v5401, %v5433
      %v5466 = vmax.f32 %v5402, %v5434
      %v5467 = vmax.f32 %v5403, %v5435
      %v5468 = vmax.f32 %v5404, %v5436
      %v5469 = vmax.f32 %v5405, %v5437
      %v5470 = vmax.f32 %v5406, %v5438
      %v5471 = vmax.f32 %v5407, %v5439
      %v5472 = vmax.f32 %v5408, %v5440
      %v5473 = vmax.f32 %v5409, %v5441
      %v5474 = vmax.f32 %v5410, %v5442
      %v5475 = vmax.f32 %v5411, %v5443
      %v5476 = vmax.f32 %v5412, %v5444
      %v5477 = vmax.f32 %v5413, %v5445
      %v5478 = vmax.f32 %v5414, %v5446
      %v5479 = vmax.f32 %v5415, %v5447
      %v5480 = vmax.f32 %v5416, %v5448
      %v5481 = vmax.f32 %v5417, %v5449
      %v5482 = vmax.f32 %v5418, %v5450
      %v5483 = vmax.f32 %v5419, %v5451
      %v5484 = vmax.f32 %v5420, %v5452
      %v5485 = vmax.f32 %v5421, %v5453
      %v5486 = vld [vmem:[%s3628] sm:$0xff]
      %v5487 = vld [vmem:[%s3628 + $0x8] sm:$0xff]
      %v5488 = vld [vmem:[%s3628 + $0x18] sm:$0xff]
      %v5489 = vld [vmem:[%s3628 + $0x20] sm:$0xff]
      %v5490 = vld [vmem:[%s3628 + $0x30] sm:$0xff]
      %v5491 = vld [vmem:[%s3628 + $0x38] sm:$0xff]
      %v5492 = vld [vmem:[%s3628 + $0x48] sm:$0xff]
      %v5493 = vld [vmem:[%s3628 + $0x50] sm:$0xff]
      %v5494 = vld [vmem:[%s3628 + $0x60] sm:$0xff]
      %v5495 = vld [vmem:[%s3628 + $0x68] sm:$0xff]
      %v5496 = vld [vmem:[%s3628 + $0x78] sm:$0xff]
      %v5497 = vld [vmem:[%s3628 + $0x80] sm:$0xff]
      %v5498 = vld [vmem:[%s3628 + $0x90] sm:$0xff]
      %v5499 = vld [vmem:[%s3628 + $0x98] sm:$0xff]
      %v5500 = vld [vmem:[%s3628 + $0xa8] sm:$0xff]
      %v5501 = vld [vmem:[%s3628 + $0xb0] sm:$0xff]
      %v5502 = vld [vmem:[%s3628 + $0xc0] sm:$0xff]
      %v5503 = vld [vmem:[%s3628 + $0xc8] sm:$0xff]
      %v5504 = vld [vmem:[%s3628 + $0xd8] sm:$0xff]
      %v5505 = vld [vmem:[%s3628 + $0xe0] sm:$0xff]
      %v5506 = vld [vmem:[%s3628 + $0xf0] sm:$0xff]
      %v5507 = vld [vmem:[%s3628 + $0xf8] sm:$0xff]
      %v5508 = vld [vmem:[%s3628 + $0x108] sm:$0xff]
      %v5509 = vld [vmem:[%s3628 + $0x110] sm:$0xff]
      %v5510 = vld [vmem:[%s3628 + $0x120] sm:$0xff]
      %v5511 = vld [vmem:[%s3628 + $0x128] sm:$0xff]
      %v5512 = vld [vmem:[%s3628 + $0x138] sm:$0xff]
      %v5513 = vld [vmem:[%s3628 + $0x140] sm:$0xff]
      %v5514 = vld [vmem:[%s3628 + $0x150] sm:$0xff]
      %v5515 = vld [vmem:[%s3628 + $0x158] sm:$0xff]
      %v5516 = vld [vmem:[%s3628 + $0x168] sm:$0xff]
      %v5517 = vld [vmem:[%s3628 + $0x170] sm:$0xff]
      %v5518 = vmax.f32 %v5454, %v5486
      %v5519 = vmax.f32 %v5455, %v5487
      %v5520 = vmax.f32 %v5456, %v5488
      %v5521 = vmax.f32 %v5457, %v5489
      %v5522 = vmax.f32 %v5458, %v5490
      %v5523 = vmax.f32 %v5459, %v5491
      %v5524 = vmax.f32 %v5460, %v5492
      %v5525 = vmax.f32 %v5461, %v5493
      %v5526 = vmax.f32 %v5462, %v5494
      %v5527 = vmax.f32 %v5463, %v5495
      %v5528 = vmax.f32 %v5464, %v5496
      %v5529 = vmax.f32 %v5465, %v5497
      %v5530 = vmax.f32 %v5466, %v5498
      %v5531 = vmax.f32 %v5467, %v5499
      %v5532 = vmax.f32 %v5468, %v5500
      %v5533 = vmax.f32 %v5469, %v5501
      %v5534 = vmax.f32 %v5470, %v5502
      %v5535 = vmax.f32 %v5471, %v5503
      %v5536 = vmax.f32 %v5472, %v5504
      %v5537 = vmax.f32 %v5473, %v5505
      %v5538 = vmax.f32 %v5474, %v5506
      %v5539 = vmax.f32 %v5475, %v5507
      %v5540 = vmax.f32 %v5476, %v5508
      %v5541 = vmax.f32 %v5477, %v5509
      %v5542 = vmax.f32 %v5478, %v5510
      %v5543 = vmax.f32 %v5479, %v5511
      %v5544 = vmax.f32 %v5480, %v5512
      %v5545 = vmax.f32 %v5481, %v5513
      %v5546 = vmax.f32 %v5482, %v5514
      %v5547 = vmax.f32 %v5483, %v5515
      %v5548 = vmax.f32 %v5484, %v5516
      %v5549 = vmax.f32 %v5485, %v5517
      %v5550 = vld [vmem:[%s3628 + $0x1] sm:$0xff]
      %v5551 = vld [vmem:[%s3628 + $0x9] sm:$0xff]
      %v5552 = vld [vmem:[%s3628 + $0x19] sm:$0xff]
      %v5553 = vld [vmem:[%s3628 + $0x21] sm:$0xff]
      %v5554 = vld [vmem:[%s3628 + $0x31] sm:$0xff]
      %v5555 = vld [vmem:[%s3628 + $0x39] sm:$0xff]
      %v5556 = vld [vmem:[%s3628 + $0x49] sm:$0xff]
      %v5557 = vld [vmem:[%s3628 + $0x51] sm:$0xff]
      %v5558 = vld [vmem:[%s3628 + $0x61] sm:$0xff]
      %v5559 = vld [vmem:[%s3628 + $0x69] sm:$0xff]
      %v5560 = vld [vmem:[%s3628 + $0x79] sm:$0xff]
      %v5561 = vld [vmem:[%s3628 + $0x81] sm:$0xff]
      %v5562 = vld [vmem:[%s3628 + $0x91] sm:$0xff]
      %v5563 = vld [vmem:[%s3628 + $0x99] sm:$0xff]
      %v5564 = vld [vmem:[%s3628 + $0xa9] sm:$0xff]
      %v5565 = vld [vmem:[%s3628 + $0xb1] sm:$0xff]
      %v5566 = vld [vmem:[%s3628 + $0xc1] sm:$0xff]
      %v5567 = vld [vmem:[%s3628 + $0xc9] sm:$0xff]
      %v5568 = vld [vmem:[%s3628 + $0xd9] sm:$0xff]
      %v5569 = vld [vmem:[%s3628 + $0xe1] sm:$0xff]
      %v5570 = vld [vmem:[%s3628 + $0xf1] sm:$0xff]
      %v5571 = vld [vmem:[%s3628 + $0xf9] sm:$0xff]
      %v5572 = vld [vmem:[%s3628 + $0x109] sm:$0xff]
      %v5573 = vld [vmem:[%s3628 + $0x111] sm:$0xff]
      %v5574 = vld [vmem:[%s3628 + $0x121] sm:$0xff]
      %v5575 = vld [vmem:[%s3628 + $0x129] sm:$0xff]
      %v5576 = vld [vmem:[%s3628 + $0x139] sm:$0xff]
      %v5577 = vld [vmem:[%s3628 + $0x141] sm:$0xff]
      %v5578 = vld [vmem:[%s3628 + $0x151] sm:$0xff]
      %v5579 = vld [vmem:[%s3628 + $0x159] sm:$0xff]
      %v5580 = vld [vmem:[%s3628 + $0x169] sm:$0xff]
      %v5581 = vld [vmem:[%s3628 + $0x171] sm:$0xff]
      %v5582 = vmax.f32 %v5518, %v5550
      %v5583 = vmax.f32 %v5519, %v5551
      %v5584 = vmax.f32 %v5520, %v5552
      %v5585 = vmax.f32 %v5521, %v5553
      %v5586 = vmax.f32 %v5522, %v5554
      %v5587 = vmax.f32 %v5523, %v5555
      %v5588 = vmax.f32 %v5524, %v5556
      %v5589 = vmax.f32 %v5525, %v5557
      %v5590 = vmax.f32 %v5526, %v5558
      %v5591 = vmax.f32 %v5527, %v5559
      %v5592 = vmax.f32 %v5528, %v5560
      %v5593 = vmax.f32 %v5529, %v5561
      %v5594 = vmax.f32 %v5530, %v5562
      %v5595 = vmax.f32 %v5531, %v5563
      %v5596 = vmax.f32 %v5532, %v5564
      %v5597 = vmax.f32 %v5533, %v5565
      %v5598 = vmax.f32 %v5534, %v5566
      %v5599 = vmax.f32 %v5535, %v5567
      %v5600 = vmax.f32 %v5536, %v5568
      %v5601 = vmax.f32 %v5537, %v5569
      %v5602 = vmax.f32 %v5538, %v5570
      %v5603 = vmax.f32 %v5539, %v5571
      %v5604 = vmax.f32 %v5540, %v5572
      %v5605 = vmax.f32 %v5541, %v5573
      %v5606 = vmax.f32 %v5542, %v5574
      %v5607 = vmax.f32 %v5543, %v5575
      %v5608 = vmax.f32 %v5544, %v5576
      %v5609 = vmax.f32 %v5545, %v5577
      %v5610 = vmax.f32 %v5546, %v5578
      %v5611 = vmax.f32 %v5547, %v5579
      %v5612 = vmax.f32 %v5548, %v5580
      %v5613 = vmax.f32 %v5549, %v5581
      %v5614 = vld [vmem:[%s3628 + $0x2] sm:$0xff]
      %v5615 = vld [vmem:[%s3628 + $0xa] sm:$0xff]
      %v5616 = vld [vmem:[%s3628 + $0x1a] sm:$0xff]
      %v5617 = vld [vmem:[%s3628 + $0x22] sm:$0xff]
      %v5618 = vld [vmem:[%s3628 + $0x32] sm:$0xff]
      %v5619 = vld [vmem:[%s3628 + $0x3a] sm:$0xff]
      %v5620 = vld [vmem:[%s3628 + $0x4a] sm:$0xff]
      %v5621 = vld [vmem:[%s3628 + $0x52] sm:$0xff]
      %v5622 = vld [vmem:[%s3628 + $0x62] sm:$0xff]
      %v5623 = vld [vmem:[%s3628 + $0x6a] sm:$0xff]
      %v5624 = vld [vmem:[%s3628 + $0x7a] sm:$0xff]
      %v5625 = vld [vmem:[%s3628 + $0x82] sm:$0xff]
      %v5626 = vld [vmem:[%s3628 + $0x92] sm:$0xff]
      %v5627 = vld [vmem:[%s3628 + $0x9a] sm:$0xff]
      %v5628 = vld [vmem:[%s3628 + $0xaa] sm:$0xff]
      %v5629 = vld [vmem:[%s3628 + $0xb2] sm:$0xff]
      %v5630 = vld [vmem:[%s3628 + $0xc2] sm:$0xff]
      %v5631 = vld [vmem:[%s3628 + $0xca] sm:$0xff]
      %v5632 = vld [vmem:[%s3628 + $0xda] sm:$0xff]
      %v5633 = vld [vmem:[%s3628 + $0xe2] sm:$0xff]
      %v5634 = vld [vmem:[%s3628 + $0xf2] sm:$0xff]
      %v5635 = vld [vmem:[%s3628 + $0xfa] sm:$0xff]
      %v5636 = vld [vmem:[%s3628 + $0x10a] sm:$0xff]
      %v5637 = vld [vmem:[%s3628 + $0x112] sm:$0xff]
      %v5638 = vld [vmem:[%s3628 + $0x122] sm:$0xff]
      %v5639 = vld [vmem:[%s3628 + $0x12a] sm:$0xff]
      %v5640 = vld [vmem:[%s3628 + $0x13a] sm:$0xff]
      %v5641 = vld [vmem:[%s3628 + $0x142] sm:$0xff]
      %v5642 = vld [vmem:[%s3628 + $0x152] sm:$0xff]
      %v5643 = vld [vmem:[%s3628 + $0x15a] sm:$0xff]
      %v5644 = vld [vmem:[%s3628 + $0x16a] sm:$0xff]
      %v5645 = vld [vmem:[%s3628 + $0x172] sm:$0xff]
      %v5646 = vmax.f32 %v5582, %v5614
      %v5647 = vmax.f32 %v5583, %v5615
      %v5648 = vmax.f32 %v5584, %v5616
      %v5649 = vmax.f32 %v5585, %v5617
      %v5650 = vmax.f32 %v5586, %v5618
      %v5651 = vmax.f32 %v5587, %v5619
      %v5652 = vmax.f32 %v5588, %v5620
      %v5653 = vmax.f32 %v5589, %v5621
      %v5654 = vmax.f32 %v5590, %v5622
      %v5655 = vmax.f32 %v5591, %v5623
      %v5656 = vmax.f32 %v5592, %v5624
      %v5657 = vmax.f32 %v5593, %v5625
      %v5658 = vmax.f32 %v5594, %v5626
      %v5659 = vmax.f32 %v5595, %v5627
      %v5660 = vmax.f32 %v5596, %v5628
      %v5661 = vmax.f32 %v5597, %v5629
      %v5662 = vmax.f32 %v5598, %v5630
      %v5663 = vmax.f32 %v5599, %v5631
      %v5664 = vmax.f32 %v5600, %v5632
      %v5665 = vmax.f32 %v5601, %v5633
      %v5666 = vmax.f32 %v5602, %v5634
      %v5667 = vmax.f32 %v5603, %v5635
      %v5668 = vmax.f32 %v5604, %v5636
      %v5669 = vmax.f32 %v5605, %v5637
      %v5670 = vmax.f32 %v5606, %v5638
      %v5671 = vmax.f32 %v5607, %v5639
      %v5672 = vmax.f32 %v5608, %v5640
      %v5673 = vmax.f32 %v5609, %v5641
      %v5674 = vmax.f32 %v5610, %v5642
      %v5675 = vmax.f32 %v5611, %v5643
      %v5676 = vmax.f32 %v5612, %v5644
      %v5677 = vmax.f32 %v5613, %v5645
      %v5678 = vpack.c.bf16 %v5647, %v5646
      %v5679 = vpack.c.bf16 %v5649, %v5648
      %v5680 = vpack.c.bf16 %v5651, %v5650
      %v5681 = vpack.c.bf16 %v5653, %v5652
      %v5682 = vpack.c.bf16 %v5655, %v5654
      %v5683 = vpack.c.bf16 %v5657, %v5656
      %v5684 = vpack.c.bf16 %v5659, %v5658
      %v5685 = vpack.c.bf16 %v5661, %v5660
      %v5686 = vpack.c.bf16 %v5663, %v5662
      %v5687 = vpack.c.bf16 %v5665, %v5664
      %v5688 = vpack.c.bf16 %v5667, %v5666
      %v5689 = vpack.c.bf16 %v5669, %v5668
      %v5690 = vpack.c.bf16 %v5671, %v5670
      %v5691 = vpack.c.bf16 %v5673, %v5672
      %v5692 = vpack.c.bf16 %v5675, %v5674
      %v5693 = vpack.c.bf16 %v5677, %v5676
      %s5694 = scalar_lea.vmem %s4, 3
      %v5695 = vld [vmem:[%s5694] sm:$0x1]
      %v5697 = vsel %vm3187, %v5678, 0
      %v5700 = vsel %vm3187, %v5679, 0
      %v5703 = vsel %vm3187, %v5680, 0
      %v5706 = vsel %vm3187, %v5681, 0
      %v5709 = vsel %vm3187, %v5682, 0
      %v5712 = vsel %vm3187, %v5683, 0
      %v5715 = vsel %vm3187, %v5684, 0
      %v5718 = vsel %vm3187, %v5685, 0
      %v5721 = vsel %vm3187, %v5686, 0
      %v5724 = vsel %vm3187, %v5687, 0
      %v5727 = vsel %vm3187, %v5688, 0
      %v5730 = vsel %vm3187, %v5689, 0
      %v5733 = vsel %vm3187, %v5690, 0
      %v5736 = vsel %vm3187, %v5691, 0
      %v5739 = vsel %vm3187, %v5692, 0
      %v5742 = vsel %vm3187, %v5693, 0
      %v5745 = vsel %vm3887, %v5695, 0
      %5747 = vmatprep.subr.bf16.mxu0 0
      %5748 = vmatpush1.bf16.msra.mxu0 0
      %5749 = vmatprep.subr.bf16.mxu0 0
      %5750 = vmatpush1.bf16.msra.mxu0 0
      %5751 = vmatprep.subr.bf16.mxu0 0
      %5752 = vmatpush1.bf16.msra.mxu0 0
      %5753 = vmatprep.subr.bf16.mxu0 0
      %5754 = vmatpush1.bf16.msra.mxu0 0
      %5755 = vmatprep.subr.bf16.mxu0 0
      %5756 = vmatpush1.bf16.msra.mxu0 0
      %5757 = vmatprep.subr.bf16.mxu0 0
      %5758 = vmatpush1.bf16.msra.mxu0 0
      %5759 = vmatprep.subr.bf16.mxu0 0
      %5760 = vmatpush1.bf16.msra.mxu0 0
      %5761 = vmatprep.subr.bf16.mxu0 0
      %5762 = vmatpush1.bf16.msra.mxu0 %v5745
      %5763 = vmatprep.subr.bf16.mxu0 0
      %5764 = vmatpush2.bf16.msra.mxu0 0
      %5765 = vmatprep.subr.bf16.mxu0 0
      %5766 = vmatpush2.bf16.msra.mxu0 0
      %5767 = vmatprep.subr.bf16.mxu0 0
      %5768 = vmatpush2.bf16.msra.mxu0 0
      %5769 = vmatprep.subr.bf16.mxu0 0
      %5770 = vmatpush2.bf16.msra.mxu0 0
      %5771 = vmatprep.subr.bf16.mxu0 0
      %5772 = vmatpush2.bf16.msra.mxu0 0
      %5773 = vmatprep.subr.bf16.mxu0 0
      %5774 = vmatpush2.bf16.msra.mxu0 0
      %5775 = vmatprep.subr.bf16.mxu0 0
      %5776 = vmatpush2.bf16.msra.mxu0 0
      %5777 = vmatprep.subr.bf16.mxu0 0
      %5778 = vmatpush2.bf16.msra.mxu0 0
      %5779 = vmatprep.mubr.bf16.mxu0 0
      %5780 = vmatmul.mubr.bf16.gmra.mxu0 %v5697
      %v5781 = vpop.f32.mrf.mxu0
      %v5782 = vadd.f32 0.0, %v5781
      %v5783 = vpop.f32.mrf.mxu0
      %v5784 = vpop.f32.mrf.mxu0
      %v5785 = vadd.f32 0.0, %v5784
      %v5786 = vpop.f32.mrf.mxu0
      %5787 = vmatprep.mubr.bf16.mxu0 0
      %5788 = vmatmul.mubr.bf16.gmra.mxu0 %v5700
      %v5789 = vpop.f32.mrf.mxu0
      %v5790 = vadd.f32 0.0, %v5789
      %v5791 = vpop.f32.mrf.mxu0
      %v5792 = vpop.f32.mrf.mxu0
      %v5793 = vadd.f32 0.0, %v5792
      %v5794 = vpop.f32.mrf.mxu0
      %5795 = vmatprep.mubr.bf16.mxu0 0
      %5796 = vmatmul.mubr.bf16.gmra.mxu0 %v5703
      %v5797 = vpop.f32.mrf.mxu0
      %v5798 = vadd.f32 0.0, %v5797
      %v5799 = vpop.f32.mrf.mxu0
      %v5800 = vpop.f32.mrf.mxu0
      %v5801 = vadd.f32 0.0, %v5800
      %v5802 = vpop.f32.mrf.mxu0
      %5803 = vmatprep.mubr.bf16.mxu0 0
      %5804 = vmatmul.mubr.bf16.gmra.mxu0 %v5706
      %v5805 = vpop.f32.mrf.mxu0
      %v5806 = vadd.f32 0.0, %v5805
      %v5807 = vpop.f32.mrf.mxu0
      %v5808 = vpop.f32.mrf.mxu0
      %v5809 = vadd.f32 0.0, %v5808
      %v5810 = vpop.f32.mrf.mxu0
      %5811 = vmatprep.mubr.bf16.mxu0 0
      %5812 = vmatmul.mubr.bf16.gmra.mxu0 %v5709
      %v5813 = vpop.f32.mrf.mxu0
      %v5814 = vadd.f32 0.0, %v5813
      %v5815 = vpop.f32.mrf.mxu0
      %v5816 = vpop.f32.mrf.mxu0
      %v5817 = vadd.f32 0.0, %v5816
      %v5818 = vpop.f32.mrf.mxu0
      %5819 = vmatprep.mubr.bf16.mxu0 0
      %5820 = vmatmul.mubr.bf16.gmra.mxu0 %v5712
      %v5821 = vpop.f32.mrf.mxu0
      %v5822 = vadd.f32 0.0, %v5821
      %v5823 = vpop.f32.mrf.mxu0
      %v5824 = vpop.f32.mrf.mxu0
      %v5825 = vadd.f32 0.0, %v5824
      %v5826 = vpop.f32.mrf.mxu0
      %5827 = vmatprep.mubr.bf16.mxu0 0
      %5828 = vmatmul.mubr.bf16.gmra.mxu0 %v5715
      %v5829 = vpop.f32.mrf.mxu0
      %v5830 = vadd.f32 0.0, %v5829
      %v5831 = vpop.f32.mrf.mxu0
      %v5832 = vpop.f32.mrf.mxu0
      %v5833 = vadd.f32 0.0, %v5832
      %v5834 = vpop.f32.mrf.mxu0
      %5835 = vmatprep.mubr.bf16.mxu0 0
      %5836 = vmatmul.mubr.bf16.gmra.mxu0 %v5718
      %v5837 = vpop.f32.mrf.mxu0
      %v5838 = vadd.f32 0.0, %v5837
      %v5839 = vpop.f32.mrf.mxu0
      %v5840 = vpop.f32.mrf.mxu0
      %v5841 = vadd.f32 0.0, %v5840
      %v5842 = vpop.f32.mrf.mxu0
      %5843 = vmatprep.mubr.bf16.mxu0 0
      %5844 = vmatmul.mubr.bf16.gmra.mxu0 %v5721
      %v5845 = vpop.f32.mrf.mxu0
      %v5846 = vadd.f32 0.0, %v5845
      %v5847 = vpop.f32.mrf.mxu0
      %v5848 = vpop.f32.mrf.mxu0
      %v5849 = vadd.f32 0.0, %v5848
      %v5850 = vpop.f32.mrf.mxu0
      %5851 = vmatprep.mubr.bf16.mxu0 0
      %5852 = vmatmul.mubr.bf16.gmra.mxu0 %v5724
      %v5853 = vpop.f32.mrf.mxu0
      %v5854 = vadd.f32 0.0, %v5853
      %v5855 = vpop.f32.mrf.mxu0
      %v5856 = vpop.f32.mrf.mxu0
      %v5857 = vadd.f32 0.0, %v5856
      %v5858 = vpop.f32.mrf.mxu0
      %5859 = vmatprep.mubr.bf16.mxu0 0
      %5860 = vmatmul.mubr.bf16.gmra.mxu0 %v5727
      %v5861 = vpop.f32.mrf.mxu0
      %v5862 = vadd.f32 0.0, %v5861
      %v5863 = vpop.f32.mrf.mxu0
      %v5864 = vpop.f32.mrf.mxu0
      %v5865 = vadd.f32 0.0, %v5864
      %v5866 = vpop.f32.mrf.mxu0
      %5867 = vmatprep.mubr.bf16.mxu0 0
      %5868 = vmatmul.mubr.bf16.gmra.mxu0 %v5730
      %v5869 = vpop.f32.mrf.mxu0
      %v5870 = vadd.f32 0.0, %v5869
      %v5871 = vpop.f32.mrf.mxu0
      %v5872 = vpop.f32.mrf.mxu0
      %v5873 = vadd.f32 0.0, %v5872
      %v5874 = vpop.f32.mrf.mxu0
      %5875 = vmatprep.mubr.bf16.mxu0 0
      %5876 = vmatmul.mubr.bf16.gmra.mxu0 %v5733
      %v5877 = vpop.f32.mrf.mxu0
      %v5878 = vadd.f32 0.0, %v5877
      %v5879 = vpop.f32.mrf.mxu0
      %v5880 = vpop.f32.mrf.mxu0
      %v5881 = vadd.f32 0.0, %v5880
      %v5882 = vpop.f32.mrf.mxu0
      %5883 = vmatprep.mubr.bf16.mxu0 0
      %5884 = vmatmul.mubr.bf16.gmra.mxu0 %v5736
      %v5885 = vpop.f32.mrf.mxu0
      %v5886 = vadd.f32 0.0, %v5885
      %v5887 = vpop.f32.mrf.mxu0
      %v5888 = vpop.f32.mrf.mxu0
      %v5889 = vadd.f32 0.0, %v5888
      %v5890 = vpop.f32.mrf.mxu0
      %5891 = vmatprep.mubr.bf16.mxu0 0
      %5892 = vmatmul.mubr.bf16.gmra.mxu0 %v5739
      %v5893 = vpop.f32.mrf.mxu0
      %v5894 = vadd.f32 0.0, %v5893
      %v5895 = vpop.f32.mrf.mxu0
      %v5896 = vpop.f32.mrf.mxu0
      %v5897 = vadd.f32 0.0, %v5896
      %v5898 = vpop.f32.mrf.mxu0
      %5899 = vmatprep.mubr.bf16.mxu0 0
      %5900 = vmatmul.mubr.bf16.gmra.mxu0 %v5742
      %v5901 = vpop.f32.mrf.mxu0
      %v5902 = vadd.f32 0.0, %v5901
      %v5903 = vpop.f32.mrf.mxu0
      %v5904 = vpop.f32.mrf.mxu0
      %v5905 = vadd.f32 0.0, %v5904
      %v5906 = vpop.f32.mrf.mxu0
      %5907 = vdwg.mxu0
      %v5908 = vadd.f32 %v5070, %v5782
      %v5909 = vadd.f32 %v5071, %v5785
      %v5910 = vadd.f32 %v5072, %v5790
      %v5911 = vadd.f32 %v5073, %v5793
      %v5912 = vadd.f32 %v5074, %v5798
      %v5913 = vadd.f32 %v5075, %v5801
      %v5914 = vadd.f32 %v5076, %v5806
      %v5915 = vadd.f32 %v5077, %v5809
      %v5916 = vadd.f32 %v5078, %v5814
      %v5917 = vadd.f32 %v5079, %v5817
      %v5918 = vadd.f32 %v5080, %v5822
      %v5919 = vadd.f32 %v5081, %v5825
      %v5920 = vadd.f32 %v5082, %v5830
      %v5921 = vadd.f32 %v5083, %v5833
      %v5922 = vadd.f32 %v5084, %v5838
      %v5923 = vadd.f32 %v5085, %v5841
      %v5924 = vadd.f32 %v5086, %v5846
      %v5925 = vadd.f32 %v5087, %v5849
      %v5926 = vadd.f32 %v5088, %v5854
      %v5927 = vadd.f32 %v5089, %v5857
      %v5928 = vadd.f32 %v5090, %v5862
      %v5929 = vadd.f32 %v5091, %v5865
      %v5930 = vadd.f32 %v5092, %v5870
      %v5931 = vadd.f32 %v5093, %v5873
      %v5932 = vadd.f32 %v5094, %v5878
      %v5933 = vadd.f32 %v5095, %v5881
      %v5934 = vadd.f32 %v5096, %v5886
      %v5935 = vadd.f32 %v5097, %v5889
      %v5936 = vadd.f32 %v5098, %v5894
      %v5937 = vadd.f32 %v5099, %v5897
      %v5938 = vadd.f32 %v5100, %v5902
      %v5939 = vadd.f32 %v5101, %v5905
      %v5940 = vld [vmem:[%s5] sm:$0x1]
      %v5942 = vlaneseq
      %v5943 = vshrl.u32 %v5942, 7
      %v5944 = vsub.s32 0, %v5943
      %v5945 = vrot.slane %v5940, %v5944
      %v5947 = vmul.f32 %v5908, %v5945
      %v5948 = vmul.f32 %v5909, %v5945
      %v5949 = vmul.f32 %v5910, %v5945
      %v5950 = vmul.f32 %v5911, %v5945
      %v5951 = vmul.f32 %v5912, %v5945
      %v5952 = vmul.f32 %v5913, %v5945
      %v5953 = vmul.f32 %v5914, %v5945
      %v5954 = vmul.f32 %v5915, %v5945
      %v5955 = vmul.f32 %v5916, %v5945
      %v5956 = vmul.f32 %v5917, %v5945
      %v5957 = vmul.f32 %v5918, %v5945
      %v5958 = vmul.f32 %v5919, %v5945
      %v5959 = vmul.f32 %v5920, %v5945
      %v5960 = vmul.f32 %v5921, %v5945
      %v5961 = vmul.f32 %v5922, %v5945
      %v5962 = vmul.f32 %v5923, %v5945
      %v5963 = vmul.f32 %v5924, %v5945
      %v5964 = vmul.f32 %v5925, %v5945
      %v5965 = vmul.f32 %v5926, %v5945
      %v5966 = vmul.f32 %v5927, %v5945
      %v5967 = vmul.f32 %v5928, %v5945
      %v5968 = vmul.f32 %v5929, %v5945
      %v5969 = vmul.f32 %v5930, %v5945
      %v5970 = vmul.f32 %v5931, %v5945
      %v5971 = vmul.f32 %v5932, %v5945
      %v5972 = vmul.f32 %v5933, %v5945
      %v5973 = vmul.f32 %v5934, %v5945
      %v5974 = vmul.f32 %v5935, %v5945
      %v5975 = vmul.f32 %v5936, %v5945
      %v5976 = vmul.f32 %v5937, %v5945
      %v5977 = vmul.f32 %v5938, %v5945
      %v5978 = vmul.f32 %v5939, %v5945
      %v5979 = vld [vmem:[%s6] sm:$0x1]
      %v5981 = vlaneseq
      %v5982 = vshrl.u32 %v5981, 7
      %v5983 = vsub.s32 0, %v5982
      %v5984 = vrot.slane %v5979, %v5983
      %v5986 = vadd.f32 %v5947, %v5984
      %v5987 = vadd.f32 %v5948, %v5984
      %v5988 = vadd.f32 %v5949, %v5984
      %v5989 = vadd.f32 %v5950, %v5984
      %v5990 = vadd.f32 %v5951, %v5984
      %v5991 = vadd.f32 %v5952, %v5984
      %v5992 = vadd.f32 %v5953, %v5984
      %v5993 = vadd.f32 %v5954, %v5984
      %v5994 = vadd.f32 %v5955, %v5984
      %v5995 = vadd.f32 %v5956, %v5984
      %v5996 = vadd.f32 %v5957, %v5984
      %v5997 = vadd.f32 %v5958, %v5984
      %v5998 = vadd.f32 %v5959, %v5984
      %v5999 = vadd.f32 %v5960, %v5984
      %v6000 = vadd.f32 %v5961, %v5984
      %v6001 = vadd.f32 %v5962, %v5984
      %v6002 = vadd.f32 %v5963, %v5984
      %v6003 = vadd.f32 %v5964, %v5984
      %v6004 = vadd.f32 %v5965, %v5984
      %v6005 = vadd.f32 %v5966, %v5984
      %v6006 = vadd.f32 %v5967, %v5984
      %v6007 = vadd.f32 %v5968, %v5984
      %v6008 = vadd.f32 %v5969, %v5984
      %v6009 = vadd.f32 %v5970, %v5984
      %v6010 = vadd.f32 %v5971, %v5984
      %v6011 = vadd.f32 %v5972, %v5984
      %v6012 = vadd.f32 %v5973, %v5984
      %v6013 = vadd.f32 %v5974, %v5984
      %v6014 = vadd.f32 %v5975, %v5984
      %v6015 = vadd.f32 %v5976, %v5984
      %v6016 = vadd.f32 %v5977, %v5984
      %v6017 = vadd.f32 %v5978, %v5984
      %vm6018 = vcmp.ge.f32.partialorder %v5986, 0.0
      %vm6019 = vcmp.ge.f32.partialorder %v5987, 0.0
      %vm6020 = vcmp.ge.f32.partialorder %v5988, 0.0
      %vm6021 = vcmp.ge.f32.partialorder %v5989, 0.0
      %vm6022 = vcmp.ge.f32.partialorder %v5990, 0.0
      %vm6023 = vcmp.ge.f32.partialorder %v5991, 0.0
      %vm6024 = vcmp.ge.f32.partialorder %v5992, 0.0
      %vm6025 = vcmp.ge.f32.partialorder %v5993, 0.0
      %vm6026 = vcmp.ge.f32.partialorder %v5994, 0.0
      %vm6027 = vcmp.ge.f32.partialorder %v5995, 0.0
      %vm6028 = vcmp.ge.f32.partialorder %v5996, 0.0
      %vm6029 = vcmp.ge.f32.partialorder %v5997, 0.0
      %vm6030 = vcmp.ge.f32.partialorder %v5998, 0.0
      %vm6031 = vcmp.ge.f32.partialorder %v5999, 0.0
      %vm6032 = vcmp.ge.f32.partialorder %v6000, 0.0
      %vm6033 = vcmp.ge.f32.partialorder %v6001, 0.0
      %vm6034 = vcmp.ge.f32.partialorder %v6002, 0.0
      %vm6035 = vcmp.ge.f32.partialorder %v6003, 0.0
      %vm6036 = vcmp.ge.f32.partialorder %v6004, 0.0
      %vm6037 = vcmp.ge.f32.partialorder %v6005, 0.0
      %vm6038 = vcmp.ge.f32.partialorder %v6006, 0.0
      %vm6039 = vcmp.ge.f32.partialorder %v6007, 0.0
      %vm6040 = vcmp.ge.f32.partialorder %v6008, 0.0
      %vm6041 = vcmp.ge.f32.partialorder %v6009, 0.0
      %vm6042 = vcmp.ge.f32.partialorder %v6010, 0.0
      %vm6043 = vcmp.ge.f32.partialorder %v6011, 0.0
      %vm6044 = vcmp.ge.f32.partialorder %v6012, 0.0
      %vm6045 = vcmp.ge.f32.partialorder %v6013, 0.0
      %vm6046 = vcmp.ge.f32.partialorder %v6014, 0.0
      %vm6047 = vcmp.ge.f32.partialorder %v6015, 0.0
      %vm6048 = vcmp.ge.f32.partialorder %v6016, 0.0
      %vm6049 = vcmp.ge.f32.partialorder %v6017, 0.0
      %v6050 = vmul.f32 %v5986, 0.1
      %v6051 = vmul.f32 %v5987, 0.1
      %v6052 = vmul.f32 %v5988, 0.1
      %v6053 = vmul.f32 %v5989, 0.1
      %v6054 = vmul.f32 %v5990, 0.1
      %v6055 = vmul.f32 %v5991, 0.1
      %v6056 = vmul.f32 %v5992, 0.1
      %v6057 = vmul.f32 %v5993, 0.1
      %v6058 = vmul.f32 %v5994, 0.1
      %v6059 = vmul.f32 %v5995, 0.1
      %v6060 = vmul.f32 %v5996, 0.1
      %v6061 = vmul.f32 %v5997, 0.1
      %v6062 = vmul.f32 %v5998, 0.1
      %v6063 = vmul.f32 %v5999, 0.1
      %v6064 = vmul.f32 %v6000, 0.1
      %v6065 = vmul.f32 %v6001, 0.1
      %v6066 = vmul.f32 %v6002, 0.1
      %v6067 = vmul.f32 %v6003, 0.1
      %v6068 = vmul.f32 %v6004, 0.1
      %v6069 = vmul.f32 %v6005, 0.1
      %v6070 = vmul.f32 %v6006, 0.1
      %v6071 = vmul.f32 %v6007, 0.1
      %v6072 = vmul.f32 %v6008, 0.1
      %v6073 = vmul.f32 %v6009, 0.1
      %v6074 = vmul.f32 %v6010, 0.1
      %v6075 = vmul.f32 %v6011, 0.1
      %v6076 = vmul.f32 %v6012, 0.1
      %v6077 = vmul.f32 %v6013, 0.1
      %v6078 = vmul.f32 %v6014, 0.1
      %v6079 = vmul.f32 %v6015, 0.1
      %v6080 = vmul.f32 %v6016, 0.1
      %v6081 = vmul.f32 %v6017, 0.1
      %v6082 = vsel %vm6018, %v5986, %v6050
      %v6083 = vsel %vm6019, %v5987, %v6051
      %v6084 = vsel %vm6020, %v5988, %v6052
      %v6085 = vsel %vm6021, %v5989, %v6053
      %v6086 = vsel %vm6022, %v5990, %v6054
      %v6087 = vsel %vm6023, %v5991, %v6055
      %v6088 = vsel %vm6024, %v5992, %v6056
      %v6089 = vsel %vm6025, %v5993, %v6057
      %v6090 = vsel %vm6026, %v5994, %v6058
      %v6091 = vsel %vm6027, %v5995, %v6059
      %v6092 = vsel %vm6028, %v5996, %v6060
      %v6093 = vsel %vm6029, %v5997, %v6061
      %v6094 = vsel %vm6030, %v5998, %v6062
      %v6095 = vsel %vm6031, %v5999, %v6063
      %v6096 = vsel %vm6032, %v6000, %v6064
      %v6097 = vsel %vm6033, %v6001, %v6065
      %v6098 = vsel %vm6034, %v6002, %v6066
      %v6099 = vsel %vm6035, %v6003, %v6067
      %v6100 = vsel %vm6036, %v6004, %v6068
      %v6101 = vsel %vm6037, %v6005, %v6069
      %v6102 = vsel %vm6038, %v6006, %v6070
      %v6103 = vsel %vm6039, %v6007, %v6071
      %v6104 = vsel %vm6040, %v6008, %v6072
      %v6105 = vsel %vm6041, %v6009, %v6073
      %v6106 = vsel %vm6042, %v6010, %v6074
      %v6107 = vsel %vm6043, %v6011, %v6075
      %v6108 = vsel %vm6044, %v6012, %v6076
      %v6109 = vsel %vm6045, %v6013, %v6077
      %v6110 = vsel %vm6046, %v6014, %v6078
      %v6111 = vsel %vm6047, %v6015, %v6079
      %v6112 = vsel %vm6048, %v6016, %v6080
      %v6113 = vsel %vm6049, %v6017, %v6081
      %6114 = vst [vmem:[%s278] sm:$0xff] %v6082
      %6115 = vst [vmem:[%s278 + $0x8] sm:$0xff] %v6083
      %6116 = vst [vmem:[%s278 + $0x10] sm:$0xff] %v6084
      %6117 = vst [vmem:[%s278 + $0x18] sm:$0xff] %v6085
      %6118 = vst [vmem:[%s278 + $0x20] sm:$0xff] %v6086
      %6119 = vst [vmem:[%s278 + $0x28] sm:$0xff] %v6087
      %6120 = vst [vmem:[%s278 + $0x30] sm:$0xff] %v6088
      %6121 = vst [vmem:[%s278 + $0x38] sm:$0xff] %v6089
      %6122 = vst [vmem:[%s278 + $0x40] sm:$0xff] %v6090
      %6123 = vst [vmem:[%s278 + $0x48] sm:$0xff] %v6091
      %6124 = vst [vmem:[%s278 + $0x50] sm:$0xff] %v6092
      %6125 = vst [vmem:[%s278 + $0x58] sm:$0xff] %v6093
      %6126 = vst [vmem:[%s278 + $0x60] sm:$0xff] %v6094
      %6127 = vst [vmem:[%s278 + $0x68] sm:$0xff] %v6095
      %6128 = vst [vmem:[%s278 + $0x70] sm:$0xff] %v6096
      %6129 = vst [vmem:[%s278 + $0x78] sm:$0xff] %v6097
      %6130 = vst [vmem:[%s278 + $0x80] sm:$0xff] %v6098
      %6131 = vst [vmem:[%s278 + $0x88] sm:$0xff] %v6099
      %6132 = vst [vmem:[%s278 + $0x90] sm:$0xff] %v6100
      %6133 = vst [vmem:[%s278 + $0x98] sm:$0xff] %v6101
      %6134 = vst [vmem:[%s278 + $0xa0] sm:$0xff] %v6102
      %6135 = vst [vmem:[%s278 + $0xa8] sm:$0xff] %v6103
      %6136 = vst [vmem:[%s278 + $0xb0] sm:$0xff] %v6104
      %6137 = vst [vmem:[%s278 + $0xb8] sm:$0xff] %v6105
      %6138 = vst [vmem:[%s278 + $0xc0] sm:$0xff] %v6106
      %6139 = vst [vmem:[%s278 + $0xc8] sm:$0xff] %v6107
      %6140 = vst [vmem:[%s278 + $0xd0] sm:$0xff] %v6108
      %6141 = vst [vmem:[%s278 + $0xd8] sm:$0xff] %v6109
      %6142 = vst [vmem:[%s278 + $0xe0] sm:$0xff] %v6110
      %6143 = vst [vmem:[%s278 + $0xe8] sm:$0xff] %v6111
      %6144 = vst [vmem:[%s278 + $0xf0] sm:$0xff] %v6112
      %6145 = vst [vmem:[%s278 + $0xf8] sm:$0xff] %v6113
      %s6146 = smul.u32 32, %s18
      %p6147 = scmp.lt.s32.totalorder %s6146, 63
      %s6148 = scalar_select %p6147, %s6146, 63
      %s6149 = smul.addr %s6148, 8
      %s6150 = scalar_lea.vmem %s7, %s6149
      // Predicated region
      $region49: #{sppf_forward.1} parent=47 // pred_check
        %p6151 = pneg %p188
      $region50: #{sppf_forward.1} parent=47 // pred_check_branch
        %6153 = sbr.rel (%p6151) target = $region52
      $region51: #{sppf_forward.1} parent=47 // pred_region
        %s6154 = smul.u32 32, %s18
      $region52: #{sppf_forward.1} parent=47 // pred_fallthru
        _
    $region48: #{sppf_forward.1} parent=5 // pred_fallthru
      _
    %p6155 = scmp.le.s32.totalorder 2, %s13
    // Predicated region
    $region53: #{sppf_forward.1} parent=5 // pred_check
      %p6156 = pneg %p6155
    $region54: #{sppf_forward.1} parent=5 // pred_check_branch
      %6158 = sbr.rel (%p6156) target = $region56
    $region55: #{sppf_forward.1} parent=5 // pred_region
      %s6159 = ssub.s32 %s13, 2
      // Predicated region
      $region57: #{sppf_forward.1} parent=55 // pred_check
        %p6160 = pneg %p194
      $region58: #{sppf_forward.1} parent=55 // pred_check_branch
        %6162 = sbr.rel (%p6160) target = $region60
      $region59: #{sppf_forward.1} parent=55 // pred_region
        %s6163 = smul.u32 32, %s19
        %p6164 = scmp.lt.s32.totalorder %s6163, 63
        %s6165 = scalar_select %p6164, %s6163, 63
        %s6166 = smul.addr %s6165, 8
        %s6167 = scalar_lea.vmem %s7, %s6166
      $region60: #{sppf_forward.1} parent=55 // pred_fallthru
        _
    $region56: #{sppf_forward.1} parent=5 // pred_fallthru
      _
  $region6: #{sppf_forward.1} parent=0 // loop_footer
    %s17 = sadd.s32 1, %s13
  $region7: #{sppf_forward.1} parent=0 // loop_footer_branch
    %12 = sbr.rel target = $region3
  $region8: #{sppf_forward.1} parent=0 // loop_exit
    _

</llo_original>
